<compile_context>
chip_gen: v6e
topology: v6e:2x2x1
jax: 0.10.0
libtpu: 0.0.40
codegen_flags: <defaults>
</compile_context>

<pallas_src>
import functools

import jax
import jax.numpy as jnp
from jax.experimental import pallas as pl
from jax.experimental.pallas import tpu as pltpu

# Shapes implied by the module (fc3 expects 64 * 62 features -> L_in = 256).
IN_CH = 18
C1 = 64
C2 = 64
C2P = 128                # conv2 output channels padded to a full lane width
K = 5
L_IN = 256
L1 = L_IN - K + 1        # 252 after conv1
L2 = L1 - K + 1          # 248 after conv2
POOL = 4
L3 = L2 // POOL          # 62 after MaxPool1d(4)
FLAT = C2 * L3           # 3968 (torch flatten size)
FLATP = C2P * L3         # 7936 (padded flatten size used in-kernel)
H3 = 200
OUT = 12


def _make_kernel(block_b):
    """Fused conv1->relu->conv2->relu->pool->flatten->fc3->relu->fc4."""

    def kernel(x_ref, w1_ref, b1_ref, w2_ref, b2_ref,
               w3_ref, b3_ref, w4_ref, b4_ref, o_ref, flat_ref):
        # x_ref : (block_b, L_IN, IN_CH) f32, channels-last
        # w1_ref: (K, IN_CH, C1) bf16    b1_ref: (1, C1)  f32
        # w2_ref: (K, C1, C2P)  bf16     b2_ref: (1, C2P) f32 (padded w/ zeros)
        # w3_ref: (FLATP, H3)   bf16     b3_ref: (1, H3)  f32
        # w4_ref: (H3, OUT)     bf16     b4_ref: (1, OUT) f32
        # o_ref : (block_b, 1, OUT) f32
        # flat_ref: VMEM scratch (block_b, FLATP) f32
        for b in range(block_b):
            x = x_ref[b]                                  # (L_IN, IN_CH) f32

            # conv1: out[t, co] = sum_k x[t+k, :] @ W1[k]
            acc1 = jnp.zeros((L1, C1), jnp.float32)
            for k in range(K):
                acc1 = acc1 + jnp.dot(
                    x[k:k + L1, :].astype(jnp.bfloat16), w1_ref[k],
                    preferred_element_type=jnp.float32)
            h1 = jnp.maximum(acc1 + b1_ref[...], 0.0)     # (L1, C1) f32

            # conv2 (output channels zero-padded to 128 lanes).
            acc2 = jnp.zeros((L2, C2P), jnp.float32)
            for k in range(K):
                acc2 = acc2 + jnp.dot(
                    h1[k:k + L2, :].astype(jnp.bfloat16), w2_ref[k],
                    preferred_element_type=jnp.float32)
            h2 = jnp.maximum(acc2 + b2_ref[...], 0.0)     # (L2, C2P) f32

            # MaxPool1d(kernel=4, stride=4) along the length (sublane) axis.
            pooled = jnp.max(h2.reshape(L3, POOL, C2P), axis=1)   # (L3, C2P)

            # Flatten into the fc3 contraction layout: one lane-aligned,
            # full-vreg (1, 128) store per pooled row into the flat scratch.
            for l in range(L3):
                flat_ref[b:b + 1, l * C2P:(l + 1) * C2P] = pooled[l:l + 1, :]

        # fc3 -> ReLU -> fc4 on the whole batch block at once.
        flat = flat_ref[...].astype(jnp.bfloat16)         # (block_b, FLATP)
        h3 = jnp.dot(flat, w3_ref[...],
                     preferred_element_type=jnp.float32) + b3_ref[...]
        h3 = jnp.maximum(h3, 0.0)                         # (block_b, H3) f32
        out = jnp.dot(h3.astype(jnp.bfloat16), w4_ref[...],
                      preferred_element_type=jnp.float32) + b4_ref[...]

        for b in range(block_b):
            o_ref[b, :, :] = out[b:b + 1, :]

    return kernel


def _pick_block_batch(batch):
    """Largest batch block <= 4 that divides B while keeping >= 2 grid steps
    (so both v7x TensorCores stay busy)."""
    for cand in (4, 2, 1):
        if batch % cand == 0 and (batch // cand) >= 2:
            return cand
    return 1


def cnn1d_forward(x, kparams):
    """x: (B, L_IN, IN_CH) float32 -> (B, OUT) float32."""
    B = x.shape[0]
    w1, b1, w2, b2, w3, b3, w4, b4 = kparams
    bb = _pick_block_batch(B)
    grid = (B // bb,)

    flops = 2 * B * (L1 * K * IN_CH * C1 + L2 * K * C1 * C2P
                     + FLATP * H3 + H3 * OUT)
    bytes_accessed = int(x.size) * 4 + B * OUT * 4 + sum(
        int(p.size) * p.dtype.itemsize for p in kparams)

    out3 = pl.pallas_call(
        _make_kernel(bb),
        out_shape=jax.ShapeDtypeStruct((B, 1, OUT), jnp.float32),
        grid=grid,
        in_specs=[
            pl.BlockSpec((bb, L_IN, IN_CH), lambda i: (i, 0, 0)),
            pl.BlockSpec((K, IN_CH, C1), lambda i: (0, 0, 0)),
            pl.BlockSpec((1, C1), lambda i: (0, 0)),
            pl.BlockSpec((K, C1, C2P), lambda i: (0, 0, 0)),
            pl.BlockSpec((1, C2P), lambda i: (0, 0)),
            pl.BlockSpec((FLATP, H3), lambda i: (0, 0)),
            pl.BlockSpec((1, H3), lambda i: (0, 0)),
            pl.BlockSpec((H3, OUT), lambda i: (0, 0)),
            pl.BlockSpec((1, OUT), lambda i: (0, 0)),
        ],
        out_specs=pl.BlockSpec((bb, 1, OUT), lambda i: (i, 0, 0)),
        scratch_shapes=[pltpu.VMEM((bb, FLATP), jnp.float32)],
        compiler_params=pltpu.CompilerParams(
            dimension_semantics=("parallel",)),
        cost_estimate=pl.CostEstimate(
            flops=flops, transcendentals=0, bytes_accessed=bytes_accessed),
    )(x, w1, b1, w2, b2, w3, b3, w4, b4)
    return out3.reshape(B, OUT)


# ----------------------------------------------------------------------------
# Parameter handling: synthetic torch-layout parameters -> kernel layout.
# ----------------------------------------------------------------------------
def init_torch_params(key):
    """Deterministic synthetic params in the torch module's native layouts."""
    ks = jax.random.split(key, 8)
    c1w = jax.random.normal(ks[0], (C1, IN_CH, K), jnp.float32) * 0.05
    c1b = jax.random.normal(ks[1], (C1,), jnp.float32) * 0.05
    c2w = jax.random.normal(ks[2], (C2, C1, K), jnp.float32) * 0.05
    c2b = jax.random.normal(ks[3], (C2,), jnp.float32) * 0.05
    f3w = jax.random.normal(ks[4], (H3, FLAT), jnp.float32) * 0.02
    f3b = jax.random.normal(ks[5], (H3,), jnp.float32) * 0.02
    f4w = jax.random.normal(ks[6], (OUT, H3), jnp.float32) * 0.02
    f4b = jax.random.normal(ks[7], (OUT,), jnp.float32) * 0.02
    return (c1w, c1b, c2w, c2b, f3w, f3b, f4w, f4b)


def prepare_params(tparams):
    """Convert torch-layout params into the fused kernel's layout.

    - conv weights -> tap-major (K, C_in, C_out), bf16.
    - conv2 / fc3 padded to 128 output channels / 7936 rows with zeros.
    - fc3 rows permuted so the kernel's (l, c) flatten matches torch's
      channel-major .view(batch, -1) flatten.
    """
    c1w, c1b, c2w, c2b, f3w, f3b, f4w, f4b = tparams

    w1 = jnp.transpose(c1w, (2, 1, 0)).astype(jnp.bfloat16)        # (K,18,64)
    b1 = c1b.reshape(1, C1).astype(jnp.float32)

    w2_full = jnp.transpose(c2w, (2, 1, 0))                        # (K,64,64)
    w2 = jnp.zeros((K, C1, C2P), jnp.float32).at[:, :, :C2].set(w2_full)
    w2 = w2.astype(jnp.bfloat16)
    b2 = jnp.zeros((1, C2P), jnp.float32).at[0, :C2].set(c2b)

    # torch flat index = c * L3 + l ; kernel flat index = l * C2P + c.
    w3t = f3w.T                                                    # (3968,200)
    w3r = w3t.reshape(C2, L3, H3)                                  # [c, l, :]
    w3r = jnp.transpose(w3r, (1, 0, 2))                            # [l, c, :]
    w3 = jnp.zeros((L3, C2P, H3), jnp.float32).at[:, :C2, :].set(w3r)
    w3 = w3.reshape(FLATP, H3).astype(jnp.bfloat16)
    b3 = f3b.reshape(1, H3).astype(jnp.float32)

    w4 = f4w.T.astype(jnp.bfloat16)                                # (200, 12)
    b4 = f4b.reshape(1, OUT).astype(jnp.float32)
    return (w1, b1, w2, b2, w3, b3, w4, b4)


def reference_forward(x, tparams):
    """Pure-JAX f32 reference matching the torch module's semantics."""
    c1w, c1b, c2w, c2b, f3w, f3b, f4w, f4b = tparams
    xc = jnp.transpose(x, (0, 2, 1))                     # (B, C_in, L)
    h = jax.lax.conv_general_dilated(
        xc, c1w, (1,), 'VALID', dimension_numbers=('NCH', 'OIH', 'NCH'))
    h = jax.nn.relu(h + c1b.reshape(1, C1, 1))
    h = jax.lax.conv_general_dilated(
        h, c2w, (1,), 'VALID', dimension_numbers=('NCH', 'OIH', 'NCH'))
    h = jax.nn.relu(h + c2b.reshape(1, C2, 1))
    B = x.shape[0]
    h = jnp.max(h.reshape(B, C2, L3, POOL), axis=-1)     # MaxPool1d(4)
    flat = h.reshape(B, FLAT)                            # torch .view(B, -1)
    h3 = jax.nn.relu(flat @ f3w.T + f3b)
    return h3 @ f4w.T + f4b


if __name__ == "__main__":
    # dropout_prob = 0.0 -> the torch forward skips dropout; omitted here.
    key = jax.random.PRNGKey(0)
    pkey, xkey = jax.random.split(key)
    tparams = init_torch_params(pkey)
    kparams = prepare_params(tparams)
    x = jax.random.normal(xkey, (2, L_IN, IN_CH), jnp.float32)

    out = jax.block_until_ready(cnn1d_forward(x, kparams))
    assert out.shape == (2, OUT), out.shape

    ref = jax.block_until_ready(reference_forward(x, tparams))
    max_err = float(jnp.max(jnp.abs(out - ref)))
    # bf16 matmul operands (f32 accumulation) -> slightly loosened tolerance.
    assert jnp.allclose(out, ref, rtol=3e-2, atol=3e-2), max_err

    print("KERNEL_OK")
</pallas_src>

<mosaic_0001>
module attributes {stable_mosaic.version = 11 : i64} {
  func.func @kernel(%arg0: i32, %arg1: memref<1x256x18xf32, #tpu.memory_space<vmem>>, %arg2: memref<5x18x64xbf16, #tpu.memory_space<vmem>>, %arg3: memref<1x64xf32, #tpu.memory_space<vmem>>, %arg4: memref<5x64x128xbf16, #tpu.memory_space<vmem>>, %arg5: memref<1x128xf32, #tpu.memory_space<vmem>>, %arg6: memref<7936x200xbf16, #tpu.memory_space<vmem>>, %arg7: memref<1x200xf32, #tpu.memory_space<vmem>>, %arg8: memref<200x12xbf16, #tpu.memory_space<vmem>>, %arg9: memref<1x12xf32, #tpu.memory_space<vmem>>, %arg10: memref<1x1x12xf32, #tpu.memory_space<vmem>>, %arg11: memref<1x7936xf32, #tpu.memory_space<vmem>>) attributes {dimension_semantics = [#tpu.dimension_semantics<parallel>], iteration_bounds = array<i64: 2>, scalar_prefetch = 0 : i64, scratch_operands = 1 : i64, tpu.core_type = #tpu.core_type<tc>, window_params = [{transform_indices = @transform_0, window_bounds = array<i64: 1, 256, 18>}, {pipeline_mode = #tpu.pipeline_mode<synchronous>, transform_indices = @transform_1, window_bounds = array<i64: 5, 18, 64>}, {pipeline_mode = #tpu.pipeline_mode<synchronous>, transform_indices = @transform_2, window_bounds = array<i64: 1, 64>}, {pipeline_mode = #tpu.pipeline_mode<synchronous>, transform_indices = @transform_3, window_bounds = array<i64: 5, 64, 128>}, {pipeline_mode = #tpu.pipeline_mode<synchronous>, transform_indices = @transform_4, window_bounds = array<i64: 1, 128>}, {pipeline_mode = #tpu.pipeline_mode<synchronous>, transform_indices = @transform_5, window_bounds = array<i64: 7936, 200>}, {pipeline_mode = #tpu.pipeline_mode<synchronous>, transform_indices = @transform_6, window_bounds = array<i64: 1, 200>}, {pipeline_mode = #tpu.pipeline_mode<synchronous>, transform_indices = @transform_7, window_bounds = array<i64: 200, 12>}, {pipeline_mode = #tpu.pipeline_mode<synchronous>, transform_indices = @transform_8, window_bounds = array<i64: 1, 12>}, {transform_indices = @transform_9, window_bounds = array<i64: 1, 1, 12>}]} {
    %c0 = arith.constant 0 : index
    %c0_0 = arith.constant 0 : index
    %c0_1 = arith.constant 0 : index
    %0 = vector.load %arg1[%c0, %c0_0, %c0_1] : memref<1x256x18xf32, #tpu.memory_space<vmem>>, vector<1x256x18xf32>
    %1 = vector.shape_cast %0 : vector<1x256x18xf32> to vector<256x18xf32>
    %cst = arith.constant 0.000000e+00 : f32
    %2 = vector.broadcast %cst : f32 to vector<252x64xf32>
    %3 = vector.extract_strided_slice %1 {offsets = [0, 0], sizes = [252, 18], strides = [1, 1]} : vector<256x18xf32> to vector<252x18xf32>
    %4 = arith.truncf %3 : vector<252x18xf32> to vector<252x18xbf16>
    %c0_2 = arith.constant 0 : index
    %c0_3 = arith.constant 0 : index
    %c0_4 = arith.constant 0 : index
    %5 = vector.load %arg2[%c0_2, %c0_3, %c0_4] : memref<5x18x64xbf16, #tpu.memory_space<vmem>>, vector<1x18x64xbf16>
    %6 = vector.shape_cast %5 : vector<1x18x64xbf16> to vector<18x64xbf16>
    %cst_5 = arith.constant dense<0.000000e+00> : vector<252x64xf32>
    %7 = tpu.matmul %4, %6, %cst_5 {dimension_numbers = #tpu.dot_dimension_numbers<[1], [0], [0], [1], [0, 0, 1, 1], [], []>} : vector<252x18xbf16>, vector<18x64xbf16>, vector<252x64xf32> -> vector<252x64xf32>
    %8 = arith.addf %2, %7 : vector<252x64xf32>
    %9 = vector.extract_strided_slice %1 {offsets = [1, 0], sizes = [252, 18], strides = [1, 1]} : vector<256x18xf32> to vector<252x18xf32>
    %10 = arith.truncf %9 : vector<252x18xf32> to vector<252x18xbf16>
    %c1 = arith.constant 1 : index
    %c0_6 = arith.constant 0 : index
    %c0_7 = arith.constant 0 : index
    %11 = vector.load %arg2[%c1, %c0_6, %c0_7] : memref<5x18x64xbf16, #tpu.memory_space<vmem>>, vector<1x18x64xbf16>
    %12 = vector.shape_cast %11 : vector<1x18x64xbf16> to vector<18x64xbf16>
    %cst_8 = arith.constant dense<0.000000e+00> : vector<252x64xf32>
    %13 = tpu.matmul %10, %12, %cst_8 {dimension_numbers = #tpu.dot_dimension_numbers<[1], [0], [0], [1], [0, 0, 1, 1], [], []>} : vector<252x18xbf16>, vector<18x64xbf16>, vector<252x64xf32> -> vector<252x64xf32>
    %14 = arith.addf %8, %13 : vector<252x64xf32>
    %15 = vector.extract_strided_slice %1 {offsets = [2, 0], sizes = [252, 18], strides = [1, 1]} : vector<256x18xf32> to vector<252x18xf32>
    %16 = arith.truncf %15 : vector<252x18xf32> to vector<252x18xbf16>
    %c2 = arith.constant 2 : index
    %c0_9 = arith.constant 0 : index
    %c0_10 = arith.constant 0 : index
    %17 = vector.load %arg2[%c2, %c0_9, %c0_10] : memref<5x18x64xbf16, #tpu.memory_space<vmem>>, vector<1x18x64xbf16>
    %18 = vector.shape_cast %17 : vector<1x18x64xbf16> to vector<18x64xbf16>
    %cst_11 = arith.constant dense<0.000000e+00> : vector<252x64xf32>
    %19 = tpu.matmul %16, %18, %cst_11 {dimension_numbers = #tpu.dot_dimension_numbers<[1], [0], [0], [1], [0, 0, 1, 1], [], []>} : vector<252x18xbf16>, vector<18x64xbf16>, vector<252x64xf32> -> vector<252x64xf32>
    %20 = arith.addf %14, %19 : vector<252x64xf32>
    %21 = vector.extract_strided_slice %1 {offsets = [3, 0], sizes = [252, 18], strides = [1, 1]} : vector<256x18xf32> to vector<252x18xf32>
    %22 = arith.truncf %21 : vector<252x18xf32> to vector<252x18xbf16>
    %c3 = arith.constant 3 : index
    %c0_12 = arith.constant 0 : index
    %c0_13 = arith.constant 0 : index
    %23 = vector.load %arg2[%c3, %c0_12, %c0_13] : memref<5x18x64xbf16, #tpu.memory_space<vmem>>, vector<1x18x64xbf16>
    %24 = vector.shape_cast %23 : vector<1x18x64xbf16> to vector<18x64xbf16>
    %cst_14 = arith.constant dense<0.000000e+00> : vector<252x64xf32>
    %25 = tpu.matmul %22, %24, %cst_14 {dimension_numbers = #tpu.dot_dimension_numbers<[1], [0], [0], [1], [0, 0, 1, 1], [], []>} : vector<252x18xbf16>, vector<18x64xbf16>, vector<252x64xf32> -> vector<252x64xf32>
    %26 = arith.addf %20, %25 : vector<252x64xf32>
    %27 = vector.extract_strided_slice %1 {offsets = [4, 0], sizes = [252, 18], strides = [1, 1]} : vector<256x18xf32> to vector<252x18xf32>
    %28 = arith.truncf %27 : vector<252x18xf32> to vector<252x18xbf16>
    %c4 = arith.constant 4 : index
    %c0_15 = arith.constant 0 : index
    %c0_16 = arith.constant 0 : index
    %29 = vector.load %arg2[%c4, %c0_15, %c0_16] : memref<5x18x64xbf16, #tpu.memory_space<vmem>>, vector<1x18x64xbf16>
    %30 = vector.shape_cast %29 : vector<1x18x64xbf16> to vector<18x64xbf16>
    %cst_17 = arith.constant dense<0.000000e+00> : vector<252x64xf32>
    %31 = tpu.matmul %28, %30, %cst_17 {dimension_numbers = #tpu.dot_dimension_numbers<[1], [0], [0], [1], [0, 0, 1, 1], [], []>} : vector<252x18xbf16>, vector<18x64xbf16>, vector<252x64xf32> -> vector<252x64xf32>
    %32 = arith.addf %26, %31 : vector<252x64xf32>
    %c0_18 = arith.constant 0 : index
    %c0_19 = arith.constant 0 : index
    %33 = vector.load %arg3[%c0_18, %c0_19] : memref<1x64xf32, #tpu.memory_space<vmem>>, vector<1x64xf32>
    %34 = vector.broadcast %33 : vector<1x64xf32> to vector<252x64xf32>
    %35 = arith.addf %32, %34 : vector<252x64xf32>
    %cst_20 = arith.constant 0.000000e+00 : f32
    %36 = vector.broadcast %cst_20 : f32 to vector<252x64xf32>
    %37 = arith.maximumf %35, %36 : vector<252x64xf32>
    %cst_21 = arith.constant 0.000000e+00 : f32
    %38 = vector.broadcast %cst_21 : f32 to vector<248x128xf32>
    %39 = vector.extract_strided_slice %37 {offsets = [0, 0], sizes = [248, 64], strides = [1, 1]} : vector<252x64xf32> to vector<248x64xf32>
    %40 = arith.truncf %39 : vector<248x64xf32> to vector<248x64xbf16>
    %c0_22 = arith.constant 0 : index
    %c0_23 = arith.constant 0 : index
    %c0_24 = arith.constant 0 : index
    %41 = vector.load %arg4[%c0_22, %c0_23, %c0_24] : memref<5x64x128xbf16, #tpu.memory_space<vmem>>, vector<1x64x128xbf16>
    %42 = vector.shape_cast %41 : vector<1x64x128xbf16> to vector<64x128xbf16>
    %cst_25 = arith.constant dense<0.000000e+00> : vector<248x128xf32>
    %43 = tpu.matmul %40, %42, %cst_25 {dimension_numbers = #tpu.dot_dimension_numbers<[1], [0], [0], [1], [0, 0, 1, 1], [], []>} : vector<248x64xbf16>, vector<64x128xbf16>, vector<248x128xf32> -> vector<248x128xf32>
    %44 = arith.addf %38, %43 : vector<248x128xf32>
    %45 = vector.extract_strided_slice %37 {offsets = [1, 0], sizes = [248, 64], strides = [1, 1]} : vector<252x64xf32> to vector<248x64xf32>
    %46 = arith.truncf %45 : vector<248x64xf32> to vector<248x64xbf16>
    %c1_26 = arith.constant 1 : index
    %c0_27 = arith.constant 0 : index
    %c0_28 = arith.constant 0 : index
    %47 = vector.load %arg4[%c1_26, %c0_27, %c0_28] : memref<5x64x128xbf16, #tpu.memory_space<vmem>>, vector<1x64x128xbf16>
    %48 = vector.shape_cast %47 : vector<1x64x128xbf16> to vector<64x128xbf16>
    %cst_29 = arith.constant dense<0.000000e+00> : vector<248x128xf32>
    %49 = tpu.matmul %46, %48, %cst_29 {dimension_numbers = #tpu.dot_dimension_numbers<[1], [0], [0], [1], [0, 0, 1, 1], [], []>} : vector<248x64xbf16>, vector<64x128xbf16>, vector<248x128xf32> -> vector<248x128xf32>
    %50 = arith.addf %44, %49 : vector<248x128xf32>
    %51 = vector.extract_strided_slice %37 {offsets = [2, 0], sizes = [248, 64], strides = [1, 1]} : vector<252x64xf32> to vector<248x64xf32>
    %52 = arith.truncf %51 : vector<248x64xf32> to vector<248x64xbf16>
    %c2_30 = arith.constant 2 : index
    %c0_31 = arith.constant 0 : index
    %c0_32 = arith.constant 0 : index
    %53 = vector.load %arg4[%c2_30, %c0_31, %c0_32] : memref<5x64x128xbf16, #tpu.memory_space<vmem>>, vector<1x64x128xbf16>
    %54 = vector.shape_cast %53 : vector<1x64x128xbf16> to vector<64x128xbf16>
    %cst_33 = arith.constant dense<0.000000e+00> : vector<248x128xf32>
    %55 = tpu.matmul %52, %54, %cst_33 {dimension_numbers = #tpu.dot_dimension_numbers<[1], [0], [0], [1], [0, 0, 1, 1], [], []>} : vector<248x64xbf16>, vector<64x128xbf16>, vector<248x128xf32> -> vector<248x128xf32>
    %56 = arith.addf %50, %55 : vector<248x128xf32>
    %57 = vector.extract_strided_slice %37 {offsets = [3, 0], sizes = [248, 64], strides = [1, 1]} : vector<252x64xf32> to vector<248x64xf32>
    %58 = arith.truncf %57 : vector<248x64xf32> to vector<248x64xbf16>
    %c3_34 = arith.constant 3 : index
    %c0_35 = arith.constant 0 : index
    %c0_36 = arith.constant 0 : index
    %59 = vector.load %arg4[%c3_34, %c0_35, %c0_36] : memref<5x64x128xbf16, #tpu.memory_space<vmem>>, vector<1x64x128xbf16>
    %60 = vector.shape_cast %59 : vector<1x64x128xbf16> to vector<64x128xbf16>
    %cst_37 = arith.constant dense<0.000000e+00> : vector<248x128xf32>
    %61 = tpu.matmul %58, %60, %cst_37 {dimension_numbers = #tpu.dot_dimension_numbers<[1], [0], [0], [1], [0, 0, 1, 1], [], []>} : vector<248x64xbf16>, vector<64x128xbf16>, vector<248x128xf32> -> vector<248x128xf32>
    %62 = arith.addf %56, %61 : vector<248x128xf32>
    %63 = vector.extract_strided_slice %37 {offsets = [4, 0], sizes = [248, 64], strides = [1, 1]} : vector<252x64xf32> to vector<248x64xf32>
    %64 = arith.truncf %63 : vector<248x64xf32> to vector<248x64xbf16>
    %c4_38 = arith.constant 4 : index
    %c0_39 = arith.constant 0 : index
    %c0_40 = arith.constant 0 : index
    %65 = vector.load %arg4[%c4_38, %c0_39, %c0_40] : memref<5x64x128xbf16, #tpu.memory_space<vmem>>, vector<1x64x128xbf16>
    %66 = vector.shape_cast %65 : vector<1x64x128xbf16> to vector<64x128xbf16>
    %cst_41 = arith.constant dense<0.000000e+00> : vector<248x128xf32>
    %67 = tpu.matmul %64, %66, %cst_41 {dimension_numbers = #tpu.dot_dimension_numbers<[1], [0], [0], [1], [0, 0, 1, 1], [], []>} : vector<248x64xbf16>, vector<64x128xbf16>, vector<248x128xf32> -> vector<248x128xf32>
    %68 = arith.addf %62, %67 : vector<248x128xf32>
    %c0_42 = arith.constant 0 : index
    %c0_43 = arith.constant 0 : index
    %69 = vector.load %arg5[%c0_42, %c0_43] : memref<1x128xf32, #tpu.memory_space<vmem>>, vector<1x128xf32>
    %70 = vector.broadcast %69 : vector<1x128xf32> to vector<248x128xf32>
    %71 = arith.addf %68, %70 : vector<248x128xf32>
    %cst_44 = arith.constant 0.000000e+00 : f32
    %72 = vector.broadcast %cst_44 : f32 to vector<248x128xf32>
    %73 = arith.maximumf %71, %72 : vector<248x128xf32>
    %74 = vector.shape_cast %73 : vector<248x128xf32> to vector<62x4x128xf32>
    %cst_45 = arith.constant dense<0xFF800000> : vector<62x128xf32>
    %75 = vector.multi_reduction <maximumf>, %74, %cst_45 [1] : vector<62x4x128xf32> to vector<62x128xf32>
    %76 = vector.extract_strided_slice %75 {offsets = [0, 0], sizes = [1, 128], strides = [1, 1]} : vector<62x128xf32> to vector<1x128xf32>
    %c0_46 = arith.constant 0 : index
    %c0_47 = arith.constant 0 : index
    %77 = vector.load %arg11[%c0_46, %c0_47] : memref<1x7936xf32, #tpu.memory_space<vmem>>, vector<1x128xf32>
    tpu.vector_store %arg11[%c0_46, %c0_47], %76 {strides = array<i32>} : memref<1x7936xf32, #tpu.memory_space<vmem>>, vector<1x128xf32>,
    %78 = vector.extract_strided_slice %75 {offsets = [1, 0], sizes = [1, 128], strides = [1, 1]} : vector<62x128xf32> to vector<1x128xf32>
    %c0_48 = arith.constant 0 : index
    %c128 = arith.constant 128 : index
    %79 = vector.load %arg11[%c0_48, %c128] : memref<1x7936xf32, #tpu.memory_space<vmem>>, vector<1x128xf32>
    tpu.vector_store %arg11[%c0_48, %c128], %78 {strides = array<i32>} : memref<1x7936xf32, #tpu.memory_space<vmem>>, vector<1x128xf32>,
    %80 = vector.extract_strided_slice %75 {offsets = [2, 0], sizes = [1, 128], strides = [1, 1]} : vector<62x128xf32> to vector<1x128xf32>
    %c0_49 = arith.constant 0 : index
    %c256 = arith.constant 256 : index
    %81 = vector.load %arg11[%c0_49, %c256] : memref<1x7936xf32, #tpu.memory_space<vmem>>, vector<1x128xf32>
    tpu.vector_store %arg11[%c0_49, %c256], %80 {strides = array<i32>} : memref<1x7936xf32, #tpu.memory_space<vmem>>, vector<1x128xf32>,
    %82 = vector.extract_strided_slice %75 {offsets = [3, 0], sizes = [1, 128], strides = [1, 1]} : vector<62x128xf32> to vector<1x128xf32>
    %c0_50 = arith.constant 0 : index
    %c384 = arith.constant 384 : index
    %83 = vector.load %arg11[%c0_50, %c384] : memref<1x7936xf32, #tpu.memory_space<vmem>>, vector<1x128xf32>
    tpu.vector_store %arg11[%c0_50, %c384], %82 {strides = array<i32>} : memref<1x7936xf32, #tpu.memory_space<vmem>>, vector<1x128xf32>,
    %84 = vector.extract_strided_slice %75 {offsets = [4, 0], sizes = [1, 128], strides = [1, 1]} : vector<62x128xf32> to vector<1x128xf32>
    %c0_51 = arith.constant 0 : index
    %c512 = arith.constant 512 : index
    %85 = vector.load %arg11[%c0_51, %c512] : memref<1x7936xf32, #tpu.memory_space<vmem>>, vector<1x128xf32>
    tpu.vector_store %arg11[%c0_51, %c512], %84 {strides = array<i32>} : memref<1x7936xf32, #tpu.memory_space<vmem>>, vector<1x128xf32>,
    %86 = vector.extract_strided_slice %75 {offsets = [5, 0], sizes = [1, 128], strides = [1, 1]} : vector<62x128xf32> to vector<1x128xf32>
    %c0_52 = arith.constant 0 : index
    %c640 = arith.constant 640 : index
    %87 = vector.load %arg11[%c0_52, %c640] : memref<1x7936xf32, #tpu.memory_space<vmem>>, vector<1x128xf32>
    tpu.vector_store %arg11[%c0_52, %c640], %86 {strides = array<i32>} : memref<1x7936xf32, #tpu.memory_space<vmem>>, vector<1x128xf32>,
    %88 = vector.extract_strided_slice %75 {offsets = [6, 0], sizes = [1, 128], strides = [1, 1]} : vector<62x128xf32> to vector<1x128xf32>
    %c0_53 = arith.constant 0 : index
    %c768 = arith.constant 768 : index
    %89 = vector.load %arg11[%c0_53, %c768] : memref<1x7936xf32, #tpu.memory_space<vmem>>, vector<1x128xf32>
    tpu.vector_store %arg11[%c0_53, %c768], %88 {strides = array<i32>} : memref<1x7936xf32, #tpu.memory_space<vmem>>, vector<1x128xf32>,
    %90 = vector.extract_strided_slice %75 {offsets = [7, 0], sizes = [1, 128], strides = [1, 1]} : vector<62x128xf32> to vector<1x128xf32>
    %c0_54 = arith.constant 0 : index
    %c896 = arith.constant 896 : index
    %91 = vector.load %arg11[%c0_54, %c896] : memref<1x7936xf32, #tpu.memory_space<vmem>>, vector<1x128xf32>
    tpu.vector_store %arg11[%c0_54, %c896], %90 {strides = array<i32>} : memref<1x7936xf32, #tpu.memory_space<vmem>>, vector<1x128xf32>,
    %92 = vector.extract_strided_slice %75 {offsets = [8, 0], sizes = [1, 128], strides = [1, 1]} : vector<62x128xf32> to vector<1x128xf32>
    %c0_55 = arith.constant 0 : index
    %c1024 = arith.constant 1024 : index
    %93 = vector.load %arg11[%c0_55, %c1024] : memref<1x7936xf32, #tpu.memory_space<vmem>>, vector<1x128xf32>
    tpu.vector_store %arg11[%c0_55, %c1024], %92 {strides = array<i32>} : memref<1x7936xf32, #tpu.memory_space<vmem>>, vector<1x128xf32>,
    %94 = vector.extract_strided_slice %75 {offsets = [9, 0], sizes = [1, 128], strides = [1, 1]} : vector<62x128xf32> to vector<1x128xf32>
    %c0_56 = arith.constant 0 : index
    %c1152 = arith.constant 1152 : index
    %95 = vector.load %arg11[%c0_56, %c1152] : memref<1x7936xf32, #tpu.memory_space<vmem>>, vector<1x128xf32>
    tpu.vector_store %arg11[%c0_56, %c1152], %94 {strides = array<i32>} : memref<1x7936xf32, #tpu.memory_space<vmem>>, vector<1x128xf32>,
    %96 = vector.extract_strided_slice %75 {offsets = [10, 0], sizes = [1, 128], strides = [1, 1]} : vector<62x128xf32> to vector<1x128xf32>
    %c0_57 = arith.constant 0 : index
    %c1280 = arith.constant 1280 : index
    %97 = vector.load %arg11[%c0_57, %c1280] : memref<1x7936xf32, #tpu.memory_space<vmem>>, vector<1x128xf32>
    tpu.vector_store %arg11[%c0_57, %c1280], %96 {strides = array<i32>} : memref<1x7936xf32, #tpu.memory_space<vmem>>, vector<1x128xf32>,
    %98 = vector.extract_strided_slice %75 {offsets = [11, 0], sizes = [1, 128], strides = [1, 1]} : vector<62x128xf32> to vector<1x128xf32>
    %c0_58 = arith.constant 0 : index
    %c1408 = arith.constant 1408 : index
    %99 = vector.load %arg11[%c0_58, %c1408] : memref<1x7936xf32, #tpu.memory_space<vmem>>, vector<1x128xf32>
    tpu.vector_store %arg11[%c0_58, %c1408], %98 {strides = array<i32>} : memref<1x7936xf32, #tpu.memory_space<vmem>>, vector<1x128xf32>,
    %100 = vector.extract_strided_slice %75 {offsets = [12, 0], sizes = [1, 128], strides = [1, 1]} : vector<62x128xf32> to vector<1x128xf32>
    %c0_59 = arith.constant 0 : index
    %c1536 = arith.constant 1536 : index
    %101 = vector.load %arg11[%c0_59, %c1536] : memref<1x7936xf32, #tpu.memory_space<vmem>>, vector<1x128xf32>
    tpu.vector_store %arg11[%c0_59, %c1536], %100 {strides = array<i32>} : memref<1x7936xf32, #tpu.memory_space<vmem>>, vector<1x128xf32>,
    %102 = vector.extract_strided_slice %75 {offsets = [13, 0], sizes = [1, 128], strides = [1, 1]} : vector<62x128xf32> to vector<1x128xf32>
    %c0_60 = arith.constant 0 : index
    %c1664 = arith.constant 1664 : index
    %103 = vector.load %arg11[%c0_60, %c1664] : memref<1x7936xf32, #tpu.memory_space<vmem>>, vector<1x128xf32>
    tpu.vector_store %arg11[%c0_60, %c1664], %102 {strides = array<i32>} : memref<1x7936xf32, #tpu.memory_space<vmem>>, vector<1x128xf32>,
    %104 = vector.extract_strided_slice %75 {offsets = [14, 0], sizes = [1, 128], strides = [1, 1]} : vector<62x128xf32> to vector<1x128xf32>
    %c0_61 = arith.constant 0 : index
    %c1792 = arith.constant 1792 : index
    %105 = vector.load %arg11[%c0_61, %c1792] : memref<1x7936xf32, #tpu.memory_space<vmem>>, vector<1x128xf32>
    tpu.vector_store %arg11[%c0_61, %c1792], %104 {strides = array<i32>} : memref<1x7936xf32, #tpu.memory_space<vmem>>, vector<1x128xf32>,
    %106 = vector.extract_strided_slice %75 {offsets = [15, 0], sizes = [1, 128], strides = [1, 1]} : vector<62x128xf32> to vector<1x128xf32>
    %c0_62 = arith.constant 0 : index
    %c1920 = arith.constant 1920 : index
    %107 = vector.load %arg11[%c0_62, %c1920] : memref<1x7936xf32, #tpu.memory_space<vmem>>, vector<1x128xf32>
    tpu.vector_store %arg11[%c0_62, %c1920], %106 {strides = array<i32>} : memref<1x7936xf32, #tpu.memory_space<vmem>>, vector<1x128xf32>,
    %108 = vector.extract_strided_slice %75 {offsets = [16, 0], sizes = [1, 128], strides = [1, 1]} : vector<62x128xf32> to vector<1x128xf32>
    %c0_63 = arith.constant 0 : index
    %c2048 = arith.constant 2048 : index
    %109 = vector.load %arg11[%c0_63, %c2048] : memref<1x7936xf32, #tpu.memory_space<vmem>>, vector<1x128xf32>
    tpu.vector_store %arg11[%c0_63, %c2048], %108 {strides = array<i32>} : memref<1x7936xf32, #tpu.memory_space<vmem>>, vector<1x128xf32>,
    %110 = vector.extract_strided_slice %75 {offsets = [17, 0], sizes = [1, 128], strides = [1, 1]} : vector<62x128xf32> to vector<1x128xf32>
    %c0_64 = arith.constant 0 : index
    %c2176 = arith.constant 2176 : index
    %111 = vector.load %arg11[%c0_64, %c2176] : memref<1x7936xf32, #tpu.memory_space<vmem>>, vector<1x128xf32>
    tpu.vector_store %arg11[%c0_64, %c2176], %110 {strides = array<i32>} : memref<1x7936xf32, #tpu.memory_space<vmem>>, vector<1x128xf32>,
    %112 = vector.extract_strided_slice %75 {offsets = [18, 0], sizes = [1, 128], strides = [1, 1]} : vector<62x128xf32> to vector<1x128xf32>
    %c0_65 = arith.constant 0 : index
    %c2304 = arith.constant 2304 : index
    %113 = vector.load %arg11[%c0_65, %c2304] : memref<1x7936xf32, #tpu.memory_space<vmem>>, vector<1x128xf32>
    tpu.vector_store %arg11[%c0_65, %c2304], %112 {strides = array<i32>} : memref<1x7936xf32, #tpu.memory_space<vmem>>, vector<1x128xf32>,
    %114 = vector.extract_strided_slice %75 {offsets = [19, 0], sizes = [1, 128], strides = [1, 1]} : vector<62x128xf32> to vector<1x128xf32>
    %c0_66 = arith.constant 0 : index
    %c2432 = arith.constant 2432 : index
    %115 = vector.load %arg11[%c0_66, %c2432] : memref<1x7936xf32, #tpu.memory_space<vmem>>, vector<1x128xf32>
    tpu.vector_store %arg11[%c0_66, %c2432], %114 {strides = array<i32>} : memref<1x7936xf32, #tpu.memory_space<vmem>>, vector<1x128xf32>,
    %116 = vector.extract_strided_slice %75 {offsets = [20, 0], sizes = [1, 128], strides = [1, 1]} : vector<62x128xf32> to vector<1x128xf32>
    %c0_67 = arith.constant 0 : index
    %c2560 = arith.constant 2560 : index
    %117 = vector.load %arg11[%c0_67, %c2560] : memref<1x7936xf32, #tpu.memory_space<vmem>>, vector<1x128xf32>
    tpu.vector_store %arg11[%c0_67, %c2560], %116 {strides = array<i32>} : memref<1x7936xf32, #tpu.memory_space<vmem>>, vector<1x128xf32>,
    %118 = vector.extract_strided_slice %75 {offsets = [21, 0], sizes = [1, 128], strides = [1, 1]} : vector<62x128xf32> to vector<1x128xf32>
    %c0_68 = arith.constant 0 : index
    %c2688 = arith.constant 2688 : index
    %119 = vector.load %arg11[%c0_68, %c2688] : memref<1x7936xf32, #tpu.memory_space<vmem>>, vector<1x128xf32>
    tpu.vector_store %arg11[%c0_68, %c2688], %118 {strides = array<i32>} : memref<1x7936xf32, #tpu.memory_space<vmem>>, vector<1x128xf32>,
    %120 = vector.extract_strided_slice %75 {offsets = [22, 0], sizes = [1, 128], strides = [1, 1]} : vector<62x128xf32> to vector<1x128xf32>
    %c0_69 = arith.constant 0 : index
    %c2816 = arith.constant 2816 : index
    %121 = vector.load %arg11[%c0_69, %c2816] : memref<1x7936xf32, #tpu.memory_space<vmem>>, vector<1x128xf32>
    tpu.vector_store %arg11[%c0_69, %c2816], %120 {strides = array<i32>} : memref<1x7936xf32, #tpu.memory_space<vmem>>, vector<1x128xf32>,
    %122 = vector.extract_strided_slice %75 {offsets = [23, 0], sizes = [1, 128], strides = [1, 1]} : vector<62x128xf32> to vector<1x128xf32>
    %c0_70 = arith.constant 0 : index
    %c2944 = arith.constant 2944 : index
    %123 = vector.load %arg11[%c0_70, %c2944] : memref<1x7936xf32, #tpu.memory_space<vmem>>, vector<1x128xf32>
    tpu.vector_store %arg11[%c0_70, %c2944], %122 {strides = array<i32>} : memref<1x7936xf32, #tpu.memory_space<vmem>>, vector<1x128xf32>,
    %124 = vector.extract_strided_slice %75 {offsets = [24, 0], sizes = [1, 128], strides = [1, 1]} : vector<62x128xf32> to vector<1x128xf32>
    %c0_71 = arith.constant 0 : index
    %c3072 = arith.constant 3072 : index
    %125 = vector.load %arg11[%c0_71, %c3072] : memref<1x7936xf32, #tpu.memory_space<vmem>>, vector<1x128xf32>
    tpu.vector_store %arg11[%c0_71, %c3072], %124 {strides = array<i32>} : memref<1x7936xf32, #tpu.memory_space<vmem>>, vector<1x128xf32>,
    %126 = vector.extract_strided_slice %75 {offsets = [25, 0], sizes = [1, 128], strides = [1, 1]} : vector<62x128xf32> to vector<1x128xf32>
    %c0_72 = arith.constant 0 : index
    %c3200 = arith.constant 3200 : index
    %127 = vector.load %arg11[%c0_72, %c3200] : memref<1x7936xf32, #tpu.memory_space<vmem>>, vector<1x128xf32>
    tpu.vector_store %arg11[%c0_72, %c3200], %126 {strides = array<i32>} : memref<1x7936xf32, #tpu.memory_space<vmem>>, vector<1x128xf32>,
    %128 = vector.extract_strided_slice %75 {offsets = [26, 0], sizes = [1, 128], strides = [1, 1]} : vector<62x128xf32> to vector<1x128xf32>
    %c0_73 = arith.constant 0 : index
    %c3328 = arith.constant 3328 : index
    %129 = vector.load %arg11[%c0_73, %c3328] : memref<1x7936xf32, #tpu.memory_space<vmem>>, vector<1x128xf32>
    tpu.vector_store %arg11[%c0_73, %c3328], %128 {strides = array<i32>} : memref<1x7936xf32, #tpu.memory_space<vmem>>, vector<1x128xf32>,
    %130 = vector.extract_strided_slice %75 {offsets = [27, 0], sizes = [1, 128], strides = [1, 1]} : vector<62x128xf32> to vector<1x128xf32>
    %c0_74 = arith.constant 0 : index
    %c3456 = arith.constant 3456 : index
    %131 = vector.load %arg11[%c0_74, %c3456] : memref<1x7936xf32, #tpu.memory_space<vmem>>, vector<1x128xf32>
    tpu.vector_store %arg11[%c0_74, %c3456], %130 {strides = array<i32>} : memref<1x7936xf32, #tpu.memory_space<vmem>>, vector<1x128xf32>,
    %132 = vector.extract_strided_slice %75 {offsets = [28, 0], sizes = [1, 128], strides = [1, 1]} : vector<62x128xf32> to vector<1x128xf32>
    %c0_75 = arith.constant 0 : index
    %c3584 = arith.constant 3584 : index
    %133 = vector.load %arg11[%c0_75, %c3584] : memref<1x7936xf32, #tpu.memory_space<vmem>>, vector<1x128xf32>
    tpu.vector_store %arg11[%c0_75, %c3584], %132 {strides = array<i32>} : memref<1x7936xf32, #tpu.memory_space<vmem>>, vector<1x128xf32>,
    %134 = vector.extract_strided_slice %75 {offsets = [29, 0], sizes = [1, 128], strides = [1, 1]} : vector<62x128xf32> to vector<1x128xf32>
    %c0_76 = arith.constant 0 : index
    %c3712 = arith.constant 3712 : index
    %135 = vector.load %arg11[%c0_76, %c3712] : memref<1x7936xf32, #tpu.memory_space<vmem>>, vector<1x128xf32>
    tpu.vector_store %arg11[%c0_76, %c3712], %134 {strides = array<i32>} : memref<1x7936xf32, #tpu.memory_space<vmem>>, vector<1x128xf32>,
    %136 = vector.extract_strided_slice %75 {offsets = [30, 0], sizes = [1, 128], strides = [1, 1]} : vector<62x128xf32> to vector<1x128xf32>
    %c0_77 = arith.constant 0 : index
    %c3840 = arith.constant 3840 : index
    %137 = vector.load %arg11[%c0_77, %c3840] : memref<1x7936xf32, #tpu.memory_space<vmem>>, vector<1x128xf32>
    tpu.vector_store %arg11[%c0_77, %c3840], %136 {strides = array<i32>} : memref<1x7936xf32, #tpu.memory_space<vmem>>, vector<1x128xf32>,
    %138 = vector.extract_strided_slice %75 {offsets = [31, 0], sizes = [1, 128], strides = [1, 1]} : vector<62x128xf32> to vector<1x128xf32>
    %c0_78 = arith.constant 0 : index
    %c3968 = arith.constant 3968 : index
    %139 = vector.load %arg11[%c0_78, %c3968] : memref<1x7936xf32, #tpu.memory_space<vmem>>, vector<1x128xf32>
    tpu.vector_store %arg11[%c0_78, %c3968], %138 {strides = array<i32>} : memref<1x7936xf32, #tpu.memory_space<vmem>>, vector<1x128xf32>,
    %140 = vector.extract_strided_slice %75 {offsets = [32, 0], sizes = [1, 128], strides = [1, 1]} : vector<62x128xf32> to vector<1x128xf32>
    %c0_79 = arith.constant 0 : index
    %c4096 = arith.constant 4096 : index
    %141 = vector.load %arg11[%c0_79, %c4096] : memref<1x7936xf32, #tpu.memory_space<vmem>>, vector<1x128xf32>
    tpu.vector_store %arg11[%c0_79, %c4096], %140 {strides = array<i32>} : memref<1x7936xf32, #tpu.memory_space<vmem>>, vector<1x128xf32>,
    %142 = vector.extract_strided_slice %75 {offsets = [33, 0], sizes = [1, 128], strides = [1, 1]} : vector<62x128xf32> to vector<1x128xf32>
    %c0_80 = arith.constant 0 : index
    %c4224 = arith.constant 4224 : index
    %143 = vector.load %arg11[%c0_80, %c4224] : memref<1x7936xf32, #tpu.memory_space<vmem>>, vector<1x128xf32>
    tpu.vector_store %arg11[%c0_80, %c4224], %142 {strides = array<i32>} : memref<1x7936xf32, #tpu.memory_space<vmem>>, vector<1x128xf32>,
    %144 = vector.extract_strided_slice %75 {offsets = [34, 0], sizes = [1, 128], strides = [1, 1]} : vector<62x128xf32> to vector<1x128xf32>
    %c0_81 = arith.constant 0 : index
    %c4352 = arith.constant 4352 : index
    %145 = vector.load %arg11[%c0_81, %c4352] : memref<1x7936xf32, #tpu.memory_space<vmem>>, vector<1x128xf32>
    tpu.vector_store %arg11[%c0_81, %c4352], %144 {strides = array<i32>} : memref<1x7936xf32, #tpu.memory_space<vmem>>, vector<1x128xf32>,
    %146 = vector.extract_strided_slice %75 {offsets = [35, 0], sizes = [1, 128], strides = [1, 1]} : vector<62x128xf32> to vector<1x128xf32>
    %c0_82 = arith.constant 0 : index
    %c4480 = arith.constant 4480 : index
    %147 = vector.load %arg11[%c0_82, %c4480] : memref<1x7936xf32, #tpu.memory_space<vmem>>, vector<1x128xf32>
    tpu.vector_store %arg11[%c0_82, %c4480], %146 {strides = array<i32>} : memref<1x7936xf32, #tpu.memory_space<vmem>>, vector<1x128xf32>,
    %148 = vector.extract_strided_slice %75 {offsets = [36, 0], sizes = [1, 128], strides = [1, 1]} : vector<62x128xf32> to vector<1x128xf32>
    %c0_83 = arith.constant 0 : index
    %c4608 = arith.constant 4608 : index
    %149 = vector.load %arg11[%c0_83, %c4608] : memref<1x7936xf32, #tpu.memory_space<vmem>>, vector<1x128xf32>
    tpu.vector_store %arg11[%c0_83, %c4608], %148 {strides = array<i32>} : memref<1x7936xf32, #tpu.memory_space<vmem>>, vector<1x128xf32>,
    %150 = vector.extract_strided_slice %75 {offsets = [37, 0], sizes = [1, 128], strides = [1, 1]} : vector<62x128xf32> to vector<1x128xf32>
    %c0_84 = arith.constant 0 : index
    %c4736 = arith.constant 4736 : index
    %151 = vector.load %arg11[%c0_84, %c4736] : memref<1x7936xf32, #tpu.memory_space<vmem>>, vector<1x128xf32>
    tpu.vector_store %arg11[%c0_84, %c4736], %150 {strides = array<i32>} : memref<1x7936xf32, #tpu.memory_space<vmem>>, vector<1x128xf32>,
    %152 = vector.extract_strided_slice %75 {offsets = [38, 0], sizes = [1, 128], strides = [1, 1]} : vector<62x128xf32> to vector<1x128xf32>
    %c0_85 = arith.constant 0 : index
    %c4864 = arith.constant 4864 : index
    %153 = vector.load %arg11[%c0_85, %c4864] : memref<1x7936xf32, #tpu.memory_space<vmem>>, vector<1x128xf32>
    tpu.vector_store %arg11[%c0_85, %c4864], %152 {strides = array<i32>} : memref<1x7936xf32, #tpu.memory_space<vmem>>, vector<1x128xf32>,
    %154 = vector.extract_strided_slice %75 {offsets = [39, 0], sizes = [1, 128], strides = [1, 1]} : vector<62x128xf32> to vector<1x128xf32>
    %c0_86 = arith.constant 0 : index
    %c4992 = arith.constant 4992 : index
    %155 = vector.load %arg11[%c0_86, %c4992] : memref<1x7936xf32, #tpu.memory_space<vmem>>, vector<1x128xf32>
    tpu.vector_store %arg11[%c0_86, %c4992], %154 {strides = array<i32>} : memref<1x7936xf32, #tpu.memory_space<vmem>>, vector<1x128xf32>,
    %156 = vector.extract_strided_slice %75 {offsets = [40, 0], sizes = [1, 128], strides = [1, 1]} : vector<62x128xf32> to vector<1x128xf32>
    %c0_87 = arith.constant 0 : index
    %c5120 = arith.constant 5120 : index
    %157 = vector.load %arg11[%c0_87, %c5120] : memref<1x7936xf32, #tpu.memory_space<vmem>>, vector<1x128xf32>
    tpu.vector_store %arg11[%c0_87, %c5120], %156 {strides = array<i32>} : memref<1x7936xf32, #tpu.memory_space<vmem>>, vector<1x128xf32>,
    %158 = vector.extract_strided_slice %75 {offsets = [41, 0], sizes = [1, 128], strides = [1, 1]} : vector<62x128xf32> to vector<1x128xf32>
    %c0_88 = arith.constant 0 : index
    %c5248 = arith.constant 5248 : index
    %159 = vector.load %arg11[%c0_88, %c5248] : memref<1x7936xf32, #tpu.memory_space<vmem>>, vector<1x128xf32>
    tpu.vector_store %arg11[%c0_88, %c5248], %158 {strides = array<i32>} : memref<1x7936xf32, #tpu.memory_space<vmem>>, vector<1x128xf32>,
    %160 = vector.extract_strided_slice %75 {offsets = [42, 0], sizes = [1, 128], strides = [1, 1]} : vector<62x128xf32> to vector<1x128xf32>
    %c0_89 = arith.constant 0 : index
    %c5376 = arith.constant 5376 : index
    %161 = vector.load %arg11[%c0_89, %c5376] : memref<1x7936xf32, #tpu.memory_space<vmem>>, vector<1x128xf32>
    tpu.vector_store %arg11[%c0_89, %c5376], %160 {strides = array<i32>} : memref<1x7936xf32, #tpu.memory_space<vmem>>, vector<1x128xf32>,
    %162 = vector.extract_strided_slice %75 {offsets = [43, 0], sizes = [1, 128], strides = [1, 1]} : vector<62x128xf32> to vector<1x128xf32>
    %c0_90 = arith.constant 0 : index
    %c5504 = arith.constant 5504 : index
    %163 = vector.load %arg11[%c0_90, %c5504] : memref<1x7936xf32, #tpu.memory_space<vmem>>, vector<1x128xf32>
    tpu.vector_store %arg11[%c0_90, %c5504], %162 {strides = array<i32>} : memref<1x7936xf32, #tpu.memory_space<vmem>>, vector<1x128xf32>,
    %164 = vector.extract_strided_slice %75 {offsets = [44, 0], sizes = [1, 128], strides = [1, 1]} : vector<62x128xf32> to vector<1x128xf32>
    %c0_91 = arith.constant 0 : index
    %c5632 = arith.constant 5632 : index
    %165 = vector.load %arg11[%c0_91, %c5632] : memref<1x7936xf32, #tpu.memory_space<vmem>>, vector<1x128xf32>
    tpu.vector_store %arg11[%c0_91, %c5632], %164 {strides = array<i32>} : memref<1x7936xf32, #tpu.memory_space<vmem>>, vector<1x128xf32>,
    %166 = vector.extract_strided_slice %75 {offsets = [45, 0], sizes = [1, 128], strides = [1, 1]} : vector<62x128xf32> to vector<1x128xf32>
    %c0_92 = arith.constant 0 : index
    %c5760 = arith.constant 5760 : index
    %167 = vector.load %arg11[%c0_92, %c5760] : memref<1x7936xf32, #tpu.memory_space<vmem>>, vector<1x128xf32>
    tpu.vector_store %arg11[%c0_92, %c5760], %166 {strides = array<i32>} : memref<1x7936xf32, #tpu.memory_space<vmem>>, vector<1x128xf32>,
    %168 = vector.extract_strided_slice %75 {offsets = [46, 0], sizes = [1, 128], strides = [1, 1]} : vector<62x128xf32> to vector<1x128xf32>
    %c0_93 = arith.constant 0 : index
    %c5888 = arith.constant 5888 : index
    %169 = vector.load %arg11[%c0_93, %c5888] : memref<1x7936xf32, #tpu.memory_space<vmem>>, vector<1x128xf32>
    tpu.vector_store %arg11[%c0_93, %c5888], %168 {strides = array<i32>} : memref<1x7936xf32, #tpu.memory_space<vmem>>, vector<1x128xf32>,
    %170 = vector.extract_strided_slice %75 {offsets = [47, 0], sizes = [1, 128], strides = [1, 1]} : vector<62x128xf32> to vector<1x128xf32>
    %c0_94 = arith.constant 0 : index
    %c6016 = arith.constant 6016 : index
    %171 = vector.load %arg11[%c0_94, %c6016] : memref<1x7936xf32, #tpu.memory_space<vmem>>, vector<1x128xf32>
    tpu.vector_store %arg11[%c0_94, %c6016], %170 {strides = array<i32>} : memref<1x7936xf32, #tpu.memory_space<vmem>>, vector<1x128xf32>,
    %172 = vector.extract_strided_slice %75 {offsets = [48, 0], sizes = [1, 128], strides = [1, 1]} : vector<62x128xf32> to vector<1x128xf32>
    %c0_95 = arith.constant 0 : index
    %c6144 = arith.constant 6144 : index
    %173 = vector.load %arg11[%c0_95, %c6144] : memref<1x7936xf32, #tpu.memory_space<vmem>>, vector<1x128xf32>
    tpu.vector_store %arg11[%c0_95, %c6144], %172 {strides = array<i32>} : memref<1x7936xf32, #tpu.memory_space<vmem>>, vector<1x128xf32>,
    %174 = vector.extract_strided_slice %75 {offsets = [49, 0], sizes = [1, 128], strides = [1, 1]} : vector<62x128xf32> to vector<1x128xf32>
    %c0_96 = arith.constant 0 : index
    %c6272 = arith.constant 6272 : index
    %175 = vector.load %arg11[%c0_96, %c6272] : memref<1x7936xf32, #tpu.memory_space<vmem>>, vector<1x128xf32>
    tpu.vector_store %arg11[%c0_96, %c6272], %174 {strides = array<i32>} : memref<1x7936xf32, #tpu.memory_space<vmem>>, vector<1x128xf32>,
    %176 = vector.extract_strided_slice %75 {offsets = [50, 0], sizes = [1, 128], strides = [1, 1]} : vector<62x128xf32> to vector<1x128xf32>
    %c0_97 = arith.constant 0 : index
    %c6400 = arith.constant 6400 : index
    %177 = vector.load %arg11[%c0_97, %c6400] : memref<1x7936xf32, #tpu.memory_space<vmem>>, vector<1x128xf32>
    tpu.vector_store %arg11[%c0_97, %c6400], %176 {strides = array<i32>} : memref<1x7936xf32, #tpu.memory_space<vmem>>, vector<1x128xf32>,
    %178 = vector.extract_strided_slice %75 {offsets = [51, 0], sizes = [1, 128], strides = [1, 1]} : vector<62x128xf32> to vector<1x128xf32>
    %c0_98 = arith.constant 0 : index
    %c6528 = arith.constant 6528 : index
    %179 = vector.load %arg11[%c0_98, %c6528] : memref<1x7936xf32, #tpu.memory_space<vmem>>, vector<1x128xf32>
    tpu.vector_store %arg11[%c0_98, %c6528], %178 {strides = array<i32>} : memref<1x7936xf32, #tpu.memory_space<vmem>>, vector<1x128xf32>,
    %180 = vector.extract_strided_slice %75 {offsets = [52, 0], sizes = [1, 128], strides = [1, 1]} : vector<62x128xf32> to vector<1x128xf32>
    %c0_99 = arith.constant 0 : index
    %c6656 = arith.constant 6656 : index
    %181 = vector.load %arg11[%c0_99, %c6656] : memref<1x7936xf32, #tpu.memory_space<vmem>>, vector<1x128xf32>
    tpu.vector_store %arg11[%c0_99, %c6656], %180 {strides = array<i32>} : memref<1x7936xf32, #tpu.memory_space<vmem>>, vector<1x128xf32>,
    %182 = vector.extract_strided_slice %75 {offsets = [53, 0], sizes = [1, 128], strides = [1, 1]} : vector<62x128xf32> to vector<1x128xf32>
    %c0_100 = arith.constant 0 : index
    %c6784 = arith.constant 6784 : index
    %183 = vector.load %arg11[%c0_100, %c6784] : memref<1x7936xf32, #tpu.memory_space<vmem>>, vector<1x128xf32>
    tpu.vector_store %arg11[%c0_100, %c6784], %182 {strides = array<i32>} : memref<1x7936xf32, #tpu.memory_space<vmem>>, vector<1x128xf32>,
    %184 = vector.extract_strided_slice %75 {offsets = [54, 0], sizes = [1, 128], strides = [1, 1]} : vector<62x128xf32> to vector<1x128xf32>
    %c0_101 = arith.constant 0 : index
    %c6912 = arith.constant 6912 : index
    %185 = vector.load %arg11[%c0_101, %c6912] : memref<1x7936xf32, #tpu.memory_space<vmem>>, vector<1x128xf32>
    tpu.vector_store %arg11[%c0_101, %c6912], %184 {strides = array<i32>} : memref<1x7936xf32, #tpu.memory_space<vmem>>, vector<1x128xf32>,
    %186 = vector.extract_strided_slice %75 {offsets = [55, 0], sizes = [1, 128], strides = [1, 1]} : vector<62x128xf32> to vector<1x128xf32>
    %c0_102 = arith.constant 0 : index
    %c7040 = arith.constant 7040 : index
    %187 = vector.load %arg11[%c0_102, %c7040] : memref<1x7936xf32, #tpu.memory_space<vmem>>, vector<1x128xf32>
    tpu.vector_store %arg11[%c0_102, %c7040], %186 {strides = array<i32>} : memref<1x7936xf32, #tpu.memory_space<vmem>>, vector<1x128xf32>,
    %188 = vector.extract_strided_slice %75 {offsets = [56, 0], sizes = [1, 128], strides = [1, 1]} : vector<62x128xf32> to vector<1x128xf32>
    %c0_103 = arith.constant 0 : index
    %c7168 = arith.constant 7168 : index
    %189 = vector.load %arg11[%c0_103, %c7168] : memref<1x7936xf32, #tpu.memory_space<vmem>>, vector<1x128xf32>
    tpu.vector_store %arg11[%c0_103, %c7168], %188 {strides = array<i32>} : memref<1x7936xf32, #tpu.memory_space<vmem>>, vector<1x128xf32>,
    %190 = vector.extract_strided_slice %75 {offsets = [57, 0], sizes = [1, 128], strides = [1, 1]} : vector<62x128xf32> to vector<1x128xf32>
    %c0_104 = arith.constant 0 : index
    %c7296 = arith.constant 7296 : index
    %191 = vector.load %arg11[%c0_104, %c7296] : memref<1x7936xf32, #tpu.memory_space<vmem>>, vector<1x128xf32>
    tpu.vector_store %arg11[%c0_104, %c7296], %190 {strides = array<i32>} : memref<1x7936xf32, #tpu.memory_space<vmem>>, vector<1x128xf32>,
    %192 = vector.extract_strided_slice %75 {offsets = [58, 0], sizes = [1, 128], strides = [1, 1]} : vector<62x128xf32> to vector<1x128xf32>
    %c0_105 = arith.constant 0 : index
    %c7424 = arith.constant 7424 : index
    %193 = vector.load %arg11[%c0_105, %c7424] : memref<1x7936xf32, #tpu.memory_space<vmem>>, vector<1x128xf32>
    tpu.vector_store %arg11[%c0_105, %c7424], %192 {strides = array<i32>} : memref<1x7936xf32, #tpu.memory_space<vmem>>, vector<1x128xf32>,
    %194 = vector.extract_strided_slice %75 {offsets = [59, 0], sizes = [1, 128], strides = [1, 1]} : vector<62x128xf32> to vector<1x128xf32>
    %c0_106 = arith.constant 0 : index
    %c7552 = arith.constant 7552 : index
    %195 = vector.load %arg11[%c0_106, %c7552] : memref<1x7936xf32, #tpu.memory_space<vmem>>, vector<1x128xf32>
    tpu.vector_store %arg11[%c0_106, %c7552], %194 {strides = array<i32>} : memref<1x7936xf32, #tpu.memory_space<vmem>>, vector<1x128xf32>,
    %196 = vector.extract_strided_slice %75 {offsets = [60, 0], sizes = [1, 128], strides = [1, 1]} : vector<62x128xf32> to vector<1x128xf32>
    %c0_107 = arith.constant 0 : index
    %c7680 = arith.constant 7680 : index
    %197 = vector.load %arg11[%c0_107, %c7680] : memref<1x7936xf32, #tpu.memory_space<vmem>>, vector<1x128xf32>
    tpu.vector_store %arg11[%c0_107, %c7680], %196 {strides = array<i32>} : memref<1x7936xf32, #tpu.memory_space<vmem>>, vector<1x128xf32>,
    %198 = vector.extract_strided_slice %75 {offsets = [61, 0], sizes = [1, 128], strides = [1, 1]} : vector<62x128xf32> to vector<1x128xf32>
    %c0_108 = arith.constant 0 : index
    %c7808 = arith.constant 7808 : index
    %199 = vector.load %arg11[%c0_108, %c7808] : memref<1x7936xf32, #tpu.memory_space<vmem>>, vector<1x128xf32>
    tpu.vector_store %arg11[%c0_108, %c7808], %198 {strides = array<i32>} : memref<1x7936xf32, #tpu.memory_space<vmem>>, vector<1x128xf32>,
    %c0_109 = arith.constant 0 : index
    %c0_110 = arith.constant 0 : index
    %200 = vector.load %arg11[%c0_109, %c0_110] : memref<1x7936xf32, #tpu.memory_space<vmem>>, vector<1x7936xf32>
    %201 = arith.truncf %200 : vector<1x7936xf32> to vector<1x7936xbf16>
    %c0_111 = arith.constant 0 : index
    %c0_112 = arith.constant 0 : index
    %202 = vector.load %arg6[%c0_111, %c0_112] : memref<7936x200xbf16, #tpu.memory_space<vmem>>, vector<7936x200xbf16>
    %cst_113 = arith.constant dense<0.000000e+00> : vector<1x200xf32>
    %203 = tpu.matmul %201, %202, %cst_113 {dimension_numbers = #tpu.dot_dimension_numbers<[1], [0], [0], [1], [0, 0, 1, 1], [], []>} : vector<1x7936xbf16>, vector<7936x200xbf16>, vector<1x200xf32> -> vector<1x200xf32>
    %c0_114 = arith.constant 0 : index
    %c0_115 = arith.constant 0 : index
    %204 = vector.load %arg7[%c0_114, %c0_115] : memref<1x200xf32, #tpu.memory_space<vmem>>, vector<1x200xf32>
    %205 = arith.addf %203, %204 : vector<1x200xf32>
    %cst_116 = arith.constant 0.000000e+00 : f32
    %206 = vector.broadcast %cst_116 : f32 to vector<1x200xf32>
    %207 = arith.maximumf %205, %206 : vector<1x200xf32>
    %208 = arith.truncf %207 : vector<1x200xf32> to vector<1x200xbf16>
    %c0_117 = arith.constant 0 : index
    %c0_118 = arith.constant 0 : index
    %209 = vector.load %arg8[%c0_117, %c0_118] : memref<200x12xbf16, #tpu.memory_space<vmem>>, vector<200x12xbf16>
    %cst_119 = arith.constant dense<0.000000e+00> : vector<1x12xf32>
    %210 = tpu.matmul %208, %209, %cst_119 {dimension_numbers = #tpu.dot_dimension_numbers<[1], [0], [0], [1], [0, 0, 1, 1], [], []>} : vector<1x200xbf16>, vector<200x12xbf16>, vector<1x12xf32> -> vector<1x12xf32>
    %c0_120 = arith.constant 0 : index
    %c0_121 = arith.constant 0 : index
    %211 = vector.load %arg9[%c0_120, %c0_121] : memref<1x12xf32, #tpu.memory_space<vmem>>, vector<1x12xf32>
    %212 = arith.addf %210, %211 : vector<1x12xf32>
    %c0_122 = arith.constant 0 : index
    %c0_123 = arith.constant 0 : index
    %c0_124 = arith.constant 0 : index
    %213 = vector.load %arg10[%c0_122, %c0_123, %c0_124] : memref<1x1x12xf32, #tpu.memory_space<vmem>>, vector<1x1x12xf32>
    %214 = vector.shape_cast %213 : vector<1x1x12xf32> to vector<1x12xf32>
    %215 = vector.shape_cast %212 : vector<1x12xf32> to vector<1x1x12xf32>
    tpu.vector_store %arg10[%c0_122, %c0_123, %c0_124], %215 {strides = array<i32>} : memref<1x1x12xf32, #tpu.memory_space<vmem>>, vector<1x1x12xf32>,
    return
  }
  func.func @transform_0(%arg0: i32) -> (i32, i32, i32) {
    %c0_i32 = arith.constant 0 : i32
    %c0_i32_0 = arith.constant 0 : i32
    %c0_i32_1 = arith.constant 0 : i32
    return %arg0, %c0_i32, %c0_i32_0 : i32, i32, i32
  }
  func.func @transform_1(%arg0: i32) -> (i32, i32, i32) {
    %c0_i32 = arith.constant 0 : i32
    %c0_i32_0 = arith.constant 0 : i32
    %c0_i32_1 = arith.constant 0 : i32
    %c0_i32_2 = arith.constant 0 : i32
    return %c0_i32, %c0_i32_0, %c0_i32_1 : i32, i32, i32
  }
  func.func @transform_2(%arg0: i32) -> (i32, i32) {
    %c0_i32 = arith.constant 0 : i32
    %c0_i32_0 = arith.constant 0 : i32
    %c0_i32_1 = arith.constant 0 : i32
    return %c0_i32, %c0_i32_0 : i32, i32
  }
  func.func @transform_3(%arg0: i32) -> (i32, i32, i32) {
    %c0_i32 = arith.constant 0 : i32
    %c0_i32_0 = arith.constant 0 : i32
    %c0_i32_1 = arith.constant 0 : i32
    %c0_i32_2 = arith.constant 0 : i32
    return %c0_i32, %c0_i32_0, %c0_i32_1 : i32, i32, i32
  }
  func.func @transform_4(%arg0: i32) -> (i32, i32) {
    %c0_i32 = arith.constant 0 : i32
    %c0_i32_0 = arith.constant 0 : i32
    %c0_i32_1 = arith.constant 0 : i32
    return %c0_i32, %c0_i32_0 : i32, i32
  }
  func.func @transform_5(%arg0: i32) -> (i32, i32) {
    %c0_i32 = arith.constant 0 : i32
    %c0_i32_0 = arith.constant 0 : i32
    %c0_i32_1 = arith.constant 0 : i32
    return %c0_i32, %c0_i32_0 : i32, i32
  }
  func.func @transform_6(%arg0: i32) -> (i32, i32) {
    %c0_i32 = arith.constant 0 : i32
    %c0_i32_0 = arith.constant 0 : i32
    %c0_i32_1 = arith.constant 0 : i32
    return %c0_i32, %c0_i32_0 : i32, i32
  }
  func.func @transform_7(%arg0: i32) -> (i32, i32) {
    %c0_i32 = arith.constant 0 : i32
    %c0_i32_0 = arith.constant 0 : i32
    %c0_i32_1 = arith.constant 0 : i32
    return %c0_i32, %c0_i32_0 : i32, i32
  }
  func.func @transform_8(%arg0: i32) -> (i32, i32) {
    %c0_i32 = arith.constant 0 : i32
    %c0_i32_0 = arith.constant 0 : i32
    %c0_i32_1 = arith.constant 0 : i32
    return %c0_i32, %c0_i32_0 : i32, i32
  }
  func.func @transform_9(%arg0: i32) -> (i32, i32, i32) {
    %c0_i32 = arith.constant 0 : i32
    %c0_i32_0 = arith.constant 0 : i32
    %c0_i32_1 = arith.constant 0 : i32
    return %arg0, %c0_i32, %c0_i32_0 : i32, i32, i32
  }
}

</mosaic_0001>

<llo_original>
// kernel: tpu_custom_call.1
$region0: #{tpu_custom_call.1}
  #allocation0 [shape = 'u32[]', space=smem, size = 0x4, offset = 0x4, fixed_abs, tag = 'smem constant byte address 0x4 - core index']
  #allocation1 [shape = 'u32[144,128]{1,0:T(1,128)}', space=vmem, size = 0x12000, scoped, tag = 'internal scratch']
  #allocation2 [shape = 'f32[1,7936]{1,0:T(1,128)}', space=vmem, size = 0x7c00, scoped, tag = 'scratch operand']
  %s0 = inlined_call_operand.vmem [shape: f32[2,256,18], index: 0, kind: input, shape index: {}]
  %s1 = inlined_call_operand.vmem [shape: bf16[5,18,64], index: 1, kind: input, shape index: {}]
  %s2 = inlined_call_operand.vmem [shape: f32[1,64], index: 2, kind: input, shape index: {}]
  %s3 = inlined_call_operand.vmem [shape: bf16[5,64,128], index: 3, kind: input, shape index: {}]
  %s4 = inlined_call_operand.vmem [shape: f32[1,128], index: 4, kind: input, shape index: {}]
  %s5 = inlined_call_operand.vmem [shape: bf16[7936,200], index: 5, kind: input, shape index: {}]
  %s6 = inlined_call_operand.vmem [shape: f32[1,200], index: 6, kind: input, shape index: {}]
  %s7 = inlined_call_operand.vmem [shape: bf16[200,12], index: 7, kind: input, shape index: {}]
  %s8 = inlined_call_operand.vmem [shape: f32[1,12], index: 8, kind: input, shape index: {}]
  %s9 = inlined_call_operand.hbm [shape: f32[2,1,12], index: 9, kind: output, shape index: {}]
  %s10 = sld [smem:[#allocation0]]
  $region69: #{tpu_custom_call.1} parent=0
    _
  %s12 = ssub.s32 1, %s10
  %s13 = scalar_select 0, %s12, %s10
  $region1: #{tpu_custom_call.1} parent=0
    #allocation3 [shape = 'u8[1024]{0}', space=vmem, size = 0x400, scoped, tag = 'output window, operand 0']
    #allocation4 [shape = 's32[2]{0}', space=sflag, size = 0x8, scoped, tag = 'scoped memory for tpu_custom_call.1']
    %14 = vsyncpa [#allocation4], 0
    %s15 = scalar_lea.sflag [#allocation4], 1
    %16 = vsyncpa %s15, 0
    loop: start=0, step=1, limit=4
    $region2: #{tpu_custom_call.1} parent=1 // loop_pre_header
      _
    $region3: #{tpu_custom_call.1} parent=1 // loop_header
      %s18 = sphi 0, %s22
      %p19 = scmp.ge.s32.totalorder %s18, 4
      %s28 = sphi 0, %s30
      %s31 = sphi 0, %s28
      %s32 = sphi 0, %s31
      %s48 = sphi 0, %s32
      %s52 = sphi 0, %s52
      %s54 = sphi 0, %s52
      %s55 = sphi 0, %s54
      %s69 = sphi 0, %s55
      %s73 = sphi 0, %s73
      %s75 = sphi 0, %s73
      %s76 = sphi 0, %s75
      %s90 = sphi 0, %s76
      %s94 = sphi 0, %s94
      %s96 = sphi 0, %s94
      %s97 = sphi 0, %s96
      %s111 = sphi 0, %s97
      %s115 = sphi 0, %s115
      %s117 = sphi 0, %s115
      %s118 = sphi 0, %s117
      %s132 = sphi 0, %s118
      %s136 = sphi 0, %s136
      %s138 = sphi 0, %s136
      %s139 = sphi 0, %s138
      %s153 = sphi 0, %s139
      %s157 = sphi 0, %s157
      %s159 = sphi 0, %s157
      %s160 = sphi 0, %s159
      %s174 = sphi 0, %s160
      %s178 = sphi 0, %s178
      %s180 = sphi 0, %s178
      %s181 = sphi 0, %s180
      %s195 = sphi 0, %s181
      %s199 = sphi 0, %s199
      %s201 = sphi 0, %s199
      %s202 = sphi 0, %s201
      %s216 = sphi 0, %s202
      %s222 = sphi 0, %s224
      %s225 = sphi 0, %s222
      %s226 = sphi 0, %s225
      %s242 = sphi 0, %s226
    $region4: #{tpu_custom_call.1} parent=1 // loop_header_branch
      %21 = sbr.rel (%p19) target = $region8
    $region5: #{tpu_custom_call.1} parent=1 // loop_body
      %s23 = ssub.s32 %s18, 1
      %s24 = ssub.s32 %s18, 2
      %s25 = sadd.s32 %s18, 1
      %s26 = ssub.s32 %s18, %s25
      %p27 = scmp.eq.s32.totalorder %s26, 0
      %s29 = sadd.s32 %s28, 1
      %s30 = scalar_select %p27, %s28, %s29
      %p33 = pneg %p27
      %p34 = scmp.eq.s32.totalorder %s18, 1
      %p35 = por %p33, %p34
      %p36 = scmp.ne.s32.totalorder %s28, %s31
      %p37 = scmp.eq.s32.totalorder %s18, 0
      %p38 = por %p36, %p37
      %p39 = scmp.ne.s32.totalorder %s28, %s31
      %p40 = scmp.eq.s32.totalorder %s23, 1
      %p41 = por %p39, %p40
      %p42 = scmp.ne.s32.totalorder %s31, %s32
      %p43 = scmp.eq.s32.totalorder %s23, 0
      %p44 = por %p42, %p43
      %p45 = scmp.ne.s32.totalorder %s31, %s32
      %p46 = scmp.eq.s32.totalorder %s24, 1
      %p47 = por %p45, %p46
      %p49 = scmp.ne.s32.totalorder %s32, %s48
      %p50 = scmp.eq.s32.totalorder %s24, 0
      %p51 = por %p49, %p50
      %s53 = sadd.s32 %s52, 1
      %p56 = scmp.eq.s32.totalorder %s18, 1
      %p57 = scmp.ne.s32.totalorder %s52, %s54
      %p58 = scmp.eq.s32.totalorder %s18, 0
      %p59 = por %p57, %p58
      %p60 = scmp.ne.s32.totalorder %s52, %s54
      %p61 = scmp.eq.s32.totalorder %s23, 1
      %p62 = por %p60, %p61
      %p63 = scmp.ne.s32.totalorder %s54, %s55
      %p64 = scmp.eq.s32.totalorder %s23, 0
      %p65 = por %p63, %p64
      %p66 = scmp.ne.s32.totalorder %s54, %s55
      %p67 = scmp.eq.s32.totalorder %s24, 1
      %p68 = por %p66, %p67
      %p70 = scmp.ne.s32.totalorder %s55, %s69
      %p71 = scmp.eq.s32.totalorder %s24, 0
      %p72 = por %p70, %p71
      %s74 = sadd.s32 %s73, 1
      %p77 = scmp.eq.s32.totalorder %s18, 1
      %p78 = scmp.ne.s32.totalorder %s73, %s75
      %p79 = scmp.eq.s32.totalorder %s18, 0
      %p80 = por %p78, %p79
      %p81 = scmp.ne.s32.totalorder %s73, %s75
      %p82 = scmp.eq.s32.totalorder %s23, 1
      %p83 = por %p81, %p82
      %p84 = scmp.ne.s32.totalorder %s75, %s76
      %p85 = scmp.eq.s32.totalorder %s23, 0
      %p86 = por %p84, %p85
      %p87 = scmp.ne.s32.totalorder %s75, %s76
      %p88 = scmp.eq.s32.totalorder %s24, 1
      %p89 = por %p87, %p88
      %p91 = scmp.ne.s32.totalorder %s76, %s90
      %p92 = scmp.eq.s32.totalorder %s24, 0
      %p93 = por %p91, %p92
      %s95 = sadd.s32 %s94, 1
      %p98 = scmp.eq.s32.totalorder %s18, 1
      %p99 = scmp.ne.s32.totalorder %s94, %s96
      %p100 = scmp.eq.s32.totalorder %s18, 0
      %p101 = por %p99, %p100
      %p102 = scmp.ne.s32.totalorder %s94, %s96
      %p103 = scmp.eq.s32.totalorder %s23, 1
      %p104 = por %p102, %p103
      %p105 = scmp.ne.s32.totalorder %s96, %s97
      %p106 = scmp.eq.s32.totalorder %s23, 0
      %p107 = por %p105, %p106
      %p108 = scmp.ne.s32.totalorder %s96, %s97
      %p109 = scmp.eq.s32.totalorder %s24, 1
      %p110 = por %p108, %p109
      %p112 = scmp.ne.s32.totalorder %s97, %s111
      %p113 = scmp.eq.s32.totalorder %s24, 0
      %p114 = por %p112, %p113
      %s116 = sadd.s32 %s115, 1
      %p119 = scmp.eq.s32.totalorder %s18, 1
      %p120 = scmp.ne.s32.totalorder %s115, %s117
      %p121 = scmp.eq.s32.totalorder %s18, 0
      %p122 = por %p120, %p121
      %p123 = scmp.ne.s32.totalorder %s115, %s117
      %p124 = scmp.eq.s32.totalorder %s23, 1
      %p125 = por %p123, %p124
      %p126 = scmp.ne.s32.totalorder %s117, %s118
      %p127 = scmp.eq.s32.totalorder %s23, 0
      %p128 = por %p126, %p127
      %p129 = scmp.ne.s32.totalorder %s117, %s118
      %p130 = scmp.eq.s32.totalorder %s24, 1
      %p131 = por %p129, %p130
      %p133 = scmp.ne.s32.totalorder %s118, %s132
      %p134 = scmp.eq.s32.totalorder %s24, 0
      %p135 = por %p133, %p134
      %s137 = sadd.s32 %s136, 1
      %p140 = scmp.eq.s32.totalorder %s18, 1
      %p141 = scmp.ne.s32.totalorder %s136, %s138
      %p142 = scmp.eq.s32.totalorder %s18, 0
      %p143 = por %p141, %p142
      %p144 = scmp.ne.s32.totalorder %s136, %s138
      %p145 = scmp.eq.s32.totalorder %s23, 1
      %p146 = por %p144, %p145
      %p147 = scmp.ne.s32.totalorder %s138, %s139
      %p148 = scmp.eq.s32.totalorder %s23, 0
      %p149 = por %p147, %p148
      %p150 = scmp.ne.s32.totalorder %s138, %s139
      %p151 = scmp.eq.s32.totalorder %s24, 1
      %p152 = por %p150, %p151
      %p154 = scmp.ne.s32.totalorder %s139, %s153
      %p155 = scmp.eq.s32.totalorder %s24, 0
      %p156 = por %p154, %p155
      %s158 = sadd.s32 %s157, 1
      %p161 = scmp.eq.s32.totalorder %s18, 1
      %p162 = scmp.ne.s32.totalorder %s157, %s159
      %p163 = scmp.eq.s32.totalorder %s18, 0
      %p164 = por %p162, %p163
      %p165 = scmp.ne.s32.totalorder %s157, %s159
      %p166 = scmp.eq.s32.totalorder %s23, 1
      %p167 = por %p165, %p166
      %p168 = scmp.ne.s32.totalorder %s159, %s160
      %p169 = scmp.eq.s32.totalorder %s23, 0
      %p170 = por %p168, %p169
      %p171 = scmp.ne.s32.totalorder %s159, %s160
      %p172 = scmp.eq.s32.totalorder %s24, 1
      %p173 = por %p171, %p172
      %p175 = scmp.ne.s32.totalorder %s160, %s174
      %p176 = scmp.eq.s32.totalorder %s24, 0
      %p177 = por %p175, %p176
      %s179 = sadd.s32 %s178, 1
      %p182 = scmp.eq.s32.totalorder %s18, 1
      %p183 = scmp.ne.s32.totalorder %s178, %s180
      %p184 = scmp.eq.s32.totalorder %s18, 0
      %p185 = por %p183, %p184
      %p186 = scmp.ne.s32.totalorder %s178, %s180
      %p187 = scmp.eq.s32.totalorder %s23, 1
      %p188 = por %p186, %p187
      %p189 = scmp.ne.s32.totalorder %s180, %s181
      %p190 = scmp.eq.s32.totalorder %s23, 0
      %p191 = por %p189, %p190
      %p192 = scmp.ne.s32.totalorder %s180, %s181
      %p193 = scmp.eq.s32.totalorder %s24, 1
      %p194 = por %p192, %p193
      %p196 = scmp.ne.s32.totalorder %s181, %s195
      %p197 = scmp.eq.s32.totalorder %s24, 0
      %p198 = por %p196, %p197
      %s200 = sadd.s32 %s199, 1
      %p203 = scmp.eq.s32.totalorder %s18, 1
      %p204 = scmp.ne.s32.totalorder %s199, %s201
      %p205 = scmp.eq.s32.totalorder %s18, 0
      %p206 = por %p204, %p205
      %p207 = scmp.ne.s32.totalorder %s199, %s201
      %p208 = scmp.eq.s32.totalorder %s23, 1
      %p209 = por %p207, %p208
      %p210 = scmp.ne.s32.totalorder %s201, %s202
      %p211 = scmp.eq.s32.totalorder %s23, 0
      %p212 = por %p210, %p211
      %p213 = scmp.ne.s32.totalorder %s201, %s202
      %p214 = scmp.eq.s32.totalorder %s24, 1
      %p215 = por %p213, %p214
      %p217 = scmp.ne.s32.totalorder %s202, %s216
      %p218 = scmp.eq.s32.totalorder %s24, 0
      %p219 = por %p217, %p218
      %s220 = ssub.s32 %s18, %s25
      %p221 = scmp.eq.s32.totalorder %s220, 0
      %s223 = sadd.s32 %s222, 1
      %s224 = scalar_select %p221, %s222, %s223
      %p227 = pneg %p221
      %p228 = scmp.eq.s32.totalorder %s18, 1
      %p229 = por %p227, %p228
      %p230 = scmp.ne.s32.totalorder %s222, %s225
      %p231 = scmp.eq.s32.totalorder %s18, 0
      %p232 = por %p230, %p231
      %p233 = scmp.ne.s32.totalorder %s222, %s225
      %p234 = scmp.eq.s32.totalorder %s23, 1
      %p235 = por %p233, %p234
      %p236 = scmp.ne.s32.totalorder %s225, %s226
      %p237 = scmp.eq.s32.totalorder %s23, 0
      %p238 = por %p236, %p237
      %p239 = scmp.ne.s32.totalorder %s225, %s226
      %p240 = scmp.eq.s32.totalorder %s24, 1
      %p241 = por %p239, %p240
      %p243 = scmp.ne.s32.totalorder %s226, %s242
      %p244 = scmp.eq.s32.totalorder %s24, 0
      %p245 = por %p243, %p244
      %p246 = scmp.le.s32.totalorder 1, %s18
      %p247 = scmp.lt.s32.totalorder %s18, 3
      %p248 = pnand %p246, %p247
      %p249 = pneg %p248
      // Predicated region
      $region9: #{tpu_custom_call.1} parent=5 // pred_check
        _
      $region10: #{tpu_custom_call.1} parent=5 // pred_check_branch
        %251 = sbr.rel (%p248) target = $region12
      $region11: #{tpu_custom_call.1} parent=5 // pred_region
        %s252 = ssub.s32 %s18, 1
        // Predicated region
        $region13: #{tpu_custom_call.1} parent=11 // pred_check
          %p253 = pneg %p65
        $region14: #{tpu_custom_call.1} parent=11 // pred_check_branch
          %255 = sbr.rel (%p253) target = $region16
        $region15: #{tpu_custom_call.1} parent=11 // pred_region
          _
        $region16: #{tpu_custom_call.1} parent=11 // pred_fallthru
          _
        // Predicated region
        $region17: #{tpu_custom_call.1} parent=11 // pred_check
          %p256 = pneg %p86
        $region18: #{tpu_custom_call.1} parent=11 // pred_check_branch
          %258 = sbr.rel (%p256) target = $region20
        $region19: #{tpu_custom_call.1} parent=11 // pred_region
          _
        $region20: #{tpu_custom_call.1} parent=11 // pred_fallthru
          _
        // Predicated region
        $region21: #{tpu_custom_call.1} parent=11 // pred_check
          %p259 = pneg %p107
        $region22: #{tpu_custom_call.1} parent=11 // pred_check_branch
          %261 = sbr.rel (%p259) target = $region24
        $region23: #{tpu_custom_call.1} parent=11 // pred_region
          _
        $region24: #{tpu_custom_call.1} parent=11 // pred_fallthru
          _
        // Predicated region
        $region25: #{tpu_custom_call.1} parent=11 // pred_check
          %p262 = pneg %p128
        $region26: #{tpu_custom_call.1} parent=11 // pred_check_branch
          %264 = sbr.rel (%p262) target = $region28
        $region27: #{tpu_custom_call.1} parent=11 // pred_region
          _
        $region28: #{tpu_custom_call.1} parent=11 // pred_fallthru
          _
        // Predicated region
        $region29: #{tpu_custom_call.1} parent=11 // pred_check
          %p265 = pneg %p149
        $region30: #{tpu_custom_call.1} parent=11 // pred_check_branch
          %267 = sbr.rel (%p265) target = $region32
        $region31: #{tpu_custom_call.1} parent=11 // pred_region
          _
        $region32: #{tpu_custom_call.1} parent=11 // pred_fallthru
          _
        // Predicated region
        $region33: #{tpu_custom_call.1} parent=11 // pred_check
          %p268 = pneg %p170
        $region34: #{tpu_custom_call.1} parent=11 // pred_check_branch
          %270 = sbr.rel (%p268) target = $region36
        $region35: #{tpu_custom_call.1} parent=11 // pred_region
          _
        $region36: #{tpu_custom_call.1} parent=11 // pred_fallthru
          _
        // Predicated region
        $region37: #{tpu_custom_call.1} parent=11 // pred_check
          %p271 = pneg %p191
        $region38: #{tpu_custom_call.1} parent=11 // pred_check_branch
          %273 = sbr.rel (%p271) target = $region40
        $region39: #{tpu_custom_call.1} parent=11 // pred_region
          _
        $region40: #{tpu_custom_call.1} parent=11 // pred_fallthru
          _
        // Predicated region
        $region41: #{tpu_custom_call.1} parent=11 // pred_check
          %p274 = pneg %p212
        $region42: #{tpu_custom_call.1} parent=11 // pred_check_branch
          %276 = sbr.rel (%p274) target = $region44
        $region43: #{tpu_custom_call.1} parent=11 // pred_region
          _
        $region44: #{tpu_custom_call.1} parent=11 // pred_fallthru
          _
      $region12: #{tpu_custom_call.1} parent=5 // pred_fallthru
        _
      %p277 = scmp.lt.s32.totalorder %s18, 2
      // Predicated region
      $region45: #{tpu_custom_call.1} parent=5 // pred_check
        %p278 = pneg %p277
      $region46: #{tpu_custom_call.1} parent=5 // pred_check_branch
        %280 = sbr.rel (%p278) target = $region48
      $region47: #{tpu_custom_call.1} parent=5 // pred_region
        // Predicated region
        $region49: #{tpu_custom_call.1} parent=47 // pred_check
          %p281 = pneg %p38
        $region50: #{tpu_custom_call.1} parent=47 // pred_check_branch
          %283 = sbr.rel (%p281) target = $region52
        $region51: #{tpu_custom_call.1} parent=47 // pred_region
          %p284 = scmp.lt.s32.totalorder %s18, 1
          %s285 = scalar_select %p284, %s18, 1
          %s286 = smul.addr %s285, 32
          %s287 = smul.addr %s286, 8
          %s288 = scalar_lea.vmem %s0, %s287
        $region52: #{tpu_custom_call.1} parent=47 // pred_fallthru
          _
      $region48: #{tpu_custom_call.1} parent=5 // pred_fallthru
        _
      %p289 = scmp.le.s32.totalorder 1, %s18
      %p290 = scmp.lt.s32.totalorder %s18, 3
      %p291 = pnand %p289, %p290
      %p292 = pneg %p291
      // Predicated region
      $region53: #{tpu_custom_call.1} parent=5 // pred_check
        _
      $region54: #{tpu_custom_call.1} parent=5 // pred_check_branch
        %294 = sbr.rel (%p291) target = $region56
      $region55: #{tpu_custom_call.1} parent=5 // pred_region
        %s295 = ssub.s32 %s18, 1
        %p296 = scmp.lt.s32.totalorder %s23, 1
        %s297 = scalar_select %p296, %s23, 1
        %s298 = smul.addr %s297, 32
        %s299 = smul.addr %s298, 8
        %s300 = scalar_lea.vmem %s0, %s299
        %p301 = pneg %p44
        %p302 = pneg %p41
        %p303 = pneg %p65
        %p304 = pneg %p62
        %p305 = pneg %p86
        %p306 = pneg %p83
        %p307 = pneg %p107
        %p308 = pneg %p104
        %p309 = pneg %p128
        %p310 = pneg %p125
        %p311 = pneg %p149
        %p312 = pneg %p146
        %p313 = pneg %p170
        %p314 = pneg %p167
        %p315 = pneg %p191
        %p316 = pneg %p188
        %p317 = pneg %p212
        %p318 = pneg %p209
        %p319 = pneg %p238
        %p320 = pneg %p235
        %s321 = sand.u32 %s225, 1
        %s322 = scalar_lea.sflag [#allocation4], %s321
        %s323 = sand.u32 %s225, 1
        %s324 = scalar_lea.vmem [#allocation3], %s323
        %p325 = scmp.lt.s32.totalorder %s23, 1
        %s326 = scalar_select %p325, %s23, 1
        %s327 = smul.addr %s326, 32
        %s328 = smul.addr %s327, 8
        %s329 = scalar_lea.vmem %s0, %s328
        %v331 = vld [vmem:[%s329] sm:$0xff]
        %v332 = vld [vmem:[%s329 + $0x8] sm:$0xff]
        %v333 = vld [vmem:[%s329 + $0x10] sm:$0xff]
        %v334 = vld [vmem:[%s329 + $0x18] sm:$0xff]
        %v335 = vld [vmem:[%s329 + $0x20] sm:$0xff]
        %v336 = vld [vmem:[%s329 + $0x28] sm:$0xff]
        %v337 = vld [vmem:[%s329 + $0x30] sm:$0xff]
        %v338 = vld [vmem:[%s329 + $0x38] sm:$0xff]
        %v339 = vld [vmem:[%s329 + $0x40] sm:$0xff]
        %v340 = vld [vmem:[%s329 + $0x48] sm:$0xff]
        %v341 = vld [vmem:[%s329 + $0x50] sm:$0xff]
        %v342 = vld [vmem:[%s329 + $0x58] sm:$0xff]
        %v343 = vld [vmem:[%s329 + $0x60] sm:$0xff]
        %v344 = vld [vmem:[%s329 + $0x68] sm:$0xff]
        %v345 = vld [vmem:[%s329 + $0x70] sm:$0xff]
        %v346 = vld [vmem:[%s329 + $0x78] sm:$0xff]
        %v347 = vld [vmem:[%s329 + $0x80] sm:$0xff]
        %v348 = vld [vmem:[%s329 + $0x88] sm:$0xff]
        %v349 = vld [vmem:[%s329 + $0x90] sm:$0xff]
        %v350 = vld [vmem:[%s329 + $0x98] sm:$0xff]
        %v351 = vld [vmem:[%s329 + $0xa0] sm:$0xff]
        %v352 = vld [vmem:[%s329 + $0xa8] sm:$0xff]
        %v353 = vld [vmem:[%s329 + $0xb0] sm:$0xff]
        %v354 = vld [vmem:[%s329 + $0xb8] sm:$0xff]
        %v355 = vld [vmem:[%s329 + $0xc0] sm:$0xff]
        %v356 = vld [vmem:[%s329 + $0xc8] sm:$0xff]
        %v357 = vld [vmem:[%s329 + $0xd0] sm:$0xff]
        %v358 = vld [vmem:[%s329 + $0xd8] sm:$0xff]
        %v359 = vld [vmem:[%s329 + $0xe0] sm:$0xff]
        %v360 = vld [vmem:[%s329 + $0xe8] sm:$0xff]
        %v361 = vld [vmem:[%s329 + $0xf0] sm:$0xff]
        %v362 = vld [vmem:[%s329 + $0xf8] sm:$0xff]
        %v363 = vpack.c.bf16 %v332, %v331
        %v364 = vpack.c.bf16 %v334, %v333
        %v365 = vpack.c.bf16 %v336, %v335
        %v366 = vpack.c.bf16 %v338, %v337
        %v367 = vpack.c.bf16 %v340, %v339
        %v368 = vpack.c.bf16 %v342, %v341
        %v369 = vpack.c.bf16 %v344, %v343
        %v370 = vpack.c.bf16 %v346, %v345
        %v371 = vpack.c.bf16 %v348, %v347
        %v372 = vpack.c.bf16 %v350, %v349
        %v373 = vpack.c.bf16 %v352, %v351
        %v374 = vpack.c.bf16 %v354, %v353
        %v375 = vpack.c.bf16 %v356, %v355
        %v376 = vpack.c.bf16 %v358, %v357
        %v377 = vpack.c.bf16 %v360, %v359
        %v378 = vpack.c.bf16 %v362, %v361
        %v379 = vld [vmem:[%s1] sm:$0xf]
        %v380 = vld [vmem:[%s1 + $0x4] sm:$0xf]
        %v381 = vld [vmem:[%s1 + $0x8] sm:$0x1]
        %s382 = scalar_lea.vmem %s1, 12
        %v383 = vld [vmem:[%s382] sm:$0xf]
        %v384 = vld [vmem:[%s382 + $0x4] sm:$0xf]
        %v385 = vld [vmem:[%s382 + $0x8] sm:$0x1]
        %vm386 = vsmask.f32 7424
        %v388 = vshrl.u32 %v363, 16
        %v390 = vshll.u32 %v363, 16
        %v392 = vrot.slane %v390, 1
        %v393 = vor.u32 %v388, %v392
        %v395 = vshll.u32 %v364, 16
        %v397 = vrot.slane %v395, 1
        %v398 = vsel %vm386, %v393, %v397
        %v399 = vshrl.u32 %v364, 16
        %v401 = vor.u32 %v399, %v397
        %v403 = vshll.u32 %v365, 16
        %v405 = vrot.slane %v403, 1
        %v406 = vsel %vm386, %v401, %v405
        %v407 = vshrl.u32 %v365, 16
        %v409 = vor.u32 %v407, %v405
        %v411 = vshll.u32 %v366, 16
        %v413 = vrot.slane %v411, 1
        %v414 = vsel %vm386, %v409, %v413
        %v415 = vshrl.u32 %v366, 16
        %v417 = vor.u32 %v415, %v413
        %v419 = vshll.u32 %v367, 16
        %v421 = vrot.slane %v419, 1
        %v422 = vsel %vm386, %v417, %v421
        %v423 = vshrl.u32 %v367, 16
        %v425 = vor.u32 %v423, %v421
        %v427 = vshll.u32 %v368, 16
        %v429 = vrot.slane %v427, 1
        %v430 = vsel %vm386, %v425, %v429
        %v431 = vshrl.u32 %v368, 16
        %v433 = vor.u32 %v431, %v429
        %v435 = vshll.u32 %v369, 16
        %v437 = vrot.slane %v435, 1
        %v438 = vsel %vm386, %v433, %v437
        %v439 = vshrl.u32 %v369, 16
        %v441 = vor.u32 %v439, %v437
        %v443 = vshll.u32 %v370, 16
        %v445 = vrot.slane %v443, 1
        %v446 = vsel %vm386, %v441, %v445
        %v447 = vshrl.u32 %v370, 16
        %v449 = vor.u32 %v447, %v445
        %v451 = vshll.u32 %v371, 16
        %v453 = vrot.slane %v451, 1
        %v454 = vsel %vm386, %v449, %v453
        %v455 = vshrl.u32 %v371, 16
        %v457 = vor.u32 %v455, %v453
        %v459 = vshll.u32 %v372, 16
        %v461 = vrot.slane %v459, 1
        %v462 = vsel %vm386, %v457, %v461
        %v463 = vshrl.u32 %v372, 16
        %v465 = vor.u32 %v463, %v461
        %v467 = vshll.u32 %v373, 16
        %v469 = vrot.slane %v467, 1
        %v470 = vsel %vm386, %v465, %v469
        %v471 = vshrl.u32 %v373, 16
        %v473 = vor.u32 %v471, %v469
        %v475 = vshll.u32 %v374, 16
        %v477 = vrot.slane %v475, 1
        %v478 = vsel %vm386, %v473, %v477
        %v479 = vshrl.u32 %v374, 16
        %v481 = vor.u32 %v479, %v477
        %v483 = vshll.u32 %v375, 16
        %v485 = vrot.slane %v483, 1
        %v486 = vsel %vm386, %v481, %v485
        %v487 = vshrl.u32 %v375, 16
        %v489 = vor.u32 %v487, %v485
        %v491 = vshll.u32 %v376, 16
        %v493 = vrot.slane %v491, 1
        %v494 = vsel %vm386, %v489, %v493
        %v495 = vshrl.u32 %v376, 16
        %v497 = vor.u32 %v495, %v493
        %v499 = vshll.u32 %v377, 16
        %v501 = vrot.slane %v499, 1
        %v502 = vsel %vm386, %v497, %v501
        %v503 = vshrl.u32 %v377, 16
        %v505 = vor.u32 %v503, %v501
        %v507 = vshll.u32 %v378, 16
        %v509 = vrot.slane %v507, 1
        %v510 = vsel %vm386, %v505, %v509
        %v511 = vshrl.u32 %v378, 16
        %v513 = vor.u32 %v511, %v509
        %v517 = vunpack.c.l.b16 %v383
        %v518 = vunpack.c.l.b16 %v384
        %v519 = vunpack.c.l.b16 %v385
        %v520 = vpack.c.b16 %v518, %v517
        %v521 = vpack.c.b16 %v519, %v519
        %vm523 = vcmask 146432
        %v525 = vsel %vm523, %v398, 0
        %v528 = vsel %vm523, %v406, 0
        %v531 = vsel %vm523, %v414, 0
        %v534 = vsel %vm523, %v422, 0
        %v537 = vsel %vm523, %v430, 0
        %v540 = vsel %vm523, %v438, 0
        %v543 = vsel %vm523, %v446, 0
        %v546 = vsel %vm523, %v454, 0
        %v549 = vsel %vm523, %v462, 0
        %v552 = vsel %vm523, %v470, 0
        %v555 = vsel %vm523, %v478, 0
        %v558 = vsel %vm523, %v486, 0
        %v561 = vsel %vm523, %v494, 0
        %v564 = vsel %vm523, %v502, 0
        %v567 = vsel %vm523, %v510, 0
        %v570 = vsel %vm523, %v513, 0
        %vm572 = vcmask 1040384
        %v574 = vsel %vm572, %v521, 0
        %576 = vmatprep.subr.bf16.mxu0 0
        %577 = vmatpush1.bf16.msra.mxu0 0
        %578 = vmatprep.subr.bf16.mxu0 0
        %579 = vmatpush1.bf16.msra.mxu0 0
        %580 = vmatprep.subr.bf16.mxu0 0
        %581 = vmatpush1.bf16.msra.mxu0 0
        %582 = vmatprep.subr.bf16.mxu0 0
        %583 = vmatpush1.bf16.msra.mxu0 0
        %584 = vmatprep.subr.bf16.mxu0 0
        %585 = vmatpush1.bf16.msra.mxu0 0
        %586 = vmatprep.subr.bf16.mxu0 0
        %587 = vmatpush1.bf16.msra.mxu0 0
        %588 = vmatprep.subr.bf16.mxu0 0
        %589 = vmatpush1.bf16.msra.mxu0 %v574
        %590 = vmatprep.subr.bf16.mxu0 0
        %591 = vmatpush1.bf16.msra.mxu0 %v520
        %592 = vmatprep.subr.bf16.mxu0 0
        %593 = vmatpush2.bf16.msra.mxu0 0
        %594 = vmatprep.subr.bf16.mxu0 0
        %595 = vmatpush2.bf16.msra.mxu0 0
        %596 = vmatprep.subr.bf16.mxu0 0
        %597 = vmatpush2.bf16.msra.mxu0 0
        %598 = vmatprep.subr.bf16.mxu0 0
        %599 = vmatpush2.bf16.msra.mxu0 0
        %600 = vmatprep.subr.bf16.mxu0 0
        %601 = vmatpush2.bf16.msra.mxu0 0
        %602 = vmatprep.subr.bf16.mxu0 0
        %603 = vmatpush2.bf16.msra.mxu0 0
        %604 = vmatprep.subr.bf16.mxu0 0
        %605 = vmatpush2.bf16.msra.mxu0 0
        %606 = vmatprep.subr.bf16.mxu0 0
        %607 = vmatpush2.bf16.msra.mxu0 0
        %608 = vmatprep.mubr.bf16.mxu0 0
        %609 = vmatmul.mubr.bf16.gmra.mxu0 %v525
        %v610 = vpop.f32.mrf.mxu0
        %v611 = vadd.f32 0.0, %v610
        %v612 = vpop.f32.mrf.mxu0
        %v613 = vpop.f32.mrf.mxu0
        %v614 = vadd.f32 0.0, %v613
        %v615 = vpop.f32.mrf.mxu0
        %616 = vmatprep.mubr.bf16.mxu0 0
        %617 = vmatmul.mubr.bf16.gmra.mxu0 %v528
        %v618 = vpop.f32.mrf.mxu0
        %v619 = vadd.f32 0.0, %v618
        %v620 = vpop.f32.mrf.mxu0
        %v621 = vpop.f32.mrf.mxu0
        %v622 = vadd.f32 0.0, %v621
        %v623 = vpop.f32.mrf.mxu0
        %624 = vmatprep.mubr.bf16.mxu0 0
        %625 = vmatmul.mubr.bf16.gmra.mxu0 %v531
        %v626 = vpop.f32.mrf.mxu0
        %v627 = vadd.f32 0.0, %v626
        %v628 = vpop.f32.mrf.mxu0
        %v629 = vpop.f32.mrf.mxu0
        %v630 = vadd.f32 0.0, %v629
        %v631 = vpop.f32.mrf.mxu0
        %632 = vmatprep.mubr.bf16.mxu0 0
        %633 = vmatmul.mubr.bf16.gmra.mxu0 %v534
        %v634 = vpop.f32.mrf.mxu0
        %v635 = vadd.f32 0.0, %v634
        %v636 = vpop.f32.mrf.mxu0
        %v637 = vpop.f32.mrf.mxu0
        %v638 = vadd.f32 0.0, %v637
        %v639 = vpop.f32.mrf.mxu0
        %640 = vmatprep.mubr.bf16.mxu0 0
        %641 = vmatmul.mubr.bf16.gmra.mxu0 %v537
        %v642 = vpop.f32.mrf.mxu0
        %v643 = vadd.f32 0.0, %v642
        %v644 = vpop.f32.mrf.mxu0
        %v645 = vpop.f32.mrf.mxu0
        %v646 = vadd.f32 0.0, %v645
        %v647 = vpop.f32.mrf.mxu0
        %648 = vmatprep.mubr.bf16.mxu0 0
        %649 = vmatmul.mubr.bf16.gmra.mxu0 %v540
        %v650 = vpop.f32.mrf.mxu0
        %v651 = vadd.f32 0.0, %v650
        %v652 = vpop.f32.mrf.mxu0
        %v653 = vpop.f32.mrf.mxu0
        %v654 = vadd.f32 0.0, %v653
        %v655 = vpop.f32.mrf.mxu0
        %656 = vmatprep.mubr.bf16.mxu0 0
        %657 = vmatmul.mubr.bf16.gmra.mxu0 %v543
        %v658 = vpop.f32.mrf.mxu0
        %v659 = vadd.f32 0.0, %v658
        %v660 = vpop.f32.mrf.mxu0
        %v661 = vpop.f32.mrf.mxu0
        %v662 = vadd.f32 0.0, %v661
        %v663 = vpop.f32.mrf.mxu0
        %664 = vmatprep.mubr.bf16.mxu0 0
        %665 = vmatmul.mubr.bf16.gmra.mxu0 %v546
        %v666 = vpop.f32.mrf.mxu0
        %v667 = vadd.f32 0.0, %v666
        %v668 = vpop.f32.mrf.mxu0
        %v669 = vpop.f32.mrf.mxu0
        %v670 = vadd.f32 0.0, %v669
        %v671 = vpop.f32.mrf.mxu0
        %672 = vmatprep.mubr.bf16.mxu0 0
        %673 = vmatmul.mubr.bf16.gmra.mxu0 %v549
        %v674 = vpop.f32.mrf.mxu0
        %v675 = vadd.f32 0.0, %v674
        %v676 = vpop.f32.mrf.mxu0
        %v677 = vpop.f32.mrf.mxu0
        %v678 = vadd.f32 0.0, %v677
        %v679 = vpop.f32.mrf.mxu0
        %680 = vmatprep.mubr.bf16.mxu0 0
        %681 = vmatmul.mubr.bf16.gmra.mxu0 %v552
        %v682 = vpop.f32.mrf.mxu0
        %v683 = vadd.f32 0.0, %v682
        %v684 = vpop.f32.mrf.mxu0
        %v685 = vpop.f32.mrf.mxu0
        %v686 = vadd.f32 0.0, %v685
        %v687 = vpop.f32.mrf.mxu0
        %688 = vmatprep.mubr.bf16.mxu0 0
        %689 = vmatmul.mubr.bf16.gmra.mxu0 %v555
        %v690 = vpop.f32.mrf.mxu0
        %v691 = vadd.f32 0.0, %v690
        %v692 = vpop.f32.mrf.mxu0
        %v693 = vpop.f32.mrf.mxu0
        %v694 = vadd.f32 0.0, %v693
        %v695 = vpop.f32.mrf.mxu0
        %696 = vmatprep.mubr.bf16.mxu0 0
        %697 = vmatmul.mubr.bf16.gmra.mxu0 %v558
        %v698 = vpop.f32.mrf.mxu0
        %v699 = vadd.f32 0.0, %v698
        %v700 = vpop.f32.mrf.mxu0
        %v701 = vpop.f32.mrf.mxu0
        %v702 = vadd.f32 0.0, %v701
        %v703 = vpop.f32.mrf.mxu0
        %704 = vmatprep.mubr.bf16.mxu0 0
        %705 = vmatmul.mubr.bf16.gmra.mxu0 %v561
        %v706 = vpop.f32.mrf.mxu0
        %v707 = vadd.f32 0.0, %v706
        %v708 = vpop.f32.mrf.mxu0
        %v709 = vpop.f32.mrf.mxu0
        %v710 = vadd.f32 0.0, %v709
        %v711 = vpop.f32.mrf.mxu0
        %712 = vmatprep.mubr.bf16.mxu0 0
        %713 = vmatmul.mubr.bf16.gmra.mxu0 %v564
        %v714 = vpop.f32.mrf.mxu0
        %v715 = vadd.f32 0.0, %v714
        %v716 = vpop.f32.mrf.mxu0
        %v717 = vpop.f32.mrf.mxu0
        %v718 = vadd.f32 0.0, %v717
        %v719 = vpop.f32.mrf.mxu0
        %720 = vmatprep.mubr.bf16.mxu0 0
        %721 = vmatmul.mubr.bf16.gmra.mxu0 %v567
        %v722 = vpop.f32.mrf.mxu0
        %v723 = vadd.f32 0.0, %v722
        %v724 = vpop.f32.mrf.mxu0
        %v725 = vpop.f32.mrf.mxu0
        %v726 = vadd.f32 0.0, %v725
        %v727 = vpop.f32.mrf.mxu0
        %728 = vmatprep.mubr.bf16.mxu0 0
        %729 = vmatmul.mubr.bf16.gmra.mxu0 %v570
        %v730 = vpop.f32.mrf.mxu0
        %v731 = vadd.f32 0.0, %v730
        %v732 = vpop.f32.mrf.mxu0
        %v733 = vpop.f32.mrf.mxu0
        %v734 = vadd.f32 0.0, %v733
        %v735 = vpop.f32.mrf.mxu0
        %736 = vdwg.mxu0
        %v740 = vunpack.c.l.b16 %v379
        %v741 = vunpack.c.l.b16 %v380
        %v742 = vunpack.c.l.b16 %v381
        %v743 = vpack.c.b16 %v741, %v740
        %v744 = vpack.c.b16 %v742, %v742
        %v746 = vsel %vm523, %v363, 0
        %v748 = vsel %vm523, %v364, 0
        %v750 = vsel %vm523, %v365, 0
        %v752 = vsel %vm523, %v366, 0
        %v754 = vsel %vm523, %v367, 0
        %v756 = vsel %vm523, %v368, 0
        %v758 = vsel %vm523, %v369, 0
        %v760 = vsel %vm523, %v370, 0
        %v762 = vsel %vm523, %v371, 0
        %v764 = vsel %vm523, %v372, 0
        %v766 = vsel %vm523, %v373, 0
        %v768 = vsel %vm523, %v374, 0
        %v770 = vsel %vm523, %v375, 0
        %v772 = vsel %vm523, %v376, 0
        %v774 = vsel %vm523, %v377, 0
        %v776 = vsel %vm523, %v378, 0
        %v779 = vsel %vm572, %v744, 0
        %781 = vmatprep.subr.bf16.mxu0 0
        %782 = vmatpush1.bf16.msra.mxu0 0
        %783 = vmatprep.subr.bf16.mxu0 0
        %784 = vmatpush1.bf16.msra.mxu0 0
        %785 = vmatprep.subr.bf16.mxu0 0
        %786 = vmatpush1.bf16.msra.mxu0 0
        %787 = vmatprep.subr.bf16.mxu0 0
        %788 = vmatpush1.bf16.msra.mxu0 0
        %789 = vmatprep.subr.bf16.mxu0 0
        %790 = vmatpush1.bf16.msra.mxu0 0
        %791 = vmatprep.subr.bf16.mxu0 0
        %792 = vmatpush1.bf16.msra.mxu0 0
        %793 = vmatprep.subr.bf16.mxu0 0
        %794 = vmatpush1.bf16.msra.mxu0 %v779
        %795 = vmatprep.subr.bf16.mxu0 0
        %796 = vmatpush1.bf16.msra.mxu0 %v743
        %797 = vmatprep.subr.bf16.mxu0 0
        %798 = vmatpush2.bf16.msra.mxu0 0
        %799 = vmatprep.subr.bf16.mxu0 0
        %800 = vmatpush2.bf16.msra.mxu0 0
        %801 = vmatprep.subr.bf16.mxu0 0
        %802 = vmatpush2.bf16.msra.mxu0 0
        %803 = vmatprep.subr.bf16.mxu0 0
        %804 = vmatpush2.bf16.msra.mxu0 0
        %805 = vmatprep.subr.bf16.mxu0 0
        %806 = vmatpush2.bf16.msra.mxu0 0
        %807 = vmatprep.subr.bf16.mxu0 0
        %808 = vmatpush2.bf16.msra.mxu0 0
        %809 = vmatprep.subr.bf16.mxu0 0
        %810 = vmatpush2.bf16.msra.mxu0 0
        %811 = vmatprep.subr.bf16.mxu0 0
        %812 = vmatpush2.bf16.msra.mxu0 0
        %813 = vmatprep.mubr.bf16.mxu0 0
        %814 = vmatmul.mubr.bf16.gmra.mxu0 %v746
        %v815 = vpop.f32.mrf.mxu0
        %v816 = vadd.f32 %v611, %v815
        %v817 = vpop.f32.mrf.mxu0
        %v818 = vpop.f32.mrf.mxu0
        %v819 = vadd.f32 %v614, %v818
        %v820 = vpop.f32.mrf.mxu0
        %821 = vmatprep.mubr.bf16.mxu0 0
        %822 = vmatmul.mubr.bf16.gmra.mxu0 %v748
        %v823 = vpop.f32.mrf.mxu0
        %v824 = vadd.f32 %v619, %v823
        %v825 = vpop.f32.mrf.mxu0
        %v826 = vpop.f32.mrf.mxu0
        %v827 = vadd.f32 %v622, %v826
        %v828 = vpop.f32.mrf.mxu0
        %829 = vmatprep.mubr.bf16.mxu0 0
        %830 = vmatmul.mubr.bf16.gmra.mxu0 %v750
        %v831 = vpop.f32.mrf.mxu0
        %v832 = vadd.f32 %v627, %v831
        %v833 = vpop.f32.mrf.mxu0
        %v834 = vpop.f32.mrf.mxu0
        %v835 = vadd.f32 %v630, %v834
        %v836 = vpop.f32.mrf.mxu0
        %837 = vmatprep.mubr.bf16.mxu0 0
        %838 = vmatmul.mubr.bf16.gmra.mxu0 %v752
        %v839 = vpop.f32.mrf.mxu0
        %v840 = vadd.f32 %v635, %v839
        %v841 = vpop.f32.mrf.mxu0
        %v842 = vpop.f32.mrf.mxu0
        %v843 = vadd.f32 %v638, %v842
        %v844 = vpop.f32.mrf.mxu0
        %845 = vmatprep.mubr.bf16.mxu0 0
        %846 = vmatmul.mubr.bf16.gmra.mxu0 %v754
        %v847 = vpop.f32.mrf.mxu0
        %v848 = vadd.f32 %v643, %v847
        %v849 = vpop.f32.mrf.mxu0
        %v850 = vpop.f32.mrf.mxu0
        %v851 = vadd.f32 %v646, %v850
        %v852 = vpop.f32.mrf.mxu0
        %853 = vmatprep.mubr.bf16.mxu0 0
        %854 = vmatmul.mubr.bf16.gmra.mxu0 %v756
        %v855 = vpop.f32.mrf.mxu0
        %v856 = vadd.f32 %v651, %v855
        %v857 = vpop.f32.mrf.mxu0
        %v858 = vpop.f32.mrf.mxu0
        %v859 = vadd.f32 %v654, %v858
        %v860 = vpop.f32.mrf.mxu0
        %861 = vmatprep.mubr.bf16.mxu0 0
        %862 = vmatmul.mubr.bf16.gmra.mxu0 %v758
        %v863 = vpop.f32.mrf.mxu0
        %v864 = vadd.f32 %v659, %v863
        %v865 = vpop.f32.mrf.mxu0
        %v866 = vpop.f32.mrf.mxu0
        %v867 = vadd.f32 %v662, %v866
        %v868 = vpop.f32.mrf.mxu0
        %869 = vmatprep.mubr.bf16.mxu0 0
        %870 = vmatmul.mubr.bf16.gmra.mxu0 %v760
        %v871 = vpop.f32.mrf.mxu0
        %v872 = vadd.f32 %v667, %v871
        %v873 = vpop.f32.mrf.mxu0
        %v874 = vpop.f32.mrf.mxu0
        %v875 = vadd.f32 %v670, %v874
        %v876 = vpop.f32.mrf.mxu0
        %877 = vmatprep.mubr.bf16.mxu0 0
        %878 = vmatmul.mubr.bf16.gmra.mxu0 %v762
        %v879 = vpop.f32.mrf.mxu0
        %v880 = vadd.f32 %v675, %v879
        %v881 = vpop.f32.mrf.mxu0
        %v882 = vpop.f32.mrf.mxu0
        %v883 = vadd.f32 %v678, %v882
        %v884 = vpop.f32.mrf.mxu0
        %885 = vmatprep.mubr.bf16.mxu0 0
        %886 = vmatmul.mubr.bf16.gmra.mxu0 %v764
        %v887 = vpop.f32.mrf.mxu0
        %v888 = vadd.f32 %v683, %v887
        %v889 = vpop.f32.mrf.mxu0
        %v890 = vpop.f32.mrf.mxu0
        %v891 = vadd.f32 %v686, %v890
        %v892 = vpop.f32.mrf.mxu0
        %893 = vmatprep.mubr.bf16.mxu0 0
        %894 = vmatmul.mubr.bf16.gmra.mxu0 %v766
        %v895 = vpop.f32.mrf.mxu0
        %v896 = vadd.f32 %v691, %v895
        %v897 = vpop.f32.mrf.mxu0
        %v898 = vpop.f32.mrf.mxu0
        %v899 = vadd.f32 %v694, %v898
        %v900 = vpop.f32.mrf.mxu0
        %901 = vmatprep.mubr.bf16.mxu0 0
        %902 = vmatmul.mubr.bf16.gmra.mxu0 %v768
        %v903 = vpop.f32.mrf.mxu0
        %v904 = vadd.f32 %v699, %v903
        %v905 = vpop.f32.mrf.mxu0
        %v906 = vpop.f32.mrf.mxu0
        %v907 = vadd.f32 %v702, %v906
        %v908 = vpop.f32.mrf.mxu0
        %909 = vmatprep.mubr.bf16.mxu0 0
        %910 = vmatmul.mubr.bf16.gmra.mxu0 %v770
        %v911 = vpop.f32.mrf.mxu0
        %v912 = vadd.f32 %v707, %v911
        %v913 = vpop.f32.mrf.mxu0
        %v914 = vpop.f32.mrf.mxu0
        %v915 = vadd.f32 %v710, %v914
        %v916 = vpop.f32.mrf.mxu0
        %917 = vmatprep.mubr.bf16.mxu0 0
        %918 = vmatmul.mubr.bf16.gmra.mxu0 %v772
        %v919 = vpop.f32.mrf.mxu0
        %v920 = vadd.f32 %v715, %v919
        %v921 = vpop.f32.mrf.mxu0
        %v922 = vpop.f32.mrf.mxu0
        %v923 = vadd.f32 %v718, %v922
        %v924 = vpop.f32.mrf.mxu0
        %925 = vmatprep.mubr.bf16.mxu0 0
        %926 = vmatmul.mubr.bf16.gmra.mxu0 %v774
        %v927 = vpop.f32.mrf.mxu0
        %v928 = vadd.f32 %v723, %v927
        %v929 = vpop.f32.mrf.mxu0
        %v930 = vpop.f32.mrf.mxu0
        %v931 = vadd.f32 %v726, %v930
        %v932 = vpop.f32.mrf.mxu0
        %933 = vmatprep.mubr.bf16.mxu0 0
        %934 = vmatmul.mubr.bf16.gmra.mxu0 %v776
        %v935 = vpop.f32.mrf.mxu0
        %v936 = vadd.f32 %v731, %v935
        %v937 = vpop.f32.mrf.mxu0
        %v938 = vpop.f32.mrf.mxu0
        %v939 = vadd.f32 %v734, %v938
        %v940 = vpop.f32.mrf.mxu0
        %941 = vdwg.mxu0
        %s942 = scalar_lea.vmem %s1, 24
        %v943 = vld [vmem:[%s942] sm:$0xf]
        %v944 = vld [vmem:[%s942 + $0x4] sm:$0xf]
        %v945 = vld [vmem:[%s942 + $0x8] sm:$0x1]
        %vm962 = vcmask 1046528
        %v963 = vrot.slane %v363, 1
        %v964 = vrot.slane %v364, 1
        %v965 = vsel %vm962, %v963, %v964
        %v966 = vrot.slane %v365, 1
        %v967 = vsel %vm962, %v964, %v966
        %v968 = vrot.slane %v366, 1
        %v969 = vsel %vm962, %v966, %v968
        %v970 = vrot.slane %v367, 1
        %v971 = vsel %vm962, %v968, %v970
        %v972 = vrot.slane %v368, 1
        %v973 = vsel %vm962, %v970, %v972
        %v974 = vrot.slane %v369, 1
        %v975 = vsel %vm962, %v972, %v974
        %v976 = vrot.slane %v370, 1
        %v977 = vsel %vm962, %v974, %v976
        %v978 = vrot.slane %v371, 1
        %v979 = vsel %vm962, %v976, %v978
        %v980 = vrot.slane %v372, 1
        %v981 = vsel %vm962, %v978, %v980
        %v982 = vrot.slane %v373, 1
        %v983 = vsel %vm962, %v980, %v982
        %v984 = vrot.slane %v374, 1
        %v985 = vsel %vm962, %v982, %v984
        %v986 = vrot.slane %v375, 1
        %v987 = vsel %vm962, %v984, %v986
        %v988 = vrot.slane %v376, 1
        %v989 = vsel %vm962, %v986, %v988
        %v990 = vrot.slane %v377, 1
        %v991 = vsel %vm962, %v988, %v990
        %v992 = vrot.slane %v378, 1
        %v993 = vsel %vm962, %v990, %v992
        %v997 = vunpack.c.l.b16 %v943
        %v998 = vunpack.c.l.b16 %v944
        %v999 = vunpack.c.l.b16 %v945
        %v1000 = vpack.c.b16 %v998, %v997
        %v1001 = vpack.c.b16 %v999, %v999
        %v1004 = vsel %vm523, %v965, 0
        %v1007 = vsel %vm523, %v967, 0
        %v1010 = vsel %vm523, %v969, 0
        %v1013 = vsel %vm523, %v971, 0
        %v1016 = vsel %vm523, %v973, 0
        %v1019 = vsel %vm523, %v975, 0
        %v1022 = vsel %vm523, %v977, 0
        %v1025 = vsel %vm523, %v979, 0
        %v1028 = vsel %vm523, %v981, 0
        %v1031 = vsel %vm523, %v983, 0
        %v1034 = vsel %vm523, %v985, 0
        %v1037 = vsel %vm523, %v987, 0
        %v1040 = vsel %vm523, %v989, 0
        %v1043 = vsel %vm523, %v991, 0
        %v1046 = vsel %vm523, %v993, 0
        %v1049 = vsel %vm523, %v992, 0
        %v1052 = vsel %vm572, %v1001, 0
        %1054 = vmatprep.subr.bf16.mxu0 0
        %1055 = vmatpush1.bf16.msra.mxu0 0
        %1056 = vmatprep.subr.bf16.mxu0 0
        %1057 = vmatpush1.bf16.msra.mxu0 0
        %1058 = vmatprep.subr.bf16.mxu0 0
        %1059 = vmatpush1.bf16.msra.mxu0 0
        %1060 = vmatprep.subr.bf16.mxu0 0
        %1061 = vmatpush1.bf16.msra.mxu0 0
        %1062 = vmatprep.subr.bf16.mxu0 0
        %1063 = vmatpush1.bf16.msra.mxu0 0
        %1064 = vmatprep.subr.bf16.mxu0 0
        %1065 = vmatpush1.bf16.msra.mxu0 0
        %1066 = vmatprep.subr.bf16.mxu0 0
        %1067 = vmatpush1.bf16.msra.mxu0 %v1052
        %1068 = vmatprep.subr.bf16.mxu0 0
        %1069 = vmatpush1.bf16.msra.mxu0 %v1000
        %1070 = vmatprep.subr.bf16.mxu0 0
        %1071 = vmatpush2.bf16.msra.mxu0 0
        %1072 = vmatprep.subr.bf16.mxu0 0
        %1073 = vmatpush2.bf16.msra.mxu0 0
        %1074 = vmatprep.subr.bf16.mxu0 0
        %1075 = vmatpush2.bf16.msra.mxu0 0
        %1076 = vmatprep.subr.bf16.mxu0 0
        %1077 = vmatpush2.bf16.msra.mxu0 0
        %1078 = vmatprep.subr.bf16.mxu0 0
        %1079 = vmatpush2.bf16.msra.mxu0 0
        %1080 = vmatprep.subr.bf16.mxu0 0
        %1081 = vmatpush2.bf16.msra.mxu0 0
        %1082 = vmatprep.subr.bf16.mxu0 0
        %1083 = vmatpush2.bf16.msra.mxu0 0
        %1084 = vmatprep.subr.bf16.mxu0 0
        %1085 = vmatpush2.bf16.msra.mxu0 0
        %1086 = vmatprep.mubr.bf16.mxu0 0
        %1087 = vmatmul.mubr.bf16.gmra.mxu0 %v1004
        %v1088 = vpop.f32.mrf.mxu0
        %v1089 = vadd.f32 0.0, %v1088
        %v1090 = vpop.f32.mrf.mxu0
        %v1091 = vpop.f32.mrf.mxu0
        %v1092 = vadd.f32 0.0, %v1091
        %v1093 = vpop.f32.mrf.mxu0
        %1094 = vmatprep.mubr.bf16.mxu0 0
        %1095 = vmatmul.mubr.bf16.gmra.mxu0 %v1007
        %v1096 = vpop.f32.mrf.mxu0
        %v1097 = vadd.f32 0.0, %v1096
        %v1098 = vpop.f32.mrf.mxu0
        %v1099 = vpop.f32.mrf.mxu0
        %v1100 = vadd.f32 0.0, %v1099
        %v1101 = vpop.f32.mrf.mxu0
        %1102 = vmatprep.mubr.bf16.mxu0 0
        %1103 = vmatmul.mubr.bf16.gmra.mxu0 %v1010
        %v1104 = vpop.f32.mrf.mxu0
        %v1105 = vadd.f32 0.0, %v1104
        %v1106 = vpop.f32.mrf.mxu0
        %v1107 = vpop.f32.mrf.mxu0
        %v1108 = vadd.f32 0.0, %v1107
        %v1109 = vpop.f32.mrf.mxu0
        %1110 = vmatprep.mubr.bf16.mxu0 0
        %1111 = vmatmul.mubr.bf16.gmra.mxu0 %v1013
        %v1112 = vpop.f32.mrf.mxu0
        %v1113 = vadd.f32 0.0, %v1112
        %v1114 = vpop.f32.mrf.mxu0
        %v1115 = vpop.f32.mrf.mxu0
        %v1116 = vadd.f32 0.0, %v1115
        %v1117 = vpop.f32.mrf.mxu0
        %1118 = vmatprep.mubr.bf16.mxu0 0
        %1119 = vmatmul.mubr.bf16.gmra.mxu0 %v1016
        %v1120 = vpop.f32.mrf.mxu0
        %v1121 = vadd.f32 0.0, %v1120
        %v1122 = vpop.f32.mrf.mxu0
        %v1123 = vpop.f32.mrf.mxu0
        %v1124 = vadd.f32 0.0, %v1123
        %v1125 = vpop.f32.mrf.mxu0
        %1126 = vmatprep.mubr.bf16.mxu0 0
        %1127 = vmatmul.mubr.bf16.gmra.mxu0 %v1019
        %v1128 = vpop.f32.mrf.mxu0
        %v1129 = vadd.f32 0.0, %v1128
        %v1130 = vpop.f32.mrf.mxu0
        %v1131 = vpop.f32.mrf.mxu0
        %v1132 = vadd.f32 0.0, %v1131
        %v1133 = vpop.f32.mrf.mxu0
        %1134 = vmatprep.mubr.bf16.mxu0 0
        %1135 = vmatmul.mubr.bf16.gmra.mxu0 %v1022
        %v1136 = vpop.f32.mrf.mxu0
        %v1137 = vadd.f32 0.0, %v1136
        %v1138 = vpop.f32.mrf.mxu0
        %v1139 = vpop.f32.mrf.mxu0
        %v1140 = vadd.f32 0.0, %v1139
        %v1141 = vpop.f32.mrf.mxu0
        %1142 = vmatprep.mubr.bf16.mxu0 0
        %1143 = vmatmul.mubr.bf16.gmra.mxu0 %v1025
        %v1144 = vpop.f32.mrf.mxu0
        %v1145 = vadd.f32 0.0, %v1144
        %v1146 = vpop.f32.mrf.mxu0
        %v1147 = vpop.f32.mrf.mxu0
        %v1148 = vadd.f32 0.0, %v1147
        %v1149 = vpop.f32.mrf.mxu0
        %1150 = vmatprep.mubr.bf16.mxu0 0
        %1151 = vmatmul.mubr.bf16.gmra.mxu0 %v1028
        %v1152 = vpop.f32.mrf.mxu0
        %v1153 = vadd.f32 0.0, %v1152
        %v1154 = vpop.f32.mrf.mxu0
        %v1155 = vpop.f32.mrf.mxu0
        %v1156 = vadd.f32 0.0, %v1155
        %v1157 = vpop.f32.mrf.mxu0
        %1158 = vmatprep.mubr.bf16.mxu0 0
        %1159 = vmatmul.mubr.bf16.gmra.mxu0 %v1031
        %v1160 = vpop.f32.mrf.mxu0
        %v1161 = vadd.f32 0.0, %v1160
        %v1162 = vpop.f32.mrf.mxu0
        %v1163 = vpop.f32.mrf.mxu0
        %v1164 = vadd.f32 0.0, %v1163
        %v1165 = vpop.f32.mrf.mxu0
        %1166 = vmatprep.mubr.bf16.mxu0 0
        %1167 = vmatmul.mubr.bf16.gmra.mxu0 %v1034
        %v1168 = vpop.f32.mrf.mxu0
        %v1169 = vadd.f32 0.0, %v1168
        %v1170 = vpop.f32.mrf.mxu0
        %v1171 = vpop.f32.mrf.mxu0
        %v1172 = vadd.f32 0.0, %v1171
        %v1173 = vpop.f32.mrf.mxu0
        %1174 = vmatprep.mubr.bf16.mxu0 0
        %1175 = vmatmul.mubr.bf16.gmra.mxu0 %v1037
        %v1176 = vpop.f32.mrf.mxu0
        %v1177 = vadd.f32 0.0, %v1176
        %v1178 = vpop.f32.mrf.mxu0
        %v1179 = vpop.f32.mrf.mxu0
        %v1180 = vadd.f32 0.0, %v1179
        %v1181 = vpop.f32.mrf.mxu0
        %1182 = vmatprep.mubr.bf16.mxu0 0
        %1183 = vmatmul.mubr.bf16.gmra.mxu0 %v1040
        %v1184 = vpop.f32.mrf.mxu0
        %v1185 = vadd.f32 0.0, %v1184
        %v1186 = vpop.f32.mrf.mxu0
        %v1187 = vpop.f32.mrf.mxu0
        %v1188 = vadd.f32 0.0, %v1187
        %v1189 = vpop.f32.mrf.mxu0
        %1190 = vmatprep.mubr.bf16.mxu0 0
        %1191 = vmatmul.mubr.bf16.gmra.mxu0 %v1043
        %v1192 = vpop.f32.mrf.mxu0
        %v1193 = vadd.f32 0.0, %v1192
        %v1194 = vpop.f32.mrf.mxu0
        %v1195 = vpop.f32.mrf.mxu0
        %v1196 = vadd.f32 0.0, %v1195
        %v1197 = vpop.f32.mrf.mxu0
        %1198 = vmatprep.mubr.bf16.mxu0 0
        %1199 = vmatmul.mubr.bf16.gmra.mxu0 %v1046
        %v1200 = vpop.f32.mrf.mxu0
        %v1201 = vadd.f32 0.0, %v1200
        %v1202 = vpop.f32.mrf.mxu0
        %v1203 = vpop.f32.mrf.mxu0
        %v1204 = vadd.f32 0.0, %v1203
        %v1205 = vpop.f32.mrf.mxu0
        %1206 = vmatprep.mubr.bf16.mxu0 0
        %1207 = vmatmul.mubr.bf16.gmra.mxu0 %v1049
        %v1208 = vpop.f32.mrf.mxu0
        %v1209 = vadd.f32 0.0, %v1208
        %v1210 = vpop.f32.mrf.mxu0
        %v1211 = vpop.f32.mrf.mxu0
        %v1212 = vadd.f32 0.0, %v1211
        %v1213 = vpop.f32.mrf.mxu0
        %1214 = vdwg.mxu0
        %v1215 = vadd.f32 %v816, %v1089
        %v1216 = vadd.f32 %v819, %v1092
        %v1217 = vadd.f32 %v824, %v1097
        %v1218 = vadd.f32 %v827, %v1100
        %v1219 = vadd.f32 %v832, %v1105
        %v1220 = vadd.f32 %v835, %v1108
        %v1221 = vadd.f32 %v840, %v1113
        %v1222 = vadd.f32 %v843, %v1116
        %v1223 = vadd.f32 %v848, %v1121
        %v1224 = vadd.f32 %v851, %v1124
        %v1225 = vadd.f32 %v856, %v1129
        %v1226 = vadd.f32 %v859, %v1132
        %v1227 = vadd.f32 %v864, %v1137
        %v1228 = vadd.f32 %v867, %v1140
        %v1229 = vadd.f32 %v872, %v1145
        %v1230 = vadd.f32 %v875, %v1148
        %v1231 = vadd.f32 %v880, %v1153
        %v1232 = vadd.f32 %v883, %v1156
        %v1233 = vadd.f32 %v888, %v1161
        %v1234 = vadd.f32 %v891, %v1164
        %v1235 = vadd.f32 %v896, %v1169
        %v1236 = vadd.f32 %v899, %v1172
        %v1237 = vadd.f32 %v904, %v1177
        %v1238 = vadd.f32 %v907, %v1180
        %v1239 = vadd.f32 %v912, %v1185
        %v1240 = vadd.f32 %v915, %v1188
        %v1241 = vadd.f32 %v920, %v1193
        %v1242 = vadd.f32 %v923, %v1196
        %v1243 = vadd.f32 %v928, %v1201
        %v1244 = vadd.f32 %v931, %v1204
        %v1245 = vadd.f32 %v936, %v1209
        %v1246 = vadd.f32 %v939, %v1212
        %s1247 = scalar_lea.vmem %s1, 36
        %v1248 = vld [vmem:[%s1247] sm:$0xf]
        %v1249 = vld [vmem:[%s1247 + $0x4] sm:$0xf]
        %v1250 = vld [vmem:[%s1247 + $0x8] sm:$0x1]
        %vm1251 = vsmask.f32 6400
        %v1252 = vrot.slane %v388, 1
        %v1253 = vrot.slane %v390, 2
        %v1254 = vor.u32 %v1252, %v1253
        %v1255 = vrot.slane %v399, 1
        %v1256 = vrot.slane %v395, 2
        %v1257 = vor.u32 %v1255, %v1256
        %v1258 = vsel %vm1251, %v1254, %v1257
        %v1259 = vrot.slane %v407, 1
        %v1260 = vrot.slane %v403, 2
        %v1261 = vor.u32 %v1259, %v1260
        %v1262 = vsel %vm1251, %v1257, %v1261
        %v1263 = vrot.slane %v415, 1
        %v1264 = vrot.slane %v411, 2
        %v1265 = vor.u32 %v1263, %v1264
        %v1266 = vsel %vm1251, %v1261, %v1265
        %v1267 = vrot.slane %v423, 1
        %v1268 = vrot.slane %v419, 2
        %v1269 = vor.u32 %v1267, %v1268
        %v1270 = vsel %vm1251, %v1265, %v1269
        %v1271 = vrot.slane %v431, 1
        %v1272 = vrot.slane %v427, 2
        %v1273 = vor.u32 %v1271, %v1272
        %v1274 = vsel %vm1251, %v1269, %v1273
        %v1275 = vrot.slane %v439, 1
        %v1276 = vrot.slane %v435, 2
        %v1277 = vor.u32 %v1275, %v1276
        %v1278 = vsel %vm1251, %v1273, %v1277
        %v1279 = vrot.slane %v447, 1
        %v1280 = vrot.slane %v443, 2
        %v1281 = vor.u32 %v1279, %v1280
        %v1282 = vsel %vm1251, %v1277, %v1281
        %v1283 = vrot.slane %v455, 1
        %v1284 = vrot.slane %v451, 2
        %v1285 = vor.u32 %v1283, %v1284
        %v1286 = vsel %vm1251, %v1281, %v1285
        %v1287 = vrot.slane %v463, 1
        %v1288 = vrot.slane %v459, 2
        %v1289 = vor.u32 %v1287, %v1288
        %v1290 = vsel %vm1251, %v1285, %v1289
        %v1291 = vrot.slane %v471, 1
        %v1292 = vrot.slane %v467, 2
        %v1293 = vor.u32 %v1291, %v1292
        %v1294 = vsel %vm1251, %v1289, %v1293
        %v1295 = vrot.slane %v479, 1
        %v1296 = vrot.slane %v475, 2
        %v1297 = vor.u32 %v1295, %v1296
        %v1298 = vsel %vm1251, %v1293, %v1297
        %v1299 = vrot.slane %v487, 1
        %v1300 = vrot.slane %v483, 2
        %v1301 = vor.u32 %v1299, %v1300
        %v1302 = vsel %vm1251, %v1297, %v1301
        %v1303 = vrot.slane %v495, 1
        %v1304 = vrot.slane %v491, 2
        %v1305 = vor.u32 %v1303, %v1304
        %v1306 = vsel %vm1251, %v1301, %v1305
        %v1307 = vrot.slane %v503, 1
        %v1308 = vrot.slane %v499, 2
        %v1309 = vor.u32 %v1307, %v1308
        %v1310 = vsel %vm1251, %v1305, %v1309
        %v1311 = vrot.slane %v511, 1
        %v1312 = vrot.slane %v507, 2
        %v1313 = vor.u32 %v1311, %v1312
        %v1314 = vsel %vm1251, %v1309, %v1313
        %v1318 = vunpack.c.l.b16 %v1248
        %v1319 = vunpack.c.l.b16 %v1249
        %v1320 = vunpack.c.l.b16 %v1250
        %v1321 = vpack.c.b16 %v1319, %v1318
        %v1322 = vpack.c.b16 %v1320, %v1320
        %v1325 = vsel %vm523, %v1258, 0
        %v1328 = vsel %vm523, %v1262, 0
        %v1331 = vsel %vm523, %v1266, 0
        %v1334 = vsel %vm523, %v1270, 0
        %v1337 = vsel %vm523, %v1274, 0
        %v1340 = vsel %vm523, %v1278, 0
        %v1343 = vsel %vm523, %v1282, 0
        %v1346 = vsel %vm523, %v1286, 0
        %v1349 = vsel %vm523, %v1290, 0
        %v1352 = vsel %vm523, %v1294, 0
        %v1355 = vsel %vm523, %v1298, 0
        %v1358 = vsel %vm523, %v1302, 0
        %v1361 = vsel %vm523, %v1306, 0
        %v1364 = vsel %vm523, %v1310, 0
        %v1367 = vsel %vm523, %v1314, 0
        %v1370 = vsel %vm523, %v1313, 0
        %v1373 = vsel %vm572, %v1322, 0
        %1375 = vmatprep.subr.bf16.mxu0 0
        %1376 = vmatpush1.bf16.msra.mxu0 0
        %1377 = vmatprep.subr.bf16.mxu0 0
        %1378 = vmatpush1.bf16.msra.mxu0 0
        %1379 = vmatprep.subr.bf16.mxu0 0
        %1380 = vmatpush1.bf16.msra.mxu0 0
        %1381 = vmatprep.subr.bf16.mxu0 0
        %1382 = vmatpush1.bf16.msra.mxu0 0
        %1383 = vmatprep.subr.bf16.mxu0 0
        %1384 = vmatpush1.bf16.msra.mxu0 0
        %1385 = vmatprep.subr.bf16.mxu0 0
        %1386 = vmatpush1.bf16.msra.mxu0 0
        %1387 = vmatprep.subr.bf16.mxu0 0
        %1388 = vmatpush1.bf16.msra.mxu0 %v1373
        %1389 = vmatprep.subr.bf16.mxu0 0
        %1390 = vmatpush1.bf16.msra.mxu0 %v1321
        %1391 = vmatprep.subr.bf16.mxu0 0
        %1392 = vmatpush2.bf16.msra.mxu0 0
        %1393 = vmatprep.subr.bf16.mxu0 0
        %1394 = vmatpush2.bf16.msra.mxu0 0
        %1395 = vmatprep.subr.bf16.mxu0 0
        %1396 = vmatpush2.bf16.msra.mxu0 0
        %1397 = vmatprep.subr.bf16.mxu0 0
        %1398 = vmatpush2.bf16.msra.mxu0 0
        %1399 = vmatprep.subr.bf16.mxu0 0
        %1400 = vmatpush2.bf16.msra.mxu0 0
        %1401 = vmatprep.subr.bf16.mxu0 0
        %1402 = vmatpush2.bf16.msra.mxu0 0
        %1403 = vmatprep.subr.bf16.mxu0 0
        %1404 = vmatpush2.bf16.msra.mxu0 0
        %1405 = vmatprep.subr.bf16.mxu0 0
        %1406 = vmatpush2.bf16.msra.mxu0 0
        %1407 = vmatprep.mubr.bf16.mxu0 0
        %1408 = vmatmul.mubr.bf16.gmra.mxu0 %v1325
        %v1409 = vpop.f32.mrf.mxu0
        %v1410 = vadd.f32 0.0, %v1409
        %v1411 = vpop.f32.mrf.mxu0
        %v1412 = vpop.f32.mrf.mxu0
        %v1413 = vadd.f32 0.0, %v1412
        %v1414 = vpop.f32.mrf.mxu0
        %1415 = vmatprep.mubr.bf16.mxu0 0
        %1416 = vmatmul.mubr.bf16.gmra.mxu0 %v1328
        %v1417 = vpop.f32.mrf.mxu0
        %v1418 = vadd.f32 0.0, %v1417
        %v1419 = vpop.f32.mrf.mxu0
        %v1420 = vpop.f32.mrf.mxu0
        %v1421 = vadd.f32 0.0, %v1420
        %v1422 = vpop.f32.mrf.mxu0
        %1423 = vmatprep.mubr.bf16.mxu0 0
        %1424 = vmatmul.mubr.bf16.gmra.mxu0 %v1331
        %v1425 = vpop.f32.mrf.mxu0
        %v1426 = vadd.f32 0.0, %v1425
        %v1427 = vpop.f32.mrf.mxu0
        %v1428 = vpop.f32.mrf.mxu0
        %v1429 = vadd.f32 0.0, %v1428
        %v1430 = vpop.f32.mrf.mxu0
        %1431 = vmatprep.mubr.bf16.mxu0 0
        %1432 = vmatmul.mubr.bf16.gmra.mxu0 %v1334
        %v1433 = vpop.f32.mrf.mxu0
        %v1434 = vadd.f32 0.0, %v1433
        %v1435 = vpop.f32.mrf.mxu0
        %v1436 = vpop.f32.mrf.mxu0
        %v1437 = vadd.f32 0.0, %v1436
        %v1438 = vpop.f32.mrf.mxu0
        %1439 = vmatprep.mubr.bf16.mxu0 0
        %1440 = vmatmul.mubr.bf16.gmra.mxu0 %v1337
        %v1441 = vpop.f32.mrf.mxu0
        %v1442 = vadd.f32 0.0, %v1441
        %v1443 = vpop.f32.mrf.mxu0
        %v1444 = vpop.f32.mrf.mxu0
        %v1445 = vadd.f32 0.0, %v1444
        %v1446 = vpop.f32.mrf.mxu0
        %1447 = vmatprep.mubr.bf16.mxu0 0
        %1448 = vmatmul.mubr.bf16.gmra.mxu0 %v1340
        %v1449 = vpop.f32.mrf.mxu0
        %v1450 = vadd.f32 0.0, %v1449
        %v1451 = vpop.f32.mrf.mxu0
        %v1452 = vpop.f32.mrf.mxu0
        %v1453 = vadd.f32 0.0, %v1452
        %v1454 = vpop.f32.mrf.mxu0
        %1455 = vmatprep.mubr.bf16.mxu0 0
        %1456 = vmatmul.mubr.bf16.gmra.mxu0 %v1343
        %v1457 = vpop.f32.mrf.mxu0
        %v1458 = vadd.f32 0.0, %v1457
        %v1459 = vpop.f32.mrf.mxu0
        %v1460 = vpop.f32.mrf.mxu0
        %v1461 = vadd.f32 0.0, %v1460
        %v1462 = vpop.f32.mrf.mxu0
        %1463 = vmatprep.mubr.bf16.mxu0 0
        %1464 = vmatmul.mubr.bf16.gmra.mxu0 %v1346
        %v1465 = vpop.f32.mrf.mxu0
        %v1466 = vadd.f32 0.0, %v1465
        %v1467 = vpop.f32.mrf.mxu0
        %v1468 = vpop.f32.mrf.mxu0
        %v1469 = vadd.f32 0.0, %v1468
        %v1470 = vpop.f32.mrf.mxu0
        %1471 = vmatprep.mubr.bf16.mxu0 0
        %1472 = vmatmul.mubr.bf16.gmra.mxu0 %v1349
        %v1473 = vpop.f32.mrf.mxu0
        %v1474 = vadd.f32 0.0, %v1473
        %v1475 = vpop.f32.mrf.mxu0
        %v1476 = vpop.f32.mrf.mxu0
        %v1477 = vadd.f32 0.0, %v1476
        %v1478 = vpop.f32.mrf.mxu0
        %1479 = vmatprep.mubr.bf16.mxu0 0
        %1480 = vmatmul.mubr.bf16.gmra.mxu0 %v1352
        %v1481 = vpop.f32.mrf.mxu0
        %v1482 = vadd.f32 0.0, %v1481
        %v1483 = vpop.f32.mrf.mxu0
        %v1484 = vpop.f32.mrf.mxu0
        %v1485 = vadd.f32 0.0, %v1484
        %v1486 = vpop.f32.mrf.mxu0
        %1487 = vmatprep.mubr.bf16.mxu0 0
        %1488 = vmatmul.mubr.bf16.gmra.mxu0 %v1355
        %v1489 = vpop.f32.mrf.mxu0
        %v1490 = vadd.f32 0.0, %v1489
        %v1491 = vpop.f32.mrf.mxu0
        %v1492 = vpop.f32.mrf.mxu0
        %v1493 = vadd.f32 0.0, %v1492
        %v1494 = vpop.f32.mrf.mxu0
        %1495 = vmatprep.mubr.bf16.mxu0 0
        %1496 = vmatmul.mubr.bf16.gmra.mxu0 %v1358
        %v1497 = vpop.f32.mrf.mxu0
        %v1498 = vadd.f32 0.0, %v1497
        %v1499 = vpop.f32.mrf.mxu0
        %v1500 = vpop.f32.mrf.mxu0
        %v1501 = vadd.f32 0.0, %v1500
        %v1502 = vpop.f32.mrf.mxu0
        %1503 = vmatprep.mubr.bf16.mxu0 0
        %1504 = vmatmul.mubr.bf16.gmra.mxu0 %v1361
        %v1505 = vpop.f32.mrf.mxu0
        %v1506 = vadd.f32 0.0, %v1505
        %v1507 = vpop.f32.mrf.mxu0
        %v1508 = vpop.f32.mrf.mxu0
        %v1509 = vadd.f32 0.0, %v1508
        %v1510 = vpop.f32.mrf.mxu0
        %1511 = vmatprep.mubr.bf16.mxu0 0
        %1512 = vmatmul.mubr.bf16.gmra.mxu0 %v1364
        %v1513 = vpop.f32.mrf.mxu0
        %v1514 = vadd.f32 0.0, %v1513
        %v1515 = vpop.f32.mrf.mxu0
        %v1516 = vpop.f32.mrf.mxu0
        %v1517 = vadd.f32 0.0, %v1516
        %v1518 = vpop.f32.mrf.mxu0
        %1519 = vmatprep.mubr.bf16.mxu0 0
        %1520 = vmatmul.mubr.bf16.gmra.mxu0 %v1367
        %v1521 = vpop.f32.mrf.mxu0
        %v1522 = vadd.f32 0.0, %v1521
        %v1523 = vpop.f32.mrf.mxu0
        %v1524 = vpop.f32.mrf.mxu0
        %v1525 = vadd.f32 0.0, %v1524
        %v1526 = vpop.f32.mrf.mxu0
        %1527 = vmatprep.mubr.bf16.mxu0 0
        %1528 = vmatmul.mubr.bf16.gmra.mxu0 %v1370
        %v1529 = vpop.f32.mrf.mxu0
        %v1530 = vadd.f32 0.0, %v1529
        %v1531 = vpop.f32.mrf.mxu0
        %v1532 = vpop.f32.mrf.mxu0
        %v1533 = vadd.f32 0.0, %v1532
        %v1534 = vpop.f32.mrf.mxu0
        %1535 = vdwg.mxu0
        %v1536 = vadd.f32 %v1215, %v1410
        %v1537 = vadd.f32 %v1216, %v1413
        %v1538 = vadd.f32 %v1217, %v1418
        %v1539 = vadd.f32 %v1218, %v1421
        %v1540 = vadd.f32 %v1219, %v1426
        %v1541 = vadd.f32 %v1220, %v1429
        %v1542 = vadd.f32 %v1221, %v1434
        %v1543 = vadd.f32 %v1222, %v1437
        %v1544 = vadd.f32 %v1223, %v1442
        %v1545 = vadd.f32 %v1224, %v1445
        %v1546 = vadd.f32 %v1225, %v1450
        %v1547 = vadd.f32 %v1226, %v1453
        %v1548 = vadd.f32 %v1227, %v1458
        %v1549 = vadd.f32 %v1228, %v1461
        %v1550 = vadd.f32 %v1229, %v1466
        %v1551 = vadd.f32 %v1230, %v1469
        %v1552 = vadd.f32 %v1231, %v1474
        %v1553 = vadd.f32 %v1232, %v1477
        %v1554 = vadd.f32 %v1233, %v1482
        %v1555 = vadd.f32 %v1234, %v1485
        %v1556 = vadd.f32 %v1235, %v1490
        %v1557 = vadd.f32 %v1236, %v1493
        %v1558 = vadd.f32 %v1237, %v1498
        %v1559 = vadd.f32 %v1238, %v1501
        %v1560 = vadd.f32 %v1239, %v1506
        %v1561 = vadd.f32 %v1240, %v1509
        %v1562 = vadd.f32 %v1241, %v1514
        %v1563 = vadd.f32 %v1242, %v1517
        %v1564 = vadd.f32 %v1243, %v1522
        %v1565 = vadd.f32 %v1244, %v1525
        %v1566 = vadd.f32 %v1245, %v1530
        %v1567 = vadd.f32 %v1246, %v1533
        %s1568 = scalar_lea.vmem %s1, 48
        %v1569 = vld [vmem:[%s1568] sm:$0xf]
        %v1570 = vld [vmem:[%s1568 + $0x4] sm:$0xf]
        %v1571 = vld [vmem:[%s1568 + $0x8] sm:$0x1]
        %vm1572 = vcmask 1045504
        %v1573 = vrot.slane %v363, 2
        %v1574 = vrot.slane %v364, 2
        %v1575 = vsel %vm1572, %v1573, %v1574
        %v1576 = vrot.slane %v365, 2
        %v1577 = vsel %vm1572, %v1574, %v1576
        %v1578 = vrot.slane %v366, 2
        %v1579 = vsel %vm1572, %v1576, %v1578
        %v1580 = vrot.slane %v367, 2
        %v1581 = vsel %vm1572, %v1578, %v1580
        %v1582 = vrot.slane %v368, 2
        %v1583 = vsel %vm1572, %v1580, %v1582
        %v1584 = vrot.slane %v369, 2
        %v1585 = vsel %vm1572, %v1582, %v1584
        %v1586 = vrot.slane %v370, 2
        %v1587 = vsel %vm1572, %v1584, %v1586
        %v1588 = vrot.slane %v371, 2
        %v1589 = vsel %vm1572, %v1586, %v1588
        %v1590 = vrot.slane %v372, 2
        %v1591 = vsel %vm1572, %v1588, %v1590
        %v1592 = vrot.slane %v373, 2
        %v1593 = vsel %vm1572, %v1590, %v1592
        %v1594 = vrot.slane %v374, 2
        %v1595 = vsel %vm1572, %v1592, %v1594
        %v1596 = vrot.slane %v375, 2
        %v1597 = vsel %vm1572, %v1594, %v1596
        %v1598 = vrot.slane %v376, 2
        %v1599 = vsel %vm1572, %v1596, %v1598
        %v1600 = vrot.slane %v377, 2
        %v1601 = vsel %vm1572, %v1598, %v1600
        %v1602 = vrot.slane %v378, 2
        %v1603 = vsel %vm1572, %v1600, %v1602
        %v1607 = vunpack.c.l.b16 %v1569
        %v1608 = vunpack.c.l.b16 %v1570
        %v1609 = vunpack.c.l.b16 %v1571
        %v1610 = vpack.c.b16 %v1608, %v1607
        %v1611 = vpack.c.b16 %v1609, %v1609
        %v1614 = vsel %vm523, %v1575, 0
        %v1617 = vsel %vm523, %v1577, 0
        %v1620 = vsel %vm523, %v1579, 0
        %v1623 = vsel %vm523, %v1581, 0
        %v1626 = vsel %vm523, %v1583, 0
        %v1629 = vsel %vm523, %v1585, 0
        %v1632 = vsel %vm523, %v1587, 0
        %v1635 = vsel %vm523, %v1589, 0
        %v1638 = vsel %vm523, %v1591, 0
        %v1641 = vsel %vm523, %v1593, 0
        %v1644 = vsel %vm523, %v1595, 0
        %v1647 = vsel %vm523, %v1597, 0
        %v1650 = vsel %vm523, %v1599, 0
        %v1653 = vsel %vm523, %v1601, 0
        %v1656 = vsel %vm523, %v1603, 0
        %v1659 = vsel %vm523, %v1602, 0
        %v1662 = vsel %vm572, %v1611, 0
        %1664 = vmatprep.subr.bf16.mxu0 0
        %1665 = vmatpush1.bf16.msra.mxu0 0
        %1666 = vmatprep.subr.bf16.mxu0 0
        %1667 = vmatpush1.bf16.msra.mxu0 0
        %1668 = vmatprep.subr.bf16.mxu0 0
        %1669 = vmatpush1.bf16.msra.mxu0 0
        %1670 = vmatprep.subr.bf16.mxu0 0
        %1671 = vmatpush1.bf16.msra.mxu0 0
        %1672 = vmatprep.subr.bf16.mxu0 0
        %1673 = vmatpush1.bf16.msra.mxu0 0
        %1674 = vmatprep.subr.bf16.mxu0 0
        %1675 = vmatpush1.bf16.msra.mxu0 0
        %1676 = vmatprep.subr.bf16.mxu0 0
        %1677 = vmatpush1.bf16.msra.mxu0 %v1662
        %1678 = vmatprep.subr.bf16.mxu0 0
        %1679 = vmatpush1.bf16.msra.mxu0 %v1610
        %1680 = vmatprep.subr.bf16.mxu0 0
        %1681 = vmatpush2.bf16.msra.mxu0 0
        %1682 = vmatprep.subr.bf16.mxu0 0
        %1683 = vmatpush2.bf16.msra.mxu0 0
        %1684 = vmatprep.subr.bf16.mxu0 0
        %1685 = vmatpush2.bf16.msra.mxu0 0
        %1686 = vmatprep.subr.bf16.mxu0 0
        %1687 = vmatpush2.bf16.msra.mxu0 0
        %1688 = vmatprep.subr.bf16.mxu0 0
        %1689 = vmatpush2.bf16.msra.mxu0 0
        %1690 = vmatprep.subr.bf16.mxu0 0
        %1691 = vmatpush2.bf16.msra.mxu0 0
        %1692 = vmatprep.subr.bf16.mxu0 0
        %1693 = vmatpush2.bf16.msra.mxu0 0
        %1694 = vmatprep.subr.bf16.mxu0 0
        %1695 = vmatpush2.bf16.msra.mxu0 0
        %1696 = vmatprep.mubr.bf16.mxu0 0
        %1697 = vmatmul.mubr.bf16.gmra.mxu0 %v1614
        %v1698 = vpop.f32.mrf.mxu0
        %v1699 = vadd.f32 0.0, %v1698
        %v1700 = vpop.f32.mrf.mxu0
        %v1701 = vpop.f32.mrf.mxu0
        %v1702 = vadd.f32 0.0, %v1701
        %v1703 = vpop.f32.mrf.mxu0
        %1704 = vmatprep.mubr.bf16.mxu0 0
        %1705 = vmatmul.mubr.bf16.gmra.mxu0 %v1617
        %v1706 = vpop.f32.mrf.mxu0
        %v1707 = vadd.f32 0.0, %v1706
        %v1708 = vpop.f32.mrf.mxu0
        %v1709 = vpop.f32.mrf.mxu0
        %v1710 = vadd.f32 0.0, %v1709
        %v1711 = vpop.f32.mrf.mxu0
        %1712 = vmatprep.mubr.bf16.mxu0 0
        %1713 = vmatmul.mubr.bf16.gmra.mxu0 %v1620
        %v1714 = vpop.f32.mrf.mxu0
        %v1715 = vadd.f32 0.0, %v1714
        %v1716 = vpop.f32.mrf.mxu0
        %v1717 = vpop.f32.mrf.mxu0
        %v1718 = vadd.f32 0.0, %v1717
        %v1719 = vpop.f32.mrf.mxu0
        %1720 = vmatprep.mubr.bf16.mxu0 0
        %1721 = vmatmul.mubr.bf16.gmra.mxu0 %v1623
        %v1722 = vpop.f32.mrf.mxu0
        %v1723 = vadd.f32 0.0, %v1722
        %v1724 = vpop.f32.mrf.mxu0
        %v1725 = vpop.f32.mrf.mxu0
        %v1726 = vadd.f32 0.0, %v1725
        %v1727 = vpop.f32.mrf.mxu0
        %1728 = vmatprep.mubr.bf16.mxu0 0
        %1729 = vmatmul.mubr.bf16.gmra.mxu0 %v1626
        %v1730 = vpop.f32.mrf.mxu0
        %v1731 = vadd.f32 0.0, %v1730
        %v1732 = vpop.f32.mrf.mxu0
        %v1733 = vpop.f32.mrf.mxu0
        %v1734 = vadd.f32 0.0, %v1733
        %v1735 = vpop.f32.mrf.mxu0
        %1736 = vmatprep.mubr.bf16.mxu0 0
        %1737 = vmatmul.mubr.bf16.gmra.mxu0 %v1629
        %v1738 = vpop.f32.mrf.mxu0
        %v1739 = vadd.f32 0.0, %v1738
        %v1740 = vpop.f32.mrf.mxu0
        %v1741 = vpop.f32.mrf.mxu0
        %v1742 = vadd.f32 0.0, %v1741
        %v1743 = vpop.f32.mrf.mxu0
        %1744 = vmatprep.mubr.bf16.mxu0 0
        %1745 = vmatmul.mubr.bf16.gmra.mxu0 %v1632
        %v1746 = vpop.f32.mrf.mxu0
        %v1747 = vadd.f32 0.0, %v1746
        %v1748 = vpop.f32.mrf.mxu0
        %v1749 = vpop.f32.mrf.mxu0
        %v1750 = vadd.f32 0.0, %v1749
        %v1751 = vpop.f32.mrf.mxu0
        %1752 = vmatprep.mubr.bf16.mxu0 0
        %1753 = vmatmul.mubr.bf16.gmra.mxu0 %v1635
        %v1754 = vpop.f32.mrf.mxu0
        %v1755 = vadd.f32 0.0, %v1754
        %v1756 = vpop.f32.mrf.mxu0
        %v1757 = vpop.f32.mrf.mxu0
        %v1758 = vadd.f32 0.0, %v1757
        %v1759 = vpop.f32.mrf.mxu0
        %1760 = vmatprep.mubr.bf16.mxu0 0
        %1761 = vmatmul.mubr.bf16.gmra.mxu0 %v1638
        %v1762 = vpop.f32.mrf.mxu0
        %v1763 = vadd.f32 0.0, %v1762
        %v1764 = vpop.f32.mrf.mxu0
        %v1765 = vpop.f32.mrf.mxu0
        %v1766 = vadd.f32 0.0, %v1765
        %v1767 = vpop.f32.mrf.mxu0
        %1768 = vmatprep.mubr.bf16.mxu0 0
        %1769 = vmatmul.mubr.bf16.gmra.mxu0 %v1641
        %v1770 = vpop.f32.mrf.mxu0
        %v1771 = vadd.f32 0.0, %v1770
        %v1772 = vpop.f32.mrf.mxu0
        %v1773 = vpop.f32.mrf.mxu0
        %v1774 = vadd.f32 0.0, %v1773
        %v1775 = vpop.f32.mrf.mxu0
        %1776 = vmatprep.mubr.bf16.mxu0 0
        %1777 = vmatmul.mubr.bf16.gmra.mxu0 %v1644
        %v1778 = vpop.f32.mrf.mxu0
        %v1779 = vadd.f32 0.0, %v1778
        %v1780 = vpop.f32.mrf.mxu0
        %v1781 = vpop.f32.mrf.mxu0
        %v1782 = vadd.f32 0.0, %v1781
        %v1783 = vpop.f32.mrf.mxu0
        %1784 = vmatprep.mubr.bf16.mxu0 0
        %1785 = vmatmul.mubr.bf16.gmra.mxu0 %v1647
        %v1786 = vpop.f32.mrf.mxu0
        %v1787 = vadd.f32 0.0, %v1786
        %v1788 = vpop.f32.mrf.mxu0
        %v1789 = vpop.f32.mrf.mxu0
        %v1790 = vadd.f32 0.0, %v1789
        %v1791 = vpop.f32.mrf.mxu0
        %1792 = vmatprep.mubr.bf16.mxu0 0
        %1793 = vmatmul.mubr.bf16.gmra.mxu0 %v1650
        %v1794 = vpop.f32.mrf.mxu0
        %v1795 = vadd.f32 0.0, %v1794
        %v1796 = vpop.f32.mrf.mxu0
        %v1797 = vpop.f32.mrf.mxu0
        %v1798 = vadd.f32 0.0, %v1797
        %v1799 = vpop.f32.mrf.mxu0
        %1800 = vmatprep.mubr.bf16.mxu0 0
        %1801 = vmatmul.mubr.bf16.gmra.mxu0 %v1653
        %v1802 = vpop.f32.mrf.mxu0
        %v1803 = vadd.f32 0.0, %v1802
        %v1804 = vpop.f32.mrf.mxu0
        %v1805 = vpop.f32.mrf.mxu0
        %v1806 = vadd.f32 0.0, %v1805
        %v1807 = vpop.f32.mrf.mxu0
        %1808 = vmatprep.mubr.bf16.mxu0 0
        %1809 = vmatmul.mubr.bf16.gmra.mxu0 %v1656
        %v1810 = vpop.f32.mrf.mxu0
        %v1811 = vadd.f32 0.0, %v1810
        %v1812 = vpop.f32.mrf.mxu0
        %v1813 = vpop.f32.mrf.mxu0
        %v1814 = vadd.f32 0.0, %v1813
        %v1815 = vpop.f32.mrf.mxu0
        %1816 = vmatprep.mubr.bf16.mxu0 0
        %1817 = vmatmul.mubr.bf16.gmra.mxu0 %v1659
        %v1818 = vpop.f32.mrf.mxu0
        %v1819 = vadd.f32 0.0, %v1818
        %v1820 = vpop.f32.mrf.mxu0
        %v1821 = vpop.f32.mrf.mxu0
        %v1822 = vadd.f32 0.0, %v1821
        %v1823 = vpop.f32.mrf.mxu0
        %1824 = vdwg.mxu0
        %v1825 = vadd.f32 %v1536, %v1699
        %v1826 = vadd.f32 %v1537, %v1702
        %v1827 = vadd.f32 %v1538, %v1707
        %v1828 = vadd.f32 %v1539, %v1710
        %v1829 = vadd.f32 %v1540, %v1715
        %v1830 = vadd.f32 %v1541, %v1718
        %v1831 = vadd.f32 %v1542, %v1723
        %v1832 = vadd.f32 %v1543, %v1726
        %v1833 = vadd.f32 %v1544, %v1731
        %v1834 = vadd.f32 %v1545, %v1734
        %v1835 = vadd.f32 %v1546, %v1739
        %v1836 = vadd.f32 %v1547, %v1742
        %v1837 = vadd.f32 %v1548, %v1747
        %v1838 = vadd.f32 %v1549, %v1750
        %v1839 = vadd.f32 %v1550, %v1755
        %v1840 = vadd.f32 %v1551, %v1758
        %v1841 = vadd.f32 %v1552, %v1763
        %v1842 = vadd.f32 %v1553, %v1766
        %v1843 = vadd.f32 %v1554, %v1771
        %v1844 = vadd.f32 %v1555, %v1774
        %v1845 = vadd.f32 %v1556, %v1779
        %v1846 = vadd.f32 %v1557, %v1782
        %v1847 = vadd.f32 %v1558, %v1787
        %v1848 = vadd.f32 %v1559, %v1790
        %v1849 = vadd.f32 %v1560, %v1795
        %v1850 = vadd.f32 %v1561, %v1798
        %v1851 = vadd.f32 %v1562, %v1803
        %v1852 = vadd.f32 %v1563, %v1806
        %v1853 = vadd.f32 %v1564, %v1811
        %v1854 = vadd.f32 %v1565, %v1814
        %v1855 = vadd.f32 %v1566, %v1819
        %v1856 = vadd.f32 %v1567, %v1822
        %v1857 = vld [vmem:[%s2] sm:$0x1]
        %v1859 = vlaneseq
        %v1860 = vshrl.u32 %v1859, 7
        %v1861 = vsub.s32 0, %v1860
        %v1862 = vrot.slane %v1857, %v1861
        %v1864 = vadd.f32 %v1825, %v1862
        %v1865 = vadd.f32 %v1826, %v1862
        %v1866 = vadd.f32 %v1827, %v1862
        %v1867 = vadd.f32 %v1828, %v1862
        %v1868 = vadd.f32 %v1829, %v1862
        %v1869 = vadd.f32 %v1830, %v1862
        %v1870 = vadd.f32 %v1831, %v1862
        %v1871 = vadd.f32 %v1832, %v1862
        %v1872 = vadd.f32 %v1833, %v1862
        %v1873 = vadd.f32 %v1834, %v1862
        %v1874 = vadd.f32 %v1835, %v1862
        %v1875 = vadd.f32 %v1836, %v1862
        %v1876 = vadd.f32 %v1837, %v1862
        %v1877 = vadd.f32 %v1838, %v1862
        %v1878 = vadd.f32 %v1839, %v1862
        %v1879 = vadd.f32 %v1840, %v1862
        %v1880 = vadd.f32 %v1841, %v1862
        %v1881 = vadd.f32 %v1842, %v1862
        %v1882 = vadd.f32 %v1843, %v1862
        %v1883 = vadd.f32 %v1844, %v1862
        %v1884 = vadd.f32 %v1845, %v1862
        %v1885 = vadd.f32 %v1846, %v1862
        %v1886 = vadd.f32 %v1847, %v1862
        %v1887 = vadd.f32 %v1848, %v1862
        %v1888 = vadd.f32 %v1849, %v1862
        %v1889 = vadd.f32 %v1850, %v1862
        %v1890 = vadd.f32 %v1851, %v1862
        %v1891 = vadd.f32 %v1852, %v1862
        %v1892 = vadd.f32 %v1853, %v1862
        %v1893 = vadd.f32 %v1854, %v1862
        %v1894 = vadd.f32 %v1855, %v1862
        %v1895 = vadd.f32 %v1856, %v1862
        %v1896 = vmax.f32 %v1864, 0.0
        %v1897 = vmax.f32 %v1865, 0.0
        %v1898 = vmax.f32 %v1866, 0.0
        %v1899 = vmax.f32 %v1867, 0.0
        %v1900 = vmax.f32 %v1868, 0.0
        %v1901 = vmax.f32 %v1869, 0.0
        %v1902 = vmax.f32 %v1870, 0.0
        %v1903 = vmax.f32 %v1871, 0.0
        %v1904 = vmax.f32 %v1872, 0.0
        %v1905 = vmax.f32 %v1873, 0.0
        %v1906 = vmax.f32 %v1874, 0.0
        %v1907 = vmax.f32 %v1875, 0.0
        %v1908 = vmax.f32 %v1876, 0.0
        %v1909 = vmax.f32 %v1877, 0.0
        %v1910 = vmax.f32 %v1878, 0.0
        %v1911 = vmax.f32 %v1879, 0.0
        %v1912 = vmax.f32 %v1880, 0.0
        %v1913 = vmax.f32 %v1881, 0.0
        %v1914 = vmax.f32 %v1882, 0.0
        %v1915 = vmax.f32 %v1883, 0.0
        %v1916 = vmax.f32 %v1884, 0.0
        %v1917 = vmax.f32 %v1885, 0.0
        %v1918 = vmax.f32 %v1886, 0.0
        %v1919 = vmax.f32 %v1887, 0.0
        %v1920 = vmax.f32 %v1888, 0.0
        %v1921 = vmax.f32 %v1889, 0.0
        %v1922 = vmax.f32 %v1890, 0.0
        %v1923 = vmax.f32 %v1891, 0.0
        %v1924 = vmax.f32 %v1892, 0.0
        %v1925 = vmax.f32 %v1893, 0.0
        %v1926 = vmax.f32 %v1894, 0.0
        %v1927 = vmax.f32 %v1895, 0.0
        %v1928 = vpack.c.bf16 %v1897, %v1896
        %v1929 = vpack.c.bf16 %v1899, %v1898
        %v1930 = vpack.c.bf16 %v1901, %v1900
        %v1931 = vpack.c.bf16 %v1903, %v1902
        %v1932 = vpack.c.bf16 %v1905, %v1904
        %v1933 = vpack.c.bf16 %v1907, %v1906
        %v1934 = vpack.c.bf16 %v1909, %v1908
        %v1935 = vpack.c.bf16 %v1911, %v1910
        %v1936 = vpack.c.bf16 %v1913, %v1912
        %v1937 = vpack.c.bf16 %v1915, %v1914
        %v1938 = vpack.c.bf16 %v1917, %v1916
        %v1939 = vpack.c.bf16 %v1919, %v1918
        %v1940 = vpack.c.bf16 %v1921, %v1920
        %v1941 = vpack.c.bf16 %v1923, %v1922
        %v1942 = vpack.c.bf16 %v1925, %v1924
        %v1943 = vpack.c.bf16 %v1926, %v1926
        %v1944 = vld [vmem:[%s3] sm:$0xf]
        %v1945 = vld [vmem:[%s3 + $0x4] sm:$0xf]
        %v1946 = vld [vmem:[%s3 + $0x8] sm:$0xf]
        %v1947 = vld [vmem:[%s3 + $0xc] sm:$0xf]
        %v1948 = vld [vmem:[%s3 + $0x10] sm:$0xf]
        %v1949 = vld [vmem:[%s3 + $0x14] sm:$0xf]
        %v1950 = vld [vmem:[%s3 + $0x18] sm:$0xf]
        %v1951 = vld [vmem:[%s3 + $0x1c] sm:$0xf]
        %v1952 = vpack.c.bf16 %v1927, %v1926
        %s1953 = scalar_lea.vmem %s3, 32
        %v1954 = vld [vmem:[%s1953] sm:$0xf]
        %v1955 = vld [vmem:[%s1953 + $0x4] sm:$0xf]
        %v1956 = vld [vmem:[%s1953 + $0x8] sm:$0xf]
        %v1957 = vld [vmem:[%s1953 + $0xc] sm:$0xf]
        %v1958 = vld [vmem:[%s1953 + $0x10] sm:$0xf]
        %v1959 = vld [vmem:[%s1953 + $0x14] sm:$0xf]
        %v1960 = vld [vmem:[%s1953 + $0x18] sm:$0xf]
        %v1961 = vld [vmem:[%s1953 + $0x1c] sm:$0xf]
        %v1963 = vshrl.u32 %v1928, 16
        %v1965 = vshll.u32 %v1928, 16
        %v1967 = vrot.slane %v1965, 1
        %v1968 = vor.u32 %v1963, %v1967
        %v1970 = vshll.u32 %v1929, 16
        %v1972 = vrot.slane %v1970, 1
        %v1973 = vsel %vm386, %v1968, %v1972
        %v1974 = vshrl.u32 %v1929, 16
        %v1976 = vor.u32 %v1974, %v1972
        %v1978 = vshll.u32 %v1930, 16
        %v1980 = vrot.slane %v1978, 1
        %v1981 = vsel %vm386, %v1976, %v1980
        %v1982 = vshrl.u32 %v1930, 16
        %v1984 = vor.u32 %v1982, %v1980
        %v1986 = vshll.u32 %v1931, 16
        %v1988 = vrot.slane %v1986, 1
        %v1989 = vsel %vm386, %v1984, %v1988
        %v1990 = vshrl.u32 %v1931, 16
        %v1992 = vor.u32 %v1990, %v1988
        %v1994 = vshll.u32 %v1932, 16
        %v1996 = vrot.slane %v1994, 1
        %v1997 = vsel %vm386, %v1992, %v1996
        %v1998 = vshrl.u32 %v1932, 16
        %v2000 = vor.u32 %v1998, %v1996
        %v2002 = vshll.u32 %v1933, 16
        %v2004 = vrot.slane %v2002, 1
        %v2005 = vsel %vm386, %v2000, %v2004
        %v2006 = vshrl.u32 %v1933, 16
        %v2008 = vor.u32 %v2006, %v2004
        %v2010 = vshll.u32 %v1934, 16
        %v2012 = vrot.slane %v2010, 1
        %v2013 = vsel %vm386, %v2008, %v2012
        %v2014 = vshrl.u32 %v1934, 16
        %v2016 = vor.u32 %v2014, %v2012
        %v2018 = vshll.u32 %v1935, 16
        %v2020 = vrot.slane %v2018, 1
        %v2021 = vsel %vm386, %v2016, %v2020
        %v2022 = vshrl.u32 %v1935, 16
        %v2024 = vor.u32 %v2022, %v2020
        %v2026 = vshll.u32 %v1936, 16
        %v2028 = vrot.slane %v2026, 1
        %v2029 = vsel %vm386, %v2024, %v2028
        %v2030 = vshrl.u32 %v1936, 16
        %v2032 = vor.u32 %v2030, %v2028
        %v2034 = vshll.u32 %v1937, 16
        %v2036 = vrot.slane %v2034, 1
        %v2037 = vsel %vm386, %v2032, %v2036
        %v2038 = vshrl.u32 %v1937, 16
        %v2040 = vor.u32 %v2038, %v2036
        %v2042 = vshll.u32 %v1938, 16
        %v2044 = vrot.slane %v2042, 1
        %v2045 = vsel %vm386, %v2040, %v2044
        %v2046 = vshrl.u32 %v1938, 16
        %v2048 = vor.u32 %v2046, %v2044
        %v2050 = vshll.u32 %v1939, 16
        %v2052 = vrot.slane %v2050, 1
        %v2053 = vsel %vm386, %v2048, %v2052
        %v2054 = vshrl.u32 %v1939, 16
        %v2056 = vor.u32 %v2054, %v2052
        %v2058 = vshll.u32 %v1940, 16
        %v2060 = vrot.slane %v2058, 1
        %v2061 = vsel %vm386, %v2056, %v2060
        %v2062 = vshrl.u32 %v1940, 16
        %v2064 = vor.u32 %v2062, %v2060
        %v2066 = vshll.u32 %v1941, 16
        %v2068 = vrot.slane %v2066, 1
        %v2069 = vsel %vm386, %v2064, %v2068
        %v2070 = vshrl.u32 %v1941, 16
        %v2072 = vor.u32 %v2070, %v2068
        %v2074 = vshll.u32 %v1942, 16
        %v2076 = vrot.slane %v2074, 1
        %v2077 = vsel %vm386, %v2072, %v2076
        %v2078 = vshrl.u32 %v1942, 16
        %v2080 = vor.u32 %v2078, %v2076
        %v2082 = vshll.u32 %v1952, 16
        %v2084 = vrot.slane %v2082, 1
        %v2085 = vsel %vm386, %v2080, %v2084
        %v2086 = vshrl.u32 %v1952, 16
        %v2088 = vor.u32 %v2086, %v2084
        %v2097 = vunpack.c.l.b16 %v1954
        %v2098 = vunpack.c.l.b16 %v1955
        %v2099 = vunpack.c.l.b16 %v1956
        %v2100 = vunpack.c.l.b16 %v1957
        %v2101 = vunpack.c.l.b16 %v1958
        %v2102 = vunpack.c.l.b16 %v1959
        %v2103 = vunpack.c.l.b16 %v1960
        %v2104 = vunpack.c.l.b16 %v1961
        %v2105 = vpack.c.b16 %v2098, %v2097
        %v2106 = vpack.c.b16 %v2100, %v2099
        %v2107 = vpack.c.b16 %v2102, %v2101
        %v2108 = vpack.c.b16 %v2104, %v2103
        %vm2113 = vcmask 523264
        %v2115 = vsel %vm2113, %v1973, 0
        %v2118 = vsel %vm2113, %v1981, 0
        %v2121 = vsel %vm2113, %v1989, 0
        %v2124 = vsel %vm2113, %v1997, 0
        %v2127 = vsel %vm2113, %v2005, 0
        %v2130 = vsel %vm2113, %v2013, 0
        %v2133 = vsel %vm2113, %v2021, 0
        %v2136 = vsel %vm2113, %v2029, 0
        %v2139 = vsel %vm2113, %v2037, 0
        %v2142 = vsel %vm2113, %v2045, 0
        %v2145 = vsel %vm2113, %v2053, 0
        %v2148 = vsel %vm2113, %v2061, 0
        %v2151 = vsel %vm2113, %v2069, 0
        %v2154 = vsel %vm2113, %v2077, 0
        %v2157 = vsel %vm2113, %v2085, 0
        %v2160 = vsel %vm2113, %v2088, 0
        %2162 = vmatprep.subr.bf16.mxu0 0
        %2163 = vmatpush1.bf16.msra.mxu0 0
        %2164 = vmatprep.subr.bf16.mxu0 0
        %2165 = vmatpush1.bf16.msra.mxu0 0
        %2166 = vmatprep.subr.bf16.mxu0 0
        %2167 = vmatpush1.bf16.msra.mxu0 0
        %2168 = vmatprep.subr.bf16.mxu0 0
        %2169 = vmatpush1.bf16.msra.mxu0 0
        %2170 = vmatprep.subr.bf16.mxu0 0
        %2171 = vmatpush1.bf16.msra.mxu0 %v2108
        %2172 = vmatprep.subr.bf16.mxu0 0
        %2173 = vmatpush1.bf16.msra.mxu0 %v2107
        %2174 = vmatprep.subr.bf16.mxu0 0
        %2175 = vmatpush1.bf16.msra.mxu0 %v2106
        %2176 = vmatprep.subr.bf16.mxu0 0
        %2177 = vmatpush1.bf16.msra.mxu0 %v2105
        %2178 = vmatprep.subr.bf16.mxu0 0
        %2179 = vmatpush2.bf16.msra.mxu0 0
        %2180 = vmatprep.subr.bf16.mxu0 0
        %2181 = vmatpush2.bf16.msra.mxu0 0
        %2182 = vmatprep.subr.bf16.mxu0 0
        %2183 = vmatpush2.bf16.msra.mxu0 0
        %2184 = vmatprep.subr.bf16.mxu0 0
        %2185 = vmatpush2.bf16.msra.mxu0 0
        %2186 = vmatprep.subr.bf16.mxu0 0
        %2187 = vmatpush2.bf16.msra.mxu0 0
        %2188 = vmatprep.subr.bf16.mxu0 0
        %2189 = vmatpush2.bf16.msra.mxu0 0
        %2190 = vmatprep.subr.bf16.mxu0 0
        %2191 = vmatpush2.bf16.msra.mxu0 0
        %2192 = vmatprep.subr.bf16.mxu0 0
        %2193 = vmatpush2.bf16.msra.mxu0 0
        %2194 = vmatprep.mubr.bf16.mxu0 0
        %2195 = vmatmul.mubr.bf16.gmra.mxu0 %v2115
        %v2196 = vpop.f32.mrf.mxu0
        %v2197 = vadd.f32 0.0, %v2196
        %v2198 = vpop.f32.mrf.mxu0
        %v2199 = vpop.f32.mrf.mxu0
        %v2200 = vadd.f32 0.0, %v2199
        %v2201 = vpop.f32.mrf.mxu0
        %2202 = vmatprep.mubr.bf16.mxu0 0
        %2203 = vmatmul.mubr.bf16.gmra.mxu0 %v2118
        %v2204 = vpop.f32.mrf.mxu0
        %v2205 = vadd.f32 0.0, %v2204
        %v2206 = vpop.f32.mrf.mxu0
        %v2207 = vpop.f32.mrf.mxu0
        %v2208 = vadd.f32 0.0, %v2207
        %v2209 = vpop.f32.mrf.mxu0
        %2210 = vmatprep.mubr.bf16.mxu0 0
        %2211 = vmatmul.mubr.bf16.gmra.mxu0 %v2121
        %v2212 = vpop.f32.mrf.mxu0
        %v2213 = vadd.f32 0.0, %v2212
        %v2214 = vpop.f32.mrf.mxu0
        %v2215 = vpop.f32.mrf.mxu0
        %v2216 = vadd.f32 0.0, %v2215
        %v2217 = vpop.f32.mrf.mxu0
        %2218 = vmatprep.mubr.bf16.mxu0 0
        %2219 = vmatmul.mubr.bf16.gmra.mxu0 %v2124
        %v2220 = vpop.f32.mrf.mxu0
        %v2221 = vadd.f32 0.0, %v2220
        %v2222 = vpop.f32.mrf.mxu0
        %v2223 = vpop.f32.mrf.mxu0
        %v2224 = vadd.f32 0.0, %v2223
        %v2225 = vpop.f32.mrf.mxu0
        %2226 = vmatprep.mubr.bf16.mxu0 0
        %2227 = vmatmul.mubr.bf16.gmra.mxu0 %v2127
        %v2228 = vpop.f32.mrf.mxu0
        %v2229 = vadd.f32 0.0, %v2228
        %v2230 = vpop.f32.mrf.mxu0
        %v2231 = vpop.f32.mrf.mxu0
        %v2232 = vadd.f32 0.0, %v2231
        %v2233 = vpop.f32.mrf.mxu0
        %2234 = vmatprep.mubr.bf16.mxu0 0
        %2235 = vmatmul.mubr.bf16.gmra.mxu0 %v2130
        %v2236 = vpop.f32.mrf.mxu0
        %v2237 = vadd.f32 0.0, %v2236
        %v2238 = vpop.f32.mrf.mxu0
        %v2239 = vpop.f32.mrf.mxu0
        %v2240 = vadd.f32 0.0, %v2239
        %v2241 = vpop.f32.mrf.mxu0
        %2242 = vmatprep.mubr.bf16.mxu0 0
        %2243 = vmatmul.mubr.bf16.gmra.mxu0 %v2133
        %v2244 = vpop.f32.mrf.mxu0
        %v2245 = vadd.f32 0.0, %v2244
        %v2246 = vpop.f32.mrf.mxu0
        %v2247 = vpop.f32.mrf.mxu0
        %v2248 = vadd.f32 0.0, %v2247
        %v2249 = vpop.f32.mrf.mxu0
        %2250 = vmatprep.mubr.bf16.mxu0 0
        %2251 = vmatmul.mubr.bf16.gmra.mxu0 %v2136
        %v2252 = vpop.f32.mrf.mxu0
        %v2253 = vadd.f32 0.0, %v2252
        %v2254 = vpop.f32.mrf.mxu0
        %v2255 = vpop.f32.mrf.mxu0
        %v2256 = vadd.f32 0.0, %v2255
        %v2257 = vpop.f32.mrf.mxu0
        %2258 = vmatprep.mubr.bf16.mxu0 0
        %2259 = vmatmul.mubr.bf16.gmra.mxu0 %v2139
        %v2260 = vpop.f32.mrf.mxu0
        %v2261 = vadd.f32 0.0, %v2260
        %v2262 = vpop.f32.mrf.mxu0
        %v2263 = vpop.f32.mrf.mxu0
        %v2264 = vadd.f32 0.0, %v2263
        %v2265 = vpop.f32.mrf.mxu0
        %2266 = vmatprep.mubr.bf16.mxu0 0
        %2267 = vmatmul.mubr.bf16.gmra.mxu0 %v2142
        %v2268 = vpop.f32.mrf.mxu0
        %v2269 = vadd.f32 0.0, %v2268
        %v2270 = vpop.f32.mrf.mxu0
        %v2271 = vpop.f32.mrf.mxu0
        %v2272 = vadd.f32 0.0, %v2271
        %v2273 = vpop.f32.mrf.mxu0
        %2274 = vmatprep.mubr.bf16.mxu0 0
        %2275 = vmatmul.mubr.bf16.gmra.mxu0 %v2145
        %v2276 = vpop.f32.mrf.mxu0
        %v2277 = vadd.f32 0.0, %v2276
        %v2278 = vpop.f32.mrf.mxu0
        %v2279 = vpop.f32.mrf.mxu0
        %v2280 = vadd.f32 0.0, %v2279
        %v2281 = vpop.f32.mrf.mxu0
        %2282 = vmatprep.mubr.bf16.mxu0 0
        %2283 = vmatmul.mubr.bf16.gmra.mxu0 %v2148
        %v2284 = vpop.f32.mrf.mxu0
        %v2285 = vadd.f32 0.0, %v2284
        %v2286 = vpop.f32.mrf.mxu0
        %v2287 = vpop.f32.mrf.mxu0
        %v2288 = vadd.f32 0.0, %v2287
        %v2289 = vpop.f32.mrf.mxu0
        %2290 = vmatprep.mubr.bf16.mxu0 0
        %2291 = vmatmul.mubr.bf16.gmra.mxu0 %v2151
        %v2292 = vpop.f32.mrf.mxu0
        %v2293 = vadd.f32 0.0, %v2292
        %v2294 = vpop.f32.mrf.mxu0
        %v2295 = vpop.f32.mrf.mxu0
        %v2296 = vadd.f32 0.0, %v2295
        %v2297 = vpop.f32.mrf.mxu0
        %2298 = vmatprep.mubr.bf16.mxu0 0
        %2299 = vmatmul.mubr.bf16.gmra.mxu0 %v2154
        %v2300 = vpop.f32.mrf.mxu0
        %v2301 = vadd.f32 0.0, %v2300
        %v2302 = vpop.f32.mrf.mxu0
        %v2303 = vpop.f32.mrf.mxu0
        %v2304 = vadd.f32 0.0, %v2303
        %v2305 = vpop.f32.mrf.mxu0
        %2306 = vmatprep.mubr.bf16.mxu0 0
        %2307 = vmatmul.mubr.bf16.gmra.mxu0 %v2157
        %v2308 = vpop.f32.mrf.mxu0
        %v2309 = vadd.f32 0.0, %v2308
        %v2310 = vpop.f32.mrf.mxu0
        %v2311 = vpop.f32.mrf.mxu0
        %v2312 = vadd.f32 0.0, %v2311
        %v2313 = vpop.f32.mrf.mxu0
        %2314 = vmatprep.mubr.bf16.mxu0 0
        %2315 = vmatmul.mubr.bf16.gmra.mxu0 %v2160
        %v2316 = vpop.f32.mrf.mxu0
        %v2317 = vadd.f32 0.0, %v2316
        %v2318 = vpop.f32.mrf.mxu0
        %v2319 = vpop.f32.mrf.mxu0
        %v2320 = vpop.f32.mrf.mxu0
        %2321 = vdwg.mxu0
        %v2330 = vunpack.c.l.b16 %v1944
        %v2331 = vunpack.c.l.b16 %v1945
        %v2332 = vunpack.c.l.b16 %v1946
        %v2333 = vunpack.c.l.b16 %v1947
        %v2334 = vunpack.c.l.b16 %v1948
        %v2335 = vunpack.c.l.b16 %v1949
        %v2336 = vunpack.c.l.b16 %v1950
        %v2337 = vunpack.c.l.b16 %v1951
        %v2338 = vpack.c.b16 %v2331, %v2330
        %v2339 = vpack.c.b16 %v2333, %v2332
        %v2340 = vpack.c.b16 %v2335, %v2334
        %v2341 = vpack.c.b16 %v2337, %v2336
        %v2346 = vsel %vm2113, %v1928, 0
        %v2348 = vsel %vm2113, %v1929, 0
        %v2350 = vsel %vm2113, %v1930, 0
        %v2352 = vsel %vm2113, %v1931, 0
        %v2354 = vsel %vm2113, %v1932, 0
        %v2356 = vsel %vm2113, %v1933, 0
        %v2358 = vsel %vm2113, %v1934, 0
        %v2360 = vsel %vm2113, %v1935, 0
        %v2362 = vsel %vm2113, %v1936, 0
        %v2364 = vsel %vm2113, %v1937, 0
        %v2366 = vsel %vm2113, %v1938, 0
        %v2368 = vsel %vm2113, %v1939, 0
        %v2370 = vsel %vm2113, %v1940, 0
        %v2372 = vsel %vm2113, %v1941, 0
        %v2374 = vsel %vm2113, %v1942, 0
        %v2377 = vsel %vm2113, %v1943, 0
        %2379 = vmatprep.subr.bf16.mxu0 0
        %2380 = vmatpush1.bf16.msra.mxu0 0
        %2381 = vmatprep.subr.bf16.mxu0 0
        %2382 = vmatpush1.bf16.msra.mxu0 0
        %2383 = vmatprep.subr.bf16.mxu0 0
        %2384 = vmatpush1.bf16.msra.mxu0 0
        %2385 = vmatprep.subr.bf16.mxu0 0
        %2386 = vmatpush1.bf16.msra.mxu0 0
        %2387 = vmatprep.subr.bf16.mxu0 0
        %2388 = vmatpush1.bf16.msra.mxu0 %v2341
        %2389 = vmatprep.subr.bf16.mxu0 0
        %2390 = vmatpush1.bf16.msra.mxu0 %v2340
        %2391 = vmatprep.subr.bf16.mxu0 0
        %2392 = vmatpush1.bf16.msra.mxu0 %v2339
        %2393 = vmatprep.subr.bf16.mxu0 0
        %2394 = vmatpush1.bf16.msra.mxu0 %v2338
        %2395 = vmatprep.subr.bf16.mxu0 0
        %2396 = vmatpush2.bf16.msra.mxu0 0
        %2397 = vmatprep.subr.bf16.mxu0 0
        %2398 = vmatpush2.bf16.msra.mxu0 0
        %2399 = vmatprep.subr.bf16.mxu0 0
        %2400 = vmatpush2.bf16.msra.mxu0 0
        %2401 = vmatprep.subr.bf16.mxu0 0
        %2402 = vmatpush2.bf16.msra.mxu0 0
        %2403 = vmatprep.subr.bf16.mxu0 0
        %2404 = vmatpush2.bf16.msra.mxu0 0
        %2405 = vmatprep.subr.bf16.mxu0 0
        %2406 = vmatpush2.bf16.msra.mxu0 0
        %2407 = vmatprep.subr.bf16.mxu0 0
        %2408 = vmatpush2.bf16.msra.mxu0 0
        %2409 = vmatprep.subr.bf16.mxu0 0
        %2410 = vmatpush2.bf16.msra.mxu0 0
        %2411 = vmatprep.mubr.bf16.mxu0 0
        %2412 = vmatmul.mubr.bf16.gmra.mxu0 %v2346
        %v2413 = vpop.f32.mrf.mxu0
        %v2414 = vadd.f32 %v2197, %v2413
        %v2415 = vpop.f32.mrf.mxu0
        %v2416 = vpop.f32.mrf.mxu0
        %v2417 = vadd.f32 %v2200, %v2416
        %v2418 = vpop.f32.mrf.mxu0
        %2419 = vmatprep.mubr.bf16.mxu0 0
        %2420 = vmatmul.mubr.bf16.gmra.mxu0 %v2348
        %v2421 = vpop.f32.mrf.mxu0
        %v2422 = vadd.f32 %v2205, %v2421
        %v2423 = vpop.f32.mrf.mxu0
        %v2424 = vpop.f32.mrf.mxu0
        %v2425 = vadd.f32 %v2208, %v2424
        %v2426 = vpop.f32.mrf.mxu0
        %2427 = vmatprep.mubr.bf16.mxu0 0
        %2428 = vmatmul.mubr.bf16.gmra.mxu0 %v2350
        %v2429 = vpop.f32.mrf.mxu0
        %v2430 = vadd.f32 %v2213, %v2429
        %v2431 = vpop.f32.mrf.mxu0
        %v2432 = vpop.f32.mrf.mxu0
        %v2433 = vadd.f32 %v2216, %v2432
        %v2434 = vpop.f32.mrf.mxu0
        %2435 = vmatprep.mubr.bf16.mxu0 0
        %2436 = vmatmul.mubr.bf16.gmra.mxu0 %v2352
        %v2437 = vpop.f32.mrf.mxu0
        %v2438 = vadd.f32 %v2221, %v2437
        %v2439 = vpop.f32.mrf.mxu0
        %v2440 = vpop.f32.mrf.mxu0
        %v2441 = vadd.f32 %v2224, %v2440
        %v2442 = vpop.f32.mrf.mxu0
        %2443 = vmatprep.mubr.bf16.mxu0 0
        %2444 = vmatmul.mubr.bf16.gmra.mxu0 %v2354
        %v2445 = vpop.f32.mrf.mxu0
        %v2446 = vadd.f32 %v2229, %v2445
        %v2447 = vpop.f32.mrf.mxu0
        %v2448 = vpop.f32.mrf.mxu0
        %v2449 = vadd.f32 %v2232, %v2448
        %v2450 = vpop.f32.mrf.mxu0
        %2451 = vmatprep.mubr.bf16.mxu0 0
        %2452 = vmatmul.mubr.bf16.gmra.mxu0 %v2356
        %v2453 = vpop.f32.mrf.mxu0
        %v2454 = vadd.f32 %v2237, %v2453
        %v2455 = vpop.f32.mrf.mxu0
        %v2456 = vpop.f32.mrf.mxu0
        %v2457 = vadd.f32 %v2240, %v2456
        %v2458 = vpop.f32.mrf.mxu0
        %2459 = vmatprep.mubr.bf16.mxu0 0
        %2460 = vmatmul.mubr.bf16.gmra.mxu0 %v2358
        %v2461 = vpop.f32.mrf.mxu0
        %v2462 = vadd.f32 %v2245, %v2461
        %v2463 = vpop.f32.mrf.mxu0
        %v2464 = vpop.f32.mrf.mxu0
        %v2465 = vadd.f32 %v2248, %v2464
        %v2466 = vpop.f32.mrf.mxu0
        %2467 = vmatprep.mubr.bf16.mxu0 0
        %2468 = vmatmul.mubr.bf16.gmra.mxu0 %v2360
        %v2469 = vpop.f32.mrf.mxu0
        %v2470 = vadd.f32 %v2253, %v2469
        %v2471 = vpop.f32.mrf.mxu0
        %v2472 = vpop.f32.mrf.mxu0
        %v2473 = vadd.f32 %v2256, %v2472
        %v2474 = vpop.f32.mrf.mxu0
        %2475 = vmatprep.mubr.bf16.mxu0 0
        %2476 = vmatmul.mubr.bf16.gmra.mxu0 %v2362
        %v2477 = vpop.f32.mrf.mxu0
        %v2478 = vadd.f32 %v2261, %v2477
        %v2479 = vpop.f32.mrf.mxu0
        %v2480 = vpop.f32.mrf.mxu0
        %v2481 = vadd.f32 %v2264, %v2480
        %v2482 = vpop.f32.mrf.mxu0
        %2483 = vmatprep.mubr.bf16.mxu0 0
        %2484 = vmatmul.mubr.bf16.gmra.mxu0 %v2364
        %v2485 = vpop.f32.mrf.mxu0
        %v2486 = vadd.f32 %v2269, %v2485
        %v2487 = vpop.f32.mrf.mxu0
        %v2488 = vpop.f32.mrf.mxu0
        %v2489 = vadd.f32 %v2272, %v2488
        %v2490 = vpop.f32.mrf.mxu0
        %2491 = vmatprep.mubr.bf16.mxu0 0
        %2492 = vmatmul.mubr.bf16.gmra.mxu0 %v2366
        %v2493 = vpop.f32.mrf.mxu0
        %v2494 = vadd.f32 %v2277, %v2493
        %v2495 = vpop.f32.mrf.mxu0
        %v2496 = vpop.f32.mrf.mxu0
        %v2497 = vadd.f32 %v2280, %v2496
        %v2498 = vpop.f32.mrf.mxu0
        %2499 = vmatprep.mubr.bf16.mxu0 0
        %2500 = vmatmul.mubr.bf16.gmra.mxu0 %v2368
        %v2501 = vpop.f32.mrf.mxu0
        %v2502 = vadd.f32 %v2285, %v2501
        %v2503 = vpop.f32.mrf.mxu0
        %v2504 = vpop.f32.mrf.mxu0
        %v2505 = vadd.f32 %v2288, %v2504
        %v2506 = vpop.f32.mrf.mxu0
        %2507 = vmatprep.mubr.bf16.mxu0 0
        %2508 = vmatmul.mubr.bf16.gmra.mxu0 %v2370
        %v2509 = vpop.f32.mrf.mxu0
        %v2510 = vadd.f32 %v2293, %v2509
        %v2511 = vpop.f32.mrf.mxu0
        %v2512 = vpop.f32.mrf.mxu0
        %v2513 = vadd.f32 %v2296, %v2512
        %v2514 = vpop.f32.mrf.mxu0
        %2515 = vmatprep.mubr.bf16.mxu0 0
        %2516 = vmatmul.mubr.bf16.gmra.mxu0 %v2372
        %v2517 = vpop.f32.mrf.mxu0
        %v2518 = vadd.f32 %v2301, %v2517
        %v2519 = vpop.f32.mrf.mxu0
        %v2520 = vpop.f32.mrf.mxu0
        %v2521 = vadd.f32 %v2304, %v2520
        %v2522 = vpop.f32.mrf.mxu0
        %2523 = vmatprep.mubr.bf16.mxu0 0
        %2524 = vmatmul.mubr.bf16.gmra.mxu0 %v2374
        %v2525 = vpop.f32.mrf.mxu0
        %v2526 = vadd.f32 %v2309, %v2525
        %v2527 = vpop.f32.mrf.mxu0
        %v2528 = vpop.f32.mrf.mxu0
        %v2529 = vadd.f32 %v2312, %v2528
        %v2530 = vpop.f32.mrf.mxu0
        %2531 = vmatprep.mubr.bf16.mxu0 0
        %2532 = vmatmul.mubr.bf16.gmra.mxu0 %v2377
        %v2533 = vpop.f32.mrf.mxu0
        %v2534 = vadd.f32 %v2317, %v2533
        %v2535 = vpop.f32.mrf.mxu0
        %v2536 = vpop.f32.mrf.mxu0
        %v2537 = vpop.f32.mrf.mxu0
        %2538 = vdwg.mxu0
        %s2539 = scalar_lea.vmem %s3, 64
        %v2540 = vld [vmem:[%s2539] sm:$0xf]
        %v2541 = vld [vmem:[%s2539 + $0x4] sm:$0xf]
        %v2542 = vld [vmem:[%s2539 + $0x8] sm:$0xf]
        %v2543 = vld [vmem:[%s2539 + $0xc] sm:$0xf]
        %v2544 = vld [vmem:[%s2539 + $0x10] sm:$0xf]
        %v2545 = vld [vmem:[%s2539 + $0x14] sm:$0xf]
        %v2546 = vld [vmem:[%s2539 + $0x18] sm:$0xf]
        %v2547 = vld [vmem:[%s2539 + $0x1c] sm:$0xf]
        %v2564 = vrot.slane %v1928, 1
        %v2565 = vrot.slane %v1929, 1
        %v2566 = vsel %vm962, %v2564, %v2565
        %v2567 = vrot.slane %v1930, 1
        %v2568 = vsel %vm962, %v2565, %v2567
        %v2569 = vrot.slane %v1931, 1
        %v2570 = vsel %vm962, %v2567, %v2569
        %v2571 = vrot.slane %v1932, 1
        %v2572 = vsel %vm962, %v2569, %v2571
        %v2573 = vrot.slane %v1933, 1
        %v2574 = vsel %vm962, %v2571, %v2573
        %v2575 = vrot.slane %v1934, 1
        %v2576 = vsel %vm962, %v2573, %v2575
        %v2577 = vrot.slane %v1935, 1
        %v2578 = vsel %vm962, %v2575, %v2577
        %v2579 = vrot.slane %v1936, 1
        %v2580 = vsel %vm962, %v2577, %v2579
        %v2581 = vrot.slane %v1937, 1
        %v2582 = vsel %vm962, %v2579, %v2581
        %v2583 = vrot.slane %v1938, 1
        %v2584 = vsel %vm962, %v2581, %v2583
        %v2585 = vrot.slane %v1939, 1
        %v2586 = vsel %vm962, %v2583, %v2585
        %v2587 = vrot.slane %v1940, 1
        %v2588 = vsel %vm962, %v2585, %v2587
        %v2589 = vrot.slane %v1941, 1
        %v2590 = vsel %vm962, %v2587, %v2589
        %v2591 = vrot.slane %v1942, 1
        %v2592 = vsel %vm962, %v2589, %v2591
        %v2593 = vrot.slane %v1952, 1
        %v2594 = vsel %vm962, %v2591, %v2593
        %v2603 = vunpack.c.l.b16 %v2540
        %v2604 = vunpack.c.l.b16 %v2541
        %v2605 = vunpack.c.l.b16 %v2542
        %v2606 = vunpack.c.l.b16 %v2543
        %v2607 = vunpack.c.l.b16 %v2544
        %v2608 = vunpack.c.l.b16 %v2545
        %v2609 = vunpack.c.l.b16 %v2546
        %v2610 = vunpack.c.l.b16 %v2547
        %v2611 = vpack.c.b16 %v2604, %v2603
        %v2612 = vpack.c.b16 %v2606, %v2605
        %v2613 = vpack.c.b16 %v2608, %v2607
        %v2614 = vpack.c.b16 %v2610, %v2609
        %v2620 = vsel %vm2113, %v2566, 0
        %v2623 = vsel %vm2113, %v2568, 0
        %v2626 = vsel %vm2113, %v2570, 0
        %v2629 = vsel %vm2113, %v2572, 0
        %v2632 = vsel %vm2113, %v2574, 0
        %v2635 = vsel %vm2113, %v2576, 0
        %v2638 = vsel %vm2113, %v2578, 0
        %v2641 = vsel %vm2113, %v2580, 0
        %v2644 = vsel %vm2113, %v2582, 0
        %v2647 = vsel %vm2113, %v2584, 0
        %v2650 = vsel %vm2113, %v2586, 0
        %v2653 = vsel %vm2113, %v2588, 0
        %v2656 = vsel %vm2113, %v2590, 0
        %v2659 = vsel %vm2113, %v2592, 0
        %v2662 = vsel %vm2113, %v2594, 0
        %v2665 = vsel %vm2113, %v2593, 0
        %2667 = vmatprep.subr.bf16.mxu0 0
        %2668 = vmatpush1.bf16.msra.mxu0 0
        %2669 = vmatprep.subr.bf16.mxu0 0
        %2670 = vmatpush1.bf16.msra.mxu0 0
        %2671 = vmatprep.subr.bf16.mxu0 0
        %2672 = vmatpush1.bf16.msra.mxu0 0
        %2673 = vmatprep.subr.bf16.mxu0 0
        %2674 = vmatpush1.bf16.msra.mxu0 0
        %2675 = vmatprep.subr.bf16.mxu0 0
        %2676 = vmatpush1.bf16.msra.mxu0 %v2614
        %2677 = vmatprep.subr.bf16.mxu0 0
        %2678 = vmatpush1.bf16.msra.mxu0 %v2613
        %2679 = vmatprep.subr.bf16.mxu0 0
        %2680 = vmatpush1.bf16.msra.mxu0 %v2612
        %2681 = vmatprep.subr.bf16.mxu0 0
        %2682 = vmatpush1.bf16.msra.mxu0 %v2611
        %2683 = vmatprep.subr.bf16.mxu0 0
        %2684 = vmatpush2.bf16.msra.mxu0 0
        %2685 = vmatprep.subr.bf16.mxu0 0
        %2686 = vmatpush2.bf16.msra.mxu0 0
        %2687 = vmatprep.subr.bf16.mxu0 0
        %2688 = vmatpush2.bf16.msra.mxu0 0
        %2689 = vmatprep.subr.bf16.mxu0 0
        %2690 = vmatpush2.bf16.msra.mxu0 0
        %2691 = vmatprep.subr.bf16.mxu0 0
        %2692 = vmatpush2.bf16.msra.mxu0 0
        %2693 = vmatprep.subr.bf16.mxu0 0
        %2694 = vmatpush2.bf16.msra.mxu0 0
        %2695 = vmatprep.subr.bf16.mxu0 0
        %2696 = vmatpush2.bf16.msra.mxu0 0
        %2697 = vmatprep.subr.bf16.mxu0 0
        %2698 = vmatpush2.bf16.msra.mxu0 0
        %2699 = vmatprep.mubr.bf16.mxu0 0
        %2700 = vmatmul.mubr.bf16.gmra.mxu0 %v2620
        %v2701 = vpop.f32.mrf.mxu0
        %v2702 = vadd.f32 0.0, %v2701
        %v2703 = vpop.f32.mrf.mxu0
        %v2704 = vpop.f32.mrf.mxu0
        %v2705 = vadd.f32 0.0, %v2704
        %v2706 = vpop.f32.mrf.mxu0
        %2707 = vmatprep.mubr.bf16.mxu0 0
        %2708 = vmatmul.mubr.bf16.gmra.mxu0 %v2623
        %v2709 = vpop.f32.mrf.mxu0
        %v2710 = vadd.f32 0.0, %v2709
        %v2711 = vpop.f32.mrf.mxu0
        %v2712 = vpop.f32.mrf.mxu0
        %v2713 = vadd.f32 0.0, %v2712
        %v2714 = vpop.f32.mrf.mxu0
        %2715 = vmatprep.mubr.bf16.mxu0 0
        %2716 = vmatmul.mubr.bf16.gmra.mxu0 %v2626
        %v2717 = vpop.f32.mrf.mxu0
        %v2718 = vadd.f32 0.0, %v2717
        %v2719 = vpop.f32.mrf.mxu0
        %v2720 = vpop.f32.mrf.mxu0
        %v2721 = vadd.f32 0.0, %v2720
        %v2722 = vpop.f32.mrf.mxu0
        %2723 = vmatprep.mubr.bf16.mxu0 0
        %2724 = vmatmul.mubr.bf16.gmra.mxu0 %v2629
        %v2725 = vpop.f32.mrf.mxu0
        %v2726 = vadd.f32 0.0, %v2725
        %v2727 = vpop.f32.mrf.mxu0
        %v2728 = vpop.f32.mrf.mxu0
        %v2729 = vadd.f32 0.0, %v2728
        %v2730 = vpop.f32.mrf.mxu0
        %2731 = vmatprep.mubr.bf16.mxu0 0
        %2732 = vmatmul.mubr.bf16.gmra.mxu0 %v2632
        %v2733 = vpop.f32.mrf.mxu0
        %v2734 = vadd.f32 0.0, %v2733
        %v2735 = vpop.f32.mrf.mxu0
        %v2736 = vpop.f32.mrf.mxu0
        %v2737 = vadd.f32 0.0, %v2736
        %v2738 = vpop.f32.mrf.mxu0
        %2739 = vmatprep.mubr.bf16.mxu0 0
        %2740 = vmatmul.mubr.bf16.gmra.mxu0 %v2635
        %v2741 = vpop.f32.mrf.mxu0
        %v2742 = vadd.f32 0.0, %v2741
        %v2743 = vpop.f32.mrf.mxu0
        %v2744 = vpop.f32.mrf.mxu0
        %v2745 = vadd.f32 0.0, %v2744
        %v2746 = vpop.f32.mrf.mxu0
        %2747 = vmatprep.mubr.bf16.mxu0 0
        %2748 = vmatmul.mubr.bf16.gmra.mxu0 %v2638
        %v2749 = vpop.f32.mrf.mxu0
        %v2750 = vadd.f32 0.0, %v2749
        %v2751 = vpop.f32.mrf.mxu0
        %v2752 = vpop.f32.mrf.mxu0
        %v2753 = vadd.f32 0.0, %v2752
        %v2754 = vpop.f32.mrf.mxu0
        %2755 = vmatprep.mubr.bf16.mxu0 0
        %2756 = vmatmul.mubr.bf16.gmra.mxu0 %v2641
        %v2757 = vpop.f32.mrf.mxu0
        %v2758 = vadd.f32 0.0, %v2757
        %v2759 = vpop.f32.mrf.mxu0
        %v2760 = vpop.f32.mrf.mxu0
        %v2761 = vadd.f32 0.0, %v2760
        %v2762 = vpop.f32.mrf.mxu0
        %2763 = vmatprep.mubr.bf16.mxu0 0
        %2764 = vmatmul.mubr.bf16.gmra.mxu0 %v2644
        %v2765 = vpop.f32.mrf.mxu0
        %v2766 = vadd.f32 0.0, %v2765
        %v2767 = vpop.f32.mrf.mxu0
        %v2768 = vpop.f32.mrf.mxu0
        %v2769 = vadd.f32 0.0, %v2768
        %v2770 = vpop.f32.mrf.mxu0
        %2771 = vmatprep.mubr.bf16.mxu0 0
        %2772 = vmatmul.mubr.bf16.gmra.mxu0 %v2647
        %v2773 = vpop.f32.mrf.mxu0
        %v2774 = vadd.f32 0.0, %v2773
        %v2775 = vpop.f32.mrf.mxu0
        %v2776 = vpop.f32.mrf.mxu0
        %v2777 = vadd.f32 0.0, %v2776
        %v2778 = vpop.f32.mrf.mxu0
        %2779 = vmatprep.mubr.bf16.mxu0 0
        %2780 = vmatmul.mubr.bf16.gmra.mxu0 %v2650
        %v2781 = vpop.f32.mrf.mxu0
        %v2782 = vadd.f32 0.0, %v2781
        %v2783 = vpop.f32.mrf.mxu0
        %v2784 = vpop.f32.mrf.mxu0
        %v2785 = vadd.f32 0.0, %v2784
        %v2786 = vpop.f32.mrf.mxu0
        %2787 = vmatprep.mubr.bf16.mxu0 0
        %2788 = vmatmul.mubr.bf16.gmra.mxu0 %v2653
        %v2789 = vpop.f32.mrf.mxu0
        %v2790 = vadd.f32 0.0, %v2789
        %v2791 = vpop.f32.mrf.mxu0
        %v2792 = vpop.f32.mrf.mxu0
        %v2793 = vadd.f32 0.0, %v2792
        %v2794 = vpop.f32.mrf.mxu0
        %2795 = vmatprep.mubr.bf16.mxu0 0
        %2796 = vmatmul.mubr.bf16.gmra.mxu0 %v2656
        %v2797 = vpop.f32.mrf.mxu0
        %v2798 = vadd.f32 0.0, %v2797
        %v2799 = vpop.f32.mrf.mxu0
        %v2800 = vpop.f32.mrf.mxu0
        %v2801 = vadd.f32 0.0, %v2800
        %v2802 = vpop.f32.mrf.mxu0
        %2803 = vmatprep.mubr.bf16.mxu0 0
        %2804 = vmatmul.mubr.bf16.gmra.mxu0 %v2659
        %v2805 = vpop.f32.mrf.mxu0
        %v2806 = vadd.f32 0.0, %v2805
        %v2807 = vpop.f32.mrf.mxu0
        %v2808 = vpop.f32.mrf.mxu0
        %v2809 = vadd.f32 0.0, %v2808
        %v2810 = vpop.f32.mrf.mxu0
        %2811 = vmatprep.mubr.bf16.mxu0 0
        %2812 = vmatmul.mubr.bf16.gmra.mxu0 %v2662
        %v2813 = vpop.f32.mrf.mxu0
        %v2814 = vadd.f32 0.0, %v2813
        %v2815 = vpop.f32.mrf.mxu0
        %v2816 = vpop.f32.mrf.mxu0
        %v2817 = vadd.f32 0.0, %v2816
        %v2818 = vpop.f32.mrf.mxu0
        %2819 = vmatprep.mubr.bf16.mxu0 0
        %2820 = vmatmul.mubr.bf16.gmra.mxu0 %v2665
        %v2821 = vpop.f32.mrf.mxu0
        %v2822 = vadd.f32 0.0, %v2821
        %v2823 = vpop.f32.mrf.mxu0
        %v2824 = vpop.f32.mrf.mxu0
        %v2825 = vpop.f32.mrf.mxu0
        %2826 = vdwg.mxu0
        %v2827 = vadd.f32 %v2414, %v2702
        %v2828 = vadd.f32 %v2417, %v2705
        %v2829 = vadd.f32 %v2422, %v2710
        %v2830 = vadd.f32 %v2425, %v2713
        %v2831 = vadd.f32 %v2430, %v2718
        %v2832 = vadd.f32 %v2433, %v2721
        %v2833 = vadd.f32 %v2438, %v2726
        %v2834 = vadd.f32 %v2441, %v2729
        %v2835 = vadd.f32 %v2446, %v2734
        %v2836 = vadd.f32 %v2449, %v2737
        %v2837 = vadd.f32 %v2454, %v2742
        %v2838 = vadd.f32 %v2457, %v2745
        %v2839 = vadd.f32 %v2462, %v2750
        %v2840 = vadd.f32 %v2465, %v2753
        %v2841 = vadd.f32 %v2470, %v2758
        %v2842 = vadd.f32 %v2473, %v2761
        %v2843 = vadd.f32 %v2478, %v2766
        %v2844 = vadd.f32 %v2481, %v2769
        %v2845 = vadd.f32 %v2486, %v2774
        %v2846 = vadd.f32 %v2489, %v2777
        %v2847 = vadd.f32 %v2494, %v2782
        %v2848 = vadd.f32 %v2497, %v2785
        %v2849 = vadd.f32 %v2502, %v2790
        %v2850 = vadd.f32 %v2505, %v2793
        %v2851 = vadd.f32 %v2510, %v2798
        %v2852 = vadd.f32 %v2513, %v2801
        %v2853 = vadd.f32 %v2518, %v2806
        %v2854 = vadd.f32 %v2521, %v2809
        %v2855 = vadd.f32 %v2526, %v2814
        %v2856 = vadd.f32 %v2529, %v2817
        %v2857 = vadd.f32 %v2534, %v2822
        %s2858 = scalar_lea.vmem %s3, 96
        %v2859 = vld [vmem:[%s2858] sm:$0xf]
        %v2860 = vld [vmem:[%s2858 + $0x4] sm:$0xf]
        %v2861 = vld [vmem:[%s2858 + $0x8] sm:$0xf]
        %v2862 = vld [vmem:[%s2858 + $0xc] sm:$0xf]
        %v2863 = vld [vmem:[%s2858 + $0x10] sm:$0xf]
        %v2864 = vld [vmem:[%s2858 + $0x14] sm:$0xf]
        %v2865 = vld [vmem:[%s2858 + $0x18] sm:$0xf]
        %v2866 = vld [vmem:[%s2858 + $0x1c] sm:$0xf]
        %v2867 = vrot.slane %v1963, 1
        %v2868 = vrot.slane %v1965, 2
        %v2869 = vor.u32 %v2867, %v2868
        %v2870 = vrot.slane %v1974, 1
        %v2871 = vrot.slane %v1970, 2
        %v2872 = vor.u32 %v2870, %v2871
        %v2873 = vsel %vm1251, %v2869, %v2872
        %v2874 = vrot.slane %v1982, 1
        %v2875 = vrot.slane %v1978, 2
        %v2876 = vor.u32 %v2874, %v2875
        %v2877 = vsel %vm1251, %v2872, %v2876
        %v2878 = vrot.slane %v1990, 1
        %v2879 = vrot.slane %v1986, 2
        %v2880 = vor.u32 %v2878, %v2879
        %v2881 = vsel %vm1251, %v2876, %v2880
        %v2882 = vrot.slane %v1998, 1
        %v2883 = vrot.slane %v1994, 2
        %v2884 = vor.u32 %v2882, %v2883
        %v2885 = vsel %vm1251, %v2880, %v2884
        %v2886 = vrot.slane %v2006, 1
        %v2887 = vrot.slane %v2002, 2
        %v2888 = vor.u32 %v2886, %v2887
        %v2889 = vsel %vm1251, %v2884, %v2888
        %v2890 = vrot.slane %v2014, 1
        %v2891 = vrot.slane %v2010, 2
        %v2892 = vor.u32 %v2890, %v2891
        %v2893 = vsel %vm1251, %v2888, %v2892
        %v2894 = vrot.slane %v2022, 1
        %v2895 = vrot.slane %v2018, 2
        %v2896 = vor.u32 %v2894, %v2895
        %v2897 = vsel %vm1251, %v2892, %v2896
        %v2898 = vrot.slane %v2030, 1
        %v2899 = vrot.slane %v2026, 2
        %v2900 = vor.u32 %v2898, %v2899
        %v2901 = vsel %vm1251, %v2896, %v2900
        %v2902 = vrot.slane %v2038, 1
        %v2903 = vrot.slane %v2034, 2
        %v2904 = vor.u32 %v2902, %v2903
        %v2905 = vsel %vm1251, %v2900, %v2904
        %v2906 = vrot.slane %v2046, 1
        %v2907 = vrot.slane %v2042, 2
        %v2908 = vor.u32 %v2906, %v2907
        %v2909 = vsel %vm1251, %v2904, %v2908
        %v2910 = vrot.slane %v2054, 1
        %v2911 = vrot.slane %v2050, 2
        %v2912 = vor.u32 %v2910, %v2911
        %v2913 = vsel %vm1251, %v2908, %v2912
        %v2914 = vrot.slane %v2062, 1
        %v2915 = vrot.slane %v2058, 2
        %v2916 = vor.u32 %v2914, %v2915
        %v2917 = vsel %vm1251, %v2912, %v2916
        %v2918 = vrot.slane %v2070, 1
        %v2919 = vrot.slane %v2066, 2
        %v2920 = vor.u32 %v2918, %v2919
        %v2921 = vsel %vm1251, %v2916, %v2920
        %v2922 = vrot.slane %v2078, 1
        %v2923 = vrot.slane %v2074, 2
        %v2924 = vor.u32 %v2922, %v2923
        %v2925 = vsel %vm1251, %v2920, %v2924
        %v2926 = vrot.slane %v2086, 1
        %v2927 = vrot.slane %v2082, 2
        %v2928 = vor.u32 %v2926, %v2927
        %v2929 = vsel %vm1251, %v2924, %v2928
        %v2938 = vunpack.c.l.b16 %v2859
        %v2939 = vunpack.c.l.b16 %v2860
        %v2940 = vunpack.c.l.b16 %v2861
        %v2941 = vunpack.c.l.b16 %v2862
        %v2942 = vunpack.c.l.b16 %v2863
        %v2943 = vunpack.c.l.b16 %v2864
        %v2944 = vunpack.c.l.b16 %v2865
        %v2945 = vunpack.c.l.b16 %v2866
        %v2946 = vpack.c.b16 %v2939, %v2938
        %v2947 = vpack.c.b16 %v2941, %v2940
        %v2948 = vpack.c.b16 %v2943, %v2942
        %v2949 = vpack.c.b16 %v2945, %v2944
        %v2955 = vsel %vm2113, %v2873, 0
        %v2958 = vsel %vm2113, %v2877, 0
        %v2961 = vsel %vm2113, %v2881, 0
        %v2964 = vsel %vm2113, %v2885, 0
        %v2967 = vsel %vm2113, %v2889, 0
        %v2970 = vsel %vm2113, %v2893, 0
        %v2973 = vsel %vm2113, %v2897, 0
        %v2976 = vsel %vm2113, %v2901, 0
        %v2979 = vsel %vm2113, %v2905, 0
        %v2982 = vsel %vm2113, %v2909, 0
        %v2985 = vsel %vm2113, %v2913, 0
        %v2988 = vsel %vm2113, %v2917, 0
        %v2991 = vsel %vm2113, %v2921, 0
        %v2994 = vsel %vm2113, %v2925, 0
        %v2997 = vsel %vm2113, %v2929, 0
        %v3000 = vsel %vm2113, %v2928, 0
        %3002 = vmatprep.subr.bf16.mxu0 0
        %3003 = vmatpush1.bf16.msra.mxu0 0
        %3004 = vmatprep.subr.bf16.mxu0 0
        %3005 = vmatpush1.bf16.msra.mxu0 0
        %3006 = vmatprep.subr.bf16.mxu0 0
        %3007 = vmatpush1.bf16.msra.mxu0 0
        %3008 = vmatprep.subr.bf16.mxu0 0
        %3009 = vmatpush1.bf16.msra.mxu0 0
        %3010 = vmatprep.subr.bf16.mxu0 0
        %3011 = vmatpush1.bf16.msra.mxu0 %v2949
        %3012 = vmatprep.subr.bf16.mxu0 0
        %3013 = vmatpush1.bf16.msra.mxu0 %v2948
        %3014 = vmatprep.subr.bf16.mxu0 0
        %3015 = vmatpush1.bf16.msra.mxu0 %v2947
        %3016 = vmatprep.subr.bf16.mxu0 0
        %3017 = vmatpush1.bf16.msra.mxu0 %v2946
        %3018 = vmatprep.subr.bf16.mxu0 0
        %3019 = vmatpush2.bf16.msra.mxu0 0
        %3020 = vmatprep.subr.bf16.mxu0 0
        %3021 = vmatpush2.bf16.msra.mxu0 0
        %3022 = vmatprep.subr.bf16.mxu0 0
        %3023 = vmatpush2.bf16.msra.mxu0 0
        %3024 = vmatprep.subr.bf16.mxu0 0
        %3025 = vmatpush2.bf16.msra.mxu0 0
        %3026 = vmatprep.subr.bf16.mxu0 0
        %3027 = vmatpush2.bf16.msra.mxu0 0
        %3028 = vmatprep.subr.bf16.mxu0 0
        %3029 = vmatpush2.bf16.msra.mxu0 0
        %3030 = vmatprep.subr.bf16.mxu0 0
        %3031 = vmatpush2.bf16.msra.mxu0 0
        %3032 = vmatprep.subr.bf16.mxu0 0
        %3033 = vmatpush2.bf16.msra.mxu0 0
        %3034 = vmatprep.mubr.bf16.mxu0 0
        %3035 = vmatmul.mubr.bf16.gmra.mxu0 %v2955
        %v3036 = vpop.f32.mrf.mxu0
        %v3037 = vadd.f32 0.0, %v3036
        %v3038 = vpop.f32.mrf.mxu0
        %v3039 = vpop.f32.mrf.mxu0
        %v3040 = vadd.f32 0.0, %v3039
        %v3041 = vpop.f32.mrf.mxu0
        %3042 = vmatprep.mubr.bf16.mxu0 0
        %3043 = vmatmul.mubr.bf16.gmra.mxu0 %v2958
        %v3044 = vpop.f32.mrf.mxu0
        %v3045 = vadd.f32 0.0, %v3044
        %v3046 = vpop.f32.mrf.mxu0
        %v3047 = vpop.f32.mrf.mxu0
        %v3048 = vadd.f32 0.0, %v3047
        %v3049 = vpop.f32.mrf.mxu0
        %3050 = vmatprep.mubr.bf16.mxu0 0
        %3051 = vmatmul.mubr.bf16.gmra.mxu0 %v2961
        %v3052 = vpop.f32.mrf.mxu0
        %v3053 = vadd.f32 0.0, %v3052
        %v3054 = vpop.f32.mrf.mxu0
        %v3055 = vpop.f32.mrf.mxu0
        %v3056 = vadd.f32 0.0, %v3055
        %v3057 = vpop.f32.mrf.mxu0
        %3058 = vmatprep.mubr.bf16.mxu0 0
        %3059 = vmatmul.mubr.bf16.gmra.mxu0 %v2964
        %v3060 = vpop.f32.mrf.mxu0
        %v3061 = vadd.f32 0.0, %v3060
        %v3062 = vpop.f32.mrf.mxu0
        %v3063 = vpop.f32.mrf.mxu0
        %v3064 = vadd.f32 0.0, %v3063
        %v3065 = vpop.f32.mrf.mxu0
        %3066 = vmatprep.mubr.bf16.mxu0 0
        %3067 = vmatmul.mubr.bf16.gmra.mxu0 %v2967
        %v3068 = vpop.f32.mrf.mxu0
        %v3069 = vadd.f32 0.0, %v3068
        %v3070 = vpop.f32.mrf.mxu0
        %v3071 = vpop.f32.mrf.mxu0
        %v3072 = vadd.f32 0.0, %v3071
        %v3073 = vpop.f32.mrf.mxu0
        %3074 = vmatprep.mubr.bf16.mxu0 0
        %3075 = vmatmul.mubr.bf16.gmra.mxu0 %v2970
        %v3076 = vpop.f32.mrf.mxu0
        %v3077 = vadd.f32 0.0, %v3076
        %v3078 = vpop.f32.mrf.mxu0
        %v3079 = vpop.f32.mrf.mxu0
        %v3080 = vadd.f32 0.0, %v3079
        %v3081 = vpop.f32.mrf.mxu0
        %3082 = vmatprep.mubr.bf16.mxu0 0
        %3083 = vmatmul.mubr.bf16.gmra.mxu0 %v2973
        %v3084 = vpop.f32.mrf.mxu0
        %v3085 = vadd.f32 0.0, %v3084
        %v3086 = vpop.f32.mrf.mxu0
        %v3087 = vpop.f32.mrf.mxu0
        %v3088 = vadd.f32 0.0, %v3087
        %v3089 = vpop.f32.mrf.mxu0
        %3090 = vmatprep.mubr.bf16.mxu0 0
        %3091 = vmatmul.mubr.bf16.gmra.mxu0 %v2976
        %v3092 = vpop.f32.mrf.mxu0
        %v3093 = vadd.f32 0.0, %v3092
        %v3094 = vpop.f32.mrf.mxu0
        %v3095 = vpop.f32.mrf.mxu0
        %v3096 = vadd.f32 0.0, %v3095
        %v3097 = vpop.f32.mrf.mxu0
        %3098 = vmatprep.mubr.bf16.mxu0 0
        %3099 = vmatmul.mubr.bf16.gmra.mxu0 %v2979
        %v3100 = vpop.f32.mrf.mxu0
        %v3101 = vadd.f32 0.0, %v3100
        %v3102 = vpop.f32.mrf.mxu0
        %v3103 = vpop.f32.mrf.mxu0
        %v3104 = vadd.f32 0.0, %v3103
        %v3105 = vpop.f32.mrf.mxu0
        %3106 = vmatprep.mubr.bf16.mxu0 0
        %3107 = vmatmul.mubr.bf16.gmra.mxu0 %v2982
        %v3108 = vpop.f32.mrf.mxu0
        %v3109 = vadd.f32 0.0, %v3108
        %v3110 = vpop.f32.mrf.mxu0
        %v3111 = vpop.f32.mrf.mxu0
        %v3112 = vadd.f32 0.0, %v3111
        %v3113 = vpop.f32.mrf.mxu0
        %3114 = vmatprep.mubr.bf16.mxu0 0
        %3115 = vmatmul.mubr.bf16.gmra.mxu0 %v2985
        %v3116 = vpop.f32.mrf.mxu0
        %v3117 = vadd.f32 0.0, %v3116
        %v3118 = vpop.f32.mrf.mxu0
        %v3119 = vpop.f32.mrf.mxu0
        %v3120 = vadd.f32 0.0, %v3119
        %v3121 = vpop.f32.mrf.mxu0
        %3122 = vmatprep.mubr.bf16.mxu0 0
        %3123 = vmatmul.mubr.bf16.gmra.mxu0 %v2988
        %v3124 = vpop.f32.mrf.mxu0
        %v3125 = vadd.f32 0.0, %v3124
        %v3126 = vpop.f32.mrf.mxu0
        %v3127 = vpop.f32.mrf.mxu0
        %v3128 = vadd.f32 0.0, %v3127
        %v3129 = vpop.f32.mrf.mxu0
        %3130 = vmatprep.mubr.bf16.mxu0 0
        %3131 = vmatmul.mubr.bf16.gmra.mxu0 %v2991
        %v3132 = vpop.f32.mrf.mxu0
        %v3133 = vadd.f32 0.0, %v3132
        %v3134 = vpop.f32.mrf.mxu0
        %v3135 = vpop.f32.mrf.mxu0
        %v3136 = vadd.f32 0.0, %v3135
        %v3137 = vpop.f32.mrf.mxu0
        %3138 = vmatprep.mubr.bf16.mxu0 0
        %3139 = vmatmul.mubr.bf16.gmra.mxu0 %v2994
        %v3140 = vpop.f32.mrf.mxu0
        %v3141 = vadd.f32 0.0, %v3140
        %v3142 = vpop.f32.mrf.mxu0
        %v3143 = vpop.f32.mrf.mxu0
        %v3144 = vadd.f32 0.0, %v3143
        %v3145 = vpop.f32.mrf.mxu0
        %3146 = vmatprep.mubr.bf16.mxu0 0
        %3147 = vmatmul.mubr.bf16.gmra.mxu0 %v2997
        %v3148 = vpop.f32.mrf.mxu0
        %v3149 = vadd.f32 0.0, %v3148
        %v3150 = vpop.f32.mrf.mxu0
        %v3151 = vpop.f32.mrf.mxu0
        %v3152 = vadd.f32 0.0, %v3151
        %v3153 = vpop.f32.mrf.mxu0
        %3154 = vmatprep.mubr.bf16.mxu0 0
        %3155 = vmatmul.mubr.bf16.gmra.mxu0 %v3000
        %v3156 = vpop.f32.mrf.mxu0
        %v3157 = vadd.f32 0.0, %v3156
        %v3158 = vpop.f32.mrf.mxu0
        %v3159 = vpop.f32.mrf.mxu0
        %v3160 = vpop.f32.mrf.mxu0
        %3161 = vdwg.mxu0
        %v3162 = vadd.f32 %v2827, %v3037
        %v3163 = vadd.f32 %v2828, %v3040
        %v3164 = vadd.f32 %v2829, %v3045
        %v3165 = vadd.f32 %v2830, %v3048
        %v3166 = vadd.f32 %v2831, %v3053
        %v3167 = vadd.f32 %v2832, %v3056
        %v3168 = vadd.f32 %v2833, %v3061
        %v3169 = vadd.f32 %v2834, %v3064
        %v3170 = vadd.f32 %v2835, %v3069
        %v3171 = vadd.f32 %v2836, %v3072
        %v3172 = vadd.f32 %v2837, %v3077
        %v3173 = vadd.f32 %v2838, %v3080
        %v3174 = vadd.f32 %v2839, %v3085
        %v3175 = vadd.f32 %v2840, %v3088
        %v3176 = vadd.f32 %v2841, %v3093
        %v3177 = vadd.f32 %v2842, %v3096
        %v3178 = vadd.f32 %v2843, %v3101
        %v3179 = vadd.f32 %v2844, %v3104
        %v3180 = vadd.f32 %v2845, %v3109
        %v3181 = vadd.f32 %v2846, %v3112
        %v3182 = vadd.f32 %v2847, %v3117
        %v3183 = vadd.f32 %v2848, %v3120
        %v3184 = vadd.f32 %v2849, %v3125
        %v3185 = vadd.f32 %v2850, %v3128
        %v3186 = vadd.f32 %v2851, %v3133
        %v3187 = vadd.f32 %v2852, %v3136
        %v3188 = vadd.f32 %v2853, %v3141
        %v3189 = vadd.f32 %v2854, %v3144
        %v3190 = vadd.f32 %v2855, %v3149
        %v3191 = vadd.f32 %v2856, %v3152
        %v3192 = vadd.f32 %v2857, %v3157
        %s3193 = scalar_lea.vmem %s3, 128
        %v3194 = vld [vmem:[%s3193] sm:$0xf]
        %v3195 = vld [vmem:[%s3193 + $0x4] sm:$0xf]
        %v3196 = vld [vmem:[%s3193 + $0x8] sm:$0xf]
        %v3197 = vld [vmem:[%s3193 + $0xc] sm:$0xf]
        %v3198 = vld [vmem:[%s3193 + $0x10] sm:$0xf]
        %v3199 = vld [vmem:[%s3193 + $0x14] sm:$0xf]
        %v3200 = vld [vmem:[%s3193 + $0x18] sm:$0xf]
        %v3201 = vld [vmem:[%s3193 + $0x1c] sm:$0xf]
        %v3202 = vrot.slane %v1928, 2
        %v3203 = vrot.slane %v1929, 2
        %v3204 = vsel %vm1572, %v3202, %v3203
        %v3205 = vrot.slane %v1930, 2
        %v3206 = vsel %vm1572, %v3203, %v3205
        %v3207 = vrot.slane %v1931, 2
        %v3208 = vsel %vm1572, %v3205, %v3207
        %v3209 = vrot.slane %v1932, 2
        %v3210 = vsel %vm1572, %v3207, %v3209
        %v3211 = vrot.slane %v1933, 2
        %v3212 = vsel %vm1572, %v3209, %v3211
        %v3213 = vrot.slane %v1934, 2
        %v3214 = vsel %vm1572, %v3211, %v3213
        %v3215 = vrot.slane %v1935, 2
        %v3216 = vsel %vm1572, %v3213, %v3215
        %v3217 = vrot.slane %v1936, 2
        %v3218 = vsel %vm1572, %v3215, %v3217
        %v3219 = vrot.slane %v1937, 2
        %v3220 = vsel %vm1572, %v3217, %v3219
        %v3221 = vrot.slane %v1938, 2
        %v3222 = vsel %vm1572, %v3219, %v3221
        %v3223 = vrot.slane %v1939, 2
        %v3224 = vsel %vm1572, %v3221, %v3223
        %v3225 = vrot.slane %v1940, 2
        %v3226 = vsel %vm1572, %v3223, %v3225
        %v3227 = vrot.slane %v1941, 2
        %v3228 = vsel %vm1572, %v3225, %v3227
        %v3229 = vrot.slane %v1942, 2
        %v3230 = vsel %vm1572, %v3227, %v3229
        %v3231 = vrot.slane %v1952, 2
        %v3232 = vsel %vm1572, %v3229, %v3231
        %v3241 = vunpack.c.l.b16 %v3194
        %v3242 = vunpack.c.l.b16 %v3195
        %v3243 = vunpack.c.l.b16 %v3196
        %v3244 = vunpack.c.l.b16 %v3197
        %v3245 = vunpack.c.l.b16 %v3198
        %v3246 = vunpack.c.l.b16 %v3199
        %v3247 = vunpack.c.l.b16 %v3200
        %v3248 = vunpack.c.l.b16 %v3201
        %v3249 = vpack.c.b16 %v3242, %v3241
        %v3250 = vpack.c.b16 %v3244, %v3243
        %v3251 = vpack.c.b16 %v3246, %v3245
        %v3252 = vpack.c.b16 %v3248, %v3247
        %v3258 = vsel %vm2113, %v3204, 0
        %v3261 = vsel %vm2113, %v3206, 0
        %v3264 = vsel %vm2113, %v3208, 0
        %v3267 = vsel %vm2113, %v3210, 0
        %v3270 = vsel %vm2113, %v3212, 0
        %v3273 = vsel %vm2113, %v3214, 0
        %v3276 = vsel %vm2113, %v3216, 0
        %v3279 = vsel %vm2113, %v3218, 0
        %v3282 = vsel %vm2113, %v3220, 0
        %v3285 = vsel %vm2113, %v3222, 0
        %v3288 = vsel %vm2113, %v3224, 0
        %v3291 = vsel %vm2113, %v3226, 0
        %v3294 = vsel %vm2113, %v3228, 0
        %v3297 = vsel %vm2113, %v3230, 0
        %v3300 = vsel %vm2113, %v3232, 0
        %v3303 = vsel %vm2113, %v3231, 0
        %3305 = vmatprep.subr.bf16.mxu0 0
        %3306 = vmatpush1.bf16.msra.mxu0 0
        %3307 = vmatprep.subr.bf16.mxu0 0
        %3308 = vmatpush1.bf16.msra.mxu0 0
        %3309 = vmatprep.subr.bf16.mxu0 0
        %3310 = vmatpush1.bf16.msra.mxu0 0
        %3311 = vmatprep.subr.bf16.mxu0 0
        %3312 = vmatpush1.bf16.msra.mxu0 0
        %3313 = vmatprep.subr.bf16.mxu0 0
        %3314 = vmatpush1.bf16.msra.mxu0 %v3252
        %3315 = vmatprep.subr.bf16.mxu0 0
        %3316 = vmatpush1.bf16.msra.mxu0 %v3251
        %3317 = vmatprep.subr.bf16.mxu0 0
        %3318 = vmatpush1.bf16.msra.mxu0 %v3250
        %3319 = vmatprep.subr.bf16.mxu0 0
        %3320 = vmatpush1.bf16.msra.mxu0 %v3249
        %3321 = vmatprep.subr.bf16.mxu0 0
        %3322 = vmatpush2.bf16.msra.mxu0 0
        %3323 = vmatprep.subr.bf16.mxu0 0
        %3324 = vmatpush2.bf16.msra.mxu0 0
        %3325 = vmatprep.subr.bf16.mxu0 0
        %3326 = vmatpush2.bf16.msra.mxu0 0
        %3327 = vmatprep.subr.bf16.mxu0 0
        %3328 = vmatpush2.bf16.msra.mxu0 0
        %3329 = vmatprep.subr.bf16.mxu0 0
        %3330 = vmatpush2.bf16.msra.mxu0 0
        %3331 = vmatprep.subr.bf16.mxu0 0
        %3332 = vmatpush2.bf16.msra.mxu0 0
        %3333 = vmatprep.subr.bf16.mxu0 0
        %3334 = vmatpush2.bf16.msra.mxu0 0
        %3335 = vmatprep.subr.bf16.mxu0 0
        %3336 = vmatpush2.bf16.msra.mxu0 0
        %3337 = vmatprep.mubr.bf16.mxu0 0
        %3338 = vmatmul.mubr.bf16.gmra.mxu0 %v3258
        %v3339 = vpop.f32.mrf.mxu0
        %v3340 = vadd.f32 0.0, %v3339
        %v3341 = vpop.f32.mrf.mxu0
        %v3342 = vpop.f32.mrf.mxu0
        %v3343 = vadd.f32 0.0, %v3342
        %v3344 = vpop.f32.mrf.mxu0
        %3345 = vmatprep.mubr.bf16.mxu0 0
        %3346 = vmatmul.mubr.bf16.gmra.mxu0 %v3261
        %v3347 = vpop.f32.mrf.mxu0
        %v3348 = vadd.f32 0.0, %v3347
        %v3349 = vpop.f32.mrf.mxu0
        %v3350 = vpop.f32.mrf.mxu0
        %v3351 = vadd.f32 0.0, %v3350
        %v3352 = vpop.f32.mrf.mxu0
        %3353 = vmatprep.mubr.bf16.mxu0 0
        %3354 = vmatmul.mubr.bf16.gmra.mxu0 %v3264
        %v3355 = vpop.f32.mrf.mxu0
        %v3356 = vadd.f32 0.0, %v3355
        %v3357 = vpop.f32.mrf.mxu0
        %v3358 = vpop.f32.mrf.mxu0
        %v3359 = vadd.f32 0.0, %v3358
        %v3360 = vpop.f32.mrf.mxu0
        %3361 = vmatprep.mubr.bf16.mxu0 0
        %3362 = vmatmul.mubr.bf16.gmra.mxu0 %v3267
        %v3363 = vpop.f32.mrf.mxu0
        %v3364 = vadd.f32 0.0, %v3363
        %v3365 = vpop.f32.mrf.mxu0
        %v3366 = vpop.f32.mrf.mxu0
        %v3367 = vadd.f32 0.0, %v3366
        %v3368 = vpop.f32.mrf.mxu0
        %3369 = vmatprep.mubr.bf16.mxu0 0
        %3370 = vmatmul.mubr.bf16.gmra.mxu0 %v3270
        %v3371 = vpop.f32.mrf.mxu0
        %v3372 = vadd.f32 0.0, %v3371
        %v3373 = vpop.f32.mrf.mxu0
        %v3374 = vpop.f32.mrf.mxu0
        %v3375 = vadd.f32 0.0, %v3374
        %v3376 = vpop.f32.mrf.mxu0
        %3377 = vmatprep.mubr.bf16.mxu0 0
        %3378 = vmatmul.mubr.bf16.gmra.mxu0 %v3273
        %v3379 = vpop.f32.mrf.mxu0
        %v3380 = vadd.f32 0.0, %v3379
        %v3381 = vpop.f32.mrf.mxu0
        %v3382 = vpop.f32.mrf.mxu0
        %v3383 = vadd.f32 0.0, %v3382
        %v3384 = vpop.f32.mrf.mxu0
        %3385 = vmatprep.mubr.bf16.mxu0 0
        %3386 = vmatmul.mubr.bf16.gmra.mxu0 %v3276
        %v3387 = vpop.f32.mrf.mxu0
        %v3388 = vadd.f32 0.0, %v3387
        %v3389 = vpop.f32.mrf.mxu0
        %v3390 = vpop.f32.mrf.mxu0
        %v3391 = vadd.f32 0.0, %v3390
        %v3392 = vpop.f32.mrf.mxu0
        %3393 = vmatprep.mubr.bf16.mxu0 0
        %3394 = vmatmul.mubr.bf16.gmra.mxu0 %v3279
        %v3395 = vpop.f32.mrf.mxu0
        %v3396 = vadd.f32 0.0, %v3395
        %v3397 = vpop.f32.mrf.mxu0
        %v3398 = vpop.f32.mrf.mxu0
        %v3399 = vadd.f32 0.0, %v3398
        %v3400 = vpop.f32.mrf.mxu0
        %3401 = vmatprep.mubr.bf16.mxu0 0
        %3402 = vmatmul.mubr.bf16.gmra.mxu0 %v3282
        %v3403 = vpop.f32.mrf.mxu0
        %v3404 = vadd.f32 0.0, %v3403
        %v3405 = vpop.f32.mrf.mxu0
        %v3406 = vpop.f32.mrf.mxu0
        %v3407 = vadd.f32 0.0, %v3406
        %v3408 = vpop.f32.mrf.mxu0
        %3409 = vmatprep.mubr.bf16.mxu0 0
        %3410 = vmatmul.mubr.bf16.gmra.mxu0 %v3285
        %v3411 = vpop.f32.mrf.mxu0
        %v3412 = vadd.f32 0.0, %v3411
        %v3413 = vpop.f32.mrf.mxu0
        %v3414 = vpop.f32.mrf.mxu0
        %v3415 = vadd.f32 0.0, %v3414
        %v3416 = vpop.f32.mrf.mxu0
        %3417 = vmatprep.mubr.bf16.mxu0 0
        %3418 = vmatmul.mubr.bf16.gmra.mxu0 %v3288
        %v3419 = vpop.f32.mrf.mxu0
        %v3420 = vadd.f32 0.0, %v3419
        %v3421 = vpop.f32.mrf.mxu0
        %v3422 = vpop.f32.mrf.mxu0
        %v3423 = vadd.f32 0.0, %v3422
        %v3424 = vpop.f32.mrf.mxu0
        %3425 = vmatprep.mubr.bf16.mxu0 0
        %3426 = vmatmul.mubr.bf16.gmra.mxu0 %v3291
        %v3427 = vpop.f32.mrf.mxu0
        %v3428 = vadd.f32 0.0, %v3427
        %v3429 = vpop.f32.mrf.mxu0
        %v3430 = vpop.f32.mrf.mxu0
        %v3431 = vadd.f32 0.0, %v3430
        %v3432 = vpop.f32.mrf.mxu0
        %3433 = vmatprep.mubr.bf16.mxu0 0
        %3434 = vmatmul.mubr.bf16.gmra.mxu0 %v3294
        %v3435 = vpop.f32.mrf.mxu0
        %v3436 = vadd.f32 0.0, %v3435
        %v3437 = vpop.f32.mrf.mxu0
        %v3438 = vpop.f32.mrf.mxu0
        %v3439 = vadd.f32 0.0, %v3438
        %v3440 = vpop.f32.mrf.mxu0
        %3441 = vmatprep.mubr.bf16.mxu0 0
        %3442 = vmatmul.mubr.bf16.gmra.mxu0 %v3297
        %v3443 = vpop.f32.mrf.mxu0
        %v3444 = vadd.f32 0.0, %v3443
        %v3445 = vpop.f32.mrf.mxu0
        %v3446 = vpop.f32.mrf.mxu0
        %v3447 = vadd.f32 0.0, %v3446
        %v3448 = vpop.f32.mrf.mxu0
        %3449 = vmatprep.mubr.bf16.mxu0 0
        %3450 = vmatmul.mubr.bf16.gmra.mxu0 %v3300
        %v3451 = vpop.f32.mrf.mxu0
        %v3452 = vadd.f32 0.0, %v3451
        %v3453 = vpop.f32.mrf.mxu0
        %v3454 = vpop.f32.mrf.mxu0
        %v3455 = vadd.f32 0.0, %v3454
        %v3456 = vpop.f32.mrf.mxu0
        %3457 = vmatprep.mubr.bf16.mxu0 0
        %3458 = vmatmul.mubr.bf16.gmra.mxu0 %v3303
        %v3459 = vpop.f32.mrf.mxu0
        %v3460 = vadd.f32 0.0, %v3459
        %v3461 = vpop.f32.mrf.mxu0
        %v3462 = vpop.f32.mrf.mxu0
        %v3463 = vpop.f32.mrf.mxu0
        %3464 = vdwg.mxu0
        %v3465 = vadd.f32 %v3162, %v3340
        %v3466 = vadd.f32 %v3163, %v3343
        %v3467 = vadd.f32 %v3164, %v3348
        %v3468 = vadd.f32 %v3165, %v3351
        %v3469 = vadd.f32 %v3166, %v3356
        %v3470 = vadd.f32 %v3167, %v3359
        %v3471 = vadd.f32 %v3168, %v3364
        %v3472 = vadd.f32 %v3169, %v3367
        %v3473 = vadd.f32 %v3170, %v3372
        %v3474 = vadd.f32 %v3171, %v3375
        %v3475 = vadd.f32 %v3172, %v3380
        %v3476 = vadd.f32 %v3173, %v3383
        %v3477 = vadd.f32 %v3174, %v3388
        %v3478 = vadd.f32 %v3175, %v3391
        %v3479 = vadd.f32 %v3176, %v3396
        %v3480 = vadd.f32 %v3177, %v3399
        %v3481 = vadd.f32 %v3178, %v3404
        %v3482 = vadd.f32 %v3179, %v3407
        %v3483 = vadd.f32 %v3180, %v3412
        %v3484 = vadd.f32 %v3181, %v3415
        %v3485 = vadd.f32 %v3182, %v3420
        %v3486 = vadd.f32 %v3183, %v3423
        %v3487 = vadd.f32 %v3184, %v3428
        %v3488 = vadd.f32 %v3185, %v3431
        %v3489 = vadd.f32 %v3186, %v3436
        %v3490 = vadd.f32 %v3187, %v3439
        %v3491 = vadd.f32 %v3188, %v3444
        %v3492 = vadd.f32 %v3189, %v3447
        %v3493 = vadd.f32 %v3190, %v3452
        %v3494 = vadd.f32 %v3191, %v3455
        %v3495 = vadd.f32 %v3192, %v3460
        %v3496 = vld [vmem:[%s4] sm:$0x1]
        %v3498 = vlaneseq
        %v3499 = vshrl.u32 %v3498, 7
        %v3500 = vsub.s32 0, %v3499
        %v3501 = vrot.slane %v3496, %v3500
        %v3503 = vadd.f32 %v3465, %v3501
        %v3504 = vadd.f32 %v3466, %v3501
        %v3505 = vadd.f32 %v3467, %v3501
        %v3506 = vadd.f32 %v3468, %v3501
        %v3507 = vadd.f32 %v3469, %v3501
        %v3508 = vadd.f32 %v3470, %v3501
        %v3509 = vadd.f32 %v3471, %v3501
        %v3510 = vadd.f32 %v3472, %v3501
        %v3511 = vadd.f32 %v3473, %v3501
        %v3512 = vadd.f32 %v3474, %v3501
        %v3513 = vadd.f32 %v3475, %v3501
        %v3514 = vadd.f32 %v3476, %v3501
        %v3515 = vadd.f32 %v3477, %v3501
        %v3516 = vadd.f32 %v3478, %v3501
        %v3517 = vadd.f32 %v3479, %v3501
        %v3518 = vadd.f32 %v3480, %v3501
        %v3519 = vadd.f32 %v3481, %v3501
        %v3520 = vadd.f32 %v3482, %v3501
        %v3521 = vadd.f32 %v3483, %v3501
        %v3522 = vadd.f32 %v3484, %v3501
        %v3523 = vadd.f32 %v3485, %v3501
        %v3524 = vadd.f32 %v3486, %v3501
        %v3525 = vadd.f32 %v3487, %v3501
        %v3526 = vadd.f32 %v3488, %v3501
        %v3527 = vadd.f32 %v3489, %v3501
        %v3528 = vadd.f32 %v3490, %v3501
        %v3529 = vadd.f32 %v3491, %v3501
        %v3530 = vadd.f32 %v3492, %v3501
        %v3531 = vadd.f32 %v3493, %v3501
        %v3532 = vadd.f32 %v3494, %v3501
        %v3533 = vadd.f32 %v3495, %v3501
        %v3534 = vmax.f32 %v3503, 0.0
        %v3535 = vmax.f32 %v3504, 0.0
        %v3536 = vmax.f32 %v3505, 0.0
        %v3537 = vmax.f32 %v3506, 0.0
        %v3538 = vmax.f32 %v3507, 0.0
        %v3539 = vmax.f32 %v3508, 0.0
        %v3540 = vmax.f32 %v3509, 0.0
        %v3541 = vmax.f32 %v3510, 0.0
        %v3542 = vmax.f32 %v3511, 0.0
        %v3543 = vmax.f32 %v3512, 0.0
        %v3544 = vmax.f32 %v3513, 0.0
        %v3545 = vmax.f32 %v3514, 0.0
        %v3546 = vmax.f32 %v3515, 0.0
        %v3547 = vmax.f32 %v3516, 0.0
        %v3548 = vmax.f32 %v3517, 0.0
        %v3549 = vmax.f32 %v3518, 0.0
        %v3550 = vmax.f32 %v3519, 0.0
        %v3551 = vmax.f32 %v3520, 0.0
        %v3552 = vmax.f32 %v3521, 0.0
        %v3553 = vmax.f32 %v3522, 0.0
        %v3554 = vmax.f32 %v3523, 0.0
        %v3555 = vmax.f32 %v3524, 0.0
        %v3556 = vmax.f32 %v3525, 0.0
        %v3557 = vmax.f32 %v3526, 0.0
        %v3558 = vmax.f32 %v3527, 0.0
        %v3559 = vmax.f32 %v3528, 0.0
        %v3560 = vmax.f32 %v3529, 0.0
        %v3561 = vmax.f32 %v3530, 0.0
        %v3562 = vmax.f32 %v3531, 0.0
        %v3563 = vmax.f32 %v3532, 0.0
        %v3564 = vmax.f32 %v3533, 0.0
        %v3596 = vcombine.high %v3534, %v3534
        %v3597 = vcombine.high %v3535, %v3535
        %v3598 = vcombine.high %v3536, %v3536
        %v3599 = vcombine.high %v3537, %v3537
        %v3600 = vcombine.high %v3538, %v3538
        %v3601 = vcombine.high %v3539, %v3539
        %v3602 = vcombine.high %v3540, %v3540
        %v3603 = vcombine.high %v3541, %v3541
        %v3604 = vcombine.high %v3542, %v3542
        %v3605 = vcombine.high %v3543, %v3543
        %v3606 = vcombine.high %v3544, %v3544
        %v3607 = vcombine.high %v3545, %v3545
        %v3608 = vcombine.high %v3546, %v3546
        %v3609 = vcombine.high %v3547, %v3547
        %v3610 = vcombine.high %v3548, %v3548
        %v3611 = vcombine.high %v3549, %v3549
        %v3612 = vcombine.high %v3550, %v3550
        %v3613 = vcombine.high %v3551, %v3551
        %v3614 = vcombine.high %v3552, %v3552
        %v3615 = vcombine.high %v3553, %v3553
        %v3616 = vcombine.high %v3554, %v3554
        %v3617 = vcombine.high %v3555, %v3555
        %v3618 = vcombine.high %v3556, %v3556
        %v3619 = vcombine.high %v3557, %v3557
        %v3620 = vcombine.high %v3558, %v3558
        %v3621 = vcombine.high %v3559, %v3559
        %v3622 = vcombine.high %v3560, %v3560
        %v3623 = vcombine.high %v3561, %v3561
        %v3624 = vcombine.high %v3562, %v3562
        %v3625 = vcombine.high %v3563, %v3563
        %v3626 = vcombine.high %v3564, %v3564
        %vm3658 = vcmask 1043456
        %v3659 = vsel %vm3658, %v3534, -inf
        %v3660 = vrot.slane %v3659, 4
        %v3661 = vmax.f32 %v3659, %v3660
        %v3662 = vrot.slane %v3661, 2
        %v3663 = vmax.f32 %v3661, %v3662
        %v3664 = vrot.slane %v3663, 1
        %v3665 = vmax.f32 %v3663, %v3664
        %v3666 = vsel %vm3658, %v3596, -inf
        %v3667 = vrot.slane %v3666, 4
        %v3668 = vmax.f32 %v3666, %v3667
        %v3669 = vrot.slane %v3668, 2
        %v3670 = vmax.f32 %v3668, %v3669
        %v3671 = vrot.slane %v3670, 1
        %v3672 = vmax.f32 %v3670, %v3671
        %v3673 = vsel %vm3658, %v3535, -inf
        %v3674 = vrot.slane %v3673, 4
        %v3675 = vmax.f32 %v3673, %v3674
        %v3676 = vrot.slane %v3675, 2
        %v3677 = vmax.f32 %v3675, %v3676
        %v3678 = vrot.slane %v3677, 1
        %v3679 = vmax.f32 %v3677, %v3678
        %v3680 = vsel %vm3658, %v3597, -inf
        %v3681 = vrot.slane %v3680, 4
        %v3682 = vmax.f32 %v3680, %v3681
        %v3683 = vrot.slane %v3682, 2
        %v3684 = vmax.f32 %v3682, %v3683
        %v3685 = vrot.slane %v3684, 1
        %v3686 = vmax.f32 %v3684, %v3685
        %v3687 = vsel %vm3658, %v3536, -inf
        %v3688 = vrot.slane %v3687, 4
        %v3689 = vmax.f32 %v3687, %v3688
        %v3690 = vrot.slane %v3689, 2
        %v3691 = vmax.f32 %v3689, %v3690
        %v3692 = vrot.slane %v3691, 1
        %v3693 = vmax.f32 %v3691, %v3692
        %v3694 = vsel %vm3658, %v3598, -inf
        %v3695 = vrot.slane %v3694, 4
        %v3696 = vmax.f32 %v3694, %v3695
        %v3697 = vrot.slane %v3696, 2
        %v3698 = vmax.f32 %v3696, %v3697
        %v3699 = vrot.slane %v3698, 1
        %v3700 = vmax.f32 %v3698, %v3699
        %v3701 = vsel %vm3658, %v3537, -inf
        %v3702 = vrot.slane %v3701, 4
        %v3703 = vmax.f32 %v3701, %v3702
        %v3704 = vrot.slane %v3703, 2
        %v3705 = vmax.f32 %v3703, %v3704
        %v3706 = vrot.slane %v3705, 1
        %v3707 = vmax.f32 %v3705, %v3706
        %v3708 = vsel %vm3658, %v3599, -inf
        %v3709 = vrot.slane %v3708, 4
        %v3710 = vmax.f32 %v3708, %v3709
        %v3711 = vrot.slane %v3710, 2
        %v3712 = vmax.f32 %v3710, %v3711
        %v3713 = vrot.slane %v3712, 1
        %v3714 = vmax.f32 %v3712, %v3713
        %v3715 = vsel %vm3658, %v3538, -inf
        %v3716 = vrot.slane %v3715, 4
        %v3717 = vmax.f32 %v3715, %v3716
        %v3718 = vrot.slane %v3717, 2
        %v3719 = vmax.f32 %v3717, %v3718
        %v3720 = vrot.slane %v3719, 1
        %v3721 = vmax.f32 %v3719, %v3720
        %v3722 = vsel %vm3658, %v3600, -inf
        %v3723 = vrot.slane %v3722, 4
        %v3724 = vmax.f32 %v3722, %v3723
        %v3725 = vrot.slane %v3724, 2
        %v3726 = vmax.f32 %v3724, %v3725
        %v3727 = vrot.slane %v3726, 1
        %v3728 = vmax.f32 %v3726, %v3727
        %v3729 = vsel %vm3658, %v3539, -inf
        %v3730 = vrot.slane %v3729, 4
        %v3731 = vmax.f32 %v3729, %v3730
        %v3732 = vrot.slane %v3731, 2
        %v3733 = vmax.f32 %v3731, %v3732
        %v3734 = vrot.slane %v3733, 1
        %v3735 = vmax.f32 %v3733, %v3734
        %v3736 = vsel %vm3658, %v3601, -inf
        %v3737 = vrot.slane %v3736, 4
        %v3738 = vmax.f32 %v3736, %v3737
        %v3739 = vrot.slane %v3738, 2
        %v3740 = vmax.f32 %v3738, %v3739
        %v3741 = vrot.slane %v3740, 1
        %v3742 = vmax.f32 %v3740, %v3741
        %v3743 = vsel %vm3658, %v3540, -inf
        %v3744 = vrot.slane %v3743, 4
        %v3745 = vmax.f32 %v3743, %v3744
        %v3746 = vrot.slane %v3745, 2
        %v3747 = vmax.f32 %v3745, %v3746
        %v3748 = vrot.slane %v3747, 1
        %v3749 = vmax.f32 %v3747, %v3748
        %v3750 = vsel %vm3658, %v3602, -inf
        %v3751 = vrot.slane %v3750, 4
        %v3752 = vmax.f32 %v3750, %v3751
        %v3753 = vrot.slane %v3752, 2
        %v3754 = vmax.f32 %v3752, %v3753
        %v3755 = vrot.slane %v3754, 1
        %v3756 = vmax.f32 %v3754, %v3755
        %v3757 = vsel %vm3658, %v3541, -inf
        %v3758 = vrot.slane %v3757, 4
        %v3759 = vmax.f32 %v3757, %v3758
        %v3760 = vrot.slane %v3759, 2
        %v3761 = vmax.f32 %v3759, %v3760
        %v3762 = vrot.slane %v3761, 1
        %v3763 = vmax.f32 %v3761, %v3762
        %v3764 = vsel %vm3658, %v3603, -inf
        %v3765 = vrot.slane %v3764, 4
        %v3766 = vmax.f32 %v3764, %v3765
        %v3767 = vrot.slane %v3766, 2
        %v3768 = vmax.f32 %v3766, %v3767
        %v3769 = vrot.slane %v3768, 1
        %v3770 = vmax.f32 %v3768, %v3769
        %v3771 = vsel %vm3658, %v3542, -inf
        %v3772 = vrot.slane %v3771, 4
        %v3773 = vmax.f32 %v3771, %v3772
        %v3774 = vrot.slane %v3773, 2
        %v3775 = vmax.f32 %v3773, %v3774
        %v3776 = vrot.slane %v3775, 1
        %v3777 = vmax.f32 %v3775, %v3776
        %v3778 = vsel %vm3658, %v3604, -inf
        %v3779 = vrot.slane %v3778, 4
        %v3780 = vmax.f32 %v3778, %v3779
        %v3781 = vrot.slane %v3780, 2
        %v3782 = vmax.f32 %v3780, %v3781
        %v3783 = vrot.slane %v3782, 1
        %v3784 = vmax.f32 %v3782, %v3783
        %v3785 = vsel %vm3658, %v3543, -inf
        %v3786 = vrot.slane %v3785, 4
        %v3787 = vmax.f32 %v3785, %v3786
        %v3788 = vrot.slane %v3787, 2
        %v3789 = vmax.f32 %v3787, %v3788
        %v3790 = vrot.slane %v3789, 1
        %v3791 = vmax.f32 %v3789, %v3790
        %v3792 = vsel %vm3658, %v3605, -inf
        %v3793 = vrot.slane %v3792, 4
        %v3794 = vmax.f32 %v3792, %v3793
        %v3795 = vrot.slane %v3794, 2
        %v3796 = vmax.f32 %v3794, %v3795
        %v3797 = vrot.slane %v3796, 1
        %v3798 = vmax.f32 %v3796, %v3797
        %v3799 = vsel %vm3658, %v3544, -inf
        %v3800 = vrot.slane %v3799, 4
        %v3801 = vmax.f32 %v3799, %v3800
        %v3802 = vrot.slane %v3801, 2
        %v3803 = vmax.f32 %v3801, %v3802
        %v3804 = vrot.slane %v3803, 1
        %v3805 = vmax.f32 %v3803, %v3804
        %v3806 = vsel %vm3658, %v3606, -inf
        %v3807 = vrot.slane %v3806, 4
        %v3808 = vmax.f32 %v3806, %v3807
        %v3809 = vrot.slane %v3808, 2
        %v3810 = vmax.f32 %v3808, %v3809
        %v3811 = vrot.slane %v3810, 1
        %v3812 = vmax.f32 %v3810, %v3811
        %v3813 = vsel %vm3658, %v3545, -inf
        %v3814 = vrot.slane %v3813, 4
        %v3815 = vmax.f32 %v3813, %v3814
        %v3816 = vrot.slane %v3815, 2
        %v3817 = vmax.f32 %v3815, %v3816
        %v3818 = vrot.slane %v3817, 1
        %v3819 = vmax.f32 %v3817, %v3818
        %v3820 = vsel %vm3658, %v3607, -inf
        %v3821 = vrot.slane %v3820, 4
        %v3822 = vmax.f32 %v3820, %v3821
        %v3823 = vrot.slane %v3822, 2
        %v3824 = vmax.f32 %v3822, %v3823
        %v3825 = vrot.slane %v3824, 1
        %v3826 = vmax.f32 %v3824, %v3825
        %v3827 = vsel %vm3658, %v3546, -inf
        %v3828 = vrot.slane %v3827, 4
        %v3829 = vmax.f32 %v3827, %v3828
        %v3830 = vrot.slane %v3829, 2
        %v3831 = vmax.f32 %v3829, %v3830
        %v3832 = vrot.slane %v3831, 1
        %v3833 = vmax.f32 %v3831, %v3832
        %v3834 = vsel %vm3658, %v3608, -inf
        %v3835 = vrot.slane %v3834, 4
        %v3836 = vmax.f32 %v3834, %v3835
        %v3837 = vrot.slane %v3836, 2
        %v3838 = vmax.f32 %v3836, %v3837
        %v3839 = vrot.slane %v3838, 1
        %v3840 = vmax.f32 %v3838, %v3839
        %v3841 = vsel %vm3658, %v3547, -inf
        %v3842 = vrot.slane %v3841, 4
        %v3843 = vmax.f32 %v3841, %v3842
        %v3844 = vrot.slane %v3843, 2
        %v3845 = vmax.f32 %v3843, %v3844
        %v3846 = vrot.slane %v3845, 1
        %v3847 = vmax.f32 %v3845, %v3846
        %v3848 = vsel %vm3658, %v3609, -inf
        %v3849 = vrot.slane %v3848, 4
        %v3850 = vmax.f32 %v3848, %v3849
        %v3851 = vrot.slane %v3850, 2
        %v3852 = vmax.f32 %v3850, %v3851
        %v3853 = vrot.slane %v3852, 1
        %v3854 = vmax.f32 %v3852, %v3853
        %v3855 = vsel %vm3658, %v3548, -inf
        %v3856 = vrot.slane %v3855, 4
        %v3857 = vmax.f32 %v3855, %v3856
        %v3858 = vrot.slane %v3857, 2
        %v3859 = vmax.f32 %v3857, %v3858
        %v3860 = vrot.slane %v3859, 1
        %v3861 = vmax.f32 %v3859, %v3860
        %v3862 = vsel %vm3658, %v3610, -inf
        %v3863 = vrot.slane %v3862, 4
        %v3864 = vmax.f32 %v3862, %v3863
        %v3865 = vrot.slane %v3864, 2
        %v3866 = vmax.f32 %v3864, %v3865
        %v3867 = vrot.slane %v3866, 1
        %v3868 = vmax.f32 %v3866, %v3867
        %v3869 = vsel %vm3658, %v3549, -inf
        %v3870 = vrot.slane %v3869, 4
        %v3871 = vmax.f32 %v3869, %v3870
        %v3872 = vrot.slane %v3871, 2
        %v3873 = vmax.f32 %v3871, %v3872
        %v3874 = vrot.slane %v3873, 1
        %v3875 = vmax.f32 %v3873, %v3874
        %v3876 = vsel %vm3658, %v3611, -inf
        %v3877 = vrot.slane %v3876, 4
        %v3878 = vmax.f32 %v3876, %v3877
        %v3879 = vrot.slane %v3878, 2
        %v3880 = vmax.f32 %v3878, %v3879
        %v3881 = vrot.slane %v3880, 1
        %v3882 = vmax.f32 %v3880, %v3881
        %v3883 = vsel %vm3658, %v3550, -inf
        %v3884 = vrot.slane %v3883, 4
        %v3885 = vmax.f32 %v3883, %v3884
        %v3886 = vrot.slane %v3885, 2
        %v3887 = vmax.f32 %v3885, %v3886
        %v3888 = vrot.slane %v3887, 1
        %v3889 = vmax.f32 %v3887, %v3888
        %v3890 = vsel %vm3658, %v3612, -inf
        %v3891 = vrot.slane %v3890, 4
        %v3892 = vmax.f32 %v3890, %v3891
        %v3893 = vrot.slane %v3892, 2
        %v3894 = vmax.f32 %v3892, %v3893
        %v3895 = vrot.slane %v3894, 1
        %v3896 = vmax.f32 %v3894, %v3895
        %v3897 = vsel %vm3658, %v3551, -inf
        %v3898 = vrot.slane %v3897, 4
        %v3899 = vmax.f32 %v3897, %v3898
        %v3900 = vrot.slane %v3899, 2
        %v3901 = vmax.f32 %v3899, %v3900
        %v3902 = vrot.slane %v3901, 1
        %v3903 = vmax.f32 %v3901, %v3902
        %v3904 = vsel %vm3658, %v3613, -inf
        %v3905 = vrot.slane %v3904, 4
        %v3906 = vmax.f32 %v3904, %v3905
        %v3907 = vrot.slane %v3906, 2
        %v3908 = vmax.f32 %v3906, %v3907
        %v3909 = vrot.slane %v3908, 1
        %v3910 = vmax.f32 %v3908, %v3909
        %v3911 = vsel %vm3658, %v3552, -inf
        %v3912 = vrot.slane %v3911, 4
        %v3913 = vmax.f32 %v3911, %v3912
        %v3914 = vrot.slane %v3913, 2
        %v3915 = vmax.f32 %v3913, %v3914
        %v3916 = vrot.slane %v3915, 1
        %v3917 = vmax.f32 %v3915, %v3916
        %v3918 = vsel %vm3658, %v3614, -inf
        %v3919 = vrot.slane %v3918, 4
        %v3920 = vmax.f32 %v3918, %v3919
        %v3921 = vrot.slane %v3920, 2
        %v3922 = vmax.f32 %v3920, %v3921
        %v3923 = vrot.slane %v3922, 1
        %v3924 = vmax.f32 %v3922, %v3923
        %v3925 = vsel %vm3658, %v3553, -inf
        %v3926 = vrot.slane %v3925, 4
        %v3927 = vmax.f32 %v3925, %v3926
        %v3928 = vrot.slane %v3927, 2
        %v3929 = vmax.f32 %v3927, %v3928
        %v3930 = vrot.slane %v3929, 1
        %v3931 = vmax.f32 %v3929, %v3930
        %v3932 = vsel %vm3658, %v3615, -inf
        %v3933 = vrot.slane %v3932, 4
        %v3934 = vmax.f32 %v3932, %v3933
        %v3935 = vrot.slane %v3934, 2
        %v3936 = vmax.f32 %v3934, %v3935
        %v3937 = vrot.slane %v3936, 1
        %v3938 = vmax.f32 %v3936, %v3937
        %v3939 = vsel %vm3658, %v3554, -inf
        %v3940 = vrot.slane %v3939, 4
        %v3941 = vmax.f32 %v3939, %v3940
        %v3942 = vrot.slane %v3941, 2
        %v3943 = vmax.f32 %v3941, %v3942
        %v3944 = vrot.slane %v3943, 1
        %v3945 = vmax.f32 %v3943, %v3944
        %v3946 = vsel %vm3658, %v3616, -inf
        %v3947 = vrot.slane %v3946, 4
        %v3948 = vmax.f32 %v3946, %v3947
        %v3949 = vrot.slane %v3948, 2
        %v3950 = vmax.f32 %v3948, %v3949
        %v3951 = vrot.slane %v3950, 1
        %v3952 = vmax.f32 %v3950, %v3951
        %v3953 = vsel %vm3658, %v3555, -inf
        %v3954 = vrot.slane %v3953, 4
        %v3955 = vmax.f32 %v3953, %v3954
        %v3956 = vrot.slane %v3955, 2
        %v3957 = vmax.f32 %v3955, %v3956
        %v3958 = vrot.slane %v3957, 1
        %v3959 = vmax.f32 %v3957, %v3958
        %v3960 = vsel %vm3658, %v3617, -inf
        %v3961 = vrot.slane %v3960, 4
        %v3962 = vmax.f32 %v3960, %v3961
        %v3963 = vrot.slane %v3962, 2
        %v3964 = vmax.f32 %v3962, %v3963
        %v3965 = vrot.slane %v3964, 1
        %v3966 = vmax.f32 %v3964, %v3965
        %v3967 = vsel %vm3658, %v3556, -inf
        %v3968 = vrot.slane %v3967, 4
        %v3969 = vmax.f32 %v3967, %v3968
        %v3970 = vrot.slane %v3969, 2
        %v3971 = vmax.f32 %v3969, %v3970
        %v3972 = vrot.slane %v3971, 1
        %v3973 = vmax.f32 %v3971, %v3972
        %v3974 = vsel %vm3658, %v3618, -inf
        %v3975 = vrot.slane %v3974, 4
        %v3976 = vmax.f32 %v3974, %v3975
        %v3977 = vrot.slane %v3976, 2
        %v3978 = vmax.f32 %v3976, %v3977
        %v3979 = vrot.slane %v3978, 1
        %v3980 = vmax.f32 %v3978, %v3979
        %v3981 = vsel %vm3658, %v3557, -inf
        %v3982 = vrot.slane %v3981, 4
        %v3983 = vmax.f32 %v3981, %v3982
        %v3984 = vrot.slane %v3983, 2
        %v3985 = vmax.f32 %v3983, %v3984
        %v3986 = vrot.slane %v3985, 1
        %v3987 = vmax.f32 %v3985, %v3986
        %v3988 = vsel %vm3658, %v3619, -inf
        %v3989 = vrot.slane %v3988, 4
        %v3990 = vmax.f32 %v3988, %v3989
        %v3991 = vrot.slane %v3990, 2
        %v3992 = vmax.f32 %v3990, %v3991
        %v3993 = vrot.slane %v3992, 1
        %v3994 = vmax.f32 %v3992, %v3993
        %v3995 = vsel %vm3658, %v3558, -inf
        %v3996 = vrot.slane %v3995, 4
        %v3997 = vmax.f32 %v3995, %v3996
        %v3998 = vrot.slane %v3997, 2
        %v3999 = vmax.f32 %v3997, %v3998
        %v4000 = vrot.slane %v3999, 1
        %v4001 = vmax.f32 %v3999, %v4000
        %v4002 = vsel %vm3658, %v3620, -inf
        %v4003 = vrot.slane %v4002, 4
        %v4004 = vmax.f32 %v4002, %v4003
        %v4005 = vrot.slane %v4004, 2
        %v4006 = vmax.f32 %v4004, %v4005
        %v4007 = vrot.slane %v4006, 1
        %v4008 = vmax.f32 %v4006, %v4007
        %v4009 = vsel %vm3658, %v3559, -inf
        %v4010 = vrot.slane %v4009, 4
        %v4011 = vmax.f32 %v4009, %v4010
        %v4012 = vrot.slane %v4011, 2
        %v4013 = vmax.f32 %v4011, %v4012
        %v4014 = vrot.slane %v4013, 1
        %v4015 = vmax.f32 %v4013, %v4014
        %v4016 = vsel %vm3658, %v3621, -inf
        %v4017 = vrot.slane %v4016, 4
        %v4018 = vmax.f32 %v4016, %v4017
        %v4019 = vrot.slane %v4018, 2
        %v4020 = vmax.f32 %v4018, %v4019
        %v4021 = vrot.slane %v4020, 1
        %v4022 = vmax.f32 %v4020, %v4021
        %v4023 = vsel %vm3658, %v3560, -inf
        %v4024 = vrot.slane %v4023, 4
        %v4025 = vmax.f32 %v4023, %v4024
        %v4026 = vrot.slane %v4025, 2
        %v4027 = vmax.f32 %v4025, %v4026
        %v4028 = vrot.slane %v4027, 1
        %v4029 = vmax.f32 %v4027, %v4028
        %v4030 = vsel %vm3658, %v3622, -inf
        %v4031 = vrot.slane %v4030, 4
        %v4032 = vmax.f32 %v4030, %v4031
        %v4033 = vrot.slane %v4032, 2
        %v4034 = vmax.f32 %v4032, %v4033
        %v4035 = vrot.slane %v4034, 1
        %v4036 = vmax.f32 %v4034, %v4035
        %v4037 = vsel %vm3658, %v3561, -inf
        %v4038 = vrot.slane %v4037, 4
        %v4039 = vmax.f32 %v4037, %v4038
        %v4040 = vrot.slane %v4039, 2
        %v4041 = vmax.f32 %v4039, %v4040
        %v4042 = vrot.slane %v4041, 1
        %v4043 = vmax.f32 %v4041, %v4042
        %v4044 = vsel %vm3658, %v3623, -inf
        %v4045 = vrot.slane %v4044, 4
        %v4046 = vmax.f32 %v4044, %v4045
        %v4047 = vrot.slane %v4046, 2
        %v4048 = vmax.f32 %v4046, %v4047
        %v4049 = vrot.slane %v4048, 1
        %v4050 = vmax.f32 %v4048, %v4049
        %v4051 = vsel %vm3658, %v3562, -inf
        %v4052 = vrot.slane %v4051, 4
        %v4053 = vmax.f32 %v4051, %v4052
        %v4054 = vrot.slane %v4053, 2
        %v4055 = vmax.f32 %v4053, %v4054
        %v4056 = vrot.slane %v4055, 1
        %v4057 = vmax.f32 %v4055, %v4056
        %v4058 = vsel %vm3658, %v3624, -inf
        %v4059 = vrot.slane %v4058, 4
        %v4060 = vmax.f32 %v4058, %v4059
        %v4061 = vrot.slane %v4060, 2
        %v4062 = vmax.f32 %v4060, %v4061
        %v4063 = vrot.slane %v4062, 1
        %v4064 = vmax.f32 %v4062, %v4063
        %v4065 = vsel %vm3658, %v3563, -inf
        %v4066 = vrot.slane %v4065, 4
        %v4067 = vmax.f32 %v4065, %v4066
        %v4068 = vrot.slane %v4067, 2
        %v4069 = vmax.f32 %v4067, %v4068
        %v4070 = vrot.slane %v4069, 1
        %v4071 = vmax.f32 %v4069, %v4070
        %v4072 = vsel %vm3658, %v3625, -inf
        %v4073 = vrot.slane %v4072, 4
        %v4074 = vmax.f32 %v4072, %v4073
        %v4075 = vrot.slane %v4074, 2
        %v4076 = vmax.f32 %v4074, %v4075
        %v4077 = vrot.slane %v4076, 1
        %v4078 = vmax.f32 %v4076, %v4077
        %v4079 = vsel %vm3658, %v3564, -inf
        %v4080 = vrot.slane %v4079, 4
        %v4081 = vmax.f32 %v4079, %v4080
        %v4082 = vrot.slane %v4081, 2
        %v4083 = vmax.f32 %v4081, %v4082
        %v4084 = vrot.slane %v4083, 1
        %v4085 = vmax.f32 %v4083, %v4084
        %v4086 = vsel %vm3658, %v3626, -inf
        %v4087 = vrot.slane %v4086, 4
        %v4088 = vmax.f32 %v4086, %v4087
        %v4089 = vrot.slane %v4088, 2
        %v4090 = vmax.f32 %v4088, %v4089
        %v4091 = vrot.slane %v4090, 1
        %v4092 = vmax.f32 %v4090, %v4091
        %v4093 = vlaneseq
        %vm4094 = vcmp.ge.s32.totalorder %v4093, 0
        %vm4095 = vcmp.lt.s32.totalorder %v4093, 128
        %vm4096 = vmand %vm4094, %vm4095
        %4097 = vst.msk [vmem:[#allocation2] sm:$0x1] %vm4096, %v3665
        %4098 = vst.msk [vmem:[#allocation2 + $0x1] sm:$0x1] %vm4096, %v3672
        %4099 = vst.msk [vmem:[#allocation2 + $0x2] sm:$0x1] %vm4096, %v3679
        %4100 = vst.msk [vmem:[#allocation2 + $0x3] sm:$0x1] %vm4096, %v3686
        %4101 = vst.msk [vmem:[#allocation2 + $0x4] sm:$0x1] %vm4096, %v3693
        %4102 = vst.msk [vmem:[#allocation2 + $0x5] sm:$0x1] %vm4096, %v3700
        %4103 = vst.msk [vmem:[#allocation2 + $0x6] sm:$0x1] %vm4096, %v3707
        %4104 = vst.msk [vmem:[#allocation2 + $0x7] sm:$0x1] %vm4096, %v3714
        %4105 = vst.msk [vmem:[#allocation2 + $0x8] sm:$0x1] %vm4096, %v3721
        %4106 = vst.msk [vmem:[#allocation2 + $0x9] sm:$0x1] %vm4096, %v3728
        %4107 = vst.msk [vmem:[#allocation2 + $0xa] sm:$0x1] %vm4096, %v3735
        %4108 = vst.msk [vmem:[#allocation2 + $0xb] sm:$0x1] %vm4096, %v3742
        %4109 = vst.msk [vmem:[#allocation2 + $0xc] sm:$0x1] %vm4096, %v3749
        %4110 = vst.msk [vmem:[#allocation2 + $0xd] sm:$0x1] %vm4096, %v3756
        %4111 = vst.msk [vmem:[#allocation2 + $0xe] sm:$0x1] %vm4096, %v3763
        %4112 = vst.msk [vmem:[#allocation2 + $0xf] sm:$0x1] %vm4096, %v3770
        %4113 = vst.msk [vmem:[#allocation2 + $0x10] sm:$0x1] %vm4096, %v3777
        %4114 = vst.msk [vmem:[#allocation2 + $0x11] sm:$0x1] %vm4096, %v3784
        %4115 = vst.msk [vmem:[#allocation2 + $0x12] sm:$0x1] %vm4096, %v3791
        %4116 = vst.msk [vmem:[#allocation2 + $0x13] sm:$0x1] %vm4096, %v3798
        %4117 = vst.msk [vmem:[#allocation2 + $0x14] sm:$0x1] %vm4096, %v3805
        %4118 = vst.msk [vmem:[#allocation2 + $0x15] sm:$0x1] %vm4096, %v3812
        %4119 = vst.msk [vmem:[#allocation2 + $0x16] sm:$0x1] %vm4096, %v3819
        %4120 = vst.msk [vmem:[#allocation2 + $0x17] sm:$0x1] %vm4096, %v3826
        %4121 = vst.msk [vmem:[#allocation2 + $0x18] sm:$0x1] %vm4096, %v3833
        %4122 = vst.msk [vmem:[#allocation2 + $0x19] sm:$0x1] %vm4096, %v3840
        %4123 = vst.msk [vmem:[#allocation2 + $0x1a] sm:$0x1] %vm4096, %v3847
        %4124 = vst.msk [vmem:[#allocation2 + $0x1b] sm:$0x1] %vm4096, %v3854
        %4125 = vst.msk [vmem:[#allocation2 + $0x1c] sm:$0x1] %vm4096, %v3861
        %4126 = vst.msk [vmem:[#allocation2 + $0x1d] sm:$0x1] %vm4096, %v3868
        %4127 = vst.msk [vmem:[#allocation2 + $0x1e] sm:$0x1] %vm4096, %v3875
        %4128 = vst.msk [vmem:[#allocation2 + $0x1f] sm:$0x1] %vm4096, %v3882
        %4129 = vst.msk [vmem:[#allocation2 + $0x20] sm:$0x1] %vm4096, %v3889
        %4130 = vst.msk [vmem:[#allocation2 + $0x21] sm:$0x1] %vm4096, %v3896
        %4131 = vst.msk [vmem:[#allocation2 + $0x22] sm:$0x1] %vm4096, %v3903
        %4132 = vst.msk [vmem:[#allocation2 + $0x23] sm:$0x1] %vm4096, %v3910
        %4133 = vst.msk [vmem:[#allocation2 + $0x24] sm:$0x1] %vm4096, %v3917
        %4134 = vst.msk [vmem:[#allocation2 + $0x25] sm:$0x1] %vm4096, %v3924
        %4135 = vst.msk [vmem:[#allocation2 + $0x26] sm:$0x1] %vm4096, %v3931
        %4136 = vst.msk [vmem:[#allocation2 + $0x27] sm:$0x1] %vm4096, %v3938
        %4137 = vst.msk [vmem:[#allocation2 + $0x28] sm:$0x1] %vm4096, %v3945
        %4138 = vst.msk [vmem:[#allocation2 + $0x29] sm:$0x1] %vm4096, %v3952
        %4139 = vst.msk [vmem:[#allocation2 + $0x2a] sm:$0x1] %vm4096, %v3959
        %4140 = vst.msk [vmem:[#allocation2 + $0x2b] sm:$0x1] %vm4096, %v3966
        %4141 = vst.msk [vmem:[#allocation2 + $0x2c] sm:$0x1] %vm4096, %v3973
        %4142 = vst.msk [vmem:[#allocation2 + $0x2d] sm:$0x1] %vm4096, %v3980
        %4143 = vst.msk [vmem:[#allocation2 + $0x2e] sm:$0x1] %vm4096, %v3987
        %4144 = vst.msk [vmem:[#allocation2 + $0x2f] sm:$0x1] %vm4096, %v3994
        %4145 = vst.msk [vmem:[#allocation2 + $0x30] sm:$0x1] %vm4096, %v4001
        %4146 = vst.msk [vmem:[#allocation2 + $0x31] sm:$0x1] %vm4096, %v4008
        %4147 = vst.msk [vmem:[#allocation2 + $0x32] sm:$0x1] %vm4096, %v4015
        %4148 = vst.msk [vmem:[#allocation2 + $0x33] sm:$0x1] %vm4096, %v4022
        %4149 = vst.msk [vmem:[#allocation2 + $0x34] sm:$0x1] %vm4096, %v4029
        %4150 = vst.msk [vmem:[#allocation2 + $0x35] sm:$0x1] %vm4096, %v4036
        %4151 = vst.msk [vmem:[#allocation2 + $0x36] sm:$0x1] %vm4096, %v4043
        %4152 = vst.msk [vmem:[#allocation2 + $0x37] sm:$0x1] %vm4096, %v4050
        %4153 = vst.msk [vmem:[#allocation2 + $0x38] sm:$0x1] %vm4096, %v4057
        %4154 = vst.msk [vmem:[#allocation2 + $0x39] sm:$0x1] %vm4096, %v4064
        %4155 = vst.msk [vmem:[#allocation2 + $0x3a] sm:$0x1] %vm4096, %v4071
        %4156 = vst.msk [vmem:[#allocation2 + $0x3b] sm:$0x1] %vm4096, %v4078
        %4157 = vst.msk [vmem:[#allocation2 + $0x3c] sm:$0x1] %vm4096, %v4085
        %4158 = vst.msk [vmem:[#allocation2 + $0x3d] sm:$0x1] %vm4096, %v4092
        %v4159 = vld [vmem:[#allocation2] sm:$0xff]
        %v4160 = vld [vmem:[#allocation2 + $0x8] sm:$0xff]
        %v4161 = vld [vmem:[#allocation2 + $0x10] sm:$0xff]
        %v4162 = vld [vmem:[#allocation2 + $0x18] sm:$0xff]
        %v4163 = vld [vmem:[#allocation2 + $0x20] sm:$0xff]
        %v4164 = vld [vmem:[#allocation2 + $0x28] sm:$0xff]
        %v4165 = vld [vmem:[#allocation2 + $0x30] sm:$0xff]
        %v4166 = vld [vmem:[#allocation2 + $0x38] sm:$0x3f]
        %v4175 = vlaneseq
        %v4176 = vshrl.u32 %v4175, 7
        %v4177 = vsub.s32 0, %v4176
        %v4178 = vrot.slane %v4159, %v4177
        %v4179 = vlaneseq
        %v4180 = vshrl.u32 %v4179, 7
        %v4181 = vsub.s32 1, %v4180
        %v4182 = vrot.slane %v4159, %v4181
        %v4183 = vlaneseq
        %v4184 = vshrl.u32 %v4183, 7
        %v4185 = vsub.s32 2, %v4184
        %v4186 = vrot.slane %v4159, %v4185
        %v4187 = vlaneseq
        %v4188 = vshrl.u32 %v4187, 7
        %v4189 = vsub.s32 3, %v4188
        %v4190 = vrot.slane %v4159, %v4189
        %v4191 = vlaneseq
        %v4192 = vshrl.u32 %v4191, 7
        %v4193 = vsub.s32 4, %v4192
        %v4194 = vrot.slane %v4159, %v4193
        %v4195 = vlaneseq
        %v4196 = vshrl.u32 %v4195, 7
        %v4197 = vsub.s32 5, %v4196
        %v4198 = vrot.slane %v4159, %v4197
        %v4199 = vlaneseq
        %v4200 = vshrl.u32 %v4199, 7
        %v4201 = vsub.s32 6, %v4200
        %v4202 = vrot.slane %v4159, %v4201
        %v4203 = vlaneseq
        %v4204 = vshrl.u32 %v4203, 7
        %v4205 = vsub.s32 7, %v4204
        %v4206 = vrot.slane %v4159, %v4205
        %v4207 = vlaneseq
        %v4208 = vshrl.u32 %v4207, 7
        %v4209 = vsub.s32 0, %v4208
        %v4210 = vrot.slane %v4160, %v4209
        %v4211 = vlaneseq
        %v4212 = vshrl.u32 %v4211, 7
        %v4213 = vsub.s32 1, %v4212
        %v4214 = vrot.slane %v4160, %v4213
        %v4215 = vlaneseq
        %v4216 = vshrl.u32 %v4215, 7
        %v4217 = vsub.s32 2, %v4216
        %v4218 = vrot.slane %v4160, %v4217
        %v4219 = vlaneseq
        %v4220 = vshrl.u32 %v4219, 7
        %v4221 = vsub.s32 3, %v4220
        %v4222 = vrot.slane %v4160, %v4221
        %v4223 = vlaneseq
        %v4224 = vshrl.u32 %v4223, 7
        %v4225 = vsub.s32 4, %v4224
        %v4226 = vrot.slane %v4160, %v4225
        %v4227 = vlaneseq
        %v4228 = vshrl.u32 %v4227, 7
        %v4229 = vsub.s32 5, %v4228
        %v4230 = vrot.slane %v4160, %v4229
        %v4231 = vlaneseq
        %v4232 = vshrl.u32 %v4231, 7
        %v4233 = vsub.s32 6, %v4232
        %v4234 = vrot.slane %v4160, %v4233
        %v4235 = vlaneseq
        %v4236 = vshrl.u32 %v4235, 7
        %v4237 = vsub.s32 7, %v4236
        %v4238 = vrot.slane %v4160, %v4237
        %v4239 = vlaneseq
        %v4240 = vshrl.u32 %v4239, 7
        %v4241 = vsub.s32 0, %v4240
        %v4242 = vrot.slane %v4161, %v4241
        %v4243 = vlaneseq
        %v4244 = vshrl.u32 %v4243, 7
        %v4245 = vsub.s32 1, %v4244
        %v4246 = vrot.slane %v4161, %v4245
        %v4247 = vlaneseq
        %v4248 = vshrl.u32 %v4247, 7
        %v4249 = vsub.s32 2, %v4248
        %v4250 = vrot.slane %v4161, %v4249
        %v4251 = vlaneseq
        %v4252 = vshrl.u32 %v4251, 7
        %v4253 = vsub.s32 3, %v4252
        %v4254 = vrot.slane %v4161, %v4253
        %v4255 = vlaneseq
        %v4256 = vshrl.u32 %v4255, 7
        %v4257 = vsub.s32 4, %v4256
        %v4258 = vrot.slane %v4161, %v4257
        %v4259 = vlaneseq
        %v4260 = vshrl.u32 %v4259, 7
        %v4261 = vsub.s32 5, %v4260
        %v4262 = vrot.slane %v4161, %v4261
        %v4263 = vlaneseq
        %v4264 = vshrl.u32 %v4263, 7
        %v4265 = vsub.s32 6, %v4264
        %v4266 = vrot.slane %v4161, %v4265
        %v4267 = vlaneseq
        %v4268 = vshrl.u32 %v4267, 7
        %v4269 = vsub.s32 7, %v4268
        %v4270 = vrot.slane %v4161, %v4269
        %v4271 = vlaneseq
        %v4272 = vshrl.u32 %v4271, 7
        %v4273 = vsub.s32 0, %v4272
        %v4274 = vrot.slane %v4162, %v4273
        %v4275 = vlaneseq
        %v4276 = vshrl.u32 %v4275, 7
        %v4277 = vsub.s32 1, %v4276
        %v4278 = vrot.slane %v4162, %v4277
        %v4279 = vlaneseq
        %v4280 = vshrl.u32 %v4279, 7
        %v4281 = vsub.s32 2, %v4280
        %v4282 = vrot.slane %v4162, %v4281
        %v4283 = vlaneseq
        %v4284 = vshrl.u32 %v4283, 7
        %v4285 = vsub.s32 3, %v4284
        %v4286 = vrot.slane %v4162, %v4285
        %v4287 = vlaneseq
        %v4288 = vshrl.u32 %v4287, 7
        %v4289 = vsub.s32 4, %v4288
        %v4290 = vrot.slane %v4162, %v4289
        %v4291 = vlaneseq
        %v4292 = vshrl.u32 %v4291, 7
        %v4293 = vsub.s32 5, %v4292
        %v4294 = vrot.slane %v4162, %v4293
        %v4295 = vlaneseq
        %v4296 = vshrl.u32 %v4295, 7
        %v4297 = vsub.s32 6, %v4296
        %v4298 = vrot.slane %v4162, %v4297
        %v4299 = vlaneseq
        %v4300 = vshrl.u32 %v4299, 7
        %v4301 = vsub.s32 7, %v4300
        %v4302 = vrot.slane %v4162, %v4301
        %v4303 = vlaneseq
        %v4304 = vshrl.u32 %v4303, 7
        %v4305 = vsub.s32 0, %v4304
        %v4306 = vrot.slane %v4163, %v4305
        %v4307 = vlaneseq
        %v4308 = vshrl.u32 %v4307, 7
        %v4309 = vsub.s32 1, %v4308
        %v4310 = vrot.slane %v4163, %v4309
        %v4311 = vlaneseq
        %v4312 = vshrl.u32 %v4311, 7
        %v4313 = vsub.s32 2, %v4312
        %v4314 = vrot.slane %v4163, %v4313
        %v4315 = vlaneseq
        %v4316 = vshrl.u32 %v4315, 7
        %v4317 = vsub.s32 3, %v4316
        %v4318 = vrot.slane %v4163, %v4317
        %v4319 = vlaneseq
        %v4320 = vshrl.u32 %v4319, 7
        %v4321 = vsub.s32 4, %v4320
        %v4322 = vrot.slane %v4163, %v4321
        %v4323 = vlaneseq
        %v4324 = vshrl.u32 %v4323, 7
        %v4325 = vsub.s32 5, %v4324
        %v4326 = vrot.slane %v4163, %v4325
        %v4327 = vlaneseq
        %v4328 = vshrl.u32 %v4327, 7
        %v4329 = vsub.s32 6, %v4328
        %v4330 = vrot.slane %v4163, %v4329
        %v4331 = vlaneseq
        %v4332 = vshrl.u32 %v4331, 7
        %v4333 = vsub.s32 7, %v4332
        %v4334 = vrot.slane %v4163, %v4333
        %v4335 = vlaneseq
        %v4336 = vshrl.u32 %v4335, 7
        %v4337 = vsub.s32 0, %v4336
        %v4338 = vrot.slane %v4164, %v4337
        %v4339 = vlaneseq
        %v4340 = vshrl.u32 %v4339, 7
        %v4341 = vsub.s32 1, %v4340
        %v4342 = vrot.slane %v4164, %v4341
        %v4343 = vlaneseq
        %v4344 = vshrl.u32 %v4343, 7
        %v4345 = vsub.s32 2, %v4344
        %v4346 = vrot.slane %v4164, %v4345
        %v4347 = vlaneseq
        %v4348 = vshrl.u32 %v4347, 7
        %v4349 = vsub.s32 3, %v4348
        %v4350 = vrot.slane %v4164, %v4349
        %v4351 = vlaneseq
        %v4352 = vshrl.u32 %v4351, 7
        %v4353 = vsub.s32 4, %v4352
        %v4354 = vrot.slane %v4164, %v4353
        %v4355 = vlaneseq
        %v4356 = vshrl.u32 %v4355, 7
        %v4357 = vsub.s32 5, %v4356
        %v4358 = vrot.slane %v4164, %v4357
        %v4359 = vlaneseq
        %v4360 = vshrl.u32 %v4359, 7
        %v4361 = vsub.s32 6, %v4360
        %v4362 = vrot.slane %v4164, %v4361
        %v4363 = vlaneseq
        %v4364 = vshrl.u32 %v4363, 7
        %v4365 = vsub.s32 7, %v4364
        %v4366 = vrot.slane %v4164, %v4365
        %v4367 = vlaneseq
        %v4368 = vshrl.u32 %v4367, 7
        %v4369 = vsub.s32 0, %v4368
        %v4370 = vrot.slane %v4165, %v4369
        %v4371 = vlaneseq
        %v4372 = vshrl.u32 %v4371, 7
        %v4373 = vsub.s32 1, %v4372
        %v4374 = vrot.slane %v4165, %v4373
        %v4375 = vlaneseq
        %v4376 = vshrl.u32 %v4375, 7
        %v4377 = vsub.s32 2, %v4376
        %v4378 = vrot.slane %v4165, %v4377
        %v4379 = vlaneseq
        %v4380 = vshrl.u32 %v4379, 7
        %v4381 = vsub.s32 3, %v4380
        %v4382 = vrot.slane %v4165, %v4381
        %v4383 = vlaneseq
        %v4384 = vshrl.u32 %v4383, 7
        %v4385 = vsub.s32 4, %v4384
        %v4386 = vrot.slane %v4165, %v4385
        %v4387 = vlaneseq
        %v4388 = vshrl.u32 %v4387, 7
        %v4389 = vsub.s32 5, %v4388
        %v4390 = vrot.slane %v4165, %v4389
        %v4391 = vlaneseq
        %v4392 = vshrl.u32 %v4391, 7
        %v4393 = vsub.s32 6, %v4392
        %v4394 = vrot.slane %v4165, %v4393
        %v4395 = vlaneseq
        %v4396 = vshrl.u32 %v4395, 7
        %v4397 = vsub.s32 7, %v4396
        %v4398 = vrot.slane %v4165, %v4397
        %v4399 = vlaneseq
        %v4400 = vshrl.u32 %v4399, 7
        %v4401 = vsub.s32 0, %v4400
        %v4402 = vrot.slane %v4166, %v4401
        %v4403 = vlaneseq
        %v4404 = vshrl.u32 %v4403, 7
        %v4405 = vsub.s32 1, %v4404
        %v4406 = vrot.slane %v4166, %v4405
        %v4407 = vlaneseq
        %v4408 = vshrl.u32 %v4407, 7
        %v4409 = vsub.s32 2, %v4408
        %v4410 = vrot.slane %v4166, %v4409
        %v4411 = vlaneseq
        %v4412 = vshrl.u32 %v4411, 7
        %v4413 = vsub.s32 3, %v4412
        %v4414 = vrot.slane %v4166, %v4413
        %v4415 = vlaneseq
        %v4416 = vshrl.u32 %v4415, 7
        %v4417 = vsub.s32 4, %v4416
        %v4418 = vrot.slane %v4166, %v4417
        %v4419 = vlaneseq
        %v4420 = vshrl.u32 %v4419, 7
        %v4421 = vsub.s32 5, %v4420
        %v4422 = vrot.slane %v4166, %v4421
        %v4485 = vpack.c.bf16 %v4178, %v4178
        %v4486 = vpack.c.bf16 %v4182, %v4182
        %v4487 = vpack.c.bf16 %v4186, %v4186
        %v4488 = vpack.c.bf16 %v4190, %v4190
        %v4489 = vpack.c.bf16 %v4194, %v4194
        %v4490 = vpack.c.bf16 %v4198, %v4198
        %v4491 = vpack.c.bf16 %v4202, %v4202
        %v4492 = vpack.c.bf16 %v4206, %v4206
        %v4493 = vpack.c.bf16 %v4210, %v4210
        %v4494 = vpack.c.bf16 %v4214, %v4214
        %v4495 = vpack.c.bf16 %v4218, %v4218
        %v4496 = vpack.c.bf16 %v4222, %v4222
        %v4497 = vpack.c.bf16 %v4226, %v4226
        %v4498 = vpack.c.bf16 %v4230, %v4230
        %v4499 = vpack.c.bf16 %v4234, %v4234
        %v4500 = vpack.c.bf16 %v4238, %v4238
        %v4501 = vpack.c.bf16 %v4242, %v4242
        %v4502 = vpack.c.bf16 %v4246, %v4246
        %v4503 = vpack.c.bf16 %v4250, %v4250
        %v4504 = vpack.c.bf16 %v4254, %v4254
        %v4505 = vpack.c.bf16 %v4258, %v4258
        %v4506 = vpack.c.bf16 %v4262, %v4262
        %v4507 = vpack.c.bf16 %v4266, %v4266
        %v4508 = vpack.c.bf16 %v4270, %v4270
        %v4509 = vpack.c.bf16 %v4274, %v4274
        %v4510 = vpack.c.bf16 %v4278, %v4278
        %v4511 = vpack.c.bf16 %v4282, %v4282
        %v4512 = vpack.c.bf16 %v4286, %v4286
        %v4513 = vpack.c.bf16 %v4290, %v4290
        %v4514 = vpack.c.bf16 %v4294, %v4294
        %v4515 = vpack.c.bf16 %v4298, %v4298
        %v4516 = vpack.c.bf16 %v4302, %v4302
        %v4517 = vpack.c.bf16 %v4306, %v4306
        %v4518 = vpack.c.bf16 %v4310, %v4310
        %v4519 = vpack.c.bf16 %v4314, %v4314
        %v4520 = vpack.c.bf16 %v4318, %v4318
        %v4521 = vpack.c.bf16 %v4322, %v4322
        %v4522 = vpack.c.bf16 %v4326, %v4326
        %v4523 = vpack.c.bf16 %v4330, %v4330
        %v4524 = vpack.c.bf16 %v4334, %v4334
        %v4525 = vpack.c.bf16 %v4338, %v4338
        %v4526 = vpack.c.bf16 %v4342, %v4342
        %v4527 = vpack.c.bf16 %v4346, %v4346
        %v4528 = vpack.c.bf16 %v4350, %v4350
        %v4529 = vpack.c.bf16 %v4354, %v4354
        %v4530 = vpack.c.bf16 %v4358, %v4358
        %v4531 = vpack.c.bf16 %v4362, %v4362
        %v4532 = vpack.c.bf16 %v4366, %v4366
        %v4533 = vpack.c.bf16 %v4370, %v4370
        %v4534 = vpack.c.bf16 %v4374, %v4374
        %v4535 = vpack.c.bf16 %v4378, %v4378
        %v4536 = vpack.c.bf16 %v4382, %v4382
        %v4537 = vpack.c.bf16 %v4386, %v4386
        %v4538 = vpack.c.bf16 %v4390, %v4390
        %v4539 = vpack.c.bf16 %v4394, %v4394
        %v4540 = vpack.c.bf16 %v4398, %v4398
        %v4541 = vpack.c.bf16 %v4402, %v4402
        %v4542 = vpack.c.bf16 %v4406, %v4406
        %v4543 = vpack.c.bf16 %v4410, %v4410
        %v4544 = vpack.c.bf16 %v4414, %v4414
        %v4545 = vpack.c.bf16 %v4418, %v4418
        %v4546 = vpack.c.bf16 %v4422, %v4422
        %v4547 = vld [vmem:[%s5] sm:$0xff]
        %v4548 = vld [vmem:[%s5 + $0x8] sm:$0xff]
        %v4549 = vld [vmem:[%s5 + $0x10] sm:$0xff]
        %v4550 = vld [vmem:[%s5 + $0x18] sm:$0xff]
        %v4551 = vld [vmem:[%s5 + $0x20] sm:$0xff]
        %v4552 = vld [vmem:[%s5 + $0x28] sm:$0xff]
        %v4553 = vld [vmem:[%s5 + $0x30] sm:$0xff]
        %v4554 = vld [vmem:[%s5 + $0x38] sm:$0xff]
        %v4555 = vld [vmem:[%s5 + $0x40] sm:$0xff]
        %v4556 = vld [vmem:[%s5 + $0x48] sm:$0xff]
        %v4557 = vld [vmem:[%s5 + $0x50] sm:$0xff]
        %v4558 = vld [vmem:[%s5 + $0x58] sm:$0xff]
        %v4559 = vld [vmem:[%s5 + $0x60] sm:$0xff]
        %v4560 = vld [vmem:[%s5 + $0x68] sm:$0xff]
        %v4561 = vld [vmem:[%s5 + $0x70] sm:$0xff]
        %v4562 = vld [vmem:[%s5 + $0x78] sm:$0xff]
        %v4563 = vld [vmem:[%s5 + $0x80] sm:$0xff]
        %v4564 = vld [vmem:[%s5 + $0x88] sm:$0xff]
        %v4565 = vld [vmem:[%s5 + $0x90] sm:$0xff]
        %v4566 = vld [vmem:[%s5 + $0x98] sm:$0xff]
        %v4567 = vld [vmem:[%s5 + $0xa0] sm:$0xff]
        %v4568 = vld [vmem:[%s5 + $0xa8] sm:$0xff]
        %v4569 = vld [vmem:[%s5 + $0xb0] sm:$0xff]
        %v4570 = vld [vmem:[%s5 + $0xb8] sm:$0xff]
        %v4571 = vld [vmem:[%s5 + $0xc0] sm:$0xff]
        %v4572 = vld [vmem:[%s5 + $0xc8] sm:$0xff]
        %v4573 = vld [vmem:[%s5 + $0xd0] sm:$0xff]
        %v4574 = vld [vmem:[%s5 + $0xd8] sm:$0xff]
        %v4575 = vld [vmem:[%s5 + $0xe0] sm:$0xff]
        %v4576 = vld [vmem:[%s5 + $0xe8] sm:$0xff]
        %v4577 = vld [vmem:[%s5 + $0xf0] sm:$0xff]
        %v4578 = vld [vmem:[%s5 + $0xf8] sm:$0xff]
        %v4579 = vld [vmem:[%s5 + $0x100] sm:$0xff]
        %v4580 = vld [vmem:[%s5 + $0x108] sm:$0xff]
        %v4581 = vld [vmem:[%s5 + $0x110] sm:$0xff]
        %v4582 = vld [vmem:[%s5 + $0x118] sm:$0xff]
        %v4583 = vld [vmem:[%s5 + $0x120] sm:$0xff]
        %v4584 = vld [vmem:[%s5 + $0x128] sm:$0xff]
        %v4585 = vld [vmem:[%s5 + $0x130] sm:$0xff]
        %v4586 = vld [vmem:[%s5 + $0x138] sm:$0xff]
        %v4587 = vld [vmem:[%s5 + $0x140] sm:$0xff]
        %v4588 = vld [vmem:[%s5 + $0x148] sm:$0xff]
        %v4589 = vld [vmem:[%s5 + $0x150] sm:$0xff]
        %v4590 = vld [vmem:[%s5 + $0x158] sm:$0xff]
        %v4591 = vld [vmem:[%s5 + $0x160] sm:$0xff]
        %v4592 = vld [vmem:[%s5 + $0x168] sm:$0xff]
        %v4593 = vld [vmem:[%s5 + $0x170] sm:$0xff]
        %v4594 = vld [vmem:[%s5 + $0x178] sm:$0xff]
        %v4595 = vld [vmem:[%s5 + $0x180] sm:$0xff]
        %v4596 = vld [vmem:[%s5 + $0x188] sm:$0xff]
        %v4597 = vld [vmem:[%s5 + $0x190] sm:$0xff]
        %v4598 = vld [vmem:[%s5 + $0x198] sm:$0xff]
        %v4599 = vld [vmem:[%s5 + $0x1a0] sm:$0xff]
        %v4600 = vld [vmem:[%s5 + $0x1a8] sm:$0xff]
        %v4601 = vld [vmem:[%s5 + $0x1b0] sm:$0xff]
        %v4602 = vld [vmem:[%s5 + $0x1b8] sm:$0xff]
        %v4603 = vld [vmem:[%s5 + $0x1c0] sm:$0xff]
        %v4604 = vld [vmem:[%s5 + $0x1c8] sm:$0xff]
        %v4605 = vld [vmem:[%s5 + $0x1d0] sm:$0xff]
        %v4606 = vld [vmem:[%s5 + $0x1d8] sm:$0xff]
        %v4607 = vld [vmem:[%s5 + $0x1e0] sm:$0xff]
        %v4608 = vld [vmem:[%s5 + $0x1e8] sm:$0xff]
        %v4609 = vld [vmem:[%s5 + $0x1f0] sm:$0xff]
        %v4610 = vld [vmem:[%s5 + $0x1f8] sm:$0xff]
        %v4611 = vld [vmem:[%s5 + $0x200] sm:$0xff]
        %v4612 = vld [vmem:[%s5 + $0x208] sm:$0xff]
        %v4613 = vld [vmem:[%s5 + $0x210] sm:$0xff]
        %v4614 = vld [vmem:[%s5 + $0x218] sm:$0xff]
        %v4615 = vld [vmem:[%s5 + $0x220] sm:$0xff]
        %v4616 = vld [vmem:[%s5 + $0x228] sm:$0xff]
        %v4617 = vld [vmem:[%s5 + $0x230] sm:$0xff]
        %v4618 = vld [vmem:[%s5 + $0x238] sm:$0xff]
        %v4619 = vld [vmem:[%s5 + $0x240] sm:$0xff]
        %v4620 = vld [vmem:[%s5 + $0x248] sm:$0xff]
        %v4621 = vld [vmem:[%s5 + $0x250] sm:$0xff]
        %v4622 = vld [vmem:[%s5 + $0x258] sm:$0xff]
        %v4623 = vld [vmem:[%s5 + $0x260] sm:$0xff]
        %v4624 = vld [vmem:[%s5 + $0x268] sm:$0xff]
        %v4625 = vld [vmem:[%s5 + $0x270] sm:$0xff]
        %v4626 = vld [vmem:[%s5 + $0x278] sm:$0xff]
        %v4627 = vld [vmem:[%s5 + $0x280] sm:$0xff]
        %v4628 = vld [vmem:[%s5 + $0x288] sm:$0xff]
        %v4629 = vld [vmem:[%s5 + $0x290] sm:$0xff]
        %v4630 = vld [vmem:[%s5 + $0x298] sm:$0xff]
        %v4631 = vld [vmem:[%s5 + $0x2a0] sm:$0xff]
        %v4632 = vld [vmem:[%s5 + $0x2a8] sm:$0xff]
        %v4633 = vld [vmem:[%s5 + $0x2b0] sm:$0xff]
        %v4634 = vld [vmem:[%s5 + $0x2b8] sm:$0xff]
        %v4635 = vld [vmem:[%s5 + $0x2c0] sm:$0xff]
        %v4636 = vld [vmem:[%s5 + $0x2c8] sm:$0xff]
        %v4637 = vld [vmem:[%s5 + $0x2d0] sm:$0xff]
        %v4638 = vld [vmem:[%s5 + $0x2d8] sm:$0xff]
        %v4639 = vld [vmem:[%s5 + $0x2e0] sm:$0xff]
        %v4640 = vld [vmem:[%s5 + $0x2e8] sm:$0xff]
        %v4641 = vld [vmem:[%s5 + $0x2f0] sm:$0xff]
        %v4642 = vld [vmem:[%s5 + $0x2f8] sm:$0xff]
        %v4643 = vld [vmem:[%s5 + $0x300] sm:$0xff]
        %v4644 = vld [vmem:[%s5 + $0x308] sm:$0xff]
        %v4645 = vld [vmem:[%s5 + $0x310] sm:$0xff]
        %v4646 = vld [vmem:[%s5 + $0x318] sm:$0xff]
        %v4647 = vld [vmem:[%s5 + $0x320] sm:$0xff]
        %v4648 = vld [vmem:[%s5 + $0x328] sm:$0xff]
        %v4649 = vld [vmem:[%s5 + $0x330] sm:$0xff]
        %v4650 = vld [vmem:[%s5 + $0x338] sm:$0xff]
        %v4651 = vld [vmem:[%s5 + $0x340] sm:$0xff]
        %v4652 = vld [vmem:[%s5 + $0x348] sm:$0xff]
        %v4653 = vld [vmem:[%s5 + $0x350] sm:$0xff]
        %v4654 = vld [vmem:[%s5 + $0x358] sm:$0xff]
        %v4655 = vld [vmem:[%s5 + $0x360] sm:$0xff]
        %v4656 = vld [vmem:[%s5 + $0x368] sm:$0xff]
        %v4657 = vld [vmem:[%s5 + $0x370] sm:$0xff]
        %v4658 = vld [vmem:[%s5 + $0x378] sm:$0xff]
        %v4659 = vld [vmem:[%s5 + $0x380] sm:$0xff]
        %v4660 = vld [vmem:[%s5 + $0x388] sm:$0xff]
        %v4661 = vld [vmem:[%s5 + $0x390] sm:$0xff]
        %v4662 = vld [vmem:[%s5 + $0x398] sm:$0xff]
        %v4663 = vld [vmem:[%s5 + $0x3a0] sm:$0xff]
        %v4664 = vld [vmem:[%s5 + $0x3a8] sm:$0xff]
        %v4665 = vld [vmem:[%s5 + $0x3b0] sm:$0xff]
        %v4666 = vld [vmem:[%s5 + $0x3b8] sm:$0xff]
        %v4667 = vld [vmem:[%s5 + $0x3c0] sm:$0xff]
        %v4668 = vld [vmem:[%s5 + $0x3c8] sm:$0xff]
        %v4669 = vld [vmem:[%s5 + $0x3d0] sm:$0xff]
        %v4670 = vld [vmem:[%s5 + $0x3d8] sm:$0xff]
        %v4671 = vld [vmem:[%s5 + $0x3e0] sm:$0xff]
        %v4672 = vld [vmem:[%s5 + $0x3e8] sm:$0xff]
        %v4673 = vld [vmem:[%s5 + $0x3f0] sm:$0xff]
        %v4674 = vld [vmem:[%s5 + $0x3f8] sm:$0xff]
        %v4675 = vld [vmem:[%s5 + $0x400] sm:$0xff]
        %v4676 = vld [vmem:[%s5 + $0x408] sm:$0xff]
        %v4677 = vld [vmem:[%s5 + $0x410] sm:$0xff]
        %v4678 = vld [vmem:[%s5 + $0x418] sm:$0xff]
        %v4679 = vld [vmem:[%s5 + $0x420] sm:$0xff]
        %v4680 = vld [vmem:[%s5 + $0x428] sm:$0xff]
        %v4681 = vld [vmem:[%s5 + $0x430] sm:$0xff]
        %v4682 = vld [vmem:[%s5 + $0x438] sm:$0xff]
        %v4683 = vld [vmem:[%s5 + $0x440] sm:$0xff]
        %v4684 = vld [vmem:[%s5 + $0x448] sm:$0xff]
        %v4685 = vld [vmem:[%s5 + $0x450] sm:$0xff]
        %v4686 = vld [vmem:[%s5 + $0x458] sm:$0xff]
        %v4687 = vld [vmem:[%s5 + $0x460] sm:$0xff]
        %v4688 = vld [vmem:[%s5 + $0x468] sm:$0xff]
        %v4689 = vld [vmem:[%s5 + $0x470] sm:$0xff]
        %v4690 = vld [vmem:[%s5 + $0x478] sm:$0xff]
        %v4691 = vld [vmem:[%s5 + $0x480] sm:$0xff]
        %v4692 = vld [vmem:[%s5 + $0x488] sm:$0xff]
        %v4693 = vld [vmem:[%s5 + $0x490] sm:$0xff]
        %v4694 = vld [vmem:[%s5 + $0x498] sm:$0xff]
        %v4695 = vld [vmem:[%s5 + $0x4a0] sm:$0xff]
        %v4696 = vld [vmem:[%s5 + $0x4a8] sm:$0xff]
        %v4697 = vld [vmem:[%s5 + $0x4b0] sm:$0xff]
        %v4698 = vld [vmem:[%s5 + $0x4b8] sm:$0xff]
        %v4699 = vld [vmem:[%s5 + $0x4c0] sm:$0xff]
        %v4700 = vld [vmem:[%s5 + $0x4c8] sm:$0xff]
        %v4701 = vld [vmem:[%s5 + $0x4d0] sm:$0xff]
        %v4702 = vld [vmem:[%s5 + $0x4d8] sm:$0xff]
        %v4703 = vld [vmem:[%s5 + $0x4e0] sm:$0xff]
        %v4704 = vld [vmem:[%s5 + $0x4e8] sm:$0xff]
        %v4705 = vld [vmem:[%s5 + $0x4f0] sm:$0xff]
        %v4706 = vld [vmem:[%s5 + $0x4f8] sm:$0xff]
        %v4707 = vld [vmem:[%s5 + $0x500] sm:$0xff]
        %v4708 = vld [vmem:[%s5 + $0x508] sm:$0xff]
        %v4709 = vld [vmem:[%s5 + $0x510] sm:$0xff]
        %v4710 = vld [vmem:[%s5 + $0x518] sm:$0xff]
        %v4711 = vld [vmem:[%s5 + $0x520] sm:$0xff]
        %v4712 = vld [vmem:[%s5 + $0x528] sm:$0xff]
        %v4713 = vld [vmem:[%s5 + $0x530] sm:$0xff]
        %v4714 = vld [vmem:[%s5 + $0x538] sm:$0xff]
        %v4715 = vld [vmem:[%s5 + $0x540] sm:$0xff]
        %v4716 = vld [vmem:[%s5 + $0x548] sm:$0xff]
        %v4717 = vld [vmem:[%s5 + $0x550] sm:$0xff]
        %v4718 = vld [vmem:[%s5 + $0x558] sm:$0xff]
        %v4719 = vld [vmem:[%s5 + $0x560] sm:$0xff]
        %v4720 = vld [vmem:[%s5 + $0x568] sm:$0xff]
        %v4721 = vld [vmem:[%s5 + $0x570] sm:$0xff]
        %v4722 = vld [vmem:[%s5 + $0x578] sm:$0xff]
        %v4723 = vld [vmem:[%s5 + $0x580] sm:$0xff]
        %v4724 = vld [vmem:[%s5 + $0x588] sm:$0xff]
        %v4725 = vld [vmem:[%s5 + $0x590] sm:$0xff]
        %v4726 = vld [vmem:[%s5 + $0x598] sm:$0xff]
        %v4727 = vld [vmem:[%s5 + $0x5a0] sm:$0xff]
        %v4728 = vld [vmem:[%s5 + $0x5a8] sm:$0xff]
        %v4729 = vld [vmem:[%s5 + $0x5b0] sm:$0xff]
        %v4730 = vld [vmem:[%s5 + $0x5b8] sm:$0xff]
        %v4731 = vld [vmem:[%s5 + $0x5c0] sm:$0xff]
        %v4732 = vld [vmem:[%s5 + $0x5c8] sm:$0xff]
        %v4733 = vld [vmem:[%s5 + $0x5d0] sm:$0xff]
        %v4734 = vld [vmem:[%s5 + $0x5d8] sm:$0xff]
        %v4735 = vld [vmem:[%s5 + $0x5e0] sm:$0xff]
        %v4736 = vld [vmem:[%s5 + $0x5e8] sm:$0xff]
        %v4737 = vld [vmem:[%s5 + $0x5f0] sm:$0xff]
        %v4738 = vld [vmem:[%s5 + $0x5f8] sm:$0xff]
        %v4739 = vld [vmem:[%s5 + $0x600] sm:$0xff]
        %v4740 = vld [vmem:[%s5 + $0x608] sm:$0xff]
        %v4741 = vld [vmem:[%s5 + $0x610] sm:$0xff]
        %v4742 = vld [vmem:[%s5 + $0x618] sm:$0xff]
        %v4743 = vld [vmem:[%s5 + $0x620] sm:$0xff]
        %v4744 = vld [vmem:[%s5 + $0x628] sm:$0xff]
        %v4745 = vld [vmem:[%s5 + $0x630] sm:$0xff]
        %v4746 = vld [vmem:[%s5 + $0x638] sm:$0xff]
        %v4747 = vld [vmem:[%s5 + $0x640] sm:$0xff]
        %v4748 = vld [vmem:[%s5 + $0x648] sm:$0xff]
        %v4749 = vld [vmem:[%s5 + $0x650] sm:$0xff]
        %v4750 = vld [vmem:[%s5 + $0x658] sm:$0xff]
        %v4751 = vld [vmem:[%s5 + $0x660] sm:$0xff]
        %v4752 = vld [vmem:[%s5 + $0x668] sm:$0xff]
        %v4753 = vld [vmem:[%s5 + $0x670] sm:$0xff]
        %v4754 = vld [vmem:[%s5 + $0x678] sm:$0xff]
        %v4755 = vld [vmem:[%s5 + $0x680] sm:$0xff]
        %v4756 = vld [vmem:[%s5 + $0x688] sm:$0xff]
        %v4757 = vld [vmem:[%s5 + $0x690] sm:$0xff]
        %v4758 = vld [vmem:[%s5 + $0x698] sm:$0xff]
        %v4759 = vld [vmem:[%s5 + $0x6a0] sm:$0xff]
        %v4760 = vld [vmem:[%s5 + $0x6a8] sm:$0xff]
        %v4761 = vld [vmem:[%s5 + $0x6b0] sm:$0xff]
        %v4762 = vld [vmem:[%s5 + $0x6b8] sm:$0xff]
        %v4763 = vld [vmem:[%s5 + $0x6c0] sm:$0xff]
        %v4764 = vld [vmem:[%s5 + $0x6c8] sm:$0xff]
        %v4765 = vld [vmem:[%s5 + $0x6d0] sm:$0xff]
        %v4766 = vld [vmem:[%s5 + $0x6d8] sm:$0xff]
        %v4767 = vld [vmem:[%s5 + $0x6e0] sm:$0xff]
        %v4768 = vld [vmem:[%s5 + $0x6e8] sm:$0xff]
        %v4769 = vld [vmem:[%s5 + $0x6f0] sm:$0xff]
        %v4770 = vld [vmem:[%s5 + $0x6f8] sm:$0xff]
        %v4771 = vld [vmem:[%s5 + $0x700] sm:$0xff]
        %v4772 = vld [vmem:[%s5 + $0x708] sm:$0xff]
        %v4773 = vld [vmem:[%s5 + $0x710] sm:$0xff]
        %v4774 = vld [vmem:[%s5 + $0x718] sm:$0xff]
        %v4775 = vld [vmem:[%s5 + $0x720] sm:$0xff]
        %v4776 = vld [vmem:[%s5 + $0x728] sm:$0xff]
        %v4777 = vld [vmem:[%s5 + $0x730] sm:$0xff]
        %v4778 = vld [vmem:[%s5 + $0x738] sm:$0xff]
        %v4779 = vld [vmem:[%s5 + $0x740] sm:$0xff]
        %v4780 = vld [vmem:[%s5 + $0x748] sm:$0xff]
        %v4781 = vld [vmem:[%s5 + $0x750] sm:$0xff]
        %v4782 = vld [vmem:[%s5 + $0x758] sm:$0xff]
        %v4783 = vld [vmem:[%s5 + $0x760] sm:$0xff]
        %v4784 = vld [vmem:[%s5 + $0x768] sm:$0xff]
        %v4785 = vld [vmem:[%s5 + $0x770] sm:$0xff]
        %v4786 = vld [vmem:[%s5 + $0x778] sm:$0xff]
        %v4787 = vld [vmem:[%s5 + $0x780] sm:$0xff]
        %v4788 = vld [vmem:[%s5 + $0x788] sm:$0xff]
        %v4789 = vld [vmem:[%s5 + $0x790] sm:$0xff]
        %v4790 = vld [vmem:[%s5 + $0x798] sm:$0xff]
        %v4791 = vld [vmem:[%s5 + $0x7a0] sm:$0xff]
        %v4792 = vld [vmem:[%s5 + $0x7a8] sm:$0xff]
        %v4793 = vld [vmem:[%s5 + $0x7b0] sm:$0xff]
        %v4794 = vld [vmem:[%s5 + $0x7b8] sm:$0xff]
        %v4795 = vld [vmem:[%s5 + $0x7c0] sm:$0xff]
        %v4796 = vld [vmem:[%s5 + $0x7c8] sm:$0xff]
        %v4797 = vld [vmem:[%s5 + $0x7d0] sm:$0xff]
        %v4798 = vld [vmem:[%s5 + $0x7d8] sm:$0xff]
        %v4799 = vld [vmem:[%s5 + $0x7e0] sm:$0xff]
        %v4800 = vld [vmem:[%s5 + $0x7e8] sm:$0xff]
        %v4801 = vld [vmem:[%s5 + $0x7f0] sm:$0xff]
        %v4802 = vld [vmem:[%s5 + $0x7f8] sm:$0xff]
        %v4803 = vld [vmem:[%s5 + $0x800] sm:$0xff]
        %v4804 = vld [vmem:[%s5 + $0x808] sm:$0xff]
        %v4805 = vld [vmem:[%s5 + $0x810] sm:$0xff]
        %v4806 = vld [vmem:[%s5 + $0x818] sm:$0xff]
        %v4807 = vld [vmem:[%s5 + $0x820] sm:$0xff]
        %v4808 = vld [vmem:[%s5 + $0x828] sm:$0xff]
        %v4809 = vld [vmem:[%s5 + $0x830] sm:$0xff]
        %v4810 = vld [vmem:[%s5 + $0x838] sm:$0xff]
        %v4811 = vld [vmem:[%s5 + $0x840] sm:$0xff]
        %v4812 = vld [vmem:[%s5 + $0x848] sm:$0xff]
        %v4813 = vld [vmem:[%s5 + $0x850] sm:$0xff]
        %v4814 = vld [vmem:[%s5 + $0x858] sm:$0xff]
        %v4815 = vld [vmem:[%s5 + $0x860] sm:$0xff]
        %v4816 = vld [vmem:[%s5 + $0x868] sm:$0xff]
        %v4817 = vld [vmem:[%s5 + $0x870] sm:$0xff]
        %v4818 = vld [vmem:[%s5 + $0x878] sm:$0xff]
        %v4819 = vld [vmem:[%s5 + $0x880] sm:$0xff]
        %v4820 = vld [vmem:[%s5 + $0x888] sm:$0xff]
        %v4821 = vld [vmem:[%s5 + $0x890] sm:$0xff]
        %v4822 = vld [vmem:[%s5 + $0x898] sm:$0xff]
        %v4823 = vld [vmem:[%s5 + $0x8a0] sm:$0xff]
        %v4824 = vld [vmem:[%s5 + $0x8a8] sm:$0xff]
        %v4825 = vld [vmem:[%s5 + $0x8b0] sm:$0xff]
        %v4826 = vld [vmem:[%s5 + $0x8b8] sm:$0xff]
        %v4827 = vld [vmem:[%s5 + $0x8c0] sm:$0xff]
        %v4828 = vld [vmem:[%s5 + $0x8c8] sm:$0xff]
        %v4829 = vld [vmem:[%s5 + $0x8d0] sm:$0xff]
        %v4830 = vld [vmem:[%s5 + $0x8d8] sm:$0xff]
        %v4831 = vld [vmem:[%s5 + $0x8e0] sm:$0xff]
        %v4832 = vld [vmem:[%s5 + $0x8e8] sm:$0xff]
        %v4833 = vld [vmem:[%s5 + $0x8f0] sm:$0xff]
        %v4834 = vld [vmem:[%s5 + $0x8f8] sm:$0xff]
        %v4835 = vld [vmem:[%s5 + $0x900] sm:$0xff]
        %v4836 = vld [vmem:[%s5 + $0x908] sm:$0xff]
        %v4837 = vld [vmem:[%s5 + $0x910] sm:$0xff]
        %v4838 = vld [vmem:[%s5 + $0x918] sm:$0xff]
        %v4839 = vld [vmem:[%s5 + $0x920] sm:$0xff]
        %v4840 = vld [vmem:[%s5 + $0x928] sm:$0xff]
        %v4841 = vld [vmem:[%s5 + $0x930] sm:$0xff]
        %v4842 = vld [vmem:[%s5 + $0x938] sm:$0xff]
        %v4843 = vld [vmem:[%s5 + $0x940] sm:$0xff]
        %v4844 = vld [vmem:[%s5 + $0x948] sm:$0xff]
        %v4845 = vld [vmem:[%s5 + $0x950] sm:$0xff]
        %v4846 = vld [vmem:[%s5 + $0x958] sm:$0xff]
        %v4847 = vld [vmem:[%s5 + $0x960] sm:$0xff]
        %v4848 = vld [vmem:[%s5 + $0x968] sm:$0xff]
        %v4849 = vld [vmem:[%s5 + $0x970] sm:$0xff]
        %v4850 = vld [vmem:[%s5 + $0x978] sm:$0xff]
        %v4851 = vld [vmem:[%s5 + $0x980] sm:$0xff]
        %v4852 = vld [vmem:[%s5 + $0x988] sm:$0xff]
        %v4853 = vld [vmem:[%s5 + $0x990] sm:$0xff]
        %v4854 = vld [vmem:[%s5 + $0x998] sm:$0xff]
        %v4855 = vld [vmem:[%s5 + $0x9a0] sm:$0xff]
        %v4856 = vld [vmem:[%s5 + $0x9a8] sm:$0xff]
        %v4857 = vld [vmem:[%s5 + $0x9b0] sm:$0xff]
        %v4858 = vld [vmem:[%s5 + $0x9b8] sm:$0xff]
        %v4859 = vld [vmem:[%s5 + $0x9c0] sm:$0xff]
        %v4860 = vld [vmem:[%s5 + $0x9c8] sm:$0xff]
        %v4861 = vld [vmem:[%s5 + $0x9d0] sm:$0xff]
        %v4862 = vld [vmem:[%s5 + $0x9d8] sm:$0xff]
        %v4863 = vld [vmem:[%s5 + $0x9e0] sm:$0xff]
        %v4864 = vld [vmem:[%s5 + $0x9e8] sm:$0xff]
        %v4865 = vld [vmem:[%s5 + $0x9f0] sm:$0xff]
        %v4866 = vld [vmem:[%s5 + $0x9f8] sm:$0xff]
        %v4867 = vld [vmem:[%s5 + $0xa00] sm:$0xff]
        %v4868 = vld [vmem:[%s5 + $0xa08] sm:$0xff]
        %v4869 = vld [vmem:[%s5 + $0xa10] sm:$0xff]
        %v4870 = vld [vmem:[%s5 + $0xa18] sm:$0xff]
        %v4871 = vld [vmem:[%s5 + $0xa20] sm:$0xff]
        %v4872 = vld [vmem:[%s5 + $0xa28] sm:$0xff]
        %v4873 = vld [vmem:[%s5 + $0xa30] sm:$0xff]
        %v4874 = vld [vmem:[%s5 + $0xa38] sm:$0xff]
        %v4875 = vld [vmem:[%s5 + $0xa40] sm:$0xff]
        %v4876 = vld [vmem:[%s5 + $0xa48] sm:$0xff]
        %v4877 = vld [vmem:[%s5 + $0xa50] sm:$0xff]
        %v4878 = vld [vmem:[%s5 + $0xa58] sm:$0xff]
        %v4879 = vld [vmem:[%s5 + $0xa60] sm:$0xff]
        %v4880 = vld [vmem:[%s5 + $0xa68] sm:$0xff]
        %v4881 = vld [vmem:[%s5 + $0xa70] sm:$0xff]
        %v4882 = vld [vmem:[%s5 + $0xa78] sm:$0xff]
        %v4883 = vld [vmem:[%s5 + $0xa80] sm:$0xff]
        %v4884 = vld [vmem:[%s5 + $0xa88] sm:$0xff]
        %v4885 = vld [vmem:[%s5 + $0xa90] sm:$0xff]
        %v4886 = vld [vmem:[%s5 + $0xa98] sm:$0xff]
        %v4887 = vld [vmem:[%s5 + $0xaa0] sm:$0xff]
        %v4888 = vld [vmem:[%s5 + $0xaa8] sm:$0xff]
        %v4889 = vld [vmem:[%s5 + $0xab0] sm:$0xff]
        %v4890 = vld [vmem:[%s5 + $0xab8] sm:$0xff]
        %v4891 = vld [vmem:[%s5 + $0xac0] sm:$0xff]
        %v4892 = vld [vmem:[%s5 + $0xac8] sm:$0xff]
        %v4893 = vld [vmem:[%s5 + $0xad0] sm:$0xff]
        %v4894 = vld [vmem:[%s5 + $0xad8] sm:$0xff]
        %v4895 = vld [vmem:[%s5 + $0xae0] sm:$0xff]
        %v4896 = vld [vmem:[%s5 + $0xae8] sm:$0xff]
        %v4897 = vld [vmem:[%s5 + $0xaf0] sm:$0xff]
        %v4898 = vld [vmem:[%s5 + $0xaf8] sm:$0xff]
        %v4899 = vld [vmem:[%s5 + $0xb00] sm:$0xff]
        %v4900 = vld [vmem:[%s5 + $0xb08] sm:$0xff]
        %v4901 = vld [vmem:[%s5 + $0xb10] sm:$0xff]
        %v4902 = vld [vmem:[%s5 + $0xb18] sm:$0xff]
        %v4903 = vld [vmem:[%s5 + $0xb20] sm:$0xff]
        %v4904 = vld [vmem:[%s5 + $0xb28] sm:$0xff]
        %v4905 = vld [vmem:[%s5 + $0xb30] sm:$0xff]
        %v4906 = vld [vmem:[%s5 + $0xb38] sm:$0xff]
        %v4907 = vld [vmem:[%s5 + $0xb40] sm:$0xff]
        %v4908 = vld [vmem:[%s5 + $0xb48] sm:$0xff]
        %v4909 = vld [vmem:[%s5 + $0xb50] sm:$0xff]
        %v4910 = vld [vmem:[%s5 + $0xb58] sm:$0xff]
        %v4911 = vld [vmem:[%s5 + $0xb60] sm:$0xff]
        %v4912 = vld [vmem:[%s5 + $0xb68] sm:$0xff]
        %v4913 = vld [vmem:[%s5 + $0xb70] sm:$0xff]
        %v4914 = vld [vmem:[%s5 + $0xb78] sm:$0xff]
        %v4915 = vld [vmem:[%s5 + $0xb80] sm:$0xff]
        %v4916 = vld [vmem:[%s5 + $0xb88] sm:$0xff]
        %v4917 = vld [vmem:[%s5 + $0xb90] sm:$0xff]
        %v4918 = vld [vmem:[%s5 + $0xb98] sm:$0xff]
        %v4919 = vld [vmem:[%s5 + $0xba0] sm:$0xff]
        %v4920 = vld [vmem:[%s5 + $0xba8] sm:$0xff]
        %v4921 = vld [vmem:[%s5 + $0xbb0] sm:$0xff]
        %v4922 = vld [vmem:[%s5 + $0xbb8] sm:$0xff]
        %v4923 = vld [vmem:[%s5 + $0xbc0] sm:$0xff]
        %v4924 = vld [vmem:[%s5 + $0xbc8] sm:$0xff]
        %v4925 = vld [vmem:[%s5 + $0xbd0] sm:$0xff]
        %v4926 = vld [vmem:[%s5 + $0xbd8] sm:$0xff]
        %v4927 = vld [vmem:[%s5 + $0xbe0] sm:$0xff]
        %v4928 = vld [vmem:[%s5 + $0xbe8] sm:$0xff]
        %v4929 = vld [vmem:[%s5 + $0xbf0] sm:$0xff]
        %v4930 = vld [vmem:[%s5 + $0xbf8] sm:$0xff]
        %v4931 = vld [vmem:[%s5 + $0xc00] sm:$0xff]
        %v4932 = vld [vmem:[%s5 + $0xc08] sm:$0xff]
        %v4933 = vld [vmem:[%s5 + $0xc10] sm:$0xff]
        %v4934 = vld [vmem:[%s5 + $0xc18] sm:$0xff]
        %v4935 = vld [vmem:[%s5 + $0xc20] sm:$0xff]
        %v4936 = vld [vmem:[%s5 + $0xc28] sm:$0xff]
        %v4937 = vld [vmem:[%s5 + $0xc30] sm:$0xff]
        %v4938 = vld [vmem:[%s5 + $0xc38] sm:$0xff]
        %v4939 = vld [vmem:[%s5 + $0xc40] sm:$0xff]
        %v4940 = vld [vmem:[%s5 + $0xc48] sm:$0xff]
        %v4941 = vld [vmem:[%s5 + $0xc50] sm:$0xff]
        %v4942 = vld [vmem:[%s5 + $0xc58] sm:$0xff]
        %v4943 = vld [vmem:[%s5 + $0xc60] sm:$0xff]
        %v4944 = vld [vmem:[%s5 + $0xc68] sm:$0xff]
        %v4945 = vld [vmem:[%s5 + $0xc70] sm:$0xff]
        %v4946 = vld [vmem:[%s5 + $0xc78] sm:$0xff]
        %v4947 = vld [vmem:[%s5 + $0xc80] sm:$0xff]
        %v4948 = vld [vmem:[%s5 + $0xc88] sm:$0xff]
        %v4949 = vld [vmem:[%s5 + $0xc90] sm:$0xff]
        %v4950 = vld [vmem:[%s5 + $0xc98] sm:$0xff]
        %v4951 = vld [vmem:[%s5 + $0xca0] sm:$0xff]
        %v4952 = vld [vmem:[%s5 + $0xca8] sm:$0xff]
        %v4953 = vld [vmem:[%s5 + $0xcb0] sm:$0xff]
        %v4954 = vld [vmem:[%s5 + $0xcb8] sm:$0xff]
        %v4955 = vld [vmem:[%s5 + $0xcc0] sm:$0xff]
        %v4956 = vld [vmem:[%s5 + $0xcc8] sm:$0xff]
        %v4957 = vld [vmem:[%s5 + $0xcd0] sm:$0xff]
        %v4958 = vld [vmem:[%s5 + $0xcd8] sm:$0xff]
        %v4959 = vld [vmem:[%s5 + $0xce0] sm:$0xff]
        %v4960 = vld [vmem:[%s5 + $0xce8] sm:$0xff]
        %v4961 = vld [vmem:[%s5 + $0xcf0] sm:$0xff]
        %v4962 = vld [vmem:[%s5 + $0xcf8] sm:$0xff]
        %v4963 = vld [vmem:[%s5 + $0xd00] sm:$0xff]
        %v4964 = vld [vmem:[%s5 + $0xd08] sm:$0xff]
        %v4965 = vld [vmem:[%s5 + $0xd10] sm:$0xff]
        %v4966 = vld [vmem:[%s5 + $0xd18] sm:$0xff]
        %v4967 = vld [vmem:[%s5 + $0xd20] sm:$0xff]
        %v4968 = vld [vmem:[%s5 + $0xd28] sm:$0xff]
        %v4969 = vld [vmem:[%s5 + $0xd30] sm:$0xff]
        %v4970 = vld [vmem:[%s5 + $0xd38] sm:$0xff]
        %v4971 = vld [vmem:[%s5 + $0xd40] sm:$0xff]
        %v4972 = vld [vmem:[%s5 + $0xd48] sm:$0xff]
        %v4973 = vld [vmem:[%s5 + $0xd50] sm:$0xff]
        %v4974 = vld [vmem:[%s5 + $0xd58] sm:$0xff]
        %v4975 = vld [vmem:[%s5 + $0xd60] sm:$0xff]
        %v4976 = vld [vmem:[%s5 + $0xd68] sm:$0xff]
        %v4977 = vld [vmem:[%s5 + $0xd70] sm:$0xff]
        %v4978 = vld [vmem:[%s5 + $0xd78] sm:$0xff]
        %v4979 = vld [vmem:[%s5 + $0xd80] sm:$0xff]
        %v4980 = vld [vmem:[%s5 + $0xd88] sm:$0xff]
        %v4981 = vld [vmem:[%s5 + $0xd90] sm:$0xff]
        %v4982 = vld [vmem:[%s5 + $0xd98] sm:$0xff]
        %v4983 = vld [vmem:[%s5 + $0xda0] sm:$0xff]
        %v4984 = vld [vmem:[%s5 + $0xda8] sm:$0xff]
        %v4985 = vld [vmem:[%s5 + $0xdb0] sm:$0xff]
        %v4986 = vld [vmem:[%s5 + $0xdb8] sm:$0xff]
        %v4987 = vld [vmem:[%s5 + $0xdc0] sm:$0xff]
        %v4988 = vld [vmem:[%s5 + $0xdc8] sm:$0xff]
        %v4989 = vld [vmem:[%s5 + $0xdd0] sm:$0xff]
        %v4990 = vld [vmem:[%s5 + $0xdd8] sm:$0xff]
        %v4991 = vld [vmem:[%s5 + $0xde0] sm:$0xff]
        %v4992 = vld [vmem:[%s5 + $0xde8] sm:$0xff]
        %v4993 = vld [vmem:[%s5 + $0xdf0] sm:$0xff]
        %v4994 = vld [vmem:[%s5 + $0xdf8] sm:$0xff]
        %v4995 = vld [vmem:[%s5 + $0xe00] sm:$0xff]
        %v4996 = vld [vmem:[%s5 + $0xe08] sm:$0xff]
        %v4997 = vld [vmem:[%s5 + $0xe10] sm:$0xff]
        %v4998 = vld [vmem:[%s5 + $0xe18] sm:$0xff]
        %v4999 = vld [vmem:[%s5 + $0xe20] sm:$0xff]
        %v5000 = vld [vmem:[%s5 + $0xe28] sm:$0xff]
        %v5001 = vld [vmem:[%s5 + $0xe30] sm:$0xff]
        %v5002 = vld [vmem:[%s5 + $0xe38] sm:$0xff]
        %v5003 = vld [vmem:[%s5 + $0xe40] sm:$0xff]
        %v5004 = vld [vmem:[%s5 + $0xe48] sm:$0xff]
        %v5005 = vld [vmem:[%s5 + $0xe50] sm:$0xff]
        %v5006 = vld [vmem:[%s5 + $0xe58] sm:$0xff]
        %v5007 = vld [vmem:[%s5 + $0xe60] sm:$0xff]
        %v5008 = vld [vmem:[%s5 + $0xe68] sm:$0xff]
        %v5009 = vld [vmem:[%s5 + $0xe70] sm:$0xff]
        %v5010 = vld [vmem:[%s5 + $0xe78] sm:$0xff]
        %v5011 = vld [vmem:[%s5 + $0xe80] sm:$0xff]
        %v5012 = vld [vmem:[%s5 + $0xe88] sm:$0xff]
        %v5013 = vld [vmem:[%s5 + $0xe90] sm:$0xff]
        %v5014 = vld [vmem:[%s5 + $0xe98] sm:$0xff]
        %v5015 = vld [vmem:[%s5 + $0xea0] sm:$0xff]
        %v5016 = vld [vmem:[%s5 + $0xea8] sm:$0xff]
        %v5017 = vld [vmem:[%s5 + $0xeb0] sm:$0xff]
        %v5018 = vld [vmem:[%s5 + $0xeb8] sm:$0xff]
        %v5019 = vld [vmem:[%s5 + $0xec0] sm:$0xff]
        %v5020 = vld [vmem:[%s5 + $0xec8] sm:$0xff]
        %v5021 = vld [vmem:[%s5 + $0xed0] sm:$0xff]
        %v5022 = vld [vmem:[%s5 + $0xed8] sm:$0xff]
        %v5023 = vld [vmem:[%s5 + $0xee0] sm:$0xff]
        %v5024 = vld [vmem:[%s5 + $0xee8] sm:$0xff]
        %v5025 = vld [vmem:[%s5 + $0xef0] sm:$0xff]
        %v5026 = vld [vmem:[%s5 + $0xef8] sm:$0xff]
        %v5027 = vld [vmem:[%s5 + $0xf00] sm:$0xff]
        %v5028 = vld [vmem:[%s5 + $0xf08] sm:$0xff]
        %v5029 = vld [vmem:[%s5 + $0xf10] sm:$0xff]
        %v5030 = vld [vmem:[%s5 + $0xf18] sm:$0xff]
        %v5031 = vld [vmem:[%s5 + $0xf20] sm:$0xff]
        %v5032 = vld [vmem:[%s5 + $0xf28] sm:$0xff]
        %v5033 = vld [vmem:[%s5 + $0xf30] sm:$0xff]
        %v5034 = vld [vmem:[%s5 + $0xf38] sm:$0xff]
        %v5035 = vld [vmem:[%s5 + $0xf40] sm:$0xff]
        %v5036 = vld [vmem:[%s5 + $0xf48] sm:$0xff]
        %v5037 = vld [vmem:[%s5 + $0xf50] sm:$0xff]
        %v5038 = vld [vmem:[%s5 + $0xf58] sm:$0xff]
        %v5039 = vld [vmem:[%s5 + $0xf60] sm:$0xff]
        %v5040 = vld [vmem:[%s5 + $0xf68] sm:$0xff]
        %v5041 = vld [vmem:[%s5 + $0xf70] sm:$0xff]
        %v5042 = vld [vmem:[%s5 + $0xf78] sm:$0xff]
        %v5043 = vld [vmem:[%s5 + $0xf80] sm:$0xff]
        %v5044 = vld [vmem:[%s5 + $0xf88] sm:$0xff]
        %v5045 = vld [vmem:[%s5 + $0xf90] sm:$0xff]
        %v5046 = vld [vmem:[%s5 + $0xf98] sm:$0xff]
        %v5047 = vld [vmem:[%s5 + $0xfa0] sm:$0xff]
        %v5048 = vld [vmem:[%s5 + $0xfa8] sm:$0xff]
        %v5049 = vld [vmem:[%s5 + $0xfb0] sm:$0xff]
        %v5050 = vld [vmem:[%s5 + $0xfb8] sm:$0xff]
        %v5051 = vld [vmem:[%s5 + $0xfc0] sm:$0xff]
        %v5052 = vld [vmem:[%s5 + $0xfc8] sm:$0xff]
        %v5053 = vld [vmem:[%s5 + $0xfd0] sm:$0xff]
        %v5054 = vld [vmem:[%s5 + $0xfd8] sm:$0xff]
        %v5055 = vld [vmem:[%s5 + $0xfe0] sm:$0xff]
        %v5056 = vld [vmem:[%s5 + $0xfe8] sm:$0xff]
        %v5057 = vld [vmem:[%s5 + $0xff0] sm:$0xff]
        %v5058 = vld [vmem:[%s5 + $0xff8] sm:$0xff]
        %v5059 = vld [vmem:[%s5 + $0x1000] sm:$0xff]
        %v5060 = vld [vmem:[%s5 + $0x1008] sm:$0xff]
        %v5061 = vld [vmem:[%s5 + $0x1010] sm:$0xff]
        %v5062 = vld [vmem:[%s5 + $0x1018] sm:$0xff]
        %v5063 = vld [vmem:[%s5 + $0x1020] sm:$0xff]
        %v5064 = vld [vmem:[%s5 + $0x1028] sm:$0xff]
        %v5065 = vld [vmem:[%s5 + $0x1030] sm:$0xff]
        %v5066 = vld [vmem:[%s5 + $0x1038] sm:$0xff]
        %v5067 = vld [vmem:[%s5 + $0x1040] sm:$0xff]
        %v5068 = vld [vmem:[%s5 + $0x1048] sm:$0xff]
        %v5069 = vld [vmem:[%s5 + $0x1050] sm:$0xff]
        %v5070 = vld [vmem:[%s5 + $0x1058] sm:$0xff]
        %v5071 = vld [vmem:[%s5 + $0x1060] sm:$0xff]
        %v5072 = vld [vmem:[%s5 + $0x1068] sm:$0xff]
        %v5073 = vld [vmem:[%s5 + $0x1070] sm:$0xff]
        %v5074 = vld [vmem:[%s5 + $0x1078] sm:$0xff]
        %v5075 = vld [vmem:[%s5 + $0x1080] sm:$0xff]
        %v5076 = vld [vmem:[%s5 + $0x1088] sm:$0xff]
        %v5077 = vld [vmem:[%s5 + $0x1090] sm:$0xff]
        %v5078 = vld [vmem:[%s5 + $0x1098] sm:$0xff]
        %v5079 = vld [vmem:[%s5 + $0x10a0] sm:$0xff]
        %v5080 = vld [vmem:[%s5 + $0x10a8] sm:$0xff]
        %v5081 = vld [vmem:[%s5 + $0x10b0] sm:$0xff]
        %v5082 = vld [vmem:[%s5 + $0x10b8] sm:$0xff]
        %v5083 = vld [vmem:[%s5 + $0x10c0] sm:$0xff]
        %v5084 = vld [vmem:[%s5 + $0x10c8] sm:$0xff]
        %v5085 = vld [vmem:[%s5 + $0x10d0] sm:$0xff]
        %v5086 = vld [vmem:[%s5 + $0x10d8] sm:$0xff]
        %v5087 = vld [vmem:[%s5 + $0x10e0] sm:$0xff]
        %v5088 = vld [vmem:[%s5 + $0x10e8] sm:$0xff]
        %v5089 = vld [vmem:[%s5 + $0x10f0] sm:$0xff]
        %v5090 = vld [vmem:[%s5 + $0x10f8] sm:$0xff]
        %v5091 = vld [vmem:[%s5 + $0x1100] sm:$0xff]
        %v5092 = vld [vmem:[%s5 + $0x1108] sm:$0xff]
        %v5093 = vld [vmem:[%s5 + $0x1110] sm:$0xff]
        %v5094 = vld [vmem:[%s5 + $0x1118] sm:$0xff]
        %v5095 = vld [vmem:[%s5 + $0x1120] sm:$0xff]
        %v5096 = vld [vmem:[%s5 + $0x1128] sm:$0xff]
        %v5097 = vld [vmem:[%s5 + $0x1130] sm:$0xff]
        %v5098 = vld [vmem:[%s5 + $0x1138] sm:$0xff]
        %v5099 = vld [vmem:[%s5 + $0x1140] sm:$0xff]
        %v5100 = vld [vmem:[%s5 + $0x1148] sm:$0xff]
        %v5101 = vld [vmem:[%s5 + $0x1150] sm:$0xff]
        %v5102 = vld [vmem:[%s5 + $0x1158] sm:$0xff]
        %v5103 = vld [vmem:[%s5 + $0x1160] sm:$0xff]
        %v5104 = vld [vmem:[%s5 + $0x1168] sm:$0xff]
        %v5105 = vld [vmem:[%s5 + $0x1170] sm:$0xff]
        %v5106 = vld [vmem:[%s5 + $0x1178] sm:$0xff]
        %v5107 = vld [vmem:[%s5 + $0x1180] sm:$0xff]
        %v5108 = vld [vmem:[%s5 + $0x1188] sm:$0xff]
        %v5109 = vld [vmem:[%s5 + $0x1190] sm:$0xff]
        %v5110 = vld [vmem:[%s5 + $0x1198] sm:$0xff]
        %v5111 = vld [vmem:[%s5 + $0x11a0] sm:$0xff]
        %v5112 = vld [vmem:[%s5 + $0x11a8] sm:$0xff]
        %v5113 = vld [vmem:[%s5 + $0x11b0] sm:$0xff]
        %v5114 = vld [vmem:[%s5 + $0x11b8] sm:$0xff]
        %v5115 = vld [vmem:[%s5 + $0x11c0] sm:$0xff]
        %v5116 = vld [vmem:[%s5 + $0x11c8] sm:$0xff]
        %v5117 = vld [vmem:[%s5 + $0x11d0] sm:$0xff]
        %v5118 = vld [vmem:[%s5 + $0x11d8] sm:$0xff]
        %v5119 = vld [vmem:[%s5 + $0x11e0] sm:$0xff]
        %v5120 = vld [vmem:[%s5 + $0x11e8] sm:$0xff]
        %v5121 = vld [vmem:[%s5 + $0x11f0] sm:$0xff]
        %v5122 = vld [vmem:[%s5 + $0x11f8] sm:$0xff]
        %v5123 = vld [vmem:[%s5 + $0x1200] sm:$0xff]
        %v5124 = vld [vmem:[%s5 + $0x1208] sm:$0xff]
        %v5125 = vld [vmem:[%s5 + $0x1210] sm:$0xff]
        %v5126 = vld [vmem:[%s5 + $0x1218] sm:$0xff]
        %v5127 = vld [vmem:[%s5 + $0x1220] sm:$0xff]
        %v5128 = vld [vmem:[%s5 + $0x1228] sm:$0xff]
        %v5129 = vld [vmem:[%s5 + $0x1230] sm:$0xff]
        %v5130 = vld [vmem:[%s5 + $0x1238] sm:$0xff]
        %v5131 = vld [vmem:[%s5 + $0x1240] sm:$0xff]
        %v5132 = vld [vmem:[%s5 + $0x1248] sm:$0xff]
        %v5133 = vld [vmem:[%s5 + $0x1250] sm:$0xff]
        %v5134 = vld [vmem:[%s5 + $0x1258] sm:$0xff]
        %v5135 = vld [vmem:[%s5 + $0x1260] sm:$0xff]
        %v5136 = vld [vmem:[%s5 + $0x1268] sm:$0xff]
        %v5137 = vld [vmem:[%s5 + $0x1270] sm:$0xff]
        %v5138 = vld [vmem:[%s5 + $0x1278] sm:$0xff]
        %v5139 = vld [vmem:[%s5 + $0x1280] sm:$0xff]
        %v5140 = vld [vmem:[%s5 + $0x1288] sm:$0xff]
        %v5141 = vld [vmem:[%s5 + $0x1290] sm:$0xff]
        %v5142 = vld [vmem:[%s5 + $0x1298] sm:$0xff]
        %v5143 = vld [vmem:[%s5 + $0x12a0] sm:$0xff]
        %v5144 = vld [vmem:[%s5 + $0x12a8] sm:$0xff]
        %v5145 = vld [vmem:[%s5 + $0x12b0] sm:$0xff]
        %v5146 = vld [vmem:[%s5 + $0x12b8] sm:$0xff]
        %v5147 = vld [vmem:[%s5 + $0x12c0] sm:$0xff]
        %v5148 = vld [vmem:[%s5 + $0x12c8] sm:$0xff]
        %v5149 = vld [vmem:[%s5 + $0x12d0] sm:$0xff]
        %v5150 = vld [vmem:[%s5 + $0x12d8] sm:$0xff]
        %v5151 = vld [vmem:[%s5 + $0x12e0] sm:$0xff]
        %v5152 = vld [vmem:[%s5 + $0x12e8] sm:$0xff]
        %v5153 = vld [vmem:[%s5 + $0x12f0] sm:$0xff]
        %v5154 = vld [vmem:[%s5 + $0x12f8] sm:$0xff]
        %v5155 = vld [vmem:[%s5 + $0x1300] sm:$0xff]
        %v5156 = vld [vmem:[%s5 + $0x1308] sm:$0xff]
        %v5157 = vld [vmem:[%s5 + $0x1310] sm:$0xff]
        %v5158 = vld [vmem:[%s5 + $0x1318] sm:$0xff]
        %v5159 = vld [vmem:[%s5 + $0x1320] sm:$0xff]
        %v5160 = vld [vmem:[%s5 + $0x1328] sm:$0xff]
        %v5161 = vld [vmem:[%s5 + $0x1330] sm:$0xff]
        %v5162 = vld [vmem:[%s5 + $0x1338] sm:$0xff]
        %v5163 = vld [vmem:[%s5 + $0x1340] sm:$0xff]
        %v5164 = vld [vmem:[%s5 + $0x1348] sm:$0xff]
        %v5165 = vld [vmem:[%s5 + $0x1350] sm:$0xff]
        %v5166 = vld [vmem:[%s5 + $0x1358] sm:$0xff]
        %v5167 = vld [vmem:[%s5 + $0x1360] sm:$0xff]
        %v5168 = vld [vmem:[%s5 + $0x1368] sm:$0xff]
        %v5169 = vld [vmem:[%s5 + $0x1370] sm:$0xff]
        %v5170 = vld [vmem:[%s5 + $0x1378] sm:$0xff]
        %v5171 = vld [vmem:[%s5 + $0x1380] sm:$0xff]
        %v5172 = vld [vmem:[%s5 + $0x1388] sm:$0xff]
        %v5173 = vld [vmem:[%s5 + $0x1390] sm:$0xff]
        %v5174 = vld [vmem:[%s5 + $0x1398] sm:$0xff]
        %v5175 = vld [vmem:[%s5 + $0x13a0] sm:$0xff]
        %v5176 = vld [vmem:[%s5 + $0x13a8] sm:$0xff]
        %v5177 = vld [vmem:[%s5 + $0x13b0] sm:$0xff]
        %v5178 = vld [vmem:[%s5 + $0x13b8] sm:$0xff]
        %v5179 = vld [vmem:[%s5 + $0x13c0] sm:$0xff]
        %v5180 = vld [vmem:[%s5 + $0x13c8] sm:$0xff]
        %v5181 = vld [vmem:[%s5 + $0x13d0] sm:$0xff]
        %v5182 = vld [vmem:[%s5 + $0x13d8] sm:$0xff]
        %v5183 = vld [vmem:[%s5 + $0x13e0] sm:$0xff]
        %v5184 = vld [vmem:[%s5 + $0x13e8] sm:$0xff]
        %v5185 = vld [vmem:[%s5 + $0x13f0] sm:$0xff]
        %v5186 = vld [vmem:[%s5 + $0x13f8] sm:$0xff]
        %v5187 = vld [vmem:[%s5 + $0x1400] sm:$0xff]
        %v5188 = vld [vmem:[%s5 + $0x1408] sm:$0xff]
        %v5189 = vld [vmem:[%s5 + $0x1410] sm:$0xff]
        %v5190 = vld [vmem:[%s5 + $0x1418] sm:$0xff]
        %v5191 = vld [vmem:[%s5 + $0x1420] sm:$0xff]
        %v5192 = vld [vmem:[%s5 + $0x1428] sm:$0xff]
        %v5193 = vld [vmem:[%s5 + $0x1430] sm:$0xff]
        %v5194 = vld [vmem:[%s5 + $0x1438] sm:$0xff]
        %v5195 = vld [vmem:[%s5 + $0x1440] sm:$0xff]
        %v5196 = vld [vmem:[%s5 + $0x1448] sm:$0xff]
        %v5197 = vld [vmem:[%s5 + $0x1450] sm:$0xff]
        %v5198 = vld [vmem:[%s5 + $0x1458] sm:$0xff]
        %v5199 = vld [vmem:[%s5 + $0x1460] sm:$0xff]
        %v5200 = vld [vmem:[%s5 + $0x1468] sm:$0xff]
        %v5201 = vld [vmem:[%s5 + $0x1470] sm:$0xff]
        %v5202 = vld [vmem:[%s5 + $0x1478] sm:$0xff]
        %v5203 = vld [vmem:[%s5 + $0x1480] sm:$0xff]
        %v5204 = vld [vmem:[%s5 + $0x1488] sm:$0xff]
        %v5205 = vld [vmem:[%s5 + $0x1490] sm:$0xff]
        %v5206 = vld [vmem:[%s5 + $0x1498] sm:$0xff]
        %v5207 = vld [vmem:[%s5 + $0x14a0] sm:$0xff]
        %v5208 = vld [vmem:[%s5 + $0x14a8] sm:$0xff]
        %v5209 = vld [vmem:[%s5 + $0x14b0] sm:$0xff]
        %v5210 = vld [vmem:[%s5 + $0x14b8] sm:$0xff]
        %v5211 = vld [vmem:[%s5 + $0x14c0] sm:$0xff]
        %v5212 = vld [vmem:[%s5 + $0x14c8] sm:$0xff]
        %v5213 = vld [vmem:[%s5 + $0x14d0] sm:$0xff]
        %v5214 = vld [vmem:[%s5 + $0x14d8] sm:$0xff]
        %v5215 = vld [vmem:[%s5 + $0x14e0] sm:$0xff]
        %v5216 = vld [vmem:[%s5 + $0x14e8] sm:$0xff]
        %v5217 = vld [vmem:[%s5 + $0x14f0] sm:$0xff]
        %v5218 = vld [vmem:[%s5 + $0x14f8] sm:$0xff]
        %v5219 = vld [vmem:[%s5 + $0x1500] sm:$0xff]
        %v5220 = vld [vmem:[%s5 + $0x1508] sm:$0xff]
        %v5221 = vld [vmem:[%s5 + $0x1510] sm:$0xff]
        %v5222 = vld [vmem:[%s5 + $0x1518] sm:$0xff]
        %v5223 = vld [vmem:[%s5 + $0x1520] sm:$0xff]
        %v5224 = vld [vmem:[%s5 + $0x1528] sm:$0xff]
        %v5225 = vld [vmem:[%s5 + $0x1530] sm:$0xff]
        %v5226 = vld [vmem:[%s5 + $0x1538] sm:$0xff]
        %v5227 = vld [vmem:[%s5 + $0x1540] sm:$0xff]
        %v5228 = vld [vmem:[%s5 + $0x1548] sm:$0xff]
        %v5229 = vld [vmem:[%s5 + $0x1550] sm:$0xff]
        %v5230 = vld [vmem:[%s5 + $0x1558] sm:$0xff]
        %v5231 = vld [vmem:[%s5 + $0x1560] sm:$0xff]
        %v5232 = vld [vmem:[%s5 + $0x1568] sm:$0xff]
        %v5233 = vld [vmem:[%s5 + $0x1570] sm:$0xff]
        %v5234 = vld [vmem:[%s5 + $0x1578] sm:$0xff]
        %v5235 = vld [vmem:[%s5 + $0x1580] sm:$0xff]
        %v5236 = vld [vmem:[%s5 + $0x1588] sm:$0xff]
        %v5237 = vld [vmem:[%s5 + $0x1590] sm:$0xff]
        %v5238 = vld [vmem:[%s5 + $0x1598] sm:$0xff]
        %v5239 = vld [vmem:[%s5 + $0x15a0] sm:$0xff]
        %v5240 = vld [vmem:[%s5 + $0x15a8] sm:$0xff]
        %v5241 = vld [vmem:[%s5 + $0x15b0] sm:$0xff]
        %v5242 = vld [vmem:[%s5 + $0x15b8] sm:$0xff]
        %v5243 = vld [vmem:[%s5 + $0x15c0] sm:$0xff]
        %v5244 = vld [vmem:[%s5 + $0x15c8] sm:$0xff]
        %v5245 = vld [vmem:[%s5 + $0x15d0] sm:$0xff]
        %v5246 = vld [vmem:[%s5 + $0x15d8] sm:$0xff]
        %v5247 = vld [vmem:[%s5 + $0x15e0] sm:$0xff]
        %v5248 = vld [vmem:[%s5 + $0x15e8] sm:$0xff]
        %v5249 = vld [vmem:[%s5 + $0x15f0] sm:$0xff]
        %v5250 = vld [vmem:[%s5 + $0x15f8] sm:$0xff]
        %v5251 = vld [vmem:[%s5 + $0x1600] sm:$0xff]
        %v5252 = vld [vmem:[%s5 + $0x1608] sm:$0xff]
        %v5253 = vld [vmem:[%s5 + $0x1610] sm:$0xff]
        %v5254 = vld [vmem:[%s5 + $0x1618] sm:$0xff]
        %v5255 = vld [vmem:[%s5 + $0x1620] sm:$0xff]
        %v5256 = vld [vmem:[%s5 + $0x1628] sm:$0xff]
        %v5257 = vld [vmem:[%s5 + $0x1630] sm:$0xff]
        %v5258 = vld [vmem:[%s5 + $0x1638] sm:$0xff]
        %v5259 = vld [vmem:[%s5 + $0x1640] sm:$0xff]
        %v5260 = vld [vmem:[%s5 + $0x1648] sm:$0xff]
        %v5261 = vld [vmem:[%s5 + $0x1650] sm:$0xff]
        %v5262 = vld [vmem:[%s5 + $0x1658] sm:$0xff]
        %v5263 = vld [vmem:[%s5 + $0x1660] sm:$0xff]
        %v5264 = vld [vmem:[%s5 + $0x1668] sm:$0xff]
        %v5265 = vld [vmem:[%s5 + $0x1670] sm:$0xff]
        %v5266 = vld [vmem:[%s5 + $0x1678] sm:$0xff]
        %v5267 = vld [vmem:[%s5 + $0x1680] sm:$0xff]
        %v5268 = vld [vmem:[%s5 + $0x1688] sm:$0xff]
        %v5269 = vld [vmem:[%s5 + $0x1690] sm:$0xff]
        %v5270 = vld [vmem:[%s5 + $0x1698] sm:$0xff]
        %v5271 = vld [vmem:[%s5 + $0x16a0] sm:$0xff]
        %v5272 = vld [vmem:[%s5 + $0x16a8] sm:$0xff]
        %v5273 = vld [vmem:[%s5 + $0x16b0] sm:$0xff]
        %v5274 = vld [vmem:[%s5 + $0x16b8] sm:$0xff]
        %v5275 = vld [vmem:[%s5 + $0x16c0] sm:$0xff]
        %v5276 = vld [vmem:[%s5 + $0x16c8] sm:$0xff]
        %v5277 = vld [vmem:[%s5 + $0x16d0] sm:$0xff]
        %v5278 = vld [vmem:[%s5 + $0x16d8] sm:$0xff]
        %v5279 = vld [vmem:[%s5 + $0x16e0] sm:$0xff]
        %v5280 = vld [vmem:[%s5 + $0x16e8] sm:$0xff]
        %v5281 = vld [vmem:[%s5 + $0x16f0] sm:$0xff]
        %v5282 = vld [vmem:[%s5 + $0x16f8] sm:$0xff]
        %v5283 = vld [vmem:[%s5 + $0x1700] sm:$0xff]
        %v5284 = vld [vmem:[%s5 + $0x1708] sm:$0xff]
        %v5285 = vld [vmem:[%s5 + $0x1710] sm:$0xff]
        %v5286 = vld [vmem:[%s5 + $0x1718] sm:$0xff]
        %v5287 = vld [vmem:[%s5 + $0x1720] sm:$0xff]
        %v5288 = vld [vmem:[%s5 + $0x1728] sm:$0xff]
        %v5289 = vld [vmem:[%s5 + $0x1730] sm:$0xff]
        %v5290 = vld [vmem:[%s5 + $0x1738] sm:$0xff]
        %v5291 = vld [vmem:[%s5 + $0x1740] sm:$0xff]
        %v5292 = vld [vmem:[%s5 + $0x1748] sm:$0xff]
        %v5293 = vld [vmem:[%s5 + $0x1750] sm:$0xff]
        %v5294 = vld [vmem:[%s5 + $0x1758] sm:$0xff]
        %v5295 = vld [vmem:[%s5 + $0x1760] sm:$0xff]
        %v5296 = vld [vmem:[%s5 + $0x1768] sm:$0xff]
        %v5297 = vld [vmem:[%s5 + $0x1770] sm:$0xff]
        %v5298 = vld [vmem:[%s5 + $0x1778] sm:$0xff]
        %v5299 = vld [vmem:[%s5 + $0x1780] sm:$0xff]
        %v5300 = vld [vmem:[%s5 + $0x1788] sm:$0xff]
        %v5301 = vld [vmem:[%s5 + $0x1790] sm:$0xff]
        %v5302 = vld [vmem:[%s5 + $0x1798] sm:$0xff]
        %v5303 = vld [vmem:[%s5 + $0x17a0] sm:$0xff]
        %v5304 = vld [vmem:[%s5 + $0x17a8] sm:$0xff]
        %v5305 = vld [vmem:[%s5 + $0x17b0] sm:$0xff]
        %v5306 = vld [vmem:[%s5 + $0x17b8] sm:$0xff]
        %v5307 = vld [vmem:[%s5 + $0x17c0] sm:$0xff]
        %v5308 = vld [vmem:[%s5 + $0x17c8] sm:$0xff]
        %v5309 = vld [vmem:[%s5 + $0x17d0] sm:$0xff]
        %v5310 = vld [vmem:[%s5 + $0x17d8] sm:$0xff]
        %v5311 = vld [vmem:[%s5 + $0x17e0] sm:$0xff]
        %v5312 = vld [vmem:[%s5 + $0x17e8] sm:$0xff]
        %v5313 = vld [vmem:[%s5 + $0x17f0] sm:$0xff]
        %v5314 = vld [vmem:[%s5 + $0x17f8] sm:$0xff]
        %v5315 = vld [vmem:[%s5 + $0x1800] sm:$0xff]
        %v5316 = vld [vmem:[%s5 + $0x1808] sm:$0xff]
        %v5317 = vld [vmem:[%s5 + $0x1810] sm:$0xff]
        %v5318 = vld [vmem:[%s5 + $0x1818] sm:$0xff]
        %v5319 = vld [vmem:[%s5 + $0x1820] sm:$0xff]
        %v5320 = vld [vmem:[%s5 + $0x1828] sm:$0xff]
        %v5321 = vld [vmem:[%s5 + $0x1830] sm:$0xff]
        %v5322 = vld [vmem:[%s5 + $0x1838] sm:$0xff]
        %v5323 = vld [vmem:[%s5 + $0x1840] sm:$0xff]
        %v5324 = vld [vmem:[%s5 + $0x1848] sm:$0xff]
        %v5325 = vld [vmem:[%s5 + $0x1850] sm:$0xff]
        %v5326 = vld [vmem:[%s5 + $0x1858] sm:$0xff]
        %v5327 = vld [vmem:[%s5 + $0x1860] sm:$0xff]
        %v5328 = vld [vmem:[%s5 + $0x1868] sm:$0xff]
        %v5329 = vld [vmem:[%s5 + $0x1870] sm:$0xff]
        %v5330 = vld [vmem:[%s5 + $0x1878] sm:$0xff]
        %v5331 = vld [vmem:[%s5 + $0x1880] sm:$0xff]
        %v5332 = vld [vmem:[%s5 + $0x1888] sm:$0xff]
        %v5333 = vld [vmem:[%s5 + $0x1890] sm:$0xff]
        %v5334 = vld [vmem:[%s5 + $0x1898] sm:$0xff]
        %v5335 = vld [vmem:[%s5 + $0x18a0] sm:$0xff]
        %v5336 = vld [vmem:[%s5 + $0x18a8] sm:$0xff]
        %v5337 = vld [vmem:[%s5 + $0x18b0] sm:$0xff]
        %v5338 = vld [vmem:[%s5 + $0x18b8] sm:$0xff]
        %v5339 = vld [vmem:[%s5 + $0x18c0] sm:$0xff]
        %v5340 = vld [vmem:[%s5 + $0x18c8] sm:$0xff]
        %v5341 = vld [vmem:[%s5 + $0x18d0] sm:$0xff]
        %v5342 = vld [vmem:[%s5 + $0x18d8] sm:$0xff]
        %v5343 = vld [vmem:[%s5 + $0x18e0] sm:$0xff]
        %v5344 = vld [vmem:[%s5 + $0x18e8] sm:$0xff]
        %v5345 = vld [vmem:[%s5 + $0x18f0] sm:$0xff]
        %v5346 = vld [vmem:[%s5 + $0x18f8] sm:$0xff]
        %v5347 = vld [vmem:[%s5 + $0x1900] sm:$0xff]
        %v5348 = vld [vmem:[%s5 + $0x1908] sm:$0xff]
        %v5349 = vld [vmem:[%s5 + $0x1910] sm:$0xff]
        %v5350 = vld [vmem:[%s5 + $0x1918] sm:$0xff]
        %v5351 = vld [vmem:[%s5 + $0x1920] sm:$0xff]
        %v5352 = vld [vmem:[%s5 + $0x1928] sm:$0xff]
        %v5353 = vld [vmem:[%s5 + $0x1930] sm:$0xff]
        %v5354 = vld [vmem:[%s5 + $0x1938] sm:$0xff]
        %v5355 = vld [vmem:[%s5 + $0x1940] sm:$0xff]
        %v5356 = vld [vmem:[%s5 + $0x1948] sm:$0xff]
        %v5357 = vld [vmem:[%s5 + $0x1950] sm:$0xff]
        %v5358 = vld [vmem:[%s5 + $0x1958] sm:$0xff]
        %v5359 = vld [vmem:[%s5 + $0x1960] sm:$0xff]
        %v5360 = vld [vmem:[%s5 + $0x1968] sm:$0xff]
        %v5361 = vld [vmem:[%s5 + $0x1970] sm:$0xff]
        %v5362 = vld [vmem:[%s5 + $0x1978] sm:$0xff]
        %v5363 = vld [vmem:[%s5 + $0x1980] sm:$0xff]
        %v5364 = vld [vmem:[%s5 + $0x1988] sm:$0xff]
        %v5365 = vld [vmem:[%s5 + $0x1990] sm:$0xff]
        %v5366 = vld [vmem:[%s5 + $0x1998] sm:$0xff]
        %v5367 = vld [vmem:[%s5 + $0x19a0] sm:$0xff]
        %v5368 = vld [vmem:[%s5 + $0x19a8] sm:$0xff]
        %v5369 = vld [vmem:[%s5 + $0x19b0] sm:$0xff]
        %v5370 = vld [vmem:[%s5 + $0x19b8] sm:$0xff]
        %v5371 = vld [vmem:[%s5 + $0x19c0] sm:$0xff]
        %v5372 = vld [vmem:[%s5 + $0x19c8] sm:$0xff]
        %v5373 = vld [vmem:[%s5 + $0x19d0] sm:$0xff]
        %v5374 = vld [vmem:[%s5 + $0x19d8] sm:$0xff]
        %v5375 = vld [vmem:[%s5 + $0x19e0] sm:$0xff]
        %v5376 = vld [vmem:[%s5 + $0x19e8] sm:$0xff]
        %v5377 = vld [vmem:[%s5 + $0x19f0] sm:$0xff]
        %v5378 = vld [vmem:[%s5 + $0x19f8] sm:$0xff]
        %v5379 = vld [vmem:[%s5 + $0x1a00] sm:$0xff]
        %v5380 = vld [vmem:[%s5 + $0x1a08] sm:$0xff]
        %v5381 = vld [vmem:[%s5 + $0x1a10] sm:$0xff]
        %v5382 = vld [vmem:[%s5 + $0x1a18] sm:$0xff]
        %v5383 = vld [vmem:[%s5 + $0x1a20] sm:$0xff]
        %v5384 = vld [vmem:[%s5 + $0x1a28] sm:$0xff]
        %v5385 = vld [vmem:[%s5 + $0x1a30] sm:$0xff]
        %v5386 = vld [vmem:[%s5 + $0x1a38] sm:$0xff]
        %v5387 = vld [vmem:[%s5 + $0x1a40] sm:$0xff]
        %v5388 = vld [vmem:[%s5 + $0x1a48] sm:$0xff]
        %v5389 = vld [vmem:[%s5 + $0x1a50] sm:$0xff]
        %v5390 = vld [vmem:[%s5 + $0x1a58] sm:$0xff]
        %v5391 = vld [vmem:[%s5 + $0x1a60] sm:$0xff]
        %v5392 = vld [vmem:[%s5 + $0x1a68] sm:$0xff]
        %v5393 = vld [vmem:[%s5 + $0x1a70] sm:$0xff]
        %v5394 = vld [vmem:[%s5 + $0x1a78] sm:$0xff]
        %v5395 = vld [vmem:[%s5 + $0x1a80] sm:$0xff]
        %v5396 = vld [vmem:[%s5 + $0x1a88] sm:$0xff]
        %v5397 = vld [vmem:[%s5 + $0x1a90] sm:$0xff]
        %v5398 = vld [vmem:[%s5 + $0x1a98] sm:$0xff]
        %v5399 = vld [vmem:[%s5 + $0x1aa0] sm:$0xff]
        %v5400 = vld [vmem:[%s5 + $0x1aa8] sm:$0xff]
        %v5401 = vld [vmem:[%s5 + $0x1ab0] sm:$0xff]
        %v5402 = vld [vmem:[%s5 + $0x1ab8] sm:$0xff]
        %v5403 = vld [vmem:[%s5 + $0x1ac0] sm:$0xff]
        %v5404 = vld [vmem:[%s5 + $0x1ac8] sm:$0xff]
        %v5405 = vld [vmem:[%s5 + $0x1ad0] sm:$0xff]
        %v5406 = vld [vmem:[%s5 + $0x1ad8] sm:$0xff]
        %v5407 = vld [vmem:[%s5 + $0x1ae0] sm:$0xff]
        %v5408 = vld [vmem:[%s5 + $0x1ae8] sm:$0xff]
        %v5409 = vld [vmem:[%s5 + $0x1af0] sm:$0xff]
        %v5410 = vld [vmem:[%s5 + $0x1af8] sm:$0xff]
        %v5411 = vld [vmem:[%s5 + $0x1b00] sm:$0xff]
        %v5412 = vld [vmem:[%s5 + $0x1b08] sm:$0xff]
        %v5413 = vld [vmem:[%s5 + $0x1b10] sm:$0xff]
        %v5414 = vld [vmem:[%s5 + $0x1b18] sm:$0xff]
        %v5415 = vld [vmem:[%s5 + $0x1b20] sm:$0xff]
        %v5416 = vld [vmem:[%s5 + $0x1b28] sm:$0xff]
        %v5417 = vld [vmem:[%s5 + $0x1b30] sm:$0xff]
        %v5418 = vld [vmem:[%s5 + $0x1b38] sm:$0xff]
        %v5419 = vld [vmem:[%s5 + $0x1b40] sm:$0xff]
        %v5420 = vld [vmem:[%s5 + $0x1b48] sm:$0xff]
        %v5421 = vld [vmem:[%s5 + $0x1b50] sm:$0xff]
        %v5422 = vld [vmem:[%s5 + $0x1b58] sm:$0xff]
        %v5423 = vld [vmem:[%s5 + $0x1b60] sm:$0xff]
        %v5424 = vld [vmem:[%s5 + $0x1b68] sm:$0xff]
        %v5425 = vld [vmem:[%s5 + $0x1b70] sm:$0xff]
        %v5426 = vld [vmem:[%s5 + $0x1b78] sm:$0xff]
        %v5427 = vld [vmem:[%s5 + $0x1b80] sm:$0xff]
        %v5428 = vld [vmem:[%s5 + $0x1b88] sm:$0xff]
        %v5429 = vld [vmem:[%s5 + $0x1b90] sm:$0xff]
        %v5430 = vld [vmem:[%s5 + $0x1b98] sm:$0xff]
        %v5431 = vld [vmem:[%s5 + $0x1ba0] sm:$0xff]
        %v5432 = vld [vmem:[%s5 + $0x1ba8] sm:$0xff]
        %v5433 = vld [vmem:[%s5 + $0x1bb0] sm:$0xff]
        %v5434 = vld [vmem:[%s5 + $0x1bb8] sm:$0xff]
        %v5435 = vld [vmem:[%s5 + $0x1bc0] sm:$0xff]
        %v5436 = vld [vmem:[%s5 + $0x1bc8] sm:$0xff]
        %v5437 = vld [vmem:[%s5 + $0x1bd0] sm:$0xff]
        %v5438 = vld [vmem:[%s5 + $0x1bd8] sm:$0xff]
        %v5439 = vld [vmem:[%s5 + $0x1be0] sm:$0xff]
        %v5440 = vld [vmem:[%s5 + $0x1be8] sm:$0xff]
        %v5441 = vld [vmem:[%s5 + $0x1bf0] sm:$0xff]
        %v5442 = vld [vmem:[%s5 + $0x1bf8] sm:$0xff]
        %v5443 = vld [vmem:[%s5 + $0x1c00] sm:$0xff]
        %v5444 = vld [vmem:[%s5 + $0x1c08] sm:$0xff]
        %v5445 = vld [vmem:[%s5 + $0x1c10] sm:$0xff]
        %v5446 = vld [vmem:[%s5 + $0x1c18] sm:$0xff]
        %v5447 = vld [vmem:[%s5 + $0x1c20] sm:$0xff]
        %v5448 = vld [vmem:[%s5 + $0x1c28] sm:$0xff]
        %v5449 = vld [vmem:[%s5 + $0x1c30] sm:$0xff]
        %v5450 = vld [vmem:[%s5 + $0x1c38] sm:$0xff]
        %v5451 = vld [vmem:[%s5 + $0x1c40] sm:$0xff]
        %v5452 = vld [vmem:[%s5 + $0x1c48] sm:$0xff]
        %v5453 = vld [vmem:[%s5 + $0x1c50] sm:$0xff]
        %v5454 = vld [vmem:[%s5 + $0x1c58] sm:$0xff]
        %v5455 = vld [vmem:[%s5 + $0x1c60] sm:$0xff]
        %v5456 = vld [vmem:[%s5 + $0x1c68] sm:$0xff]
        %v5457 = vld [vmem:[%s5 + $0x1c70] sm:$0xff]
        %v5458 = vld [vmem:[%s5 + $0x1c78] sm:$0xff]
        %v5459 = vld [vmem:[%s5 + $0x1c80] sm:$0xff]
        %v5460 = vld [vmem:[%s5 + $0x1c88] sm:$0xff]
        %v5461 = vld [vmem:[%s5 + $0x1c90] sm:$0xff]
        %v5462 = vld [vmem:[%s5 + $0x1c98] sm:$0xff]
        %v5463 = vld [vmem:[%s5 + $0x1ca0] sm:$0xff]
        %v5464 = vld [vmem:[%s5 + $0x1ca8] sm:$0xff]
        %v5465 = vld [vmem:[%s5 + $0x1cb0] sm:$0xff]
        %v5466 = vld [vmem:[%s5 + $0x1cb8] sm:$0xff]
        %v5467 = vld [vmem:[%s5 + $0x1cc0] sm:$0xff]
        %v5468 = vld [vmem:[%s5 + $0x1cc8] sm:$0xff]
        %v5469 = vld [vmem:[%s5 + $0x1cd0] sm:$0xff]
        %v5470 = vld [vmem:[%s5 + $0x1cd8] sm:$0xff]
        %v5471 = vld [vmem:[%s5 + $0x1ce0] sm:$0xff]
        %v5472 = vld [vmem:[%s5 + $0x1ce8] sm:$0xff]
        %v5473 = vld [vmem:[%s5 + $0x1cf0] sm:$0xff]
        %v5474 = vld [vmem:[%s5 + $0x1cf8] sm:$0xff]
        %v5475 = vld [vmem:[%s5 + $0x1d00] sm:$0xff]
        %v5476 = vld [vmem:[%s5 + $0x1d08] sm:$0xff]
        %v5477 = vld [vmem:[%s5 + $0x1d10] sm:$0xff]
        %v5478 = vld [vmem:[%s5 + $0x1d18] sm:$0xff]
        %v5479 = vld [vmem:[%s5 + $0x1d20] sm:$0xff]
        %v5480 = vld [vmem:[%s5 + $0x1d28] sm:$0xff]
        %v5481 = vld [vmem:[%s5 + $0x1d30] sm:$0xff]
        %v5482 = vld [vmem:[%s5 + $0x1d38] sm:$0xff]
        %v5483 = vld [vmem:[%s5 + $0x1d40] sm:$0xff]
        %v5484 = vld [vmem:[%s5 + $0x1d48] sm:$0xff]
        %v5485 = vld [vmem:[%s5 + $0x1d50] sm:$0xff]
        %v5486 = vld [vmem:[%s5 + $0x1d58] sm:$0xff]
        %v5487 = vld [vmem:[%s5 + $0x1d60] sm:$0xff]
        %v5488 = vld [vmem:[%s5 + $0x1d68] sm:$0xff]
        %v5489 = vld [vmem:[%s5 + $0x1d70] sm:$0xff]
        %v5490 = vld [vmem:[%s5 + $0x1d78] sm:$0xff]
        %v5491 = vld [vmem:[%s5 + $0x1d80] sm:$0xff]
        %v5492 = vld [vmem:[%s5 + $0x1d88] sm:$0xff]
        %v5493 = vld [vmem:[%s5 + $0x1d90] sm:$0xff]
        %v5494 = vld [vmem:[%s5 + $0x1d98] sm:$0xff]
        %v5495 = vld [vmem:[%s5 + $0x1da0] sm:$0xff]
        %v5496 = vld [vmem:[%s5 + $0x1da8] sm:$0xff]
        %v5497 = vld [vmem:[%s5 + $0x1db0] sm:$0xff]
        %v5498 = vld [vmem:[%s5 + $0x1db8] sm:$0xff]
        %v5499 = vld [vmem:[%s5 + $0x1dc0] sm:$0xff]
        %v5500 = vld [vmem:[%s5 + $0x1dc8] sm:$0xff]
        %v5501 = vld [vmem:[%s5 + $0x1dd0] sm:$0xff]
        %v5502 = vld [vmem:[%s5 + $0x1dd8] sm:$0xff]
        %v5503 = vld [vmem:[%s5 + $0x1de0] sm:$0xff]
        %v5504 = vld [vmem:[%s5 + $0x1de8] sm:$0xff]
        %v5505 = vld [vmem:[%s5 + $0x1df0] sm:$0xff]
        %v5506 = vld [vmem:[%s5 + $0x1df8] sm:$0xff]
        %v5507 = vld [vmem:[%s5 + $0x1e00] sm:$0xff]
        %v5508 = vld [vmem:[%s5 + $0x1e08] sm:$0xff]
        %v5509 = vld [vmem:[%s5 + $0x1e10] sm:$0xff]
        %v5510 = vld [vmem:[%s5 + $0x1e18] sm:$0xff]
        %v5511 = vld [vmem:[%s5 + $0x1e20] sm:$0xff]
        %v5512 = vld [vmem:[%s5 + $0x1e28] sm:$0xff]
        %v5513 = vld [vmem:[%s5 + $0x1e30] sm:$0xff]
        %v5514 = vld [vmem:[%s5 + $0x1e38] sm:$0xff]
        %v5515 = vld [vmem:[%s5 + $0x1e40] sm:$0xff]
        %v5516 = vld [vmem:[%s5 + $0x1e48] sm:$0xff]
        %v5517 = vld [vmem:[%s5 + $0x1e50] sm:$0xff]
        %v5518 = vld [vmem:[%s5 + $0x1e58] sm:$0xff]
        %v5519 = vld [vmem:[%s5 + $0x1e60] sm:$0xff]
        %v5520 = vld [vmem:[%s5 + $0x1e68] sm:$0xff]
        %v5521 = vld [vmem:[%s5 + $0x1e70] sm:$0xff]
        %v5522 = vld [vmem:[%s5 + $0x1e78] sm:$0xff]
        %v5523 = vld [vmem:[%s5 + $0x1e80] sm:$0xff]
        %v5524 = vld [vmem:[%s5 + $0x1e88] sm:$0xff]
        %v5525 = vld [vmem:[%s5 + $0x1e90] sm:$0xff]
        %v5526 = vld [vmem:[%s5 + $0x1e98] sm:$0xff]
        %v5527 = vld [vmem:[%s5 + $0x1ea0] sm:$0xff]
        %v5528 = vld [vmem:[%s5 + $0x1ea8] sm:$0xff]
        %v5529 = vld [vmem:[%s5 + $0x1eb0] sm:$0xff]
        %v5530 = vld [vmem:[%s5 + $0x1eb8] sm:$0xff]
        %v5531 = vld [vmem:[%s5 + $0x1ec0] sm:$0xff]
        %v5532 = vld [vmem:[%s5 + $0x1ec8] sm:$0xff]
        %v5533 = vld [vmem:[%s5 + $0x1ed0] sm:$0xff]
        %v5534 = vld [vmem:[%s5 + $0x1ed8] sm:$0xff]
        %v5535 = vld [vmem:[%s5 + $0x1ee0] sm:$0xff]
        %v5536 = vld [vmem:[%s5 + $0x1ee8] sm:$0xff]
        %v5537 = vld [vmem:[%s5 + $0x1ef0] sm:$0xff]
        %v5538 = vld [vmem:[%s5 + $0x1ef8] sm:$0xff]
        %v5539 = vld [vmem:[%s6] sm:$0x3]
        %v6532 = vunpack.c.l.b16 %v4547
        %v6533 = vunpack.c.h.b16 %v4547
        %v6534 = vunpack.c.l.b16 %v4548
        %v6535 = vunpack.c.h.b16 %v4548
        %v6536 = vunpack.c.l.b16 %v4549
        %v6537 = vunpack.c.h.b16 %v4549
        %v6538 = vunpack.c.l.b16 %v4550
        %v6539 = vunpack.c.h.b16 %v4550
        %v6540 = vunpack.c.l.b16 %v4551
        %v6541 = vunpack.c.h.b16 %v4551
        %v6542 = vunpack.c.l.b16 %v4552
        %v6543 = vunpack.c.h.b16 %v4552
        %v6544 = vunpack.c.l.b16 %v4553
        %v6545 = vunpack.c.h.b16 %v4553
        %v6546 = vunpack.c.l.b16 %v4554
        %v6547 = vunpack.c.h.b16 %v4554
        %v6548 = vunpack.c.l.b16 %v4555
        %v6549 = vunpack.c.h.b16 %v4555
        %v6550 = vunpack.c.l.b16 %v4556
        %v6551 = vunpack.c.h.b16 %v4556
        %v6552 = vunpack.c.l.b16 %v4557
        %v6553 = vunpack.c.h.b16 %v4557
        %v6554 = vunpack.c.l.b16 %v4558
        %v6555 = vunpack.c.h.b16 %v4558
        %v6556 = vunpack.c.l.b16 %v4559
        %v6557 = vunpack.c.h.b16 %v4559
        %v6558 = vunpack.c.l.b16 %v4560
        %v6559 = vunpack.c.h.b16 %v4560
        %v6560 = vunpack.c.l.b16 %v4561
        %v6561 = vunpack.c.h.b16 %v4561
        %v6562 = vunpack.c.l.b16 %v4562
        %v6563 = vunpack.c.h.b16 %v4562
        %v6564 = vunpack.c.l.b16 %v4563
        %v6565 = vunpack.c.h.b16 %v4563
        %v6566 = vunpack.c.l.b16 %v4564
        %v6567 = vunpack.c.h.b16 %v4564
        %v6568 = vunpack.c.l.b16 %v4565
        %v6569 = vunpack.c.h.b16 %v4565
        %v6570 = vunpack.c.l.b16 %v4566
        %v6571 = vunpack.c.h.b16 %v4566
        %v6572 = vunpack.c.l.b16 %v4567
        %v6573 = vunpack.c.h.b16 %v4567
        %v6574 = vunpack.c.l.b16 %v4568
        %v6575 = vunpack.c.h.b16 %v4568
        %v6576 = vunpack.c.l.b16 %v4569
        %v6577 = vunpack.c.h.b16 %v4569
        %v6578 = vunpack.c.l.b16 %v4570
        %v6579 = vunpack.c.h.b16 %v4570
        %v6580 = vunpack.c.l.b16 %v4571
        %v6581 = vunpack.c.h.b16 %v4571
        %v6582 = vunpack.c.l.b16 %v4572
        %v6583 = vunpack.c.h.b16 %v4572
        %v6584 = vunpack.c.l.b16 %v4573
        %v6585 = vunpack.c.h.b16 %v4573
        %v6586 = vunpack.c.l.b16 %v4574
        %v6587 = vunpack.c.h.b16 %v4574
        %v6588 = vunpack.c.l.b16 %v4575
        %v6589 = vunpack.c.h.b16 %v4575
        %v6590 = vunpack.c.l.b16 %v4576
        %v6591 = vunpack.c.h.b16 %v4576
        %v6592 = vunpack.c.l.b16 %v4577
        %v6593 = vunpack.c.h.b16 %v4577
        %v6594 = vunpack.c.l.b16 %v4578
        %v6595 = vunpack.c.h.b16 %v4578
        %v6596 = vunpack.c.l.b16 %v4579
        %v6597 = vunpack.c.h.b16 %v4579
        %v6598 = vunpack.c.l.b16 %v4580
        %v6599 = vunpack.c.h.b16 %v4580
        %v6600 = vunpack.c.l.b16 %v4581
        %v6601 = vunpack.c.h.b16 %v4581
        %v6602 = vunpack.c.l.b16 %v4582
        %v6603 = vunpack.c.h.b16 %v4582
        %v6604 = vunpack.c.l.b16 %v4583
        %v6605 = vunpack.c.h.b16 %v4583
        %v6606 = vunpack.c.l.b16 %v4584
        %v6607 = vunpack.c.h.b16 %v4584
        %v6608 = vunpack.c.l.b16 %v4585
        %v6609 = vunpack.c.h.b16 %v4585
        %v6610 = vunpack.c.l.b16 %v4586
        %v6611 = vunpack.c.h.b16 %v4586
        %v6612 = vunpack.c.l.b16 %v4587
        %v6613 = vunpack.c.h.b16 %v4587
        %v6614 = vunpack.c.l.b16 %v4588
        %v6615 = vunpack.c.h.b16 %v4588
        %v6616 = vunpack.c.l.b16 %v4589
        %v6617 = vunpack.c.h.b16 %v4589
        %v6618 = vunpack.c.l.b16 %v4590
        %v6619 = vunpack.c.h.b16 %v4590
        %v6620 = vunpack.c.l.b16 %v4591
        %v6621 = vunpack.c.h.b16 %v4591
        %v6622 = vunpack.c.l.b16 %v4592
        %v6623 = vunpack.c.h.b16 %v4592
        %v6624 = vunpack.c.l.b16 %v4593
        %v6625 = vunpack.c.h.b16 %v4593
        %v6626 = vunpack.c.l.b16 %v4594
        %v6627 = vunpack.c.h.b16 %v4594
        %v6628 = vunpack.c.l.b16 %v4595
        %v6629 = vunpack.c.h.b16 %v4595
        %v6630 = vunpack.c.l.b16 %v4596
        %v6631 = vunpack.c.h.b16 %v4596
        %v6632 = vunpack.c.l.b16 %v4597
        %v6633 = vunpack.c.h.b16 %v4597
        %v6634 = vunpack.c.l.b16 %v4598
        %v6635 = vunpack.c.h.b16 %v4598
        %v6636 = vunpack.c.l.b16 %v4599
        %v6637 = vunpack.c.h.b16 %v4599
        %v6638 = vunpack.c.l.b16 %v4600
        %v6639 = vunpack.c.h.b16 %v4600
        %v6640 = vunpack.c.l.b16 %v4601
        %v6641 = vunpack.c.h.b16 %v4601
        %v6642 = vunpack.c.l.b16 %v4602
        %v6643 = vunpack.c.h.b16 %v4602
        %v6644 = vunpack.c.l.b16 %v4603
        %v6645 = vunpack.c.h.b16 %v4603
        %v6646 = vunpack.c.l.b16 %v4604
        %v6647 = vunpack.c.h.b16 %v4604
        %v6648 = vunpack.c.l.b16 %v4605
        %v6649 = vunpack.c.h.b16 %v4605
        %v6650 = vunpack.c.l.b16 %v4606
        %v6651 = vunpack.c.h.b16 %v4606
        %v6652 = vunpack.c.l.b16 %v4607
        %v6653 = vunpack.c.h.b16 %v4607
        %v6654 = vunpack.c.l.b16 %v4608
        %v6655 = vunpack.c.h.b16 %v4608
        %v6656 = vunpack.c.l.b16 %v4609
        %v6657 = vunpack.c.h.b16 %v4609
        %v6658 = vunpack.c.l.b16 %v4610
        %v6659 = vunpack.c.h.b16 %v4610
        %v6660 = vunpack.c.l.b16 %v4611
        %v6661 = vunpack.c.h.b16 %v4611
        %v6662 = vunpack.c.l.b16 %v4612
        %v6663 = vunpack.c.h.b16 %v4612
        %v6664 = vunpack.c.l.b16 %v4613
        %v6665 = vunpack.c.h.b16 %v4613
        %v6666 = vunpack.c.l.b16 %v4614
        %v6667 = vunpack.c.h.b16 %v4614
        %v6668 = vunpack.c.l.b16 %v4615
        %v6669 = vunpack.c.h.b16 %v4615
        %v6670 = vunpack.c.l.b16 %v4616
        %v6671 = vunpack.c.h.b16 %v4616
        %v6672 = vunpack.c.l.b16 %v4617
        %v6673 = vunpack.c.h.b16 %v4617
        %v6674 = vunpack.c.l.b16 %v4618
        %v6675 = vunpack.c.h.b16 %v4618
        %v6676 = vunpack.c.l.b16 %v4619
        %v6677 = vunpack.c.h.b16 %v4619
        %v6678 = vunpack.c.l.b16 %v4620
        %v6679 = vunpack.c.h.b16 %v4620
        %v6680 = vunpack.c.l.b16 %v4621
        %v6681 = vunpack.c.h.b16 %v4621
        %v6682 = vunpack.c.l.b16 %v4622
        %v6683 = vunpack.c.h.b16 %v4622
        %v6684 = vunpack.c.l.b16 %v4623
        %v6685 = vunpack.c.h.b16 %v4623
        %v6686 = vunpack.c.l.b16 %v4624
        %v6687 = vunpack.c.h.b16 %v4624
        %v6688 = vunpack.c.l.b16 %v4625
        %v6689 = vunpack.c.h.b16 %v4625
        %v6690 = vunpack.c.l.b16 %v4626
        %v6691 = vunpack.c.h.b16 %v4626
        %v6692 = vunpack.c.l.b16 %v4627
        %v6693 = vunpack.c.h.b16 %v4627
        %v6694 = vunpack.c.l.b16 %v4628
        %v6695 = vunpack.c.h.b16 %v4628
        %v6696 = vunpack.c.l.b16 %v4629
        %v6697 = vunpack.c.h.b16 %v4629
        %v6698 = vunpack.c.l.b16 %v4630
        %v6699 = vunpack.c.h.b16 %v4630
        %v6700 = vunpack.c.l.b16 %v4631
        %v6701 = vunpack.c.h.b16 %v4631
        %v6702 = vunpack.c.l.b16 %v4632
        %v6703 = vunpack.c.h.b16 %v4632
        %v6704 = vunpack.c.l.b16 %v4633
        %v6705 = vunpack.c.h.b16 %v4633
        %v6706 = vunpack.c.l.b16 %v4634
        %v6707 = vunpack.c.h.b16 %v4634
        %v6708 = vunpack.c.l.b16 %v4635
        %v6709 = vunpack.c.h.b16 %v4635
        %v6710 = vunpack.c.l.b16 %v4636
        %v6711 = vunpack.c.h.b16 %v4636
        %v6712 = vunpack.c.l.b16 %v4637
        %v6713 = vunpack.c.h.b16 %v4637
        %v6714 = vunpack.c.l.b16 %v4638
        %v6715 = vunpack.c.h.b16 %v4638
        %v6716 = vunpack.c.l.b16 %v4639
        %v6717 = vunpack.c.h.b16 %v4639
        %v6718 = vunpack.c.l.b16 %v4640
        %v6719 = vunpack.c.h.b16 %v4640
        %v6720 = vunpack.c.l.b16 %v4641
        %v6721 = vunpack.c.h.b16 %v4641
        %v6722 = vunpack.c.l.b16 %v4642
        %v6723 = vunpack.c.h.b16 %v4642
        %v6724 = vunpack.c.l.b16 %v4643
        %v6725 = vunpack.c.h.b16 %v4643
        %v6726 = vunpack.c.l.b16 %v4644
        %v6727 = vunpack.c.h.b16 %v4644
        %v6728 = vunpack.c.l.b16 %v4645
        %v6729 = vunpack.c.h.b16 %v4645
        %v6730 = vunpack.c.l.b16 %v4646
        %v6731 = vunpack.c.h.b16 %v4646
        %v6732 = vunpack.c.l.b16 %v4647
        %v6733 = vunpack.c.h.b16 %v4647
        %v6734 = vunpack.c.l.b16 %v4648
        %v6735 = vunpack.c.h.b16 %v4648
        %v6736 = vunpack.c.l.b16 %v4649
        %v6737 = vunpack.c.h.b16 %v4649
        %v6738 = vunpack.c.l.b16 %v4650
        %v6739 = vunpack.c.h.b16 %v4650
        %v6740 = vunpack.c.l.b16 %v4651
        %v6741 = vunpack.c.h.b16 %v4651
        %v6742 = vunpack.c.l.b16 %v4652
        %v6743 = vunpack.c.h.b16 %v4652
        %v6744 = vunpack.c.l.b16 %v4653
        %v6745 = vunpack.c.h.b16 %v4653
        %v6746 = vunpack.c.l.b16 %v4654
        %v6747 = vunpack.c.h.b16 %v4654
        %v6748 = vunpack.c.l.b16 %v4655
        %v6749 = vunpack.c.h.b16 %v4655
        %v6750 = vunpack.c.l.b16 %v4656
        %v6751 = vunpack.c.h.b16 %v4656
        %v6752 = vunpack.c.l.b16 %v4657
        %v6753 = vunpack.c.h.b16 %v4657
        %v6754 = vunpack.c.l.b16 %v4658
        %v6755 = vunpack.c.h.b16 %v4658
        %v6756 = vunpack.c.l.b16 %v4659
        %v6757 = vunpack.c.h.b16 %v4659
        %v6758 = vunpack.c.l.b16 %v4660
        %v6759 = vunpack.c.h.b16 %v4660
        %v6760 = vunpack.c.l.b16 %v4661
        %v6761 = vunpack.c.h.b16 %v4661
        %v6762 = vunpack.c.l.b16 %v4662
        %v6763 = vunpack.c.h.b16 %v4662
        %v6764 = vunpack.c.l.b16 %v4663
        %v6765 = vunpack.c.h.b16 %v4663
        %v6766 = vunpack.c.l.b16 %v4664
        %v6767 = vunpack.c.h.b16 %v4664
        %v6768 = vunpack.c.l.b16 %v4665
        %v6769 = vunpack.c.h.b16 %v4665
        %v6770 = vunpack.c.l.b16 %v4666
        %v6771 = vunpack.c.h.b16 %v4666
        %v6772 = vunpack.c.l.b16 %v4667
        %v6773 = vunpack.c.h.b16 %v4667
        %v6774 = vunpack.c.l.b16 %v4668
        %v6775 = vunpack.c.h.b16 %v4668
        %v6776 = vunpack.c.l.b16 %v4669
        %v6777 = vunpack.c.h.b16 %v4669
        %v6778 = vunpack.c.l.b16 %v4670
        %v6779 = vunpack.c.h.b16 %v4670
        %v6780 = vunpack.c.l.b16 %v4671
        %v6781 = vunpack.c.h.b16 %v4671
        %v6782 = vunpack.c.l.b16 %v4672
        %v6783 = vunpack.c.h.b16 %v4672
        %v6784 = vunpack.c.l.b16 %v4673
        %v6785 = vunpack.c.h.b16 %v4673
        %v6786 = vunpack.c.l.b16 %v4674
        %v6787 = vunpack.c.h.b16 %v4674
        %v6788 = vunpack.c.l.b16 %v4675
        %v6789 = vunpack.c.h.b16 %v4675
        %v6790 = vunpack.c.l.b16 %v4676
        %v6791 = vunpack.c.h.b16 %v4676
        %v6792 = vunpack.c.l.b16 %v4677
        %v6793 = vunpack.c.h.b16 %v4677
        %v6794 = vunpack.c.l.b16 %v4678
        %v6795 = vunpack.c.h.b16 %v4678
        %v6796 = vunpack.c.l.b16 %v4679
        %v6797 = vunpack.c.h.b16 %v4679
        %v6798 = vunpack.c.l.b16 %v4680
        %v6799 = vunpack.c.h.b16 %v4680
        %v6800 = vunpack.c.l.b16 %v4681
        %v6801 = vunpack.c.h.b16 %v4681
        %v6802 = vunpack.c.l.b16 %v4682
        %v6803 = vunpack.c.h.b16 %v4682
        %v6804 = vunpack.c.l.b16 %v4683
        %v6805 = vunpack.c.h.b16 %v4683
        %v6806 = vunpack.c.l.b16 %v4684
        %v6807 = vunpack.c.h.b16 %v4684
        %v6808 = vunpack.c.l.b16 %v4685
        %v6809 = vunpack.c.h.b16 %v4685
        %v6810 = vunpack.c.l.b16 %v4686
        %v6811 = vunpack.c.h.b16 %v4686
        %v6812 = vunpack.c.l.b16 %v4687
        %v6813 = vunpack.c.h.b16 %v4687
        %v6814 = vunpack.c.l.b16 %v4688
        %v6815 = vunpack.c.h.b16 %v4688
        %v6816 = vunpack.c.l.b16 %v4689
        %v6817 = vunpack.c.h.b16 %v4689
        %v6818 = vunpack.c.l.b16 %v4690
        %v6819 = vunpack.c.h.b16 %v4690
        %v6820 = vunpack.c.l.b16 %v4691
        %v6821 = vunpack.c.h.b16 %v4691
        %v6822 = vunpack.c.l.b16 %v4692
        %v6823 = vunpack.c.h.b16 %v4692
        %v6824 = vunpack.c.l.b16 %v4693
        %v6825 = vunpack.c.h.b16 %v4693
        %v6826 = vunpack.c.l.b16 %v4694
        %v6827 = vunpack.c.h.b16 %v4694
        %v6828 = vunpack.c.l.b16 %v4695
        %v6829 = vunpack.c.h.b16 %v4695
        %v6830 = vunpack.c.l.b16 %v4696
        %v6831 = vunpack.c.h.b16 %v4696
        %v6832 = vunpack.c.l.b16 %v4697
        %v6833 = vunpack.c.h.b16 %v4697
        %v6834 = vunpack.c.l.b16 %v4698
        %v6835 = vunpack.c.h.b16 %v4698
        %v6836 = vunpack.c.l.b16 %v4699
        %v6837 = vunpack.c.h.b16 %v4699
        %v6838 = vunpack.c.l.b16 %v4700
        %v6839 = vunpack.c.h.b16 %v4700
        %v6840 = vunpack.c.l.b16 %v4701
        %v6841 = vunpack.c.h.b16 %v4701
        %v6842 = vunpack.c.l.b16 %v4702
        %v6843 = vunpack.c.h.b16 %v4702
        %v6844 = vunpack.c.l.b16 %v4703
        %v6845 = vunpack.c.h.b16 %v4703
        %v6846 = vunpack.c.l.b16 %v4704
        %v6847 = vunpack.c.h.b16 %v4704
        %v6848 = vunpack.c.l.b16 %v4705
        %v6849 = vunpack.c.h.b16 %v4705
        %v6850 = vunpack.c.l.b16 %v4706
        %v6851 = vunpack.c.h.b16 %v4706
        %v6852 = vunpack.c.l.b16 %v4707
        %v6853 = vunpack.c.h.b16 %v4707
        %v6854 = vunpack.c.l.b16 %v4708
        %v6855 = vunpack.c.h.b16 %v4708
        %v6856 = vunpack.c.l.b16 %v4709
        %v6857 = vunpack.c.h.b16 %v4709
        %v6858 = vunpack.c.l.b16 %v4710
        %v6859 = vunpack.c.h.b16 %v4710
        %v6860 = vunpack.c.l.b16 %v4711
        %v6861 = vunpack.c.h.b16 %v4711
        %v6862 = vunpack.c.l.b16 %v4712
        %v6863 = vunpack.c.h.b16 %v4712
        %v6864 = vunpack.c.l.b16 %v4713
        %v6865 = vunpack.c.h.b16 %v4713
        %v6866 = vunpack.c.l.b16 %v4714
        %v6867 = vunpack.c.h.b16 %v4714
        %v6868 = vunpack.c.l.b16 %v4715
        %v6869 = vunpack.c.h.b16 %v4715
        %v6870 = vunpack.c.l.b16 %v4716
        %v6871 = vunpack.c.h.b16 %v4716
        %v6872 = vunpack.c.l.b16 %v4717
        %v6873 = vunpack.c.h.b16 %v4717
        %v6874 = vunpack.c.l.b16 %v4718
        %v6875 = vunpack.c.h.b16 %v4718
        %v6876 = vunpack.c.l.b16 %v4719
        %v6877 = vunpack.c.h.b16 %v4719
        %v6878 = vunpack.c.l.b16 %v4720
        %v6879 = vunpack.c.h.b16 %v4720
        %v6880 = vunpack.c.l.b16 %v4721
        %v6881 = vunpack.c.h.b16 %v4721
        %v6882 = vunpack.c.l.b16 %v4722
        %v6883 = vunpack.c.h.b16 %v4722
        %v6884 = vunpack.c.l.b16 %v4723
        %v6885 = vunpack.c.h.b16 %v4723
        %v6886 = vunpack.c.l.b16 %v4724
        %v6887 = vunpack.c.h.b16 %v4724
        %v6888 = vunpack.c.l.b16 %v4725
        %v6889 = vunpack.c.h.b16 %v4725
        %v6890 = vunpack.c.l.b16 %v4726
        %v6891 = vunpack.c.h.b16 %v4726
        %v6892 = vunpack.c.l.b16 %v4727
        %v6893 = vunpack.c.h.b16 %v4727
        %v6894 = vunpack.c.l.b16 %v4728
        %v6895 = vunpack.c.h.b16 %v4728
        %v6896 = vunpack.c.l.b16 %v4729
        %v6897 = vunpack.c.h.b16 %v4729
        %v6898 = vunpack.c.l.b16 %v4730
        %v6899 = vunpack.c.h.b16 %v4730
        %v6900 = vunpack.c.l.b16 %v4731
        %v6901 = vunpack.c.h.b16 %v4731
        %v6902 = vunpack.c.l.b16 %v4732
        %v6903 = vunpack.c.h.b16 %v4732
        %v6904 = vunpack.c.l.b16 %v4733
        %v6905 = vunpack.c.h.b16 %v4733
        %v6906 = vunpack.c.l.b16 %v4734
        %v6907 = vunpack.c.h.b16 %v4734
        %v6908 = vunpack.c.l.b16 %v4735
        %v6909 = vunpack.c.h.b16 %v4735
        %v6910 = vunpack.c.l.b16 %v4736
        %v6911 = vunpack.c.h.b16 %v4736
        %v6912 = vunpack.c.l.b16 %v4737
        %v6913 = vunpack.c.h.b16 %v4737
        %v6914 = vunpack.c.l.b16 %v4738
        %v6915 = vunpack.c.h.b16 %v4738
        %v6916 = vunpack.c.l.b16 %v4739
        %v6917 = vunpack.c.h.b16 %v4739
        %v6918 = vunpack.c.l.b16 %v4740
        %v6919 = vunpack.c.h.b16 %v4740
        %v6920 = vunpack.c.l.b16 %v4741
        %v6921 = vunpack.c.h.b16 %v4741
        %v6922 = vunpack.c.l.b16 %v4742
        %v6923 = vunpack.c.h.b16 %v4742
        %v6924 = vunpack.c.l.b16 %v4743
        %v6925 = vunpack.c.h.b16 %v4743
        %v6926 = vunpack.c.l.b16 %v4744
        %v6927 = vunpack.c.h.b16 %v4744
        %v6928 = vunpack.c.l.b16 %v4745
        %v6929 = vunpack.c.h.b16 %v4745
        %v6930 = vunpack.c.l.b16 %v4746
        %v6931 = vunpack.c.h.b16 %v4746
        %v6932 = vunpack.c.l.b16 %v4747
        %v6933 = vunpack.c.h.b16 %v4747
        %v6934 = vunpack.c.l.b16 %v4748
        %v6935 = vunpack.c.h.b16 %v4748
        %v6936 = vunpack.c.l.b16 %v4749
        %v6937 = vunpack.c.h.b16 %v4749
        %v6938 = vunpack.c.l.b16 %v4750
        %v6939 = vunpack.c.h.b16 %v4750
        %v6940 = vunpack.c.l.b16 %v4751
        %v6941 = vunpack.c.h.b16 %v4751
        %v6942 = vunpack.c.l.b16 %v4752
        %v6943 = vunpack.c.h.b16 %v4752
        %v6944 = vunpack.c.l.b16 %v4753
        %v6945 = vunpack.c.h.b16 %v4753
        %v6946 = vunpack.c.l.b16 %v4754
        %v6947 = vunpack.c.h.b16 %v4754
        %v6948 = vunpack.c.l.b16 %v4755
        %v6949 = vunpack.c.h.b16 %v4755
        %v6950 = vunpack.c.l.b16 %v4756
        %v6951 = vunpack.c.h.b16 %v4756
        %v6952 = vunpack.c.l.b16 %v4757
        %v6953 = vunpack.c.h.b16 %v4757
        %v6954 = vunpack.c.l.b16 %v4758
        %v6955 = vunpack.c.h.b16 %v4758
        %v6956 = vunpack.c.l.b16 %v4759
        %v6957 = vunpack.c.h.b16 %v4759
        %v6958 = vunpack.c.l.b16 %v4760
        %v6959 = vunpack.c.h.b16 %v4760
        %v6960 = vunpack.c.l.b16 %v4761
        %v6961 = vunpack.c.h.b16 %v4761
        %v6962 = vunpack.c.l.b16 %v4762
        %v6963 = vunpack.c.h.b16 %v4762
        %v6964 = vunpack.c.l.b16 %v4763
        %v6965 = vunpack.c.h.b16 %v4763
        %v6966 = vunpack.c.l.b16 %v4764
        %v6967 = vunpack.c.h.b16 %v4764
        %v6968 = vunpack.c.l.b16 %v4765
        %v6969 = vunpack.c.h.b16 %v4765
        %v6970 = vunpack.c.l.b16 %v4766
        %v6971 = vunpack.c.h.b16 %v4766
        %v6972 = vunpack.c.l.b16 %v4767
        %v6973 = vunpack.c.h.b16 %v4767
        %v6974 = vunpack.c.l.b16 %v4768
        %v6975 = vunpack.c.h.b16 %v4768
        %v6976 = vunpack.c.l.b16 %v4769
        %v6977 = vunpack.c.h.b16 %v4769
        %v6978 = vunpack.c.l.b16 %v4770
        %v6979 = vunpack.c.h.b16 %v4770
        %v6980 = vunpack.c.l.b16 %v4771
        %v6981 = vunpack.c.h.b16 %v4771
        %v6982 = vunpack.c.l.b16 %v4772
        %v6983 = vunpack.c.h.b16 %v4772
        %v6984 = vunpack.c.l.b16 %v4773
        %v6985 = vunpack.c.h.b16 %v4773
        %v6986 = vunpack.c.l.b16 %v4774
        %v6987 = vunpack.c.h.b16 %v4774
        %v6988 = vunpack.c.l.b16 %v4775
        %v6989 = vunpack.c.h.b16 %v4775
        %v6990 = vunpack.c.l.b16 %v4776
        %v6991 = vunpack.c.h.b16 %v4776
        %v6992 = vunpack.c.l.b16 %v4777
        %v6993 = vunpack.c.h.b16 %v4777
        %v6994 = vunpack.c.l.b16 %v4778
        %v6995 = vunpack.c.h.b16 %v4778
        %v6996 = vunpack.c.l.b16 %v4779
        %v6997 = vunpack.c.h.b16 %v4779
        %v6998 = vunpack.c.l.b16 %v4780
        %v6999 = vunpack.c.h.b16 %v4780
        %v7000 = vunpack.c.l.b16 %v4781
        %v7001 = vunpack.c.h.b16 %v4781
        %v7002 = vunpack.c.l.b16 %v4782
        %v7003 = vunpack.c.h.b16 %v4782
        %v7004 = vunpack.c.l.b16 %v4783
        %v7005 = vunpack.c.h.b16 %v4783
        %v7006 = vunpack.c.l.b16 %v4784
        %v7007 = vunpack.c.h.b16 %v4784
        %v7008 = vunpack.c.l.b16 %v4785
        %v7009 = vunpack.c.h.b16 %v4785
        %v7010 = vunpack.c.l.b16 %v4786
        %v7011 = vunpack.c.h.b16 %v4786
        %v7012 = vunpack.c.l.b16 %v4787
        %v7013 = vunpack.c.h.b16 %v4787
        %v7014 = vunpack.c.l.b16 %v4788
        %v7015 = vunpack.c.h.b16 %v4788
        %v7016 = vunpack.c.l.b16 %v4789
        %v7017 = vunpack.c.h.b16 %v4789
        %v7018 = vunpack.c.l.b16 %v4790
        %v7019 = vunpack.c.h.b16 %v4790
        %v7020 = vunpack.c.l.b16 %v4791
        %v7021 = vunpack.c.h.b16 %v4791
        %v7022 = vunpack.c.l.b16 %v4792
        %v7023 = vunpack.c.h.b16 %v4792
        %v7024 = vunpack.c.l.b16 %v4793
        %v7025 = vunpack.c.h.b16 %v4793
        %v7026 = vunpack.c.l.b16 %v4794
        %v7027 = vunpack.c.h.b16 %v4794
        %v7028 = vunpack.c.l.b16 %v4795
        %v7029 = vunpack.c.h.b16 %v4795
        %v7030 = vunpack.c.l.b16 %v4796
        %v7031 = vunpack.c.h.b16 %v4796
        %v7032 = vunpack.c.l.b16 %v4797
        %v7033 = vunpack.c.h.b16 %v4797
        %v7034 = vunpack.c.l.b16 %v4798
        %v7035 = vunpack.c.h.b16 %v4798
        %v7036 = vunpack.c.l.b16 %v4799
        %v7037 = vunpack.c.h.b16 %v4799
        %v7038 = vunpack.c.l.b16 %v4800
        %v7039 = vunpack.c.h.b16 %v4800
        %v7040 = vunpack.c.l.b16 %v4801
        %v7041 = vunpack.c.h.b16 %v4801
        %v7042 = vunpack.c.l.b16 %v4802
        %v7043 = vunpack.c.h.b16 %v4802
        %v7044 = vunpack.c.l.b16 %v4803
        %v7045 = vunpack.c.h.b16 %v4803
        %v7046 = vunpack.c.l.b16 %v4804
        %v7047 = vunpack.c.h.b16 %v4804
        %v7048 = vunpack.c.l.b16 %v4805
        %v7049 = vunpack.c.h.b16 %v4805
        %v7050 = vunpack.c.l.b16 %v4806
        %v7051 = vunpack.c.h.b16 %v4806
        %v7052 = vunpack.c.l.b16 %v4807
        %v7053 = vunpack.c.h.b16 %v4807
        %v7054 = vunpack.c.l.b16 %v4808
        %v7055 = vunpack.c.h.b16 %v4808
        %v7056 = vunpack.c.l.b16 %v4809
        %v7057 = vunpack.c.h.b16 %v4809
        %v7058 = vunpack.c.l.b16 %v4810
        %v7059 = vunpack.c.h.b16 %v4810
        %v7060 = vunpack.c.l.b16 %v4811
        %v7061 = vunpack.c.h.b16 %v4811
        %v7062 = vunpack.c.l.b16 %v4812
        %v7063 = vunpack.c.h.b16 %v4812
        %v7064 = vunpack.c.l.b16 %v4813
        %v7065 = vunpack.c.h.b16 %v4813
        %v7066 = vunpack.c.l.b16 %v4814
        %v7067 = vunpack.c.h.b16 %v4814
        %v7068 = vunpack.c.l.b16 %v4815
        %v7069 = vunpack.c.h.b16 %v4815
        %v7070 = vunpack.c.l.b16 %v4816
        %v7071 = vunpack.c.h.b16 %v4816
        %v7072 = vunpack.c.l.b16 %v4817
        %v7073 = vunpack.c.h.b16 %v4817
        %v7074 = vunpack.c.l.b16 %v4818
        %v7075 = vunpack.c.h.b16 %v4818
        %v7076 = vunpack.c.l.b16 %v4819
        %v7077 = vunpack.c.h.b16 %v4819
        %v7078 = vunpack.c.l.b16 %v4820
        %v7079 = vunpack.c.h.b16 %v4820
        %v7080 = vunpack.c.l.b16 %v4821
        %v7081 = vunpack.c.h.b16 %v4821
        %v7082 = vunpack.c.l.b16 %v4822
        %v7083 = vunpack.c.h.b16 %v4822
        %v7084 = vunpack.c.l.b16 %v4823
        %v7085 = vunpack.c.h.b16 %v4823
        %v7086 = vunpack.c.l.b16 %v4824
        %v7087 = vunpack.c.h.b16 %v4824
        %v7088 = vunpack.c.l.b16 %v4825
        %v7089 = vunpack.c.h.b16 %v4825
        %v7090 = vunpack.c.l.b16 %v4826
        %v7091 = vunpack.c.h.b16 %v4826
        %v7092 = vunpack.c.l.b16 %v4827
        %v7093 = vunpack.c.h.b16 %v4827
        %v7094 = vunpack.c.l.b16 %v4828
        %v7095 = vunpack.c.h.b16 %v4828
        %v7096 = vunpack.c.l.b16 %v4829
        %v7097 = vunpack.c.h.b16 %v4829
        %v7098 = vunpack.c.l.b16 %v4830
        %v7099 = vunpack.c.h.b16 %v4830
        %v7100 = vunpack.c.l.b16 %v4831
        %v7101 = vunpack.c.h.b16 %v4831
        %v7102 = vunpack.c.l.b16 %v4832
        %v7103 = vunpack.c.h.b16 %v4832
        %v7104 = vunpack.c.l.b16 %v4833
        %v7105 = vunpack.c.h.b16 %v4833
        %v7106 = vunpack.c.l.b16 %v4834
        %v7107 = vunpack.c.h.b16 %v4834
        %v7108 = vunpack.c.l.b16 %v4835
        %v7109 = vunpack.c.h.b16 %v4835
        %v7110 = vunpack.c.l.b16 %v4836
        %v7111 = vunpack.c.h.b16 %v4836
        %v7112 = vunpack.c.l.b16 %v4837
        %v7113 = vunpack.c.h.b16 %v4837
        %v7114 = vunpack.c.l.b16 %v4838
        %v7115 = vunpack.c.h.b16 %v4838
        %v7116 = vunpack.c.l.b16 %v4839
        %v7117 = vunpack.c.h.b16 %v4839
        %v7118 = vunpack.c.l.b16 %v4840
        %v7119 = vunpack.c.h.b16 %v4840
        %v7120 = vunpack.c.l.b16 %v4841
        %v7121 = vunpack.c.h.b16 %v4841
        %v7122 = vunpack.c.l.b16 %v4842
        %v7123 = vunpack.c.h.b16 %v4842
        %v7124 = vunpack.c.l.b16 %v4843
        %v7125 = vunpack.c.h.b16 %v4843
        %v7126 = vunpack.c.l.b16 %v4844
        %v7127 = vunpack.c.h.b16 %v4844
        %v7128 = vunpack.c.l.b16 %v4845
        %v7129 = vunpack.c.h.b16 %v4845
        %v7130 = vunpack.c.l.b16 %v4846
        %v7131 = vunpack.c.h.b16 %v4846
        %v7132 = vunpack.c.l.b16 %v4847
        %v7133 = vunpack.c.h.b16 %v4847
        %v7134 = vunpack.c.l.b16 %v4848
        %v7135 = vunpack.c.h.b16 %v4848
        %v7136 = vunpack.c.l.b16 %v4849
        %v7137 = vunpack.c.h.b16 %v4849
        %v7138 = vunpack.c.l.b16 %v4850
        %v7139 = vunpack.c.h.b16 %v4850
        %v7140 = vunpack.c.l.b16 %v4851
        %v7141 = vunpack.c.h.b16 %v4851
        %v7142 = vunpack.c.l.b16 %v4852
        %v7143 = vunpack.c.h.b16 %v4852
        %v7144 = vunpack.c.l.b16 %v4853
        %v7145 = vunpack.c.h.b16 %v4853
        %v7146 = vunpack.c.l.b16 %v4854
        %v7147 = vunpack.c.h.b16 %v4854
        %v7148 = vunpack.c.l.b16 %v4855
        %v7149 = vunpack.c.h.b16 %v4855
        %v7150 = vunpack.c.l.b16 %v4856
        %v7151 = vunpack.c.h.b16 %v4856
        %v7152 = vunpack.c.l.b16 %v4857
        %v7153 = vunpack.c.h.b16 %v4857
        %v7154 = vunpack.c.l.b16 %v4858
        %v7155 = vunpack.c.h.b16 %v4858
        %v7156 = vunpack.c.l.b16 %v4859
        %v7157 = vunpack.c.h.b16 %v4859
        %v7158 = vunpack.c.l.b16 %v4860
        %v7159 = vunpack.c.h.b16 %v4860
        %v7160 = vunpack.c.l.b16 %v4861
        %v7161 = vunpack.c.h.b16 %v4861
        %v7162 = vunpack.c.l.b16 %v4862
        %v7163 = vunpack.c.h.b16 %v4862
        %v7164 = vunpack.c.l.b16 %v4863
        %v7165 = vunpack.c.h.b16 %v4863
        %v7166 = vunpack.c.l.b16 %v4864
        %v7167 = vunpack.c.h.b16 %v4864
        %v7168 = vunpack.c.l.b16 %v4865
        %v7169 = vunpack.c.h.b16 %v4865
        %v7170 = vunpack.c.l.b16 %v4866
        %v7171 = vunpack.c.h.b16 %v4866
        %v7172 = vunpack.c.l.b16 %v4867
        %v7173 = vunpack.c.h.b16 %v4867
        %v7174 = vunpack.c.l.b16 %v4868
        %v7175 = vunpack.c.h.b16 %v4868
        %v7176 = vunpack.c.l.b16 %v4869
        %v7177 = vunpack.c.h.b16 %v4869
        %v7178 = vunpack.c.l.b16 %v4870
        %v7179 = vunpack.c.h.b16 %v4870
        %v7180 = vunpack.c.l.b16 %v4871
        %v7181 = vunpack.c.h.b16 %v4871
        %v7182 = vunpack.c.l.b16 %v4872
        %v7183 = vunpack.c.h.b16 %v4872
        %v7184 = vunpack.c.l.b16 %v4873
        %v7185 = vunpack.c.h.b16 %v4873
        %v7186 = vunpack.c.l.b16 %v4874
        %v7187 = vunpack.c.h.b16 %v4874
        %v7188 = vunpack.c.l.b16 %v4875
        %v7189 = vunpack.c.h.b16 %v4875
        %v7190 = vunpack.c.l.b16 %v4876
        %v7191 = vunpack.c.h.b16 %v4876
        %v7192 = vunpack.c.l.b16 %v4877
        %v7193 = vunpack.c.h.b16 %v4877
        %v7194 = vunpack.c.l.b16 %v4878
        %v7195 = vunpack.c.h.b16 %v4878
        %v7196 = vunpack.c.l.b16 %v4879
        %v7197 = vunpack.c.h.b16 %v4879
        %v7198 = vunpack.c.l.b16 %v4880
        %v7199 = vunpack.c.h.b16 %v4880
        %v7200 = vunpack.c.l.b16 %v4881
        %v7201 = vunpack.c.h.b16 %v4881
        %v7202 = vunpack.c.l.b16 %v4882
        %v7203 = vunpack.c.h.b16 %v4882
        %v7204 = vunpack.c.l.b16 %v4883
        %v7205 = vunpack.c.h.b16 %v4883
        %v7206 = vunpack.c.l.b16 %v4884
        %v7207 = vunpack.c.h.b16 %v4884
        %v7208 = vunpack.c.l.b16 %v4885
        %v7209 = vunpack.c.h.b16 %v4885
        %v7210 = vunpack.c.l.b16 %v4886
        %v7211 = vunpack.c.h.b16 %v4886
        %v7212 = vunpack.c.l.b16 %v4887
        %v7213 = vunpack.c.h.b16 %v4887
        %v7214 = vunpack.c.l.b16 %v4888
        %v7215 = vunpack.c.h.b16 %v4888
        %v7216 = vunpack.c.l.b16 %v4889
        %v7217 = vunpack.c.h.b16 %v4889
        %v7218 = vunpack.c.l.b16 %v4890
        %v7219 = vunpack.c.h.b16 %v4890
        %v7220 = vunpack.c.l.b16 %v4891
        %v7221 = vunpack.c.h.b16 %v4891
        %v7222 = vunpack.c.l.b16 %v4892
        %v7223 = vunpack.c.h.b16 %v4892
        %v7224 = vunpack.c.l.b16 %v4893
        %v7225 = vunpack.c.h.b16 %v4893
        %v7226 = vunpack.c.l.b16 %v4894
        %v7227 = vunpack.c.h.b16 %v4894
        %v7228 = vunpack.c.l.b16 %v4895
        %v7229 = vunpack.c.h.b16 %v4895
        %v7230 = vunpack.c.l.b16 %v4896
        %v7231 = vunpack.c.h.b16 %v4896
        %v7232 = vunpack.c.l.b16 %v4897
        %v7233 = vunpack.c.h.b16 %v4897
        %v7234 = vunpack.c.l.b16 %v4898
        %v7235 = vunpack.c.h.b16 %v4898
        %v7236 = vunpack.c.l.b16 %v4899
        %v7237 = vunpack.c.h.b16 %v4899
        %v7238 = vunpack.c.l.b16 %v4900
        %v7239 = vunpack.c.h.b16 %v4900
        %v7240 = vunpack.c.l.b16 %v4901
        %v7241 = vunpack.c.h.b16 %v4901
        %v7242 = vunpack.c.l.b16 %v4902
        %v7243 = vunpack.c.h.b16 %v4902
        %v7244 = vunpack.c.l.b16 %v4903
        %v7245 = vunpack.c.h.b16 %v4903
        %v7246 = vunpack.c.l.b16 %v4904
        %v7247 = vunpack.c.h.b16 %v4904
        %v7248 = vunpack.c.l.b16 %v4905
        %v7249 = vunpack.c.h.b16 %v4905
        %v7250 = vunpack.c.l.b16 %v4906
        %v7251 = vunpack.c.h.b16 %v4906
        %v7252 = vunpack.c.l.b16 %v4907
        %v7253 = vunpack.c.h.b16 %v4907
        %v7254 = vunpack.c.l.b16 %v4908
        %v7255 = vunpack.c.h.b16 %v4908
        %v7256 = vunpack.c.l.b16 %v4909
        %v7257 = vunpack.c.h.b16 %v4909
        %v7258 = vunpack.c.l.b16 %v4910
        %v7259 = vunpack.c.h.b16 %v4910
        %v7260 = vunpack.c.l.b16 %v4911
        %v7261 = vunpack.c.h.b16 %v4911
        %v7262 = vunpack.c.l.b16 %v4912
        %v7263 = vunpack.c.h.b16 %v4912
        %v7264 = vunpack.c.l.b16 %v4913
        %v7265 = vunpack.c.h.b16 %v4913
        %v7266 = vunpack.c.l.b16 %v4914
        %v7267 = vunpack.c.h.b16 %v4914
        %v7268 = vunpack.c.l.b16 %v4915
        %v7269 = vunpack.c.h.b16 %v4915
        %v7270 = vunpack.c.l.b16 %v4916
        %v7271 = vunpack.c.h.b16 %v4916
        %v7272 = vunpack.c.l.b16 %v4917
        %v7273 = vunpack.c.h.b16 %v4917
        %v7274 = vunpack.c.l.b16 %v4918
        %v7275 = vunpack.c.h.b16 %v4918
        %v7276 = vunpack.c.l.b16 %v4919
        %v7277 = vunpack.c.h.b16 %v4919
        %v7278 = vunpack.c.l.b16 %v4920
        %v7279 = vunpack.c.h.b16 %v4920
        %v7280 = vunpack.c.l.b16 %v4921
        %v7281 = vunpack.c.h.b16 %v4921
        %v7282 = vunpack.c.l.b16 %v4922
        %v7283 = vunpack.c.h.b16 %v4922
        %v7284 = vunpack.c.l.b16 %v4923
        %v7285 = vunpack.c.h.b16 %v4923
        %v7286 = vunpack.c.l.b16 %v4924
        %v7287 = vunpack.c.h.b16 %v4924
        %v7288 = vunpack.c.l.b16 %v4925
        %v7289 = vunpack.c.h.b16 %v4925
        %v7290 = vunpack.c.l.b16 %v4926
        %v7291 = vunpack.c.h.b16 %v4926
        %v7292 = vunpack.c.l.b16 %v4927
        %v7293 = vunpack.c.h.b16 %v4927
        %v7294 = vunpack.c.l.b16 %v4928
        %v7295 = vunpack.c.h.b16 %v4928
        %v7296 = vunpack.c.l.b16 %v4929
        %v7297 = vunpack.c.h.b16 %v4929
        %v7298 = vunpack.c.l.b16 %v4930
        %v7299 = vunpack.c.h.b16 %v4930
        %v7300 = vunpack.c.l.b16 %v4931
        %v7301 = vunpack.c.h.b16 %v4931
        %v7302 = vunpack.c.l.b16 %v4932
        %v7303 = vunpack.c.h.b16 %v4932
        %v7304 = vunpack.c.l.b16 %v4933
        %v7305 = vunpack.c.h.b16 %v4933
        %v7306 = vunpack.c.l.b16 %v4934
        %v7307 = vunpack.c.h.b16 %v4934
        %v7308 = vunpack.c.l.b16 %v4935
        %v7309 = vunpack.c.h.b16 %v4935
        %v7310 = vunpack.c.l.b16 %v4936
        %v7311 = vunpack.c.h.b16 %v4936
        %v7312 = vunpack.c.l.b16 %v4937
        %v7313 = vunpack.c.h.b16 %v4937
        %v7314 = vunpack.c.l.b16 %v4938
        %v7315 = vunpack.c.h.b16 %v4938
        %v7316 = vunpack.c.l.b16 %v4939
        %v7317 = vunpack.c.h.b16 %v4939
        %v7318 = vunpack.c.l.b16 %v4940
        %v7319 = vunpack.c.h.b16 %v4940
        %v7320 = vunpack.c.l.b16 %v4941
        %v7321 = vunpack.c.h.b16 %v4941
        %v7322 = vunpack.c.l.b16 %v4942
        %v7323 = vunpack.c.h.b16 %v4942
        %v7324 = vunpack.c.l.b16 %v4943
        %v7325 = vunpack.c.h.b16 %v4943
        %v7326 = vunpack.c.l.b16 %v4944
        %v7327 = vunpack.c.h.b16 %v4944
        %v7328 = vunpack.c.l.b16 %v4945
        %v7329 = vunpack.c.h.b16 %v4945
        %v7330 = vunpack.c.l.b16 %v4946
        %v7331 = vunpack.c.h.b16 %v4946
        %v7332 = vunpack.c.l.b16 %v4947
        %v7333 = vunpack.c.h.b16 %v4947
        %v7334 = vunpack.c.l.b16 %v4948
        %v7335 = vunpack.c.h.b16 %v4948
        %v7336 = vunpack.c.l.b16 %v4949
        %v7337 = vunpack.c.h.b16 %v4949
        %v7338 = vunpack.c.l.b16 %v4950
        %v7339 = vunpack.c.h.b16 %v4950
        %v7340 = vunpack.c.l.b16 %v4951
        %v7341 = vunpack.c.h.b16 %v4951
        %v7342 = vunpack.c.l.b16 %v4952
        %v7343 = vunpack.c.h.b16 %v4952
        %v7344 = vunpack.c.l.b16 %v4953
        %v7345 = vunpack.c.h.b16 %v4953
        %v7346 = vunpack.c.l.b16 %v4954
        %v7347 = vunpack.c.h.b16 %v4954
        %v7348 = vunpack.c.l.b16 %v4955
        %v7349 = vunpack.c.h.b16 %v4955
        %v7350 = vunpack.c.l.b16 %v4956
        %v7351 = vunpack.c.h.b16 %v4956
        %v7352 = vunpack.c.l.b16 %v4957
        %v7353 = vunpack.c.h.b16 %v4957
        %v7354 = vunpack.c.l.b16 %v4958
        %v7355 = vunpack.c.h.b16 %v4958
        %v7356 = vunpack.c.l.b16 %v4959
        %v7357 = vunpack.c.h.b16 %v4959
        %v7358 = vunpack.c.l.b16 %v4960
        %v7359 = vunpack.c.h.b16 %v4960
        %v7360 = vunpack.c.l.b16 %v4961
        %v7361 = vunpack.c.h.b16 %v4961
        %v7362 = vunpack.c.l.b16 %v4962
        %v7363 = vunpack.c.h.b16 %v4962
        %v7364 = vunpack.c.l.b16 %v4963
        %v7365 = vunpack.c.h.b16 %v4963
        %v7366 = vunpack.c.l.b16 %v4964
        %v7367 = vunpack.c.h.b16 %v4964
        %v7368 = vunpack.c.l.b16 %v4965
        %v7369 = vunpack.c.h.b16 %v4965
        %v7370 = vunpack.c.l.b16 %v4966
        %v7371 = vunpack.c.h.b16 %v4966
        %v7372 = vunpack.c.l.b16 %v4967
        %v7373 = vunpack.c.h.b16 %v4967
        %v7374 = vunpack.c.l.b16 %v4968
        %v7375 = vunpack.c.h.b16 %v4968
        %v7376 = vunpack.c.l.b16 %v4969
        %v7377 = vunpack.c.h.b16 %v4969
        %v7378 = vunpack.c.l.b16 %v4970
        %v7379 = vunpack.c.h.b16 %v4970
        %v7380 = vunpack.c.l.b16 %v4971
        %v7381 = vunpack.c.h.b16 %v4971
        %v7382 = vunpack.c.l.b16 %v4972
        %v7383 = vunpack.c.h.b16 %v4972
        %v7384 = vunpack.c.l.b16 %v4973
        %v7385 = vunpack.c.h.b16 %v4973
        %v7386 = vunpack.c.l.b16 %v4974
        %v7387 = vunpack.c.h.b16 %v4974
        %v7388 = vunpack.c.l.b16 %v4975
        %v7389 = vunpack.c.h.b16 %v4975
        %v7390 = vunpack.c.l.b16 %v4976
        %v7391 = vunpack.c.h.b16 %v4976
        %v7392 = vunpack.c.l.b16 %v4977
        %v7393 = vunpack.c.h.b16 %v4977
        %v7394 = vunpack.c.l.b16 %v4978
        %v7395 = vunpack.c.h.b16 %v4978
        %v7396 = vunpack.c.l.b16 %v4979
        %v7397 = vunpack.c.h.b16 %v4979
        %v7398 = vunpack.c.l.b16 %v4980
        %v7399 = vunpack.c.h.b16 %v4980
        %v7400 = vunpack.c.l.b16 %v4981
        %v7401 = vunpack.c.h.b16 %v4981
        %v7402 = vunpack.c.l.b16 %v4982
        %v7403 = vunpack.c.h.b16 %v4982
        %v7404 = vunpack.c.l.b16 %v4983
        %v7405 = vunpack.c.h.b16 %v4983
        %v7406 = vunpack.c.l.b16 %v4984
        %v7407 = vunpack.c.h.b16 %v4984
        %v7408 = vunpack.c.l.b16 %v4985
        %v7409 = vunpack.c.h.b16 %v4985
        %v7410 = vunpack.c.l.b16 %v4986
        %v7411 = vunpack.c.h.b16 %v4986
        %v7412 = vunpack.c.l.b16 %v4987
        %v7413 = vunpack.c.h.b16 %v4987
        %v7414 = vunpack.c.l.b16 %v4988
        %v7415 = vunpack.c.h.b16 %v4988
        %v7416 = vunpack.c.l.b16 %v4989
        %v7417 = vunpack.c.h.b16 %v4989
        %v7418 = vunpack.c.l.b16 %v4990
        %v7419 = vunpack.c.h.b16 %v4990
        %v7420 = vunpack.c.l.b16 %v4991
        %v7421 = vunpack.c.h.b16 %v4991
        %v7422 = vunpack.c.l.b16 %v4992
        %v7423 = vunpack.c.h.b16 %v4992
        %v7424 = vunpack.c.l.b16 %v4993
        %v7425 = vunpack.c.h.b16 %v4993
        %v7426 = vunpack.c.l.b16 %v4994
        %v7427 = vunpack.c.h.b16 %v4994
        %v7428 = vunpack.c.l.b16 %v4995
        %v7429 = vunpack.c.h.b16 %v4995
        %v7430 = vunpack.c.l.b16 %v4996
        %v7431 = vunpack.c.h.b16 %v4996
        %v7432 = vunpack.c.l.b16 %v4997
        %v7433 = vunpack.c.h.b16 %v4997
        %v7434 = vunpack.c.l.b16 %v4998
        %v7435 = vunpack.c.h.b16 %v4998
        %v7436 = vunpack.c.l.b16 %v4999
        %v7437 = vunpack.c.h.b16 %v4999
        %v7438 = vunpack.c.l.b16 %v5000
        %v7439 = vunpack.c.h.b16 %v5000
        %v7440 = vunpack.c.l.b16 %v5001
        %v7441 = vunpack.c.h.b16 %v5001
        %v7442 = vunpack.c.l.b16 %v5002
        %v7443 = vunpack.c.h.b16 %v5002
        %v7444 = vunpack.c.l.b16 %v5003
        %v7445 = vunpack.c.h.b16 %v5003
        %v7446 = vunpack.c.l.b16 %v5004
        %v7447 = vunpack.c.h.b16 %v5004
        %v7448 = vunpack.c.l.b16 %v5005
        %v7449 = vunpack.c.h.b16 %v5005
        %v7450 = vunpack.c.l.b16 %v5006
        %v7451 = vunpack.c.h.b16 %v5006
        %v7452 = vunpack.c.l.b16 %v5007
        %v7453 = vunpack.c.h.b16 %v5007
        %v7454 = vunpack.c.l.b16 %v5008
        %v7455 = vunpack.c.h.b16 %v5008
        %v7456 = vunpack.c.l.b16 %v5009
        %v7457 = vunpack.c.h.b16 %v5009
        %v7458 = vunpack.c.l.b16 %v5010
        %v7459 = vunpack.c.h.b16 %v5010
        %v7460 = vunpack.c.l.b16 %v5011
        %v7461 = vunpack.c.h.b16 %v5011
        %v7462 = vunpack.c.l.b16 %v5012
        %v7463 = vunpack.c.h.b16 %v5012
        %v7464 = vunpack.c.l.b16 %v5013
        %v7465 = vunpack.c.h.b16 %v5013
        %v7466 = vunpack.c.l.b16 %v5014
        %v7467 = vunpack.c.h.b16 %v5014
        %v7468 = vunpack.c.l.b16 %v5015
        %v7469 = vunpack.c.h.b16 %v5015
        %v7470 = vunpack.c.l.b16 %v5016
        %v7471 = vunpack.c.h.b16 %v5016
        %v7472 = vunpack.c.l.b16 %v5017
        %v7473 = vunpack.c.h.b16 %v5017
        %v7474 = vunpack.c.l.b16 %v5018
        %v7475 = vunpack.c.h.b16 %v5018
        %v7476 = vunpack.c.l.b16 %v5019
        %v7477 = vunpack.c.h.b16 %v5019
        %v7478 = vunpack.c.l.b16 %v5020
        %v7479 = vunpack.c.h.b16 %v5020
        %v7480 = vunpack.c.l.b16 %v5021
        %v7481 = vunpack.c.h.b16 %v5021
        %v7482 = vunpack.c.l.b16 %v5022
        %v7483 = vunpack.c.h.b16 %v5022
        %v7484 = vunpack.c.l.b16 %v5023
        %v7485 = vunpack.c.h.b16 %v5023
        %v7486 = vunpack.c.l.b16 %v5024
        %v7487 = vunpack.c.h.b16 %v5024
        %v7488 = vunpack.c.l.b16 %v5025
        %v7489 = vunpack.c.h.b16 %v5025
        %v7490 = vunpack.c.l.b16 %v5026
        %v7491 = vunpack.c.h.b16 %v5026
        %v7492 = vunpack.c.l.b16 %v5027
        %v7493 = vunpack.c.h.b16 %v5027
        %v7494 = vunpack.c.l.b16 %v5028
        %v7495 = vunpack.c.h.b16 %v5028
        %v7496 = vunpack.c.l.b16 %v5029
        %v7497 = vunpack.c.h.b16 %v5029
        %v7498 = vunpack.c.l.b16 %v5030
        %v7499 = vunpack.c.h.b16 %v5030
        %v7500 = vunpack.c.l.b16 %v5031
        %v7501 = vunpack.c.h.b16 %v5031
        %v7502 = vunpack.c.l.b16 %v5032
        %v7503 = vunpack.c.h.b16 %v5032
        %v7504 = vunpack.c.l.b16 %v5033
        %v7505 = vunpack.c.h.b16 %v5033
        %v7506 = vunpack.c.l.b16 %v5034
        %v7507 = vunpack.c.h.b16 %v5034
        %v7508 = vunpack.c.l.b16 %v5035
        %v7509 = vunpack.c.h.b16 %v5035
        %v7510 = vunpack.c.l.b16 %v5036
        %v7511 = vunpack.c.h.b16 %v5036
        %v7512 = vunpack.c.l.b16 %v5037
        %v7513 = vunpack.c.h.b16 %v5037
        %v7514 = vunpack.c.l.b16 %v5038
        %v7515 = vunpack.c.h.b16 %v5038
        %v7516 = vunpack.c.l.b16 %v5039
        %v7517 = vunpack.c.h.b16 %v5039
        %v7518 = vunpack.c.l.b16 %v5040
        %v7519 = vunpack.c.h.b16 %v5040
        %v7520 = vunpack.c.l.b16 %v5041
        %v7521 = vunpack.c.h.b16 %v5041
        %v7522 = vunpack.c.l.b16 %v5042
        %v7523 = vunpack.c.h.b16 %v5042
        %v7524 = vunpack.c.l.b16 %v5043
        %v7525 = vunpack.c.h.b16 %v5043
        %v7526 = vunpack.c.l.b16 %v5044
        %v7527 = vunpack.c.h.b16 %v5044
        %v7528 = vunpack.c.l.b16 %v5045
        %v7529 = vunpack.c.h.b16 %v5045
        %v7530 = vunpack.c.l.b16 %v5046
        %v7531 = vunpack.c.h.b16 %v5046
        %v7532 = vunpack.c.l.b16 %v5047
        %v7533 = vunpack.c.h.b16 %v5047
        %v7534 = vunpack.c.l.b16 %v5048
        %v7535 = vunpack.c.h.b16 %v5048
        %v7536 = vunpack.c.l.b16 %v5049
        %v7537 = vunpack.c.h.b16 %v5049
        %v7538 = vunpack.c.l.b16 %v5050
        %v7539 = vunpack.c.h.b16 %v5050
        %v7540 = vunpack.c.l.b16 %v5051
        %v7541 = vunpack.c.h.b16 %v5051
        %v7542 = vunpack.c.l.b16 %v5052
        %v7543 = vunpack.c.h.b16 %v5052
        %v7544 = vunpack.c.l.b16 %v5053
        %v7545 = vunpack.c.h.b16 %v5053
        %v7546 = vunpack.c.l.b16 %v5054
        %v7547 = vunpack.c.h.b16 %v5054
        %v7548 = vunpack.c.l.b16 %v5055
        %v7549 = vunpack.c.h.b16 %v5055
        %v7550 = vunpack.c.l.b16 %v5056
        %v7551 = vunpack.c.h.b16 %v5056
        %v7552 = vunpack.c.l.b16 %v5057
        %v7553 = vunpack.c.h.b16 %v5057
        %v7554 = vunpack.c.l.b16 %v5058
        %v7555 = vunpack.c.h.b16 %v5058
        %v7556 = vunpack.c.l.b16 %v5059
        %v7557 = vunpack.c.h.b16 %v5059
        %v7558 = vunpack.c.l.b16 %v5060
        %v7559 = vunpack.c.h.b16 %v5060
        %v7560 = vunpack.c.l.b16 %v5061
        %v7561 = vunpack.c.h.b16 %v5061
        %v7562 = vunpack.c.l.b16 %v5062
        %v7563 = vunpack.c.h.b16 %v5062
        %v7564 = vunpack.c.l.b16 %v5063
        %v7565 = vunpack.c.h.b16 %v5063
        %v7566 = vunpack.c.l.b16 %v5064
        %v7567 = vunpack.c.h.b16 %v5064
        %v7568 = vunpack.c.l.b16 %v5065
        %v7569 = vunpack.c.h.b16 %v5065
        %v7570 = vunpack.c.l.b16 %v5066
        %v7571 = vunpack.c.h.b16 %v5066
        %v7572 = vunpack.c.l.b16 %v5067
        %v7573 = vunpack.c.h.b16 %v5067
        %v7574 = vunpack.c.l.b16 %v5068
        %v7575 = vunpack.c.h.b16 %v5068
        %v7576 = vunpack.c.l.b16 %v5069
        %v7577 = vunpack.c.h.b16 %v5069
        %v7578 = vunpack.c.l.b16 %v5070
        %v7579 = vunpack.c.h.b16 %v5070
        %v7580 = vunpack.c.l.b16 %v5071
        %v7581 = vunpack.c.h.b16 %v5071
        %v7582 = vunpack.c.l.b16 %v5072
        %v7583 = vunpack.c.h.b16 %v5072
        %v7584 = vunpack.c.l.b16 %v5073
        %v7585 = vunpack.c.h.b16 %v5073
        %v7586 = vunpack.c.l.b16 %v5074
        %v7587 = vunpack.c.h.b16 %v5074
        %v7588 = vunpack.c.l.b16 %v5075
        %v7589 = vunpack.c.h.b16 %v5075
        %v7590 = vunpack.c.l.b16 %v5076
        %v7591 = vunpack.c.h.b16 %v5076
        %v7592 = vunpack.c.l.b16 %v5077
        %v7593 = vunpack.c.h.b16 %v5077
        %v7594 = vunpack.c.l.b16 %v5078
        %v7595 = vunpack.c.h.b16 %v5078
        %v7596 = vunpack.c.l.b16 %v5079
        %v7597 = vunpack.c.h.b16 %v5079
        %v7598 = vunpack.c.l.b16 %v5080
        %v7599 = vunpack.c.h.b16 %v5080
        %v7600 = vunpack.c.l.b16 %v5081
        %v7601 = vunpack.c.h.b16 %v5081
        %v7602 = vunpack.c.l.b16 %v5082
        %v7603 = vunpack.c.h.b16 %v5082
        %v7604 = vunpack.c.l.b16 %v5083
        %v7605 = vunpack.c.h.b16 %v5083
        %v7606 = vunpack.c.l.b16 %v5084
        %v7607 = vunpack.c.h.b16 %v5084
        %v7608 = vunpack.c.l.b16 %v5085
        %v7609 = vunpack.c.h.b16 %v5085
        %v7610 = vunpack.c.l.b16 %v5086
        %v7611 = vunpack.c.h.b16 %v5086
        %v7612 = vunpack.c.l.b16 %v5087
        %v7613 = vunpack.c.h.b16 %v5087
        %v7614 = vunpack.c.l.b16 %v5088
        %v7615 = vunpack.c.h.b16 %v5088
        %v7616 = vunpack.c.l.b16 %v5089
        %v7617 = vunpack.c.h.b16 %v5089
        %v7618 = vunpack.c.l.b16 %v5090
        %v7619 = vunpack.c.h.b16 %v5090
        %v7620 = vunpack.c.l.b16 %v5091
        %v7621 = vunpack.c.h.b16 %v5091
        %v7622 = vunpack.c.l.b16 %v5092
        %v7623 = vunpack.c.h.b16 %v5092
        %v7624 = vunpack.c.l.b16 %v5093
        %v7625 = vunpack.c.h.b16 %v5093
        %v7626 = vunpack.c.l.b16 %v5094
        %v7627 = vunpack.c.h.b16 %v5094
        %v7628 = vunpack.c.l.b16 %v5095
        %v7629 = vunpack.c.h.b16 %v5095
        %v7630 = vunpack.c.l.b16 %v5096
        %v7631 = vunpack.c.h.b16 %v5096
        %v7632 = vunpack.c.l.b16 %v5097
        %v7633 = vunpack.c.h.b16 %v5097
        %v7634 = vunpack.c.l.b16 %v5098
        %v7635 = vunpack.c.h.b16 %v5098
        %v7636 = vunpack.c.l.b16 %v5099
        %v7637 = vunpack.c.h.b16 %v5099
        %v7638 = vunpack.c.l.b16 %v5100
        %v7639 = vunpack.c.h.b16 %v5100
        %v7640 = vunpack.c.l.b16 %v5101
        %v7641 = vunpack.c.h.b16 %v5101
        %v7642 = vunpack.c.l.b16 %v5102
        %v7643 = vunpack.c.h.b16 %v5102
        %v7644 = vunpack.c.l.b16 %v5103
        %v7645 = vunpack.c.h.b16 %v5103
        %v7646 = vunpack.c.l.b16 %v5104
        %v7647 = vunpack.c.h.b16 %v5104
        %v7648 = vunpack.c.l.b16 %v5105
        %v7649 = vunpack.c.h.b16 %v5105
        %v7650 = vunpack.c.l.b16 %v5106
        %v7651 = vunpack.c.h.b16 %v5106
        %v7652 = vunpack.c.l.b16 %v5107
        %v7653 = vunpack.c.h.b16 %v5107
        %v7654 = vunpack.c.l.b16 %v5108
        %v7655 = vunpack.c.h.b16 %v5108
        %v7656 = vunpack.c.l.b16 %v5109
        %v7657 = vunpack.c.h.b16 %v5109
        %v7658 = vunpack.c.l.b16 %v5110
        %v7659 = vunpack.c.h.b16 %v5110
        %v7660 = vunpack.c.l.b16 %v5111
        %v7661 = vunpack.c.h.b16 %v5111
        %v7662 = vunpack.c.l.b16 %v5112
        %v7663 = vunpack.c.h.b16 %v5112
        %v7664 = vunpack.c.l.b16 %v5113
        %v7665 = vunpack.c.h.b16 %v5113
        %v7666 = vunpack.c.l.b16 %v5114
        %v7667 = vunpack.c.h.b16 %v5114
        %v7668 = vunpack.c.l.b16 %v5115
        %v7669 = vunpack.c.h.b16 %v5115
        %v7670 = vunpack.c.l.b16 %v5116
        %v7671 = vunpack.c.h.b16 %v5116
        %v7672 = vunpack.c.l.b16 %v5117
        %v7673 = vunpack.c.h.b16 %v5117
        %v7674 = vunpack.c.l.b16 %v5118
        %v7675 = vunpack.c.h.b16 %v5118
        %v7676 = vunpack.c.l.b16 %v5119
        %v7677 = vunpack.c.h.b16 %v5119
        %v7678 = vunpack.c.l.b16 %v5120
        %v7679 = vunpack.c.h.b16 %v5120
        %v7680 = vunpack.c.l.b16 %v5121
        %v7681 = vunpack.c.h.b16 %v5121
        %v7682 = vunpack.c.l.b16 %v5122
        %v7683 = vunpack.c.h.b16 %v5122
        %v7684 = vunpack.c.l.b16 %v5123
        %v7685 = vunpack.c.h.b16 %v5123
        %v7686 = vunpack.c.l.b16 %v5124
        %v7687 = vunpack.c.h.b16 %v5124
        %v7688 = vunpack.c.l.b16 %v5125
        %v7689 = vunpack.c.h.b16 %v5125
        %v7690 = vunpack.c.l.b16 %v5126
        %v7691 = vunpack.c.h.b16 %v5126
        %v7692 = vunpack.c.l.b16 %v5127
        %v7693 = vunpack.c.h.b16 %v5127
        %v7694 = vunpack.c.l.b16 %v5128
        %v7695 = vunpack.c.h.b16 %v5128
        %v7696 = vunpack.c.l.b16 %v5129
        %v7697 = vunpack.c.h.b16 %v5129
        %v7698 = vunpack.c.l.b16 %v5130
        %v7699 = vunpack.c.h.b16 %v5130
        %v7700 = vunpack.c.l.b16 %v5131
        %v7701 = vunpack.c.h.b16 %v5131
        %v7702 = vunpack.c.l.b16 %v5132
        %v7703 = vunpack.c.h.b16 %v5132
        %v7704 = vunpack.c.l.b16 %v5133
        %v7705 = vunpack.c.h.b16 %v5133
        %v7706 = vunpack.c.l.b16 %v5134
        %v7707 = vunpack.c.h.b16 %v5134
        %v7708 = vunpack.c.l.b16 %v5135
        %v7709 = vunpack.c.h.b16 %v5135
        %v7710 = vunpack.c.l.b16 %v5136
        %v7711 = vunpack.c.h.b16 %v5136
        %v7712 = vunpack.c.l.b16 %v5137
        %v7713 = vunpack.c.h.b16 %v5137
        %v7714 = vunpack.c.l.b16 %v5138
        %v7715 = vunpack.c.h.b16 %v5138
        %v7716 = vunpack.c.l.b16 %v5139
        %v7717 = vunpack.c.h.b16 %v5139
        %v7718 = vunpack.c.l.b16 %v5140
        %v7719 = vunpack.c.h.b16 %v5140
        %v7720 = vunpack.c.l.b16 %v5141
        %v7721 = vunpack.c.h.b16 %v5141
        %v7722 = vunpack.c.l.b16 %v5142
        %v7723 = vunpack.c.h.b16 %v5142
        %v7724 = vunpack.c.l.b16 %v5143
        %v7725 = vunpack.c.h.b16 %v5143
        %v7726 = vunpack.c.l.b16 %v5144
        %v7727 = vunpack.c.h.b16 %v5144
        %v7728 = vunpack.c.l.b16 %v5145
        %v7729 = vunpack.c.h.b16 %v5145
        %v7730 = vunpack.c.l.b16 %v5146
        %v7731 = vunpack.c.h.b16 %v5146
        %v7732 = vunpack.c.l.b16 %v5147
        %v7733 = vunpack.c.h.b16 %v5147
        %v7734 = vunpack.c.l.b16 %v5148
        %v7735 = vunpack.c.h.b16 %v5148
        %v7736 = vunpack.c.l.b16 %v5149
        %v7737 = vunpack.c.h.b16 %v5149
        %v7738 = vunpack.c.l.b16 %v5150
        %v7739 = vunpack.c.h.b16 %v5150
        %v7740 = vunpack.c.l.b16 %v5151
        %v7741 = vunpack.c.h.b16 %v5151
        %v7742 = vunpack.c.l.b16 %v5152
        %v7743 = vunpack.c.h.b16 %v5152
        %v7744 = vunpack.c.l.b16 %v5153
        %v7745 = vunpack.c.h.b16 %v5153
        %v7746 = vunpack.c.l.b16 %v5154
        %v7747 = vunpack.c.h.b16 %v5154
        %v7748 = vunpack.c.l.b16 %v5155
        %v7749 = vunpack.c.h.b16 %v5155
        %v7750 = vunpack.c.l.b16 %v5156
        %v7751 = vunpack.c.h.b16 %v5156
        %v7752 = vunpack.c.l.b16 %v5157
        %v7753 = vunpack.c.h.b16 %v5157
        %v7754 = vunpack.c.l.b16 %v5158
        %v7755 = vunpack.c.h.b16 %v5158
        %v7756 = vunpack.c.l.b16 %v5159
        %v7757 = vunpack.c.h.b16 %v5159
        %v7758 = vunpack.c.l.b16 %v5160
        %v7759 = vunpack.c.h.b16 %v5160
        %v7760 = vunpack.c.l.b16 %v5161
        %v7761 = vunpack.c.h.b16 %v5161
        %v7762 = vunpack.c.l.b16 %v5162
        %v7763 = vunpack.c.h.b16 %v5162
        %v7764 = vunpack.c.l.b16 %v5163
        %v7765 = vunpack.c.h.b16 %v5163
        %v7766 = vunpack.c.l.b16 %v5164
        %v7767 = vunpack.c.h.b16 %v5164
        %v7768 = vunpack.c.l.b16 %v5165
        %v7769 = vunpack.c.h.b16 %v5165
        %v7770 = vunpack.c.l.b16 %v5166
        %v7771 = vunpack.c.h.b16 %v5166
        %v7772 = vunpack.c.l.b16 %v5167
        %v7773 = vunpack.c.h.b16 %v5167
        %v7774 = vunpack.c.l.b16 %v5168
        %v7775 = vunpack.c.h.b16 %v5168
        %v7776 = vunpack.c.l.b16 %v5169
        %v7777 = vunpack.c.h.b16 %v5169
        %v7778 = vunpack.c.l.b16 %v5170
        %v7779 = vunpack.c.h.b16 %v5170
        %v7780 = vunpack.c.l.b16 %v5171
        %v7781 = vunpack.c.h.b16 %v5171
        %v7782 = vunpack.c.l.b16 %v5172
        %v7783 = vunpack.c.h.b16 %v5172
        %v7784 = vunpack.c.l.b16 %v5173
        %v7785 = vunpack.c.h.b16 %v5173
        %v7786 = vunpack.c.l.b16 %v5174
        %v7787 = vunpack.c.h.b16 %v5174
        %v7788 = vunpack.c.l.b16 %v5175
        %v7789 = vunpack.c.h.b16 %v5175
        %v7790 = vunpack.c.l.b16 %v5176
        %v7791 = vunpack.c.h.b16 %v5176
        %v7792 = vunpack.c.l.b16 %v5177
        %v7793 = vunpack.c.h.b16 %v5177
        %v7794 = vunpack.c.l.b16 %v5178
        %v7795 = vunpack.c.h.b16 %v5178
        %v7796 = vunpack.c.l.b16 %v5179
        %v7797 = vunpack.c.h.b16 %v5179
        %v7798 = vunpack.c.l.b16 %v5180
        %v7799 = vunpack.c.h.b16 %v5180
        %v7800 = vunpack.c.l.b16 %v5181
        %v7801 = vunpack.c.h.b16 %v5181
        %v7802 = vunpack.c.l.b16 %v5182
        %v7803 = vunpack.c.h.b16 %v5182
        %v7804 = vunpack.c.l.b16 %v5183
        %v7805 = vunpack.c.h.b16 %v5183
        %v7806 = vunpack.c.l.b16 %v5184
        %v7807 = vunpack.c.h.b16 %v5184
        %v7808 = vunpack.c.l.b16 %v5185
        %v7809 = vunpack.c.h.b16 %v5185
        %v7810 = vunpack.c.l.b16 %v5186
        %v7811 = vunpack.c.h.b16 %v5186
        %v7812 = vunpack.c.l.b16 %v5187
        %v7813 = vunpack.c.h.b16 %v5187
        %v7814 = vunpack.c.l.b16 %v5188
        %v7815 = vunpack.c.h.b16 %v5188
        %v7816 = vunpack.c.l.b16 %v5189
        %v7817 = vunpack.c.h.b16 %v5189
        %v7818 = vunpack.c.l.b16 %v5190
        %v7819 = vunpack.c.h.b16 %v5190
        %v7820 = vunpack.c.l.b16 %v5191
        %v7821 = vunpack.c.h.b16 %v5191
        %v7822 = vunpack.c.l.b16 %v5192
        %v7823 = vunpack.c.h.b16 %v5192
        %v7824 = vunpack.c.l.b16 %v5193
        %v7825 = vunpack.c.h.b16 %v5193
        %v7826 = vunpack.c.l.b16 %v5194
        %v7827 = vunpack.c.h.b16 %v5194
        %v7828 = vunpack.c.l.b16 %v5195
        %v7829 = vunpack.c.h.b16 %v5195
        %v7830 = vunpack.c.l.b16 %v5196
        %v7831 = vunpack.c.h.b16 %v5196
        %v7832 = vunpack.c.l.b16 %v5197
        %v7833 = vunpack.c.h.b16 %v5197
        %v7834 = vunpack.c.l.b16 %v5198
        %v7835 = vunpack.c.h.b16 %v5198
        %v7836 = vunpack.c.l.b16 %v5199
        %v7837 = vunpack.c.h.b16 %v5199
        %v7838 = vunpack.c.l.b16 %v5200
        %v7839 = vunpack.c.h.b16 %v5200
        %v7840 = vunpack.c.l.b16 %v5201
        %v7841 = vunpack.c.h.b16 %v5201
        %v7842 = vunpack.c.l.b16 %v5202
        %v7843 = vunpack.c.h.b16 %v5202
        %v7844 = vunpack.c.l.b16 %v5203
        %v7845 = vunpack.c.h.b16 %v5203
        %v7846 = vunpack.c.l.b16 %v5204
        %v7847 = vunpack.c.h.b16 %v5204
        %v7848 = vunpack.c.l.b16 %v5205
        %v7849 = vunpack.c.h.b16 %v5205
        %v7850 = vunpack.c.l.b16 %v5206
        %v7851 = vunpack.c.h.b16 %v5206
        %v7852 = vunpack.c.l.b16 %v5207
        %v7853 = vunpack.c.h.b16 %v5207
        %v7854 = vunpack.c.l.b16 %v5208
        %v7855 = vunpack.c.h.b16 %v5208
        %v7856 = vunpack.c.l.b16 %v5209
        %v7857 = vunpack.c.h.b16 %v5209
        %v7858 = vunpack.c.l.b16 %v5210
        %v7859 = vunpack.c.h.b16 %v5210
        %v7860 = vunpack.c.l.b16 %v5211
        %v7861 = vunpack.c.h.b16 %v5211
        %v7862 = vunpack.c.l.b16 %v5212
        %v7863 = vunpack.c.h.b16 %v5212
        %v7864 = vunpack.c.l.b16 %v5213
        %v7865 = vunpack.c.h.b16 %v5213
        %v7866 = vunpack.c.l.b16 %v5214
        %v7867 = vunpack.c.h.b16 %v5214
        %v7868 = vunpack.c.l.b16 %v5215
        %v7869 = vunpack.c.h.b16 %v5215
        %v7870 = vunpack.c.l.b16 %v5216
        %v7871 = vunpack.c.h.b16 %v5216
        %v7872 = vunpack.c.l.b16 %v5217
        %v7873 = vunpack.c.h.b16 %v5217
        %v7874 = vunpack.c.l.b16 %v5218
        %v7875 = vunpack.c.h.b16 %v5218
        %v7876 = vunpack.c.l.b16 %v5219
        %v7877 = vunpack.c.h.b16 %v5219
        %v7878 = vunpack.c.l.b16 %v5220
        %v7879 = vunpack.c.h.b16 %v5220
        %v7880 = vunpack.c.l.b16 %v5221
        %v7881 = vunpack.c.h.b16 %v5221
        %v7882 = vunpack.c.l.b16 %v5222
        %v7883 = vunpack.c.h.b16 %v5222
        %v7884 = vunpack.c.l.b16 %v5223
        %v7885 = vunpack.c.h.b16 %v5223
        %v7886 = vunpack.c.l.b16 %v5224
        %v7887 = vunpack.c.h.b16 %v5224
        %v7888 = vunpack.c.l.b16 %v5225
        %v7889 = vunpack.c.h.b16 %v5225
        %v7890 = vunpack.c.l.b16 %v5226
        %v7891 = vunpack.c.h.b16 %v5226
        %v7892 = vunpack.c.l.b16 %v5227
        %v7893 = vunpack.c.h.b16 %v5227
        %v7894 = vunpack.c.l.b16 %v5228
        %v7895 = vunpack.c.h.b16 %v5228
        %v7896 = vunpack.c.l.b16 %v5229
        %v7897 = vunpack.c.h.b16 %v5229
        %v7898 = vunpack.c.l.b16 %v5230
        %v7899 = vunpack.c.h.b16 %v5230
        %v7900 = vunpack.c.l.b16 %v5231
        %v7901 = vunpack.c.h.b16 %v5231
        %v7902 = vunpack.c.l.b16 %v5232
        %v7903 = vunpack.c.h.b16 %v5232
        %v7904 = vunpack.c.l.b16 %v5233
        %v7905 = vunpack.c.h.b16 %v5233
        %v7906 = vunpack.c.l.b16 %v5234
        %v7907 = vunpack.c.h.b16 %v5234
        %v7908 = vunpack.c.l.b16 %v5235
        %v7909 = vunpack.c.h.b16 %v5235
        %v7910 = vunpack.c.l.b16 %v5236
        %v7911 = vunpack.c.h.b16 %v5236
        %v7912 = vunpack.c.l.b16 %v5237
        %v7913 = vunpack.c.h.b16 %v5237
        %v7914 = vunpack.c.l.b16 %v5238
        %v7915 = vunpack.c.h.b16 %v5238
        %v7916 = vunpack.c.l.b16 %v5239
        %v7917 = vunpack.c.h.b16 %v5239
        %v7918 = vunpack.c.l.b16 %v5240
        %v7919 = vunpack.c.h.b16 %v5240
        %v7920 = vunpack.c.l.b16 %v5241
        %v7921 = vunpack.c.h.b16 %v5241
        %v7922 = vunpack.c.l.b16 %v5242
        %v7923 = vunpack.c.h.b16 %v5242
        %v7924 = vunpack.c.l.b16 %v5243
        %v7925 = vunpack.c.h.b16 %v5243
        %v7926 = vunpack.c.l.b16 %v5244
        %v7927 = vunpack.c.h.b16 %v5244
        %v7928 = vunpack.c.l.b16 %v5245
        %v7929 = vunpack.c.h.b16 %v5245
        %v7930 = vunpack.c.l.b16 %v5246
        %v7931 = vunpack.c.h.b16 %v5246
        %v7932 = vunpack.c.l.b16 %v5247
        %v7933 = vunpack.c.h.b16 %v5247
        %v7934 = vunpack.c.l.b16 %v5248
        %v7935 = vunpack.c.h.b16 %v5248
        %v7936 = vunpack.c.l.b16 %v5249
        %v7937 = vunpack.c.h.b16 %v5249
        %v7938 = vunpack.c.l.b16 %v5250
        %v7939 = vunpack.c.h.b16 %v5250
        %v7940 = vunpack.c.l.b16 %v5251
        %v7941 = vunpack.c.h.b16 %v5251
        %v7942 = vunpack.c.l.b16 %v5252
        %v7943 = vunpack.c.h.b16 %v5252
        %v7944 = vunpack.c.l.b16 %v5253
        %v7945 = vunpack.c.h.b16 %v5253
        %v7946 = vunpack.c.l.b16 %v5254
        %v7947 = vunpack.c.h.b16 %v5254
        %v7948 = vunpack.c.l.b16 %v5255
        %v7949 = vunpack.c.h.b16 %v5255
        %v7950 = vunpack.c.l.b16 %v5256
        %v7951 = vunpack.c.h.b16 %v5256
        %v7952 = vunpack.c.l.b16 %v5257
        %v7953 = vunpack.c.h.b16 %v5257
        %v7954 = vunpack.c.l.b16 %v5258
        %v7955 = vunpack.c.h.b16 %v5258
        %v7956 = vunpack.c.l.b16 %v5259
        %v7957 = vunpack.c.h.b16 %v5259
        %v7958 = vunpack.c.l.b16 %v5260
        %v7959 = vunpack.c.h.b16 %v5260
        %v7960 = vunpack.c.l.b16 %v5261
        %v7961 = vunpack.c.h.b16 %v5261
        %v7962 = vunpack.c.l.b16 %v5262
        %v7963 = vunpack.c.h.b16 %v5262
        %v7964 = vunpack.c.l.b16 %v5263
        %v7965 = vunpack.c.h.b16 %v5263
        %v7966 = vunpack.c.l.b16 %v5264
        %v7967 = vunpack.c.h.b16 %v5264
        %v7968 = vunpack.c.l.b16 %v5265
        %v7969 = vunpack.c.h.b16 %v5265
        %v7970 = vunpack.c.l.b16 %v5266
        %v7971 = vunpack.c.h.b16 %v5266
        %v7972 = vunpack.c.l.b16 %v5267
        %v7973 = vunpack.c.h.b16 %v5267
        %v7974 = vunpack.c.l.b16 %v5268
        %v7975 = vunpack.c.h.b16 %v5268
        %v7976 = vunpack.c.l.b16 %v5269
        %v7977 = vunpack.c.h.b16 %v5269
        %v7978 = vunpack.c.l.b16 %v5270
        %v7979 = vunpack.c.h.b16 %v5270
        %v7980 = vunpack.c.l.b16 %v5271
        %v7981 = vunpack.c.h.b16 %v5271
        %v7982 = vunpack.c.l.b16 %v5272
        %v7983 = vunpack.c.h.b16 %v5272
        %v7984 = vunpack.c.l.b16 %v5273
        %v7985 = vunpack.c.h.b16 %v5273
        %v7986 = vunpack.c.l.b16 %v5274
        %v7987 = vunpack.c.h.b16 %v5274
        %v7988 = vunpack.c.l.b16 %v5275
        %v7989 = vunpack.c.h.b16 %v5275
        %v7990 = vunpack.c.l.b16 %v5276
        %v7991 = vunpack.c.h.b16 %v5276
        %v7992 = vunpack.c.l.b16 %v5277
        %v7993 = vunpack.c.h.b16 %v5277
        %v7994 = vunpack.c.l.b16 %v5278
        %v7995 = vunpack.c.h.b16 %v5278
        %v7996 = vunpack.c.l.b16 %v5279
        %v7997 = vunpack.c.h.b16 %v5279
        %v7998 = vunpack.c.l.b16 %v5280
        %v7999 = vunpack.c.h.b16 %v5280
        %v8000 = vunpack.c.l.b16 %v5281
        %v8001 = vunpack.c.h.b16 %v5281
        %v8002 = vunpack.c.l.b16 %v5282
        %v8003 = vunpack.c.h.b16 %v5282
        %v8004 = vunpack.c.l.b16 %v5283
        %v8005 = vunpack.c.h.b16 %v5283
        %v8006 = vunpack.c.l.b16 %v5284
        %v8007 = vunpack.c.h.b16 %v5284
        %v8008 = vunpack.c.l.b16 %v5285
        %v8009 = vunpack.c.h.b16 %v5285
        %v8010 = vunpack.c.l.b16 %v5286
        %v8011 = vunpack.c.h.b16 %v5286
        %v8012 = vunpack.c.l.b16 %v5287
        %v8013 = vunpack.c.h.b16 %v5287
        %v8014 = vunpack.c.l.b16 %v5288
        %v8015 = vunpack.c.h.b16 %v5288
        %v8016 = vunpack.c.l.b16 %v5289
        %v8017 = vunpack.c.h.b16 %v5289
        %v8018 = vunpack.c.l.b16 %v5290
        %v8019 = vunpack.c.h.b16 %v5290
        %v8020 = vunpack.c.l.b16 %v5291
        %v8021 = vunpack.c.h.b16 %v5291
        %v8022 = vunpack.c.l.b16 %v5292
        %v8023 = vunpack.c.h.b16 %v5292
        %v8024 = vunpack.c.l.b16 %v5293
        %v8025 = vunpack.c.h.b16 %v5293
        %v8026 = vunpack.c.l.b16 %v5294
        %v8027 = vunpack.c.h.b16 %v5294
        %v8028 = vunpack.c.l.b16 %v5295
        %v8029 = vunpack.c.h.b16 %v5295
        %v8030 = vunpack.c.l.b16 %v5296
        %v8031 = vunpack.c.h.b16 %v5296
        %v8032 = vunpack.c.l.b16 %v5297
        %v8033 = vunpack.c.h.b16 %v5297
        %v8034 = vunpack.c.l.b16 %v5298
        %v8035 = vunpack.c.h.b16 %v5298
        %v8036 = vunpack.c.l.b16 %v5299
        %v8037 = vunpack.c.h.b16 %v5299
        %v8038 = vunpack.c.l.b16 %v5300
        %v8039 = vunpack.c.h.b16 %v5300
        %v8040 = vunpack.c.l.b16 %v5301
        %v8041 = vunpack.c.h.b16 %v5301
        %v8042 = vunpack.c.l.b16 %v5302
        %v8043 = vunpack.c.h.b16 %v5302
        %v8044 = vunpack.c.l.b16 %v5303
        %v8045 = vunpack.c.h.b16 %v5303
        %v8046 = vunpack.c.l.b16 %v5304
        %v8047 = vunpack.c.h.b16 %v5304
        %v8048 = vunpack.c.l.b16 %v5305
        %v8049 = vunpack.c.h.b16 %v5305
        %v8050 = vunpack.c.l.b16 %v5306
        %v8051 = vunpack.c.h.b16 %v5306
        %v8052 = vunpack.c.l.b16 %v5307
        %v8053 = vunpack.c.h.b16 %v5307
        %v8054 = vunpack.c.l.b16 %v5308
        %v8055 = vunpack.c.h.b16 %v5308
        %v8056 = vunpack.c.l.b16 %v5309
        %v8057 = vunpack.c.h.b16 %v5309
        %v8058 = vunpack.c.l.b16 %v5310
        %v8059 = vunpack.c.h.b16 %v5310
        %v8060 = vunpack.c.l.b16 %v5311
        %v8061 = vunpack.c.h.b16 %v5311
        %v8062 = vunpack.c.l.b16 %v5312
        %v8063 = vunpack.c.h.b16 %v5312
        %v8064 = vunpack.c.l.b16 %v5313
        %v8065 = vunpack.c.h.b16 %v5313
        %v8066 = vunpack.c.l.b16 %v5314
        %v8067 = vunpack.c.h.b16 %v5314
        %v8068 = vunpack.c.l.b16 %v5315
        %v8069 = vunpack.c.h.b16 %v5315
        %v8070 = vunpack.c.l.b16 %v5316
        %v8071 = vunpack.c.h.b16 %v5316
        %v8072 = vunpack.c.l.b16 %v5317
        %v8073 = vunpack.c.h.b16 %v5317
        %v8074 = vunpack.c.l.b16 %v5318
        %v8075 = vunpack.c.h.b16 %v5318
        %v8076 = vunpack.c.l.b16 %v5319
        %v8077 = vunpack.c.h.b16 %v5319
        %v8078 = vunpack.c.l.b16 %v5320
        %v8079 = vunpack.c.h.b16 %v5320
        %v8080 = vunpack.c.l.b16 %v5321
        %v8081 = vunpack.c.h.b16 %v5321
        %v8082 = vunpack.c.l.b16 %v5322
        %v8083 = vunpack.c.h.b16 %v5322
        %v8084 = vunpack.c.l.b16 %v5323
        %v8085 = vunpack.c.h.b16 %v5323
        %v8086 = vunpack.c.l.b16 %v5324
        %v8087 = vunpack.c.h.b16 %v5324
        %v8088 = vunpack.c.l.b16 %v5325
        %v8089 = vunpack.c.h.b16 %v5325
        %v8090 = vunpack.c.l.b16 %v5326
        %v8091 = vunpack.c.h.b16 %v5326
        %v8092 = vunpack.c.l.b16 %v5327
        %v8093 = vunpack.c.h.b16 %v5327
        %v8094 = vunpack.c.l.b16 %v5328
        %v8095 = vunpack.c.h.b16 %v5328
        %v8096 = vunpack.c.l.b16 %v5329
        %v8097 = vunpack.c.h.b16 %v5329
        %v8098 = vunpack.c.l.b16 %v5330
        %v8099 = vunpack.c.h.b16 %v5330
        %v8100 = vunpack.c.l.b16 %v5331
        %v8101 = vunpack.c.h.b16 %v5331
        %v8102 = vunpack.c.l.b16 %v5332
        %v8103 = vunpack.c.h.b16 %v5332
        %v8104 = vunpack.c.l.b16 %v5333
        %v8105 = vunpack.c.h.b16 %v5333
        %v8106 = vunpack.c.l.b16 %v5334
        %v8107 = vunpack.c.h.b16 %v5334
        %v8108 = vunpack.c.l.b16 %v5335
        %v8109 = vunpack.c.h.b16 %v5335
        %v8110 = vunpack.c.l.b16 %v5336
        %v8111 = vunpack.c.h.b16 %v5336
        %v8112 = vunpack.c.l.b16 %v5337
        %v8113 = vunpack.c.h.b16 %v5337
        %v8114 = vunpack.c.l.b16 %v5338
        %v8115 = vunpack.c.h.b16 %v5338
        %v8116 = vunpack.c.l.b16 %v5339
        %v8117 = vunpack.c.h.b16 %v5339
        %v8118 = vunpack.c.l.b16 %v5340
        %v8119 = vunpack.c.h.b16 %v5340
        %v8120 = vunpack.c.l.b16 %v5341
        %v8121 = vunpack.c.h.b16 %v5341
        %v8122 = vunpack.c.l.b16 %v5342
        %v8123 = vunpack.c.h.b16 %v5342
        %v8124 = vunpack.c.l.b16 %v5343
        %v8125 = vunpack.c.h.b16 %v5343
        %v8126 = vunpack.c.l.b16 %v5344
        %v8127 = vunpack.c.h.b16 %v5344
        %v8128 = vunpack.c.l.b16 %v5345
        %v8129 = vunpack.c.h.b16 %v5345
        %v8130 = vunpack.c.l.b16 %v5346
        %v8131 = vunpack.c.h.b16 %v5346
        %v8132 = vunpack.c.l.b16 %v5347
        %v8133 = vunpack.c.h.b16 %v5347
        %v8134 = vunpack.c.l.b16 %v5348
        %v8135 = vunpack.c.h.b16 %v5348
        %v8136 = vunpack.c.l.b16 %v5349
        %v8137 = vunpack.c.h.b16 %v5349
        %v8138 = vunpack.c.l.b16 %v5350
        %v8139 = vunpack.c.h.b16 %v5350
        %v8140 = vunpack.c.l.b16 %v5351
        %v8141 = vunpack.c.h.b16 %v5351
        %v8142 = vunpack.c.l.b16 %v5352
        %v8143 = vunpack.c.h.b16 %v5352
        %v8144 = vunpack.c.l.b16 %v5353
        %v8145 = vunpack.c.h.b16 %v5353
        %v8146 = vunpack.c.l.b16 %v5354
        %v8147 = vunpack.c.h.b16 %v5354
        %v8148 = vunpack.c.l.b16 %v5355
        %v8149 = vunpack.c.h.b16 %v5355
        %v8150 = vunpack.c.l.b16 %v5356
        %v8151 = vunpack.c.h.b16 %v5356
        %v8152 = vunpack.c.l.b16 %v5357
        %v8153 = vunpack.c.h.b16 %v5357
        %v8154 = vunpack.c.l.b16 %v5358
        %v8155 = vunpack.c.h.b16 %v5358
        %v8156 = vunpack.c.l.b16 %v5359
        %v8157 = vunpack.c.h.b16 %v5359
        %v8158 = vunpack.c.l.b16 %v5360
        %v8159 = vunpack.c.h.b16 %v5360
        %v8160 = vunpack.c.l.b16 %v5361
        %v8161 = vunpack.c.h.b16 %v5361
        %v8162 = vunpack.c.l.b16 %v5362
        %v8163 = vunpack.c.h.b16 %v5362
        %v8164 = vunpack.c.l.b16 %v5363
        %v8165 = vunpack.c.h.b16 %v5363
        %v8166 = vunpack.c.l.b16 %v5364
        %v8167 = vunpack.c.h.b16 %v5364
        %v8168 = vunpack.c.l.b16 %v5365
        %v8169 = vunpack.c.h.b16 %v5365
        %v8170 = vunpack.c.l.b16 %v5366
        %v8171 = vunpack.c.h.b16 %v5366
        %v8172 = vunpack.c.l.b16 %v5367
        %v8173 = vunpack.c.h.b16 %v5367
        %v8174 = vunpack.c.l.b16 %v5368
        %v8175 = vunpack.c.h.b16 %v5368
        %v8176 = vunpack.c.l.b16 %v5369
        %v8177 = vunpack.c.h.b16 %v5369
        %v8178 = vunpack.c.l.b16 %v5370
        %v8179 = vunpack.c.h.b16 %v5370
        %v8180 = vunpack.c.l.b16 %v5371
        %v8181 = vunpack.c.h.b16 %v5371
        %v8182 = vunpack.c.l.b16 %v5372
        %v8183 = vunpack.c.h.b16 %v5372
        %v8184 = vunpack.c.l.b16 %v5373
        %v8185 = vunpack.c.h.b16 %v5373
        %v8186 = vunpack.c.l.b16 %v5374
        %v8187 = vunpack.c.h.b16 %v5374
        %v8188 = vunpack.c.l.b16 %v5375
        %v8189 = vunpack.c.h.b16 %v5375
        %v8190 = vunpack.c.l.b16 %v5376
        %v8191 = vunpack.c.h.b16 %v5376
        %v8192 = vunpack.c.l.b16 %v5377
        %v8193 = vunpack.c.h.b16 %v5377
        %v8194 = vunpack.c.l.b16 %v5378
        %v8195 = vunpack.c.h.b16 %v5378
        %v8196 = vunpack.c.l.b16 %v5379
        %v8197 = vunpack.c.h.b16 %v5379
        %v8198 = vunpack.c.l.b16 %v5380
        %v8199 = vunpack.c.h.b16 %v5380
        %v8200 = vunpack.c.l.b16 %v5381
        %v8201 = vunpack.c.h.b16 %v5381
        %v8202 = vunpack.c.l.b16 %v5382
        %v8203 = vunpack.c.h.b16 %v5382
        %v8204 = vunpack.c.l.b16 %v5383
        %v8205 = vunpack.c.h.b16 %v5383
        %v8206 = vunpack.c.l.b16 %v5384
        %v8207 = vunpack.c.h.b16 %v5384
        %v8208 = vunpack.c.l.b16 %v5385
        %v8209 = vunpack.c.h.b16 %v5385
        %v8210 = vunpack.c.l.b16 %v5386
        %v8211 = vunpack.c.h.b16 %v5386
        %v8212 = vunpack.c.l.b16 %v5387
        %v8213 = vunpack.c.h.b16 %v5387
        %v8214 = vunpack.c.l.b16 %v5388
        %v8215 = vunpack.c.h.b16 %v5388
        %v8216 = vunpack.c.l.b16 %v5389
        %v8217 = vunpack.c.h.b16 %v5389
        %v8218 = vunpack.c.l.b16 %v5390
        %v8219 = vunpack.c.h.b16 %v5390
        %v8220 = vunpack.c.l.b16 %v5391
        %v8221 = vunpack.c.h.b16 %v5391
        %v8222 = vunpack.c.l.b16 %v5392
        %v8223 = vunpack.c.h.b16 %v5392
        %v8224 = vunpack.c.l.b16 %v5393
        %v8225 = vunpack.c.h.b16 %v5393
        %v8226 = vunpack.c.l.b16 %v5394
        %v8227 = vunpack.c.h.b16 %v5394
        %v8228 = vunpack.c.l.b16 %v5395
        %v8229 = vunpack.c.h.b16 %v5395
        %v8230 = vunpack.c.l.b16 %v5396
        %v8231 = vunpack.c.h.b16 %v5396
        %v8232 = vunpack.c.l.b16 %v5397
        %v8233 = vunpack.c.h.b16 %v5397
        %v8234 = vunpack.c.l.b16 %v5398
        %v8235 = vunpack.c.h.b16 %v5398
        %v8236 = vunpack.c.l.b16 %v5399
        %v8237 = vunpack.c.h.b16 %v5399
        %v8238 = vunpack.c.l.b16 %v5400
        %v8239 = vunpack.c.h.b16 %v5400
        %v8240 = vunpack.c.l.b16 %v5401
        %v8241 = vunpack.c.h.b16 %v5401
        %v8242 = vunpack.c.l.b16 %v5402
        %v8243 = vunpack.c.h.b16 %v5402
        %v8244 = vunpack.c.l.b16 %v5403
        %v8245 = vunpack.c.h.b16 %v5403
        %v8246 = vunpack.c.l.b16 %v5404
        %v8247 = vunpack.c.h.b16 %v5404
        %v8248 = vunpack.c.l.b16 %v5405
        %v8249 = vunpack.c.h.b16 %v5405
        %v8250 = vunpack.c.l.b16 %v5406
        %v8251 = vunpack.c.h.b16 %v5406
        %v8252 = vunpack.c.l.b16 %v5407
        %v8253 = vunpack.c.h.b16 %v5407
        %v8254 = vunpack.c.l.b16 %v5408
        %v8255 = vunpack.c.h.b16 %v5408
        %v8256 = vunpack.c.l.b16 %v5409
        %v8257 = vunpack.c.h.b16 %v5409
        %v8258 = vunpack.c.l.b16 %v5410
        %v8259 = vunpack.c.h.b16 %v5410
        %v8260 = vunpack.c.l.b16 %v5411
        %v8261 = vunpack.c.h.b16 %v5411
        %v8262 = vunpack.c.l.b16 %v5412
        %v8263 = vunpack.c.h.b16 %v5412
        %v8264 = vunpack.c.l.b16 %v5413
        %v8265 = vunpack.c.h.b16 %v5413
        %v8266 = vunpack.c.l.b16 %v5414
        %v8267 = vunpack.c.h.b16 %v5414
        %v8268 = vunpack.c.l.b16 %v5415
        %v8269 = vunpack.c.h.b16 %v5415
        %v8270 = vunpack.c.l.b16 %v5416
        %v8271 = vunpack.c.h.b16 %v5416
        %v8272 = vunpack.c.l.b16 %v5417
        %v8273 = vunpack.c.h.b16 %v5417
        %v8274 = vunpack.c.l.b16 %v5418
        %v8275 = vunpack.c.h.b16 %v5418
        %v8276 = vunpack.c.l.b16 %v5419
        %v8277 = vunpack.c.h.b16 %v5419
        %v8278 = vunpack.c.l.b16 %v5420
        %v8279 = vunpack.c.h.b16 %v5420
        %v8280 = vunpack.c.l.b16 %v5421
        %v8281 = vunpack.c.h.b16 %v5421
        %v8282 = vunpack.c.l.b16 %v5422
        %v8283 = vunpack.c.h.b16 %v5422
        %v8284 = vunpack.c.l.b16 %v5423
        %v8285 = vunpack.c.h.b16 %v5423
        %v8286 = vunpack.c.l.b16 %v5424
        %v8287 = vunpack.c.h.b16 %v5424
        %v8288 = vunpack.c.l.b16 %v5425
        %v8289 = vunpack.c.h.b16 %v5425
        %v8290 = vunpack.c.l.b16 %v5426
        %v8291 = vunpack.c.h.b16 %v5426
        %v8292 = vunpack.c.l.b16 %v5427
        %v8293 = vunpack.c.h.b16 %v5427
        %v8294 = vunpack.c.l.b16 %v5428
        %v8295 = vunpack.c.h.b16 %v5428
        %v8296 = vunpack.c.l.b16 %v5429
        %v8297 = vunpack.c.h.b16 %v5429
        %v8298 = vunpack.c.l.b16 %v5430
        %v8299 = vunpack.c.h.b16 %v5430
        %v8300 = vunpack.c.l.b16 %v5431
        %v8301 = vunpack.c.h.b16 %v5431
        %v8302 = vunpack.c.l.b16 %v5432
        %v8303 = vunpack.c.h.b16 %v5432
        %v8304 = vunpack.c.l.b16 %v5433
        %v8305 = vunpack.c.h.b16 %v5433
        %v8306 = vunpack.c.l.b16 %v5434
        %v8307 = vunpack.c.h.b16 %v5434
        %v8308 = vunpack.c.l.b16 %v5435
        %v8309 = vunpack.c.h.b16 %v5435
        %v8310 = vunpack.c.l.b16 %v5436
        %v8311 = vunpack.c.h.b16 %v5436
        %v8312 = vunpack.c.l.b16 %v5437
        %v8313 = vunpack.c.h.b16 %v5437
        %v8314 = vunpack.c.l.b16 %v5438
        %v8315 = vunpack.c.h.b16 %v5438
        %v8316 = vunpack.c.l.b16 %v5439
        %v8317 = vunpack.c.h.b16 %v5439
        %v8318 = vunpack.c.l.b16 %v5440
        %v8319 = vunpack.c.h.b16 %v5440
        %v8320 = vunpack.c.l.b16 %v5441
        %v8321 = vunpack.c.h.b16 %v5441
        %v8322 = vunpack.c.l.b16 %v5442
        %v8323 = vunpack.c.h.b16 %v5442
        %v8324 = vunpack.c.l.b16 %v5443
        %v8325 = vunpack.c.h.b16 %v5443
        %v8326 = vunpack.c.l.b16 %v5444
        %v8327 = vunpack.c.h.b16 %v5444
        %v8328 = vunpack.c.l.b16 %v5445
        %v8329 = vunpack.c.h.b16 %v5445
        %v8330 = vunpack.c.l.b16 %v5446
        %v8331 = vunpack.c.h.b16 %v5446
        %v8332 = vunpack.c.l.b16 %v5447
        %v8333 = vunpack.c.h.b16 %v5447
        %v8334 = vunpack.c.l.b16 %v5448
        %v8335 = vunpack.c.h.b16 %v5448
        %v8336 = vunpack.c.l.b16 %v5449
        %v8337 = vunpack.c.h.b16 %v5449
        %v8338 = vunpack.c.l.b16 %v5450
        %v8339 = vunpack.c.h.b16 %v5450
        %v8340 = vunpack.c.l.b16 %v5451
        %v8341 = vunpack.c.h.b16 %v5451
        %v8342 = vunpack.c.l.b16 %v5452
        %v8343 = vunpack.c.h.b16 %v5452
        %v8344 = vunpack.c.l.b16 %v5453
        %v8345 = vunpack.c.h.b16 %v5453
        %v8346 = vunpack.c.l.b16 %v5454
        %v8347 = vunpack.c.h.b16 %v5454
        %v8348 = vunpack.c.l.b16 %v5455
        %v8349 = vunpack.c.h.b16 %v5455
        %v8350 = vunpack.c.l.b16 %v5456
        %v8351 = vunpack.c.h.b16 %v5456
        %v8352 = vunpack.c.l.b16 %v5457
        %v8353 = vunpack.c.h.b16 %v5457
        %v8354 = vunpack.c.l.b16 %v5458
        %v8355 = vunpack.c.h.b16 %v5458
        %v8356 = vunpack.c.l.b16 %v5459
        %v8357 = vunpack.c.h.b16 %v5459
        %v8358 = vunpack.c.l.b16 %v5460
        %v8359 = vunpack.c.h.b16 %v5460
        %v8360 = vunpack.c.l.b16 %v5461
        %v8361 = vunpack.c.h.b16 %v5461
        %v8362 = vunpack.c.l.b16 %v5462
        %v8363 = vunpack.c.h.b16 %v5462
        %v8364 = vunpack.c.l.b16 %v5463
        %v8365 = vunpack.c.h.b16 %v5463
        %v8366 = vunpack.c.l.b16 %v5464
        %v8367 = vunpack.c.h.b16 %v5464
        %v8368 = vunpack.c.l.b16 %v5465
        %v8369 = vunpack.c.h.b16 %v5465
        %v8370 = vunpack.c.l.b16 %v5466
        %v8371 = vunpack.c.h.b16 %v5466
        %v8372 = vunpack.c.l.b16 %v5467
        %v8373 = vunpack.c.h.b16 %v5467
        %v8374 = vunpack.c.l.b16 %v5468
        %v8375 = vunpack.c.h.b16 %v5468
        %v8376 = vunpack.c.l.b16 %v5469
        %v8377 = vunpack.c.h.b16 %v5469
        %v8378 = vunpack.c.l.b16 %v5470
        %v8379 = vunpack.c.h.b16 %v5470
        %v8380 = vunpack.c.l.b16 %v5471
        %v8381 = vunpack.c.h.b16 %v5471
        %v8382 = vunpack.c.l.b16 %v5472
        %v8383 = vunpack.c.h.b16 %v5472
        %v8384 = vunpack.c.l.b16 %v5473
        %v8385 = vunpack.c.h.b16 %v5473
        %v8386 = vunpack.c.l.b16 %v5474
        %v8387 = vunpack.c.h.b16 %v5474
        %v8388 = vunpack.c.l.b16 %v5475
        %v8389 = vunpack.c.h.b16 %v5475
        %v8390 = vunpack.c.l.b16 %v5476
        %v8391 = vunpack.c.h.b16 %v5476
        %v8392 = vunpack.c.l.b16 %v5477
        %v8393 = vunpack.c.h.b16 %v5477
        %v8394 = vunpack.c.l.b16 %v5478
        %v8395 = vunpack.c.h.b16 %v5478
        %v8396 = vunpack.c.l.b16 %v5479
        %v8397 = vunpack.c.h.b16 %v5479
        %v8398 = vunpack.c.l.b16 %v5480
        %v8399 = vunpack.c.h.b16 %v5480
        %v8400 = vunpack.c.l.b16 %v5481
        %v8401 = vunpack.c.h.b16 %v5481
        %v8402 = vunpack.c.l.b16 %v5482
        %v8403 = vunpack.c.h.b16 %v5482
        %v8404 = vunpack.c.l.b16 %v5483
        %v8405 = vunpack.c.h.b16 %v5483
        %v8406 = vunpack.c.l.b16 %v5484
        %v8407 = vunpack.c.h.b16 %v5484
        %v8408 = vunpack.c.l.b16 %v5485
        %v8409 = vunpack.c.h.b16 %v5485
        %v8410 = vunpack.c.l.b16 %v5486
        %v8411 = vunpack.c.h.b16 %v5486
        %v8412 = vunpack.c.l.b16 %v5487
        %v8413 = vunpack.c.h.b16 %v5487
        %v8414 = vunpack.c.l.b16 %v5488
        %v8415 = vunpack.c.h.b16 %v5488
        %v8416 = vunpack.c.l.b16 %v5489
        %v8417 = vunpack.c.h.b16 %v5489
        %v8418 = vunpack.c.l.b16 %v5490
        %v8419 = vunpack.c.h.b16 %v5490
        %v8420 = vunpack.c.l.b16 %v5491
        %v8421 = vunpack.c.h.b16 %v5491
        %v8422 = vunpack.c.l.b16 %v5492
        %v8423 = vunpack.c.h.b16 %v5492
        %v8424 = vunpack.c.l.b16 %v5493
        %v8425 = vunpack.c.h.b16 %v5493
        %v8426 = vunpack.c.l.b16 %v5494
        %v8427 = vunpack.c.h.b16 %v5494
        %v8428 = vunpack.c.l.b16 %v5495
        %v8429 = vunpack.c.h.b16 %v5495
        %v8430 = vunpack.c.l.b16 %v5496
        %v8431 = vunpack.c.h.b16 %v5496
        %v8432 = vunpack.c.l.b16 %v5497
        %v8433 = vunpack.c.h.b16 %v5497
        %v8434 = vunpack.c.l.b16 %v5498
        %v8435 = vunpack.c.h.b16 %v5498
        %v8436 = vunpack.c.l.b16 %v5499
        %v8437 = vunpack.c.h.b16 %v5499
        %v8438 = vunpack.c.l.b16 %v5500
        %v8439 = vunpack.c.h.b16 %v5500
        %v8440 = vunpack.c.l.b16 %v5501
        %v8441 = vunpack.c.h.b16 %v5501
        %v8442 = vunpack.c.l.b16 %v5502
        %v8443 = vunpack.c.h.b16 %v5502
        %v8444 = vunpack.c.l.b16 %v5503
        %v8445 = vunpack.c.h.b16 %v5503
        %v8446 = vunpack.c.l.b16 %v5504
        %v8447 = vunpack.c.h.b16 %v5504
        %v8448 = vunpack.c.l.b16 %v5505
        %v8449 = vunpack.c.h.b16 %v5505
        %v8450 = vunpack.c.l.b16 %v5506
        %v8451 = vunpack.c.h.b16 %v5506
        %v8452 = vunpack.c.l.b16 %v5507
        %v8453 = vunpack.c.h.b16 %v5507
        %v8454 = vunpack.c.l.b16 %v5508
        %v8455 = vunpack.c.h.b16 %v5508
        %v8456 = vunpack.c.l.b16 %v5509
        %v8457 = vunpack.c.h.b16 %v5509
        %v8458 = vunpack.c.l.b16 %v5510
        %v8459 = vunpack.c.h.b16 %v5510
        %v8460 = vunpack.c.l.b16 %v5511
        %v8461 = vunpack.c.h.b16 %v5511
        %v8462 = vunpack.c.l.b16 %v5512
        %v8463 = vunpack.c.h.b16 %v5512
        %v8464 = vunpack.c.l.b16 %v5513
        %v8465 = vunpack.c.h.b16 %v5513
        %v8466 = vunpack.c.l.b16 %v5514
        %v8467 = vunpack.c.h.b16 %v5514
        %v8468 = vunpack.c.l.b16 %v5515
        %v8469 = vunpack.c.h.b16 %v5515
        %v8470 = vunpack.c.l.b16 %v5516
        %v8471 = vunpack.c.h.b16 %v5516
        %v8472 = vunpack.c.l.b16 %v5517
        %v8473 = vunpack.c.h.b16 %v5517
        %v8474 = vunpack.c.l.b16 %v5518
        %v8475 = vunpack.c.h.b16 %v5518
        %v8476 = vunpack.c.l.b16 %v5519
        %v8477 = vunpack.c.h.b16 %v5519
        %v8478 = vunpack.c.l.b16 %v5520
        %v8479 = vunpack.c.h.b16 %v5520
        %v8480 = vunpack.c.l.b16 %v5521
        %v8481 = vunpack.c.h.b16 %v5521
        %v8482 = vunpack.c.l.b16 %v5522
        %v8483 = vunpack.c.h.b16 %v5522
        %v8484 = vunpack.c.l.b16 %v5523
        %v8485 = vunpack.c.h.b16 %v5523
        %v8486 = vunpack.c.l.b16 %v5524
        %v8487 = vunpack.c.h.b16 %v5524
        %v8488 = vunpack.c.l.b16 %v5525
        %v8489 = vunpack.c.h.b16 %v5525
        %v8490 = vunpack.c.l.b16 %v5526
        %v8491 = vunpack.c.h.b16 %v5526
        %v8492 = vunpack.c.l.b16 %v5527
        %v8493 = vunpack.c.h.b16 %v5527
        %v8494 = vunpack.c.l.b16 %v5528
        %v8495 = vunpack.c.h.b16 %v5528
        %v8496 = vunpack.c.l.b16 %v5529
        %v8497 = vunpack.c.h.b16 %v5529
        %v8498 = vunpack.c.l.b16 %v5530
        %v8499 = vunpack.c.h.b16 %v5530
        %v8500 = vunpack.c.l.b16 %v5531
        %v8501 = vunpack.c.h.b16 %v5531
        %v8502 = vunpack.c.l.b16 %v5532
        %v8503 = vunpack.c.h.b16 %v5532
        %v8504 = vunpack.c.l.b16 %v5533
        %v8505 = vunpack.c.h.b16 %v5533
        %v8506 = vunpack.c.l.b16 %v5534
        %v8507 = vunpack.c.h.b16 %v5534
        %v8508 = vunpack.c.l.b16 %v5535
        %v8509 = vunpack.c.h.b16 %v5535
        %v8510 = vunpack.c.l.b16 %v5536
        %v8511 = vunpack.c.h.b16 %v5536
        %v8512 = vunpack.c.l.b16 %v5537
        %v8513 = vunpack.c.h.b16 %v5537
        %v8514 = vunpack.c.l.b16 %v5538
        %v8515 = vunpack.c.h.b16 %v5538
        %v8516 = vpack.c.b16 %v6534, %v6532
        %v8517 = vpack.c.b16 %v6535, %v6533
        %v8518 = vpack.c.b16 %v6538, %v6536
        %v8519 = vpack.c.b16 %v6539, %v6537
        %v8520 = vpack.c.b16 %v6542, %v6540
        %v8521 = vpack.c.b16 %v6543, %v6541
        %v8522 = vpack.c.b16 %v6546, %v6544
        %v8523 = vpack.c.b16 %v6547, %v6545
        %v8524 = vpack.c.b16 %v6550, %v6548
        %v8525 = vpack.c.b16 %v6551, %v6549
        %v8526 = vpack.c.b16 %v6554, %v6552
        %v8527 = vpack.c.b16 %v6555, %v6553
        %v8528 = vpack.c.b16 %v6558, %v6556
        %v8529 = vpack.c.b16 %v6559, %v6557
        %v8530 = vpack.c.b16 %v6562, %v6560
        %v8531 = vpack.c.b16 %v6563, %v6561
        %v8532 = vpack.c.b16 %v6566, %v6564
        %v8533 = vpack.c.b16 %v6567, %v6565
        %v8534 = vpack.c.b16 %v6570, %v6568
        %v8535 = vpack.c.b16 %v6571, %v6569
        %v8536 = vpack.c.b16 %v6574, %v6572
        %v8537 = vpack.c.b16 %v6575, %v6573
        %v8538 = vpack.c.b16 %v6578, %v6576
        %v8539 = vpack.c.b16 %v6579, %v6577
        %v8540 = vpack.c.b16 %v6582, %v6580
        %v8541 = vpack.c.b16 %v6583, %v6581
        %v8542 = vpack.c.b16 %v6586, %v6584
        %v8543 = vpack.c.b16 %v6587, %v6585
        %v8544 = vpack.c.b16 %v6590, %v6588
        %v8545 = vpack.c.b16 %v6591, %v6589
        %v8546 = vpack.c.b16 %v6594, %v6592
        %v8547 = vpack.c.b16 %v6595, %v6593
        %v8548 = vpack.c.b16 %v6598, %v6596
        %v8549 = vpack.c.b16 %v6599, %v6597
        %v8550 = vpack.c.b16 %v6602, %v6600
        %v8551 = vpack.c.b16 %v6603, %v6601
        %v8552 = vpack.c.b16 %v6606, %v6604
        %v8553 = vpack.c.b16 %v6607, %v6605
        %v8554 = vpack.c.b16 %v6610, %v6608
        %v8555 = vpack.c.b16 %v6611, %v6609
        %v8556 = vpack.c.b16 %v6614, %v6612
        %v8557 = vpack.c.b16 %v6615, %v6613
        %v8558 = vpack.c.b16 %v6618, %v6616
        %v8559 = vpack.c.b16 %v6619, %v6617
        %v8560 = vpack.c.b16 %v6622, %v6620
        %v8561 = vpack.c.b16 %v6623, %v6621
        %v8562 = vpack.c.b16 %v6626, %v6624
        %v8563 = vpack.c.b16 %v6627, %v6625
        %v8564 = vpack.c.b16 %v6630, %v6628
        %v8565 = vpack.c.b16 %v6631, %v6629
        %v8566 = vpack.c.b16 %v6634, %v6632
        %v8567 = vpack.c.b16 %v6635, %v6633
        %v8568 = vpack.c.b16 %v6638, %v6636
        %v8569 = vpack.c.b16 %v6639, %v6637
        %v8570 = vpack.c.b16 %v6642, %v6640
        %v8571 = vpack.c.b16 %v6643, %v6641
        %v8572 = vpack.c.b16 %v6646, %v6644
        %v8573 = vpack.c.b16 %v6647, %v6645
        %v8574 = vpack.c.b16 %v6650, %v6648
        %v8575 = vpack.c.b16 %v6651, %v6649
        %v8576 = vpack.c.b16 %v6654, %v6652
        %v8577 = vpack.c.b16 %v6655, %v6653
        %v8578 = vpack.c.b16 %v6658, %v6656
        %v8579 = vpack.c.b16 %v6659, %v6657
        %v8580 = vpack.c.b16 %v6662, %v6660
        %v8581 = vpack.c.b16 %v6663, %v6661
        %v8582 = vpack.c.b16 %v6666, %v6664
        %v8583 = vpack.c.b16 %v6667, %v6665
        %v8584 = vpack.c.b16 %v6670, %v6668
        %v8585 = vpack.c.b16 %v6671, %v6669
        %v8586 = vpack.c.b16 %v6674, %v6672
        %v8587 = vpack.c.b16 %v6675, %v6673
        %v8588 = vpack.c.b16 %v6678, %v6676
        %v8589 = vpack.c.b16 %v6679, %v6677
        %v8590 = vpack.c.b16 %v6682, %v6680
        %v8591 = vpack.c.b16 %v6683, %v6681
        %v8592 = vpack.c.b16 %v6686, %v6684
        %v8593 = vpack.c.b16 %v6687, %v6685
        %v8594 = vpack.c.b16 %v6690, %v6688
        %v8595 = vpack.c.b16 %v6691, %v6689
        %v8596 = vpack.c.b16 %v6694, %v6692
        %v8597 = vpack.c.b16 %v6695, %v6693
        %v8598 = vpack.c.b16 %v6698, %v6696
        %v8599 = vpack.c.b16 %v6699, %v6697
        %v8600 = vpack.c.b16 %v6702, %v6700
        %v8601 = vpack.c.b16 %v6703, %v6701
        %v8602 = vpack.c.b16 %v6706, %v6704
        %v8603 = vpack.c.b16 %v6707, %v6705
        %v8604 = vpack.c.b16 %v6710, %v6708
        %v8605 = vpack.c.b16 %v6711, %v6709
        %v8606 = vpack.c.b16 %v6714, %v6712
        %v8607 = vpack.c.b16 %v6715, %v6713
        %v8608 = vpack.c.b16 %v6718, %v6716
        %v8609 = vpack.c.b16 %v6719, %v6717
        %v8610 = vpack.c.b16 %v6722, %v6720
        %v8611 = vpack.c.b16 %v6723, %v6721
        %v8612 = vpack.c.b16 %v6726, %v6724
        %v8613 = vpack.c.b16 %v6727, %v6725
        %v8614 = vpack.c.b16 %v6730, %v6728
        %v8615 = vpack.c.b16 %v6731, %v6729
        %v8616 = vpack.c.b16 %v6734, %v6732
        %v8617 = vpack.c.b16 %v6735, %v6733
        %v8618 = vpack.c.b16 %v6738, %v6736
        %v8619 = vpack.c.b16 %v6739, %v6737
        %v8620 = vpack.c.b16 %v6742, %v6740
        %v8621 = vpack.c.b16 %v6743, %v6741
        %v8622 = vpack.c.b16 %v6746, %v6744
        %v8623 = vpack.c.b16 %v6747, %v6745
        %v8624 = vpack.c.b16 %v6750, %v6748
        %v8625 = vpack.c.b16 %v6751, %v6749
        %v8626 = vpack.c.b16 %v6754, %v6752
        %v8627 = vpack.c.b16 %v6755, %v6753
        %v8628 = vpack.c.b16 %v6758, %v6756
        %v8629 = vpack.c.b16 %v6759, %v6757
        %v8630 = vpack.c.b16 %v6762, %v6760
        %v8631 = vpack.c.b16 %v6763, %v6761
        %v8632 = vpack.c.b16 %v6766, %v6764
        %v8633 = vpack.c.b16 %v6767, %v6765
        %v8634 = vpack.c.b16 %v6770, %v6768
        %v8635 = vpack.c.b16 %v6771, %v6769
        %v8636 = vpack.c.b16 %v6774, %v6772
        %v8637 = vpack.c.b16 %v6775, %v6773
        %v8638 = vpack.c.b16 %v6778, %v6776
        %v8639 = vpack.c.b16 %v6779, %v6777
        %v8640 = vpack.c.b16 %v6782, %v6780
        %v8641 = vpack.c.b16 %v6783, %v6781
        %v8642 = vpack.c.b16 %v6786, %v6784
        %v8643 = vpack.c.b16 %v6787, %v6785
        %v8644 = vpack.c.b16 %v6790, %v6788
        %v8645 = vpack.c.b16 %v6791, %v6789
        %v8646 = vpack.c.b16 %v6794, %v6792
        %v8647 = vpack.c.b16 %v6795, %v6793
        %v8648 = vpack.c.b16 %v6798, %v6796
        %v8649 = vpack.c.b16 %v6799, %v6797
        %v8650 = vpack.c.b16 %v6802, %v6800
        %v8651 = vpack.c.b16 %v6803, %v6801
        %v8652 = vpack.c.b16 %v6806, %v6804
        %v8653 = vpack.c.b16 %v6807, %v6805
        %v8654 = vpack.c.b16 %v6810, %v6808
        %v8655 = vpack.c.b16 %v6811, %v6809
        %v8656 = vpack.c.b16 %v6814, %v6812
        %v8657 = vpack.c.b16 %v6815, %v6813
        %v8658 = vpack.c.b16 %v6818, %v6816
        %v8659 = vpack.c.b16 %v6819, %v6817
        %v8660 = vpack.c.b16 %v6822, %v6820
        %v8661 = vpack.c.b16 %v6823, %v6821
        %v8662 = vpack.c.b16 %v6826, %v6824
        %v8663 = vpack.c.b16 %v6827, %v6825
        %v8664 = vpack.c.b16 %v6830, %v6828
        %v8665 = vpack.c.b16 %v6831, %v6829
        %v8666 = vpack.c.b16 %v6834, %v6832
        %v8667 = vpack.c.b16 %v6835, %v6833
        %v8668 = vpack.c.b16 %v6838, %v6836
        %v8669 = vpack.c.b16 %v6839, %v6837
        %v8670 = vpack.c.b16 %v6842, %v6840
        %v8671 = vpack.c.b16 %v6843, %v6841
        %v8672 = vpack.c.b16 %v6846, %v6844
        %v8673 = vpack.c.b16 %v6847, %v6845
        %v8674 = vpack.c.b16 %v6850, %v6848
        %v8675 = vpack.c.b16 %v6851, %v6849
        %v8676 = vpack.c.b16 %v6854, %v6852
        %v8677 = vpack.c.b16 %v6855, %v6853
        %v8678 = vpack.c.b16 %v6858, %v6856
        %v8679 = vpack.c.b16 %v6859, %v6857
        %v8680 = vpack.c.b16 %v6862, %v6860
        %v8681 = vpack.c.b16 %v6863, %v6861
        %v8682 = vpack.c.b16 %v6866, %v6864
        %v8683 = vpack.c.b16 %v6867, %v6865
        %v8684 = vpack.c.b16 %v6870, %v6868
        %v8685 = vpack.c.b16 %v6871, %v6869
        %v8686 = vpack.c.b16 %v6874, %v6872
        %v8687 = vpack.c.b16 %v6875, %v6873
        %v8688 = vpack.c.b16 %v6878, %v6876
        %v8689 = vpack.c.b16 %v6879, %v6877
        %v8690 = vpack.c.b16 %v6882, %v6880
        %v8691 = vpack.c.b16 %v6883, %v6881
        %v8692 = vpack.c.b16 %v6886, %v6884
        %v8693 = vpack.c.b16 %v6887, %v6885
        %v8694 = vpack.c.b16 %v6890, %v6888
        %v8695 = vpack.c.b16 %v6891, %v6889
        %v8696 = vpack.c.b16 %v6894, %v6892
        %v8697 = vpack.c.b16 %v6895, %v6893
        %v8698 = vpack.c.b16 %v6898, %v6896
        %v8699 = vpack.c.b16 %v6899, %v6897
        %v8700 = vpack.c.b16 %v6902, %v6900
        %v8701 = vpack.c.b16 %v6903, %v6901
        %v8702 = vpack.c.b16 %v6906, %v6904
        %v8703 = vpack.c.b16 %v6907, %v6905
        %v8704 = vpack.c.b16 %v6910, %v6908
        %v8705 = vpack.c.b16 %v6911, %v6909
        %v8706 = vpack.c.b16 %v6914, %v6912
        %v8707 = vpack.c.b16 %v6915, %v6913
        %v8708 = vpack.c.b16 %v6918, %v6916
        %v8709 = vpack.c.b16 %v6919, %v6917
        %v8710 = vpack.c.b16 %v6922, %v6920
        %v8711 = vpack.c.b16 %v6923, %v6921
        %v8712 = vpack.c.b16 %v6926, %v6924
        %v8713 = vpack.c.b16 %v6927, %v6925
        %v8714 = vpack.c.b16 %v6930, %v6928
        %v8715 = vpack.c.b16 %v6931, %v6929
        %v8716 = vpack.c.b16 %v6934, %v6932
        %v8717 = vpack.c.b16 %v6935, %v6933
        %v8718 = vpack.c.b16 %v6938, %v6936
        %v8719 = vpack.c.b16 %v6939, %v6937
        %v8720 = vpack.c.b16 %v6942, %v6940
        %v8721 = vpack.c.b16 %v6943, %v6941
        %v8722 = vpack.c.b16 %v6946, %v6944
        %v8723 = vpack.c.b16 %v6947, %v6945
        %v8724 = vpack.c.b16 %v6950, %v6948
        %v8725 = vpack.c.b16 %v6951, %v6949
        %v8726 = vpack.c.b16 %v6954, %v6952
        %v8727 = vpack.c.b16 %v6955, %v6953
        %v8728 = vpack.c.b16 %v6958, %v6956
        %v8729 = vpack.c.b16 %v6959, %v6957
        %v8730 = vpack.c.b16 %v6962, %v6960
        %v8731 = vpack.c.b16 %v6963, %v6961
        %v8732 = vpack.c.b16 %v6966, %v6964
        %v8733 = vpack.c.b16 %v6967, %v6965
        %v8734 = vpack.c.b16 %v6970, %v6968
        %v8735 = vpack.c.b16 %v6971, %v6969
        %v8736 = vpack.c.b16 %v6974, %v6972
        %v8737 = vpack.c.b16 %v6975, %v6973
        %v8738 = vpack.c.b16 %v6978, %v6976
        %v8739 = vpack.c.b16 %v6979, %v6977
        %v8740 = vpack.c.b16 %v6982, %v6980
        %v8741 = vpack.c.b16 %v6983, %v6981
        %v8742 = vpack.c.b16 %v6986, %v6984
        %v8743 = vpack.c.b16 %v6987, %v6985
        %v8744 = vpack.c.b16 %v6990, %v6988
        %v8745 = vpack.c.b16 %v6991, %v6989
        %v8746 = vpack.c.b16 %v6994, %v6992
        %v8747 = vpack.c.b16 %v6995, %v6993
        %v8748 = vpack.c.b16 %v6998, %v6996
        %v8749 = vpack.c.b16 %v6999, %v6997
        %v8750 = vpack.c.b16 %v7002, %v7000
        %v8751 = vpack.c.b16 %v7003, %v7001
        %v8752 = vpack.c.b16 %v7006, %v7004
        %v8753 = vpack.c.b16 %v7007, %v7005
        %v8754 = vpack.c.b16 %v7010, %v7008
        %v8755 = vpack.c.b16 %v7011, %v7009
        %v8756 = vpack.c.b16 %v7014, %v7012
        %v8757 = vpack.c.b16 %v7015, %v7013
        %v8758 = vpack.c.b16 %v7018, %v7016
        %v8759 = vpack.c.b16 %v7019, %v7017
        %v8760 = vpack.c.b16 %v7022, %v7020
        %v8761 = vpack.c.b16 %v7023, %v7021
        %v8762 = vpack.c.b16 %v7026, %v7024
        %v8763 = vpack.c.b16 %v7027, %v7025
        %v8764 = vpack.c.b16 %v7030, %v7028
        %v8765 = vpack.c.b16 %v7031, %v7029
        %v8766 = vpack.c.b16 %v7034, %v7032
        %v8767 = vpack.c.b16 %v7035, %v7033
        %v8768 = vpack.c.b16 %v7038, %v7036
        %v8769 = vpack.c.b16 %v7039, %v7037
        %v8770 = vpack.c.b16 %v7042, %v7040
        %v8771 = vpack.c.b16 %v7043, %v7041
        %v8772 = vpack.c.b16 %v7046, %v7044
        %v8773 = vpack.c.b16 %v7047, %v7045
        %v8774 = vpack.c.b16 %v7050, %v7048
        %v8775 = vpack.c.b16 %v7051, %v7049
        %v8776 = vpack.c.b16 %v7054, %v7052
        %v8777 = vpack.c.b16 %v7055, %v7053
        %v8778 = vpack.c.b16 %v7058, %v7056
        %v8779 = vpack.c.b16 %v7059, %v7057
        %v8780 = vpack.c.b16 %v7062, %v7060
        %v8781 = vpack.c.b16 %v7063, %v7061
        %v8782 = vpack.c.b16 %v7066, %v7064
        %v8783 = vpack.c.b16 %v7067, %v7065
        %v8784 = vpack.c.b16 %v7070, %v7068
        %v8785 = vpack.c.b16 %v7071, %v7069
        %v8786 = vpack.c.b16 %v7074, %v7072
        %v8787 = vpack.c.b16 %v7075, %v7073
        %v8788 = vpack.c.b16 %v7078, %v7076
        %v8789 = vpack.c.b16 %v7079, %v7077
        %v8790 = vpack.c.b16 %v7082, %v7080
        %v8791 = vpack.c.b16 %v7083, %v7081
        %v8792 = vpack.c.b16 %v7086, %v7084
        %v8793 = vpack.c.b16 %v7087, %v7085
        %v8794 = vpack.c.b16 %v7090, %v7088
        %v8795 = vpack.c.b16 %v7091, %v7089
        %v8796 = vpack.c.b16 %v7094, %v7092
        %v8797 = vpack.c.b16 %v7095, %v7093
        %v8798 = vpack.c.b16 %v7098, %v7096
        %v8799 = vpack.c.b16 %v7099, %v7097
        %v8800 = vpack.c.b16 %v7102, %v7100
        %v8801 = vpack.c.b16 %v7103, %v7101
        %v8802 = vpack.c.b16 %v7106, %v7104
        %v8803 = vpack.c.b16 %v7107, %v7105
        %v8804 = vpack.c.b16 %v7110, %v7108
        %v8805 = vpack.c.b16 %v7111, %v7109
        %v8806 = vpack.c.b16 %v7114, %v7112
        %v8807 = vpack.c.b16 %v7115, %v7113
        %v8808 = vpack.c.b16 %v7118, %v7116
        %v8809 = vpack.c.b16 %v7119, %v7117
        %v8810 = vpack.c.b16 %v7122, %v7120
        %v8811 = vpack.c.b16 %v7123, %v7121
        %v8812 = vpack.c.b16 %v7126, %v7124
        %v8813 = vpack.c.b16 %v7127, %v7125
        %v8814 = vpack.c.b16 %v7130, %v7128
        %v8815 = vpack.c.b16 %v7131, %v7129
        %v8816 = vpack.c.b16 %v7134, %v7132
        %v8817 = vpack.c.b16 %v7135, %v7133
        %v8818 = vpack.c.b16 %v7138, %v7136
        %v8819 = vpack.c.b16 %v7139, %v7137
        %v8820 = vpack.c.b16 %v7142, %v7140
        %v8821 = vpack.c.b16 %v7143, %v7141
        %v8822 = vpack.c.b16 %v7146, %v7144
        %v8823 = vpack.c.b16 %v7147, %v7145
        %v8824 = vpack.c.b16 %v7150, %v7148
        %v8825 = vpack.c.b16 %v7151, %v7149
        %v8826 = vpack.c.b16 %v7154, %v7152
        %v8827 = vpack.c.b16 %v7155, %v7153
        %v8828 = vpack.c.b16 %v7158, %v7156
        %v8829 = vpack.c.b16 %v7159, %v7157
        %v8830 = vpack.c.b16 %v7162, %v7160
        %v8831 = vpack.c.b16 %v7163, %v7161
        %v8832 = vpack.c.b16 %v7166, %v7164
        %v8833 = vpack.c.b16 %v7167, %v7165
        %v8834 = vpack.c.b16 %v7170, %v7168
        %v8835 = vpack.c.b16 %v7171, %v7169
        %v8836 = vpack.c.b16 %v7174, %v7172
        %v8837 = vpack.c.b16 %v7175, %v7173
        %v8838 = vpack.c.b16 %v7178, %v7176
        %v8839 = vpack.c.b16 %v7179, %v7177
        %v8840 = vpack.c.b16 %v7182, %v7180
        %v8841 = vpack.c.b16 %v7183, %v7181
        %v8842 = vpack.c.b16 %v7186, %v7184
        %v8843 = vpack.c.b16 %v7187, %v7185
        %v8844 = vpack.c.b16 %v7190, %v7188
        %v8845 = vpack.c.b16 %v7191, %v7189
        %v8846 = vpack.c.b16 %v7194, %v7192
        %v8847 = vpack.c.b16 %v7195, %v7193
        %v8848 = vpack.c.b16 %v7198, %v7196
        %v8849 = vpack.c.b16 %v7199, %v7197
        %v8850 = vpack.c.b16 %v7202, %v7200
        %v8851 = vpack.c.b16 %v7203, %v7201
        %v8852 = vpack.c.b16 %v7206, %v7204
        %v8853 = vpack.c.b16 %v7207, %v7205
        %v8854 = vpack.c.b16 %v7210, %v7208
        %v8855 = vpack.c.b16 %v7211, %v7209
        %v8856 = vpack.c.b16 %v7214, %v7212
        %v8857 = vpack.c.b16 %v7215, %v7213
        %v8858 = vpack.c.b16 %v7218, %v7216
        %v8859 = vpack.c.b16 %v7219, %v7217
        %v8860 = vpack.c.b16 %v7222, %v7220
        %v8861 = vpack.c.b16 %v7223, %v7221
        %v8862 = vpack.c.b16 %v7226, %v7224
        %v8863 = vpack.c.b16 %v7227, %v7225
        %v8864 = vpack.c.b16 %v7230, %v7228
        %v8865 = vpack.c.b16 %v7231, %v7229
        %v8866 = vpack.c.b16 %v7234, %v7232
        %v8867 = vpack.c.b16 %v7235, %v7233
        %v8868 = vpack.c.b16 %v7238, %v7236
        %v8869 = vpack.c.b16 %v7239, %v7237
        %v8870 = vpack.c.b16 %v7242, %v7240
        %v8871 = vpack.c.b16 %v7243, %v7241
        %v8872 = vpack.c.b16 %v7246, %v7244
        %v8873 = vpack.c.b16 %v7247, %v7245
        %v8874 = vpack.c.b16 %v7250, %v7248
        %v8875 = vpack.c.b16 %v7251, %v7249
        %v8876 = vpack.c.b16 %v7254, %v7252
        %v8877 = vpack.c.b16 %v7255, %v7253
        %v8878 = vpack.c.b16 %v7258, %v7256
        %v8879 = vpack.c.b16 %v7259, %v7257
        %v8880 = vpack.c.b16 %v7262, %v7260
        %v8881 = vpack.c.b16 %v7263, %v7261
        %v8882 = vpack.c.b16 %v7266, %v7264
        %v8883 = vpack.c.b16 %v7267, %v7265
        %v8884 = vpack.c.b16 %v7270, %v7268
        %v8885 = vpack.c.b16 %v7271, %v7269
        %v8886 = vpack.c.b16 %v7274, %v7272
        %v8887 = vpack.c.b16 %v7275, %v7273
        %v8888 = vpack.c.b16 %v7278, %v7276
        %v8889 = vpack.c.b16 %v7279, %v7277
        %v8890 = vpack.c.b16 %v7282, %v7280
        %v8891 = vpack.c.b16 %v7283, %v7281
        %v8892 = vpack.c.b16 %v7286, %v7284
        %v8893 = vpack.c.b16 %v7287, %v7285
        %v8894 = vpack.c.b16 %v7290, %v7288
        %v8895 = vpack.c.b16 %v7291, %v7289
        %v8896 = vpack.c.b16 %v7294, %v7292
        %v8897 = vpack.c.b16 %v7295, %v7293
        %v8898 = vpack.c.b16 %v7298, %v7296
        %v8899 = vpack.c.b16 %v7299, %v7297
        %v8900 = vpack.c.b16 %v7302, %v7300
        %v8901 = vpack.c.b16 %v7303, %v7301
        %v8902 = vpack.c.b16 %v7306, %v7304
        %v8903 = vpack.c.b16 %v7307, %v7305
        %v8904 = vpack.c.b16 %v7310, %v7308
        %v8905 = vpack.c.b16 %v7311, %v7309
        %v8906 = vpack.c.b16 %v7314, %v7312
        %v8907 = vpack.c.b16 %v7315, %v7313
        %v8908 = vpack.c.b16 %v7318, %v7316
        %v8909 = vpack.c.b16 %v7319, %v7317
        %v8910 = vpack.c.b16 %v7322, %v7320
        %v8911 = vpack.c.b16 %v7323, %v7321
        %v8912 = vpack.c.b16 %v7326, %v7324
        %v8913 = vpack.c.b16 %v7327, %v7325
        %v8914 = vpack.c.b16 %v7330, %v7328
        %v8915 = vpack.c.b16 %v7331, %v7329
        %v8916 = vpack.c.b16 %v7334, %v7332
        %v8917 = vpack.c.b16 %v7335, %v7333
        %v8918 = vpack.c.b16 %v7338, %v7336
        %v8919 = vpack.c.b16 %v7339, %v7337
        %v8920 = vpack.c.b16 %v7342, %v7340
        %v8921 = vpack.c.b16 %v7343, %v7341
        %v8922 = vpack.c.b16 %v7346, %v7344
        %v8923 = vpack.c.b16 %v7347, %v7345
        %v8924 = vpack.c.b16 %v7350, %v7348
        %v8925 = vpack.c.b16 %v7351, %v7349
        %v8926 = vpack.c.b16 %v7354, %v7352
        %v8927 = vpack.c.b16 %v7355, %v7353
        %v8928 = vpack.c.b16 %v7358, %v7356
        %v8929 = vpack.c.b16 %v7359, %v7357
        %v8930 = vpack.c.b16 %v7362, %v7360
        %v8931 = vpack.c.b16 %v7363, %v7361
        %v8932 = vpack.c.b16 %v7366, %v7364
        %v8933 = vpack.c.b16 %v7367, %v7365
        %v8934 = vpack.c.b16 %v7370, %v7368
        %v8935 = vpack.c.b16 %v7371, %v7369
        %v8936 = vpack.c.b16 %v7374, %v7372
        %v8937 = vpack.c.b16 %v7375, %v7373
        %v8938 = vpack.c.b16 %v7378, %v7376
        %v8939 = vpack.c.b16 %v7379, %v7377
        %v8940 = vpack.c.b16 %v7382, %v7380
        %v8941 = vpack.c.b16 %v7383, %v7381
        %v8942 = vpack.c.b16 %v7386, %v7384
        %v8943 = vpack.c.b16 %v7387, %v7385
        %v8944 = vpack.c.b16 %v7390, %v7388
        %v8945 = vpack.c.b16 %v7391, %v7389
        %v8946 = vpack.c.b16 %v7394, %v7392
        %v8947 = vpack.c.b16 %v7395, %v7393
        %v8948 = vpack.c.b16 %v7398, %v7396
        %v8949 = vpack.c.b16 %v7399, %v7397
        %v8950 = vpack.c.b16 %v7402, %v7400
        %v8951 = vpack.c.b16 %v7403, %v7401
        %v8952 = vpack.c.b16 %v7406, %v7404
        %v8953 = vpack.c.b16 %v7407, %v7405
        %v8954 = vpack.c.b16 %v7410, %v7408
        %v8955 = vpack.c.b16 %v7411, %v7409
        %v8956 = vpack.c.b16 %v7414, %v7412
        %v8957 = vpack.c.b16 %v7415, %v7413
        %v8958 = vpack.c.b16 %v7418, %v7416
        %v8959 = vpack.c.b16 %v7419, %v7417
        %v8960 = vpack.c.b16 %v7422, %v7420
        %v8961 = vpack.c.b16 %v7423, %v7421
        %v8962 = vpack.c.b16 %v7426, %v7424
        %v8963 = vpack.c.b16 %v7427, %v7425
        %v8964 = vpack.c.b16 %v7430, %v7428
        %v8965 = vpack.c.b16 %v7431, %v7429
        %v8966 = vpack.c.b16 %v7434, %v7432
        %v8967 = vpack.c.b16 %v7435, %v7433
        %v8968 = vpack.c.b16 %v7438, %v7436
        %v8969 = vpack.c.b16 %v7439, %v7437
        %v8970 = vpack.c.b16 %v7442, %v7440
        %v8971 = vpack.c.b16 %v7443, %v7441
        %v8972 = vpack.c.b16 %v7446, %v7444
        %v8973 = vpack.c.b16 %v7447, %v7445
        %v8974 = vpack.c.b16 %v7450, %v7448
        %v8975 = vpack.c.b16 %v7451, %v7449
        %v8976 = vpack.c.b16 %v7454, %v7452
        %v8977 = vpack.c.b16 %v7455, %v7453
        %v8978 = vpack.c.b16 %v7458, %v7456
        %v8979 = vpack.c.b16 %v7459, %v7457
        %v8980 = vpack.c.b16 %v7462, %v7460
        %v8981 = vpack.c.b16 %v7463, %v7461
        %v8982 = vpack.c.b16 %v7466, %v7464
        %v8983 = vpack.c.b16 %v7467, %v7465
        %v8984 = vpack.c.b16 %v7470, %v7468
        %v8985 = vpack.c.b16 %v7471, %v7469
        %v8986 = vpack.c.b16 %v7474, %v7472
        %v8987 = vpack.c.b16 %v7475, %v7473
        %v8988 = vpack.c.b16 %v7478, %v7476
        %v8989 = vpack.c.b16 %v7479, %v7477
        %v8990 = vpack.c.b16 %v7482, %v7480
        %v8991 = vpack.c.b16 %v7483, %v7481
        %v8992 = vpack.c.b16 %v7486, %v7484
        %v8993 = vpack.c.b16 %v7487, %v7485
        %v8994 = vpack.c.b16 %v7490, %v7488
        %v8995 = vpack.c.b16 %v7491, %v7489
        %v8996 = vpack.c.b16 %v7494, %v7492
        %v8997 = vpack.c.b16 %v7495, %v7493
        %v8998 = vpack.c.b16 %v7498, %v7496
        %v8999 = vpack.c.b16 %v7499, %v7497
        %v9000 = vpack.c.b16 %v7502, %v7500
        %v9001 = vpack.c.b16 %v7503, %v7501
        %v9002 = vpack.c.b16 %v7506, %v7504
        %v9003 = vpack.c.b16 %v7507, %v7505
        %v9004 = vpack.c.b16 %v7510, %v7508
        %v9005 = vpack.c.b16 %v7511, %v7509
        %v9006 = vpack.c.b16 %v7514, %v7512
        %v9007 = vpack.c.b16 %v7515, %v7513
        %v9008 = vpack.c.b16 %v7518, %v7516
        %v9009 = vpack.c.b16 %v7519, %v7517
        %v9010 = vpack.c.b16 %v7522, %v7520
        %v9011 = vpack.c.b16 %v7523, %v7521
        %v9012 = vpack.c.b16 %v7526, %v7524
        %v9013 = vpack.c.b16 %v7527, %v7525
        %v9014 = vpack.c.b16 %v7530, %v7528
        %v9015 = vpack.c.b16 %v7531, %v7529
        %v9016 = vpack.c.b16 %v7534, %v7532
        %v9017 = vpack.c.b16 %v7535, %v7533
        %v9018 = vpack.c.b16 %v7538, %v7536
        %v9019 = vpack.c.b16 %v7539, %v7537
        %v9020 = vpack.c.b16 %v7542, %v7540
        %v9021 = vpack.c.b16 %v7543, %v7541
        %v9022 = vpack.c.b16 %v7546, %v7544
        %v9023 = vpack.c.b16 %v7547, %v7545
        %v9024 = vpack.c.b16 %v7550, %v7548
        %v9025 = vpack.c.b16 %v7551, %v7549
        %v9026 = vpack.c.b16 %v7554, %v7552
        %v9027 = vpack.c.b16 %v7555, %v7553
        %v9028 = vpack.c.b16 %v7558, %v7556
        %v9029 = vpack.c.b16 %v7559, %v7557
        %v9030 = vpack.c.b16 %v7562, %v7560
        %v9031 = vpack.c.b16 %v7563, %v7561
        %v9032 = vpack.c.b16 %v7566, %v7564
        %v9033 = vpack.c.b16 %v7567, %v7565
        %v9034 = vpack.c.b16 %v7570, %v7568
        %v9035 = vpack.c.b16 %v7571, %v7569
        %v9036 = vpack.c.b16 %v7574, %v7572
        %v9037 = vpack.c.b16 %v7575, %v7573
        %v9038 = vpack.c.b16 %v7578, %v7576
        %v9039 = vpack.c.b16 %v7579, %v7577
        %v9040 = vpack.c.b16 %v7582, %v7580
        %v9041 = vpack.c.b16 %v7583, %v7581
        %v9042 = vpack.c.b16 %v7586, %v7584
        %v9043 = vpack.c.b16 %v7587, %v7585
        %v9044 = vpack.c.b16 %v7590, %v7588
        %v9045 = vpack.c.b16 %v7591, %v7589
        %v9046 = vpack.c.b16 %v7594, %v7592
        %v9047 = vpack.c.b16 %v7595, %v7593
        %v9048 = vpack.c.b16 %v7598, %v7596
        %v9049 = vpack.c.b16 %v7599, %v7597
        %v9050 = vpack.c.b16 %v7602, %v7600
        %v9051 = vpack.c.b16 %v7603, %v7601
        %v9052 = vpack.c.b16 %v7606, %v7604
        %v9053 = vpack.c.b16 %v7607, %v7605
        %v9054 = vpack.c.b16 %v7610, %v7608
        %v9055 = vpack.c.b16 %v7611, %v7609
        %v9056 = vpack.c.b16 %v7614, %v7612
        %v9057 = vpack.c.b16 %v7615, %v7613
        %v9058 = vpack.c.b16 %v7618, %v7616
        %v9059 = vpack.c.b16 %v7619, %v7617
        %v9060 = vpack.c.b16 %v7622, %v7620
        %v9061 = vpack.c.b16 %v7623, %v7621
        %v9062 = vpack.c.b16 %v7626, %v7624
        %v9063 = vpack.c.b16 %v7627, %v7625
        %v9064 = vpack.c.b16 %v7630, %v7628
        %v9065 = vpack.c.b16 %v7631, %v7629
        %v9066 = vpack.c.b16 %v7634, %v7632
        %v9067 = vpack.c.b16 %v7635, %v7633
        %v9068 = vpack.c.b16 %v7638, %v7636
        %v9069 = vpack.c.b16 %v7639, %v7637
        %v9070 = vpack.c.b16 %v7642, %v7640
        %v9071 = vpack.c.b16 %v7643, %v7641
        %v9072 = vpack.c.b16 %v7646, %v7644
        %v9073 = vpack.c.b16 %v7647, %v7645
        %v9074 = vpack.c.b16 %v7650, %v7648
        %v9075 = vpack.c.b16 %v7651, %v7649
        %v9076 = vpack.c.b16 %v7654, %v7652
        %v9077 = vpack.c.b16 %v7655, %v7653
        %v9078 = vpack.c.b16 %v7658, %v7656
        %v9079 = vpack.c.b16 %v7659, %v7657
        %v9080 = vpack.c.b16 %v7662, %v7660
        %v9081 = vpack.c.b16 %v7663, %v7661
        %v9082 = vpack.c.b16 %v7666, %v7664
        %v9083 = vpack.c.b16 %v7667, %v7665
        %v9084 = vpack.c.b16 %v7670, %v7668
        %v9085 = vpack.c.b16 %v7671, %v7669
        %v9086 = vpack.c.b16 %v7674, %v7672
        %v9087 = vpack.c.b16 %v7675, %v7673
        %v9088 = vpack.c.b16 %v7678, %v7676
        %v9089 = vpack.c.b16 %v7679, %v7677
        %v9090 = vpack.c.b16 %v7682, %v7680
        %v9091 = vpack.c.b16 %v7683, %v7681
        %v9092 = vpack.c.b16 %v7686, %v7684
        %v9093 = vpack.c.b16 %v7687, %v7685
        %v9094 = vpack.c.b16 %v7690, %v7688
        %v9095 = vpack.c.b16 %v7691, %v7689
        %v9096 = vpack.c.b16 %v7694, %v7692
        %v9097 = vpack.c.b16 %v7695, %v7693
        %v9098 = vpack.c.b16 %v7698, %v7696
        %v9099 = vpack.c.b16 %v7699, %v7697
        %v9100 = vpack.c.b16 %v7702, %v7700
        %v9101 = vpack.c.b16 %v7703, %v7701
        %v9102 = vpack.c.b16 %v7706, %v7704
        %v9103 = vpack.c.b16 %v7707, %v7705
        %v9104 = vpack.c.b16 %v7710, %v7708
        %v9105 = vpack.c.b16 %v7711, %v7709
        %v9106 = vpack.c.b16 %v7714, %v7712
        %v9107 = vpack.c.b16 %v7715, %v7713
        %v9108 = vpack.c.b16 %v7718, %v7716
        %v9109 = vpack.c.b16 %v7719, %v7717
        %v9110 = vpack.c.b16 %v7722, %v7720
        %v9111 = vpack.c.b16 %v7723, %v7721
        %v9112 = vpack.c.b16 %v7726, %v7724
        %v9113 = vpack.c.b16 %v7727, %v7725
        %v9114 = vpack.c.b16 %v7730, %v7728
        %v9115 = vpack.c.b16 %v7731, %v7729
        %v9116 = vpack.c.b16 %v7734, %v7732
        %v9117 = vpack.c.b16 %v7735, %v7733
        %v9118 = vpack.c.b16 %v7738, %v7736
        %v9119 = vpack.c.b16 %v7739, %v7737
        %v9120 = vpack.c.b16 %v7742, %v7740
        %v9121 = vpack.c.b16 %v7743, %v7741
        %v9122 = vpack.c.b16 %v7746, %v7744
        %v9123 = vpack.c.b16 %v7747, %v7745
        %v9124 = vpack.c.b16 %v7750, %v7748
        %v9125 = vpack.c.b16 %v7751, %v7749
        %v9126 = vpack.c.b16 %v7754, %v7752
        %v9127 = vpack.c.b16 %v7755, %v7753
        %v9128 = vpack.c.b16 %v7758, %v7756
        %v9129 = vpack.c.b16 %v7759, %v7757
        %v9130 = vpack.c.b16 %v7762, %v7760
        %v9131 = vpack.c.b16 %v7763, %v7761
        %v9132 = vpack.c.b16 %v7766, %v7764
        %v9133 = vpack.c.b16 %v7767, %v7765
        %v9134 = vpack.c.b16 %v7770, %v7768
        %v9135 = vpack.c.b16 %v7771, %v7769
        %v9136 = vpack.c.b16 %v7774, %v7772
        %v9137 = vpack.c.b16 %v7775, %v7773
        %v9138 = vpack.c.b16 %v7778, %v7776
        %v9139 = vpack.c.b16 %v7779, %v7777
        %v9140 = vpack.c.b16 %v7782, %v7780
        %v9141 = vpack.c.b16 %v7783, %v7781
        %v9142 = vpack.c.b16 %v7786, %v7784
        %v9143 = vpack.c.b16 %v7787, %v7785
        %v9144 = vpack.c.b16 %v7790, %v7788
        %v9145 = vpack.c.b16 %v7791, %v7789
        %v9146 = vpack.c.b16 %v7794, %v7792
        %v9147 = vpack.c.b16 %v7795, %v7793
        %v9148 = vpack.c.b16 %v7798, %v7796
        %v9149 = vpack.c.b16 %v7799, %v7797
        %v9150 = vpack.c.b16 %v7802, %v7800
        %v9151 = vpack.c.b16 %v7803, %v7801
        %v9152 = vpack.c.b16 %v7806, %v7804
        %v9153 = vpack.c.b16 %v7807, %v7805
        %v9154 = vpack.c.b16 %v7810, %v7808
        %v9155 = vpack.c.b16 %v7811, %v7809
        %v9156 = vpack.c.b16 %v7814, %v7812
        %v9157 = vpack.c.b16 %v7815, %v7813
        %v9158 = vpack.c.b16 %v7818, %v7816
        %v9159 = vpack.c.b16 %v7819, %v7817
        %v9160 = vpack.c.b16 %v7822, %v7820
        %v9161 = vpack.c.b16 %v7823, %v7821
        %v9162 = vpack.c.b16 %v7826, %v7824
        %v9163 = vpack.c.b16 %v7827, %v7825
        %v9164 = vpack.c.b16 %v7830, %v7828
        %v9165 = vpack.c.b16 %v7831, %v7829
        %v9166 = vpack.c.b16 %v7834, %v7832
        %v9167 = vpack.c.b16 %v7835, %v7833
        %v9168 = vpack.c.b16 %v7838, %v7836
        %v9169 = vpack.c.b16 %v7839, %v7837
        %v9170 = vpack.c.b16 %v7842, %v7840
        %v9171 = vpack.c.b16 %v7843, %v7841
        %v9172 = vpack.c.b16 %v7846, %v7844
        %v9173 = vpack.c.b16 %v7847, %v7845
        %v9174 = vpack.c.b16 %v7850, %v7848
        %v9175 = vpack.c.b16 %v7851, %v7849
        %v9176 = vpack.c.b16 %v7854, %v7852
        %v9177 = vpack.c.b16 %v7855, %v7853
        %v9178 = vpack.c.b16 %v7858, %v7856
        %v9179 = vpack.c.b16 %v7859, %v7857
        %v9180 = vpack.c.b16 %v7862, %v7860
        %v9181 = vpack.c.b16 %v7863, %v7861
        %v9182 = vpack.c.b16 %v7866, %v7864
        %v9183 = vpack.c.b16 %v7867, %v7865
        %v9184 = vpack.c.b16 %v7870, %v7868
        %v9185 = vpack.c.b16 %v7871, %v7869
        %v9186 = vpack.c.b16 %v7874, %v7872
        %v9187 = vpack.c.b16 %v7875, %v7873
        %v9188 = vpack.c.b16 %v7878, %v7876
        %v9189 = vpack.c.b16 %v7879, %v7877
        %v9190 = vpack.c.b16 %v7882, %v7880
        %v9191 = vpack.c.b16 %v7883, %v7881
        %v9192 = vpack.c.b16 %v7886, %v7884
        %v9193 = vpack.c.b16 %v7887, %v7885
        %v9194 = vpack.c.b16 %v7890, %v7888
        %v9195 = vpack.c.b16 %v7891, %v7889
        %v9196 = vpack.c.b16 %v7894, %v7892
        %v9197 = vpack.c.b16 %v7895, %v7893
        %v9198 = vpack.c.b16 %v7898, %v7896
        %v9199 = vpack.c.b16 %v7899, %v7897
        %v9200 = vpack.c.b16 %v7902, %v7900
        %v9201 = vpack.c.b16 %v7903, %v7901
        %v9202 = vpack.c.b16 %v7906, %v7904
        %v9203 = vpack.c.b16 %v7907, %v7905
        %v9204 = vpack.c.b16 %v7910, %v7908
        %v9205 = vpack.c.b16 %v7911, %v7909
        %v9206 = vpack.c.b16 %v7914, %v7912
        %v9207 = vpack.c.b16 %v7915, %v7913
        %v9208 = vpack.c.b16 %v7918, %v7916
        %v9209 = vpack.c.b16 %v7919, %v7917
        %v9210 = vpack.c.b16 %v7922, %v7920
        %v9211 = vpack.c.b16 %v7923, %v7921
        %v9212 = vpack.c.b16 %v7926, %v7924
        %v9213 = vpack.c.b16 %v7927, %v7925
        %v9214 = vpack.c.b16 %v7930, %v7928
        %v9215 = vpack.c.b16 %v7931, %v7929
        %v9216 = vpack.c.b16 %v7934, %v7932
        %v9217 = vpack.c.b16 %v7935, %v7933
        %v9218 = vpack.c.b16 %v7938, %v7936
        %v9219 = vpack.c.b16 %v7939, %v7937
        %v9220 = vpack.c.b16 %v7942, %v7940
        %v9221 = vpack.c.b16 %v7943, %v7941
        %v9222 = vpack.c.b16 %v7946, %v7944
        %v9223 = vpack.c.b16 %v7947, %v7945
        %v9224 = vpack.c.b16 %v7950, %v7948
        %v9225 = vpack.c.b16 %v7951, %v7949
        %v9226 = vpack.c.b16 %v7954, %v7952
        %v9227 = vpack.c.b16 %v7955, %v7953
        %v9228 = vpack.c.b16 %v7958, %v7956
        %v9229 = vpack.c.b16 %v7959, %v7957
        %v9230 = vpack.c.b16 %v7962, %v7960
        %v9231 = vpack.c.b16 %v7963, %v7961
        %v9232 = vpack.c.b16 %v7966, %v7964
        %v9233 = vpack.c.b16 %v7967, %v7965
        %v9234 = vpack.c.b16 %v7970, %v7968
        %v9235 = vpack.c.b16 %v7971, %v7969
        %v9236 = vpack.c.b16 %v7974, %v7972
        %v9237 = vpack.c.b16 %v7975, %v7973
        %v9238 = vpack.c.b16 %v7978, %v7976
        %v9239 = vpack.c.b16 %v7979, %v7977
        %v9240 = vpack.c.b16 %v7982, %v7980
        %v9241 = vpack.c.b16 %v7983, %v7981
        %v9242 = vpack.c.b16 %v7986, %v7984
        %v9243 = vpack.c.b16 %v7987, %v7985
        %v9244 = vpack.c.b16 %v7990, %v7988
        %v9245 = vpack.c.b16 %v7991, %v7989
        %v9246 = vpack.c.b16 %v7994, %v7992
        %v9247 = vpack.c.b16 %v7995, %v7993
        %v9248 = vpack.c.b16 %v7998, %v7996
        %v9249 = vpack.c.b16 %v7999, %v7997
        %v9250 = vpack.c.b16 %v8002, %v8000
        %v9251 = vpack.c.b16 %v8003, %v8001
        %v9252 = vpack.c.b16 %v8006, %v8004
        %v9253 = vpack.c.b16 %v8007, %v8005
        %v9254 = vpack.c.b16 %v8010, %v8008
        %v9255 = vpack.c.b16 %v8011, %v8009
        %v9256 = vpack.c.b16 %v8014, %v8012
        %v9257 = vpack.c.b16 %v8015, %v8013
        %v9258 = vpack.c.b16 %v8018, %v8016
        %v9259 = vpack.c.b16 %v8019, %v8017
        %v9260 = vpack.c.b16 %v8022, %v8020
        %v9261 = vpack.c.b16 %v8023, %v8021
        %v9262 = vpack.c.b16 %v8026, %v8024
        %v9263 = vpack.c.b16 %v8027, %v8025
        %v9264 = vpack.c.b16 %v8030, %v8028
        %v9265 = vpack.c.b16 %v8031, %v8029
        %v9266 = vpack.c.b16 %v8034, %v8032
        %v9267 = vpack.c.b16 %v8035, %v8033
        %v9268 = vpack.c.b16 %v8038, %v8036
        %v9269 = vpack.c.b16 %v8039, %v8037
        %v9270 = vpack.c.b16 %v8042, %v8040
        %v9271 = vpack.c.b16 %v8043, %v8041
        %v9272 = vpack.c.b16 %v8046, %v8044
        %v9273 = vpack.c.b16 %v8047, %v8045
        %v9274 = vpack.c.b16 %v8050, %v8048
        %v9275 = vpack.c.b16 %v8051, %v8049
        %v9276 = vpack.c.b16 %v8054, %v8052
        %v9277 = vpack.c.b16 %v8055, %v8053
        %v9278 = vpack.c.b16 %v8058, %v8056
        %v9279 = vpack.c.b16 %v8059, %v8057
        %v9280 = vpack.c.b16 %v8062, %v8060
        %v9281 = vpack.c.b16 %v8063, %v8061
        %v9282 = vpack.c.b16 %v8066, %v8064
        %v9283 = vpack.c.b16 %v8067, %v8065
        %v9284 = vpack.c.b16 %v8070, %v8068
        %v9285 = vpack.c.b16 %v8071, %v8069
        %v9286 = vpack.c.b16 %v8074, %v8072
        %v9287 = vpack.c.b16 %v8075, %v8073
        %v9288 = vpack.c.b16 %v8078, %v8076
        %v9289 = vpack.c.b16 %v8079, %v8077
        %v9290 = vpack.c.b16 %v8082, %v8080
        %v9291 = vpack.c.b16 %v8083, %v8081
        %v9292 = vpack.c.b16 %v8086, %v8084
        %v9293 = vpack.c.b16 %v8087, %v8085
        %v9294 = vpack.c.b16 %v8090, %v8088
        %v9295 = vpack.c.b16 %v8091, %v8089
        %v9296 = vpack.c.b16 %v8094, %v8092
        %v9297 = vpack.c.b16 %v8095, %v8093
        %v9298 = vpack.c.b16 %v8098, %v8096
        %v9299 = vpack.c.b16 %v8099, %v8097
        %v9300 = vpack.c.b16 %v8102, %v8100
        %v9301 = vpack.c.b16 %v8103, %v8101
        %v9302 = vpack.c.b16 %v8106, %v8104
        %v9303 = vpack.c.b16 %v8107, %v8105
        %v9304 = vpack.c.b16 %v8110, %v8108
        %v9305 = vpack.c.b16 %v8111, %v8109
        %v9306 = vpack.c.b16 %v8114, %v8112
        %v9307 = vpack.c.b16 %v8115, %v8113
        %v9308 = vpack.c.b16 %v8118, %v8116
        %v9309 = vpack.c.b16 %v8119, %v8117
        %v9310 = vpack.c.b16 %v8122, %v8120
        %v9311 = vpack.c.b16 %v8123, %v8121
        %v9312 = vpack.c.b16 %v8126, %v8124
        %v9313 = vpack.c.b16 %v8127, %v8125
        %v9314 = vpack.c.b16 %v8130, %v8128
        %v9315 = vpack.c.b16 %v8131, %v8129
        %v9316 = vpack.c.b16 %v8134, %v8132
        %v9317 = vpack.c.b16 %v8135, %v8133
        %v9318 = vpack.c.b16 %v8138, %v8136
        %v9319 = vpack.c.b16 %v8139, %v8137
        %v9320 = vpack.c.b16 %v8142, %v8140
        %v9321 = vpack.c.b16 %v8143, %v8141
        %v9322 = vpack.c.b16 %v8146, %v8144
        %v9323 = vpack.c.b16 %v8147, %v8145
        %v9324 = vpack.c.b16 %v8150, %v8148
        %v9325 = vpack.c.b16 %v8151, %v8149
        %v9326 = vpack.c.b16 %v8154, %v8152
        %v9327 = vpack.c.b16 %v8155, %v8153
        %v9328 = vpack.c.b16 %v8158, %v8156
        %v9329 = vpack.c.b16 %v8159, %v8157
        %v9330 = vpack.c.b16 %v8162, %v8160
        %v9331 = vpack.c.b16 %v8163, %v8161
        %v9332 = vpack.c.b16 %v8166, %v8164
        %v9333 = vpack.c.b16 %v8167, %v8165
        %v9334 = vpack.c.b16 %v8170, %v8168
        %v9335 = vpack.c.b16 %v8171, %v8169
        %v9336 = vpack.c.b16 %v8174, %v8172
        %v9337 = vpack.c.b16 %v8175, %v8173
        %v9338 = vpack.c.b16 %v8178, %v8176
        %v9339 = vpack.c.b16 %v8179, %v8177
        %v9340 = vpack.c.b16 %v8182, %v8180
        %v9341 = vpack.c.b16 %v8183, %v8181
        %v9342 = vpack.c.b16 %v8186, %v8184
        %v9343 = vpack.c.b16 %v8187, %v8185
        %v9344 = vpack.c.b16 %v8190, %v8188
        %v9345 = vpack.c.b16 %v8191, %v8189
        %v9346 = vpack.c.b16 %v8194, %v8192
        %v9347 = vpack.c.b16 %v8195, %v8193
        %v9348 = vpack.c.b16 %v8198, %v8196
        %v9349 = vpack.c.b16 %v8199, %v8197
        %v9350 = vpack.c.b16 %v8202, %v8200
        %v9351 = vpack.c.b16 %v8203, %v8201
        %v9352 = vpack.c.b16 %v8206, %v8204
        %v9353 = vpack.c.b16 %v8207, %v8205
        %v9354 = vpack.c.b16 %v8210, %v8208
        %v9355 = vpack.c.b16 %v8211, %v8209
        %v9356 = vpack.c.b16 %v8214, %v8212
        %v9357 = vpack.c.b16 %v8215, %v8213
        %v9358 = vpack.c.b16 %v8218, %v8216
        %v9359 = vpack.c.b16 %v8219, %v8217
        %v9360 = vpack.c.b16 %v8222, %v8220
        %v9361 = vpack.c.b16 %v8223, %v8221
        %v9362 = vpack.c.b16 %v8226, %v8224
        %v9363 = vpack.c.b16 %v8227, %v8225
        %v9364 = vpack.c.b16 %v8230, %v8228
        %v9365 = vpack.c.b16 %v8231, %v8229
        %v9366 = vpack.c.b16 %v8234, %v8232
        %v9367 = vpack.c.b16 %v8235, %v8233
        %v9368 = vpack.c.b16 %v8238, %v8236
        %v9369 = vpack.c.b16 %v8239, %v8237
        %v9370 = vpack.c.b16 %v8242, %v8240
        %v9371 = vpack.c.b16 %v8243, %v8241
        %v9372 = vpack.c.b16 %v8246, %v8244
        %v9373 = vpack.c.b16 %v8247, %v8245
        %v9374 = vpack.c.b16 %v8250, %v8248
        %v9375 = vpack.c.b16 %v8251, %v8249
        %v9376 = vpack.c.b16 %v8254, %v8252
        %v9377 = vpack.c.b16 %v8255, %v8253
        %v9378 = vpack.c.b16 %v8258, %v8256
        %v9379 = vpack.c.b16 %v8259, %v8257
        %v9380 = vpack.c.b16 %v8262, %v8260
        %v9381 = vpack.c.b16 %v8263, %v8261
        %v9382 = vpack.c.b16 %v8266, %v8264
        %v9383 = vpack.c.b16 %v8267, %v8265
        %v9384 = vpack.c.b16 %v8270, %v8268
        %v9385 = vpack.c.b16 %v8271, %v8269
        %v9386 = vpack.c.b16 %v8274, %v8272
        %v9387 = vpack.c.b16 %v8275, %v8273
        %v9388 = vpack.c.b16 %v8278, %v8276
        %v9389 = vpack.c.b16 %v8279, %v8277
        %v9390 = vpack.c.b16 %v8282, %v8280
        %v9391 = vpack.c.b16 %v8283, %v8281
        %v9392 = vpack.c.b16 %v8286, %v8284
        %v9393 = vpack.c.b16 %v8287, %v8285
        %v9394 = vpack.c.b16 %v8290, %v8288
        %v9395 = vpack.c.b16 %v8291, %v8289
        %v9396 = vpack.c.b16 %v8294, %v8292
        %v9397 = vpack.c.b16 %v8295, %v8293
        %v9398 = vpack.c.b16 %v8298, %v8296
        %v9399 = vpack.c.b16 %v8299, %v8297
        %v9400 = vpack.c.b16 %v8302, %v8300
        %v9401 = vpack.c.b16 %v8303, %v8301
        %v9402 = vpack.c.b16 %v8306, %v8304
        %v9403 = vpack.c.b16 %v8307, %v8305
        %v9404 = vpack.c.b16 %v8310, %v8308
        %v9405 = vpack.c.b16 %v8311, %v8309
        %v9406 = vpack.c.b16 %v8314, %v8312
        %v9407 = vpack.c.b16 %v8315, %v8313
        %v9408 = vpack.c.b16 %v8318, %v8316
        %v9409 = vpack.c.b16 %v8319, %v8317
        %v9410 = vpack.c.b16 %v8322, %v8320
        %v9411 = vpack.c.b16 %v8323, %v8321
        %v9412 = vpack.c.b16 %v8326, %v8324
        %v9413 = vpack.c.b16 %v8327, %v8325
        %v9414 = vpack.c.b16 %v8330, %v8328
        %v9415 = vpack.c.b16 %v8331, %v8329
        %v9416 = vpack.c.b16 %v8334, %v8332
        %v9417 = vpack.c.b16 %v8335, %v8333
        %v9418 = vpack.c.b16 %v8338, %v8336
        %v9419 = vpack.c.b16 %v8339, %v8337
        %v9420 = vpack.c.b16 %v8342, %v8340
        %v9421 = vpack.c.b16 %v8343, %v8341
        %v9422 = vpack.c.b16 %v8346, %v8344
        %v9423 = vpack.c.b16 %v8347, %v8345
        %v9424 = vpack.c.b16 %v8350, %v8348
        %v9425 = vpack.c.b16 %v8351, %v8349
        %v9426 = vpack.c.b16 %v8354, %v8352
        %v9427 = vpack.c.b16 %v8355, %v8353
        %v9428 = vpack.c.b16 %v8358, %v8356
        %v9429 = vpack.c.b16 %v8359, %v8357
        %v9430 = vpack.c.b16 %v8362, %v8360
        %v9431 = vpack.c.b16 %v8363, %v8361
        %v9432 = vpack.c.b16 %v8366, %v8364
        %v9433 = vpack.c.b16 %v8367, %v8365
        %v9434 = vpack.c.b16 %v8370, %v8368
        %v9435 = vpack.c.b16 %v8371, %v8369
        %v9436 = vpack.c.b16 %v8374, %v8372
        %v9437 = vpack.c.b16 %v8375, %v8373
        %v9438 = vpack.c.b16 %v8378, %v8376
        %v9439 = vpack.c.b16 %v8379, %v8377
        %v9440 = vpack.c.b16 %v8382, %v8380
        %v9441 = vpack.c.b16 %v8383, %v8381
        %v9442 = vpack.c.b16 %v8386, %v8384
        %v9443 = vpack.c.b16 %v8387, %v8385
        %v9444 = vpack.c.b16 %v8390, %v8388
        %v9445 = vpack.c.b16 %v8391, %v8389
        %v9446 = vpack.c.b16 %v8394, %v8392
        %v9447 = vpack.c.b16 %v8395, %v8393
        %v9448 = vpack.c.b16 %v8398, %v8396
        %v9449 = vpack.c.b16 %v8399, %v8397
        %v9450 = vpack.c.b16 %v8402, %v8400
        %v9451 = vpack.c.b16 %v8403, %v8401
        %v9452 = vpack.c.b16 %v8406, %v8404
        %v9453 = vpack.c.b16 %v8407, %v8405
        %v9454 = vpack.c.b16 %v8410, %v8408
        %v9455 = vpack.c.b16 %v8411, %v8409
        %v9456 = vpack.c.b16 %v8414, %v8412
        %v9457 = vpack.c.b16 %v8415, %v8413
        %v9458 = vpack.c.b16 %v8418, %v8416
        %v9459 = vpack.c.b16 %v8419, %v8417
        %v9460 = vpack.c.b16 %v8422, %v8420
        %v9461 = vpack.c.b16 %v8423, %v8421
        %v9462 = vpack.c.b16 %v8426, %v8424
        %v9463 = vpack.c.b16 %v8427, %v8425
        %v9464 = vpack.c.b16 %v8430, %v8428
        %v9465 = vpack.c.b16 %v8431, %v8429
        %v9466 = vpack.c.b16 %v8434, %v8432
        %v9467 = vpack.c.b16 %v8435, %v8433
        %v9468 = vpack.c.b16 %v8438, %v8436
        %v9469 = vpack.c.b16 %v8439, %v8437
        %v9470 = vpack.c.b16 %v8442, %v8440
        %v9471 = vpack.c.b16 %v8443, %v8441
        %v9472 = vpack.c.b16 %v8446, %v8444
        %v9473 = vpack.c.b16 %v8447, %v8445
        %v9474 = vpack.c.b16 %v8450, %v8448
        %v9475 = vpack.c.b16 %v8451, %v8449
        %v9476 = vpack.c.b16 %v8454, %v8452
        %v9477 = vpack.c.b16 %v8455, %v8453
        %v9478 = vpack.c.b16 %v8458, %v8456
        %v9479 = vpack.c.b16 %v8459, %v8457
        %v9480 = vpack.c.b16 %v8462, %v8460
        %v9481 = vpack.c.b16 %v8463, %v8461
        %v9482 = vpack.c.b16 %v8466, %v8464
        %v9483 = vpack.c.b16 %v8467, %v8465
        %v9484 = vpack.c.b16 %v8470, %v8468
        %v9485 = vpack.c.b16 %v8471, %v8469
        %v9486 = vpack.c.b16 %v8474, %v8472
        %v9487 = vpack.c.b16 %v8475, %v8473
        %v9488 = vpack.c.b16 %v8478, %v8476
        %v9489 = vpack.c.b16 %v8479, %v8477
        %v9490 = vpack.c.b16 %v8482, %v8480
        %v9491 = vpack.c.b16 %v8483, %v8481
        %v9492 = vpack.c.b16 %v8486, %v8484
        %v9493 = vpack.c.b16 %v8487, %v8485
        %v9494 = vpack.c.b16 %v8490, %v8488
        %v9495 = vpack.c.b16 %v8491, %v8489
        %v9496 = vpack.c.b16 %v8494, %v8492
        %v9497 = vpack.c.b16 %v8495, %v8493
        %v9498 = vpack.c.b16 %v8498, %v8496
        %v9499 = vpack.c.b16 %v8499, %v8497
        %v9500 = vpack.c.b16 %v8502, %v8500
        %v9501 = vpack.c.b16 %v8503, %v8501
        %v9502 = vpack.c.b16 %v8506, %v8504
        %v9503 = vpack.c.b16 %v8507, %v8505
        %v9504 = vpack.c.b16 %v8510, %v8508
        %v9505 = vpack.c.b16 %v8511, %v8509
        %v9506 = vpack.c.b16 %v8514, %v8512
        %v9507 = vpack.c.b16 %v8515, %v8513
        %v10501 = vlaneseq
        %v10502 = vshrl.u32 %v10501, 7
        %v10503 = vsub.s32 0, %v10502
        %v10504 = vrot.slane %v5539, %v10503
        %v10505 = vlaneseq
        %v10506 = vshrl.u32 %v10505, 7
        %v10507 = vsub.s32 1, %v10506
        %v10508 = vrot.slane %v5539, %v10507
        %10511 = vmatprep.subr.bf16.mxu0 %v8531
        %10512 = vmatpush1.bf16.msra.mxu0 %v8530
        %10513 = vmatprep.subr.bf16.mxu0 %v8529
        %10514 = vmatpush1.bf16.msra.mxu0 %v8528
        %10515 = vmatprep.subr.bf16.mxu0 %v8527
        %10516 = vmatpush1.bf16.msra.mxu0 %v8526
        %10517 = vmatprep.subr.bf16.mxu0 %v8525
        %10518 = vmatpush1.bf16.msra.mxu0 %v8524
        %10519 = vmatprep.subr.bf16.mxu0 %v8523
        %10520 = vmatpush1.bf16.msra.mxu0 %v8522
        %10521 = vmatprep.subr.bf16.mxu0 %v8521
        %10522 = vmatpush1.bf16.msra.mxu0 %v8520
        %10523 = vmatprep.subr.bf16.mxu0 %v8519
        %10524 = vmatpush1.bf16.msra.mxu0 %v8518
        %10525 = vmatprep.subr.bf16.mxu0 %v8517
        %10526 = vmatpush1.bf16.msra.mxu0 %v8516
        %10527 = vmatprep.subr.bf16.mxu0 %v8547
        %10528 = vmatpush2.bf16.msra.mxu0 %v8546
        %10529 = vmatprep.subr.bf16.mxu0 %v8545
        %10530 = vmatpush2.bf16.msra.mxu0 %v8544
        %10531 = vmatprep.subr.bf16.mxu0 %v8543
        %10532 = vmatpush2.bf16.msra.mxu0 %v8542
        %10533 = vmatprep.subr.bf16.mxu0 %v8541
        %10534 = vmatpush2.bf16.msra.mxu0 %v8540
        %10535 = vmatprep.subr.bf16.mxu0 %v8539
        %10536 = vmatpush2.bf16.msra.mxu0 %v8538
        %10537 = vmatprep.subr.bf16.mxu0 %v8537
        %10538 = vmatpush2.bf16.msra.mxu0 %v8536
        %10539 = vmatprep.subr.bf16.mxu0 %v8535
        %10540 = vmatpush2.bf16.msra.mxu0 %v8534
        %10541 = vmatprep.subr.bf16.mxu0 %v8533
        %10542 = vmatpush2.bf16.msra.mxu0 %v8532
        %10543 = vmatprep.mubr.bf16.mxu0 %v4486
        %10544 = vmatmul.mubr.bf16.gmra.mxu0 %v4485
        %v10545 = vpop.f32.mrf.mxu0
        %v10546 = vadd.f32 %v10504, %v10545
        %v10547 = vpop.f32.mrf.mxu0
        %v10548 = vadd.f32 %v10508, %v10547
        %v10549 = vpop.f32.mrf.mxu0
        %v10550 = vpop.f32.mrf.mxu0
        %10551 = vdwg.mxu0
        %10552 = vmatprep.subr.bf16.mxu0 %v8563
        %10553 = vmatpush1.bf16.msra.mxu0 %v8562
        %10554 = vmatprep.subr.bf16.mxu0 %v8561
        %10555 = vmatpush1.bf16.msra.mxu0 %v8560
        %10556 = vmatprep.subr.bf16.mxu0 %v8559
        %10557 = vmatpush1.bf16.msra.mxu0 %v8558
        %10558 = vmatprep.subr.bf16.mxu0 %v8557
        %10559 = vmatpush1.bf16.msra.mxu0 %v8556
        %10560 = vmatprep.subr.bf16.mxu0 %v8555
        %10561 = vmatpush1.bf16.msra.mxu0 %v8554
        %10562 = vmatprep.subr.bf16.mxu0 %v8553
        %10563 = vmatpush1.bf16.msra.mxu0 %v8552
        %10564 = vmatprep.subr.bf16.mxu0 %v8551
        %10565 = vmatpush1.bf16.msra.mxu0 %v8550
        %10566 = vmatprep.subr.bf16.mxu0 %v8549
        %10567 = vmatpush1.bf16.msra.mxu0 %v8548
        %10568 = vmatprep.subr.bf16.mxu0 %v8579
        %10569 = vmatpush2.bf16.msra.mxu0 %v8578
        %10570 = vmatprep.subr.bf16.mxu0 %v8577
        %10571 = vmatpush2.bf16.msra.mxu0 %v8576
        %10572 = vmatprep.subr.bf16.mxu0 %v8575
        %10573 = vmatpush2.bf16.msra.mxu0 %v8574
        %10574 = vmatprep.subr.bf16.mxu0 %v8573
        %10575 = vmatpush2.bf16.msra.mxu0 %v8572
        %10576 = vmatprep.subr.bf16.mxu0 %v8571
        %10577 = vmatpush2.bf16.msra.mxu0 %v8570
        %10578 = vmatprep.subr.bf16.mxu0 %v8569
        %10579 = vmatpush2.bf16.msra.mxu0 %v8568
        %10580 = vmatprep.subr.bf16.mxu0 %v8567
        %10581 = vmatpush2.bf16.msra.mxu0 %v8566
        %10582 = vmatprep.subr.bf16.mxu0 %v8565
        %10583 = vmatpush2.bf16.msra.mxu0 %v8564
        %10584 = vmatprep.mubr.bf16.mxu0 %v4488
        %10585 = vmatmul.mubr.bf16.gmra.mxu0 %v4487
        %v10586 = vpop.f32.mrf.mxu0
        %v10587 = vadd.f32 %v10546, %v10586
        %v10588 = vpop.f32.mrf.mxu0
        %v10589 = vadd.f32 %v10548, %v10588
        %v10590 = vpop.f32.mrf.mxu0
        %v10591 = vpop.f32.mrf.mxu0
        %10592 = vdwg.mxu0
        %10593 = vmatprep.subr.bf16.mxu0 %v8595
        %10594 = vmatpush1.bf16.msra.mxu0 %v8594
        %10595 = vmatprep.subr.bf16.mxu0 %v8593
        %10596 = vmatpush1.bf16.msra.mxu0 %v8592
        %10597 = vmatprep.subr.bf16.mxu0 %v8591
        %10598 = vmatpush1.bf16.msra.mxu0 %v8590
        %10599 = vmatprep.subr.bf16.mxu0 %v8589
        %10600 = vmatpush1.bf16.msra.mxu0 %v8588
        %10601 = vmatprep.subr.bf16.mxu0 %v8587
        %10602 = vmatpush1.bf16.msra.mxu0 %v8586
        %10603 = vmatprep.subr.bf16.mxu0 %v8585
        %10604 = vmatpush1.bf16.msra.mxu0 %v8584
        %10605 = vmatprep.subr.bf16.mxu0 %v8583
        %10606 = vmatpush1.bf16.msra.mxu0 %v8582
        %10607 = vmatprep.subr.bf16.mxu0 %v8581
        %10608 = vmatpush1.bf16.msra.mxu0 %v8580
        %10609 = vmatprep.subr.bf16.mxu0 %v8611
        %10610 = vmatpush2.bf16.msra.mxu0 %v8610
        %10611 = vmatprep.subr.bf16.mxu0 %v8609
        %10612 = vmatpush2.bf16.msra.mxu0 %v8608
        %10613 = vmatprep.subr.bf16.mxu0 %v8607
        %10614 = vmatpush2.bf16.msra.mxu0 %v8606
        %10615 = vmatprep.subr.bf16.mxu0 %v8605
        %10616 = vmatpush2.bf16.msra.mxu0 %v8604
        %10617 = vmatprep.subr.bf16.mxu0 %v8603
        %10618 = vmatpush2.bf16.msra.mxu0 %v8602
        %10619 = vmatprep.subr.bf16.mxu0 %v8601
        %10620 = vmatpush2.bf16.msra.mxu0 %v8600
        %10621 = vmatprep.subr.bf16.mxu0 %v8599
        %10622 = vmatpush2.bf16.msra.mxu0 %v8598
        %10623 = vmatprep.subr.bf16.mxu0 %v8597
        %10624 = vmatpush2.bf16.msra.mxu0 %v8596
        %10625 = vmatprep.mubr.bf16.mxu0 %v4490
        %10626 = vmatmul.mubr.bf16.gmra.mxu0 %v4489
        %v10627 = vpop.f32.mrf.mxu0
        %v10628 = vadd.f32 %v10587, %v10627
        %v10629 = vpop.f32.mrf.mxu0
        %v10630 = vadd.f32 %v10589, %v10629
        %v10631 = vpop.f32.mrf.mxu0
        %v10632 = vpop.f32.mrf.mxu0
        %10633 = vdwg.mxu0
        %10634 = vmatprep.subr.bf16.mxu0 %v8627
        %10635 = vmatpush1.bf16.msra.mxu0 %v8626
        %10636 = vmatprep.subr.bf16.mxu0 %v8625
        %10637 = vmatpush1.bf16.msra.mxu0 %v8624
        %10638 = vmatprep.subr.bf16.mxu0 %v8623
        %10639 = vmatpush1.bf16.msra.mxu0 %v8622
        %10640 = vmatprep.subr.bf16.mxu0 %v8621
        %10641 = vmatpush1.bf16.msra.mxu0 %v8620
        %10642 = vmatprep.subr.bf16.mxu0 %v8619
        %10643 = vmatpush1.bf16.msra.mxu0 %v8618
        %10644 = vmatprep.subr.bf16.mxu0 %v8617
        %10645 = vmatpush1.bf16.msra.mxu0 %v8616
        %10646 = vmatprep.subr.bf16.mxu0 %v8615
        %10647 = vmatpush1.bf16.msra.mxu0 %v8614
        %10648 = vmatprep.subr.bf16.mxu0 %v8613
        %10649 = vmatpush1.bf16.msra.mxu0 %v8612
        %10650 = vmatprep.subr.bf16.mxu0 %v8643
        %10651 = vmatpush2.bf16.msra.mxu0 %v8642
        %10652 = vmatprep.subr.bf16.mxu0 %v8641
        %10653 = vmatpush2.bf16.msra.mxu0 %v8640
        %10654 = vmatprep.subr.bf16.mxu0 %v8639
        %10655 = vmatpush2.bf16.msra.mxu0 %v8638
        %10656 = vmatprep.subr.bf16.mxu0 %v8637
        %10657 = vmatpush2.bf16.msra.mxu0 %v8636
        %10658 = vmatprep.subr.bf16.mxu0 %v8635
        %10659 = vmatpush2.bf16.msra.mxu0 %v8634
        %10660 = vmatprep.subr.bf16.mxu0 %v8633
        %10661 = vmatpush2.bf16.msra.mxu0 %v8632
        %10662 = vmatprep.subr.bf16.mxu0 %v8631
        %10663 = vmatpush2.bf16.msra.mxu0 %v8630
        %10664 = vmatprep.subr.bf16.mxu0 %v8629
        %10665 = vmatpush2.bf16.msra.mxu0 %v8628
        %10666 = vmatprep.mubr.bf16.mxu0 %v4492
        %10667 = vmatmul.mubr.bf16.gmra.mxu0 %v4491
        %v10668 = vpop.f32.mrf.mxu0
        %v10669 = vadd.f32 %v10628, %v10668
        %v10670 = vpop.f32.mrf.mxu0
        %v10671 = vadd.f32 %v10630, %v10670
        %v10672 = vpop.f32.mrf.mxu0
        %v10673 = vpop.f32.mrf.mxu0
        %10674 = vdwg.mxu0
        %10675 = vmatprep.subr.bf16.mxu0 %v8659
        %10676 = vmatpush1.bf16.msra.mxu0 %v8658
        %10677 = vmatprep.subr.bf16.mxu0 %v8657
        %10678 = vmatpush1.bf16.msra.mxu0 %v8656
        %10679 = vmatprep.subr.bf16.mxu0 %v8655
        %10680 = vmatpush1.bf16.msra.mxu0 %v8654
        %10681 = vmatprep.subr.bf16.mxu0 %v8653
        %10682 = vmatpush1.bf16.msra.mxu0 %v8652
        %10683 = vmatprep.subr.bf16.mxu0 %v8651
        %10684 = vmatpush1.bf16.msra.mxu0 %v8650
        %10685 = vmatprep.subr.bf16.mxu0 %v8649
        %10686 = vmatpush1.bf16.msra.mxu0 %v8648
        %10687 = vmatprep.subr.bf16.mxu0 %v8647
        %10688 = vmatpush1.bf16.msra.mxu0 %v8646
        %10689 = vmatprep.subr.bf16.mxu0 %v8645
        %10690 = vmatpush1.bf16.msra.mxu0 %v8644
        %10691 = vmatprep.subr.bf16.mxu0 %v8675
        %10692 = vmatpush2.bf16.msra.mxu0 %v8674
        %10693 = vmatprep.subr.bf16.mxu0 %v8673
        %10694 = vmatpush2.bf16.msra.mxu0 %v8672
        %10695 = vmatprep.subr.bf16.mxu0 %v8671
        %10696 = vmatpush2.bf16.msra.mxu0 %v8670
        %10697 = vmatprep.subr.bf16.mxu0 %v8669
        %10698 = vmatpush2.bf16.msra.mxu0 %v8668
        %10699 = vmatprep.subr.bf16.mxu0 %v8667
        %10700 = vmatpush2.bf16.msra.mxu0 %v8666
        %10701 = vmatprep.subr.bf16.mxu0 %v8665
        %10702 = vmatpush2.bf16.msra.mxu0 %v8664
        %10703 = vmatprep.subr.bf16.mxu0 %v8663
        %10704 = vmatpush2.bf16.msra.mxu0 %v8662
        %10705 = vmatprep.subr.bf16.mxu0 %v8661
        %10706 = vmatpush2.bf16.msra.mxu0 %v8660
        %10707 = vmatprep.mubr.bf16.mxu0 %v4494
        %10708 = vmatmul.mubr.bf16.gmra.mxu0 %v4493
        %v10709 = vpop.f32.mrf.mxu0
        %v10710 = vadd.f32 %v10669, %v10709
        %v10711 = vpop.f32.mrf.mxu0
        %v10712 = vadd.f32 %v10671, %v10711
        %v10713 = vpop.f32.mrf.mxu0
        %v10714 = vpop.f32.mrf.mxu0
        %10715 = vdwg.mxu0
        %10716 = vmatprep.subr.bf16.mxu0 %v8691
        %10717 = vmatpush1.bf16.msra.mxu0 %v8690
        %10718 = vmatprep.subr.bf16.mxu0 %v8689
        %10719 = vmatpush1.bf16.msra.mxu0 %v8688
        %10720 = vmatprep.subr.bf16.mxu0 %v8687
        %10721 = vmatpush1.bf16.msra.mxu0 %v8686
        %10722 = vmatprep.subr.bf16.mxu0 %v8685
        %10723 = vmatpush1.bf16.msra.mxu0 %v8684
        %10724 = vmatprep.subr.bf16.mxu0 %v8683
        %10725 = vmatpush1.bf16.msra.mxu0 %v8682
        %10726 = vmatprep.subr.bf16.mxu0 %v8681
        %10727 = vmatpush1.bf16.msra.mxu0 %v8680
        %10728 = vmatprep.subr.bf16.mxu0 %v8679
        %10729 = vmatpush1.bf16.msra.mxu0 %v8678
        %10730 = vmatprep.subr.bf16.mxu0 %v8677
        %10731 = vmatpush1.bf16.msra.mxu0 %v8676
        %10732 = vmatprep.subr.bf16.mxu0 %v8707
        %10733 = vmatpush2.bf16.msra.mxu0 %v8706
        %10734 = vmatprep.subr.bf16.mxu0 %v8705
        %10735 = vmatpush2.bf16.msra.mxu0 %v8704
        %10736 = vmatprep.subr.bf16.mxu0 %v8703
        %10737 = vmatpush2.bf16.msra.mxu0 %v8702
        %10738 = vmatprep.subr.bf16.mxu0 %v8701
        %10739 = vmatpush2.bf16.msra.mxu0 %v8700
        %10740 = vmatprep.subr.bf16.mxu0 %v8699
        %10741 = vmatpush2.bf16.msra.mxu0 %v8698
        %10742 = vmatprep.subr.bf16.mxu0 %v8697
        %10743 = vmatpush2.bf16.msra.mxu0 %v8696
        %10744 = vmatprep.subr.bf16.mxu0 %v8695
        %10745 = vmatpush2.bf16.msra.mxu0 %v8694
        %10746 = vmatprep.subr.bf16.mxu0 %v8693
        %10747 = vmatpush2.bf16.msra.mxu0 %v8692
        %10748 = vmatprep.mubr.bf16.mxu0 %v4496
        %10749 = vmatmul.mubr.bf16.gmra.mxu0 %v4495
        %v10750 = vpop.f32.mrf.mxu0
        %v10751 = vadd.f32 %v10710, %v10750
        %v10752 = vpop.f32.mrf.mxu0
        %v10753 = vadd.f32 %v10712, %v10752
        %v10754 = vpop.f32.mrf.mxu0
        %v10755 = vpop.f32.mrf.mxu0
        %10756 = vdwg.mxu0
        %10757 = vmatprep.subr.bf16.mxu0 %v8723
        %10758 = vmatpush1.bf16.msra.mxu0 %v8722
        %10759 = vmatprep.subr.bf16.mxu0 %v8721
        %10760 = vmatpush1.bf16.msra.mxu0 %v8720
        %10761 = vmatprep.subr.bf16.mxu0 %v8719
        %10762 = vmatpush1.bf16.msra.mxu0 %v8718
        %10763 = vmatprep.subr.bf16.mxu0 %v8717
        %10764 = vmatpush1.bf16.msra.mxu0 %v8716
        %10765 = vmatprep.subr.bf16.mxu0 %v8715
        %10766 = vmatpush1.bf16.msra.mxu0 %v8714
        %10767 = vmatprep.subr.bf16.mxu0 %v8713
        %10768 = vmatpush1.bf16.msra.mxu0 %v8712
        %10769 = vmatprep.subr.bf16.mxu0 %v8711
        %10770 = vmatpush1.bf16.msra.mxu0 %v8710
        %10771 = vmatprep.subr.bf16.mxu0 %v8709
        %10772 = vmatpush1.bf16.msra.mxu0 %v8708
        %10773 = vmatprep.subr.bf16.mxu0 %v8739
        %10774 = vmatpush2.bf16.msra.mxu0 %v8738
        %10775 = vmatprep.subr.bf16.mxu0 %v8737
        %10776 = vmatpush2.bf16.msra.mxu0 %v8736
        %10777 = vmatprep.subr.bf16.mxu0 %v8735
        %10778 = vmatpush2.bf16.msra.mxu0 %v8734
        %10779 = vmatprep.subr.bf16.mxu0 %v8733
        %10780 = vmatpush2.bf16.msra.mxu0 %v8732
        %10781 = vmatprep.subr.bf16.mxu0 %v8731
        %10782 = vmatpush2.bf16.msra.mxu0 %v8730
        %10783 = vmatprep.subr.bf16.mxu0 %v8729
        %10784 = vmatpush2.bf16.msra.mxu0 %v8728
        %10785 = vmatprep.subr.bf16.mxu0 %v8727
        %10786 = vmatpush2.bf16.msra.mxu0 %v8726
        %10787 = vmatprep.subr.bf16.mxu0 %v8725
        %10788 = vmatpush2.bf16.msra.mxu0 %v8724
        %10789 = vmatprep.mubr.bf16.mxu0 %v4498
        %10790 = vmatmul.mubr.bf16.gmra.mxu0 %v4497
        %v10791 = vpop.f32.mrf.mxu0
        %v10792 = vadd.f32 %v10751, %v10791
        %v10793 = vpop.f32.mrf.mxu0
        %v10794 = vadd.f32 %v10753, %v10793
        %v10795 = vpop.f32.mrf.mxu0
        %v10796 = vpop.f32.mrf.mxu0
        %10797 = vdwg.mxu0
        %10798 = vmatprep.subr.bf16.mxu0 %v8755
        %10799 = vmatpush1.bf16.msra.mxu0 %v8754
        %10800 = vmatprep.subr.bf16.mxu0 %v8753
        %10801 = vmatpush1.bf16.msra.mxu0 %v8752
        %10802 = vmatprep.subr.bf16.mxu0 %v8751
        %10803 = vmatpush1.bf16.msra.mxu0 %v8750
        %10804 = vmatprep.subr.bf16.mxu0 %v8749
        %10805 = vmatpush1.bf16.msra.mxu0 %v8748
        %10806 = vmatprep.subr.bf16.mxu0 %v8747
        %10807 = vmatpush1.bf16.msra.mxu0 %v8746
        %10808 = vmatprep.subr.bf16.mxu0 %v8745
        %10809 = vmatpush1.bf16.msra.mxu0 %v8744
        %10810 = vmatprep.subr.bf16.mxu0 %v8743
        %10811 = vmatpush1.bf16.msra.mxu0 %v8742
        %10812 = vmatprep.subr.bf16.mxu0 %v8741
        %10813 = vmatpush1.bf16.msra.mxu0 %v8740
        %10814 = vmatprep.subr.bf16.mxu0 %v8771
        %10815 = vmatpush2.bf16.msra.mxu0 %v8770
        %10816 = vmatprep.subr.bf16.mxu0 %v8769
        %10817 = vmatpush2.bf16.msra.mxu0 %v8768
        %10818 = vmatprep.subr.bf16.mxu0 %v8767
        %10819 = vmatpush2.bf16.msra.mxu0 %v8766
        %10820 = vmatprep.subr.bf16.mxu0 %v8765
        %10821 = vmatpush2.bf16.msra.mxu0 %v8764
        %10822 = vmatprep.subr.bf16.mxu0 %v8763
        %10823 = vmatpush2.bf16.msra.mxu0 %v8762
        %10824 = vmatprep.subr.bf16.mxu0 %v8761
        %10825 = vmatpush2.bf16.msra.mxu0 %v8760
        %10826 = vmatprep.subr.bf16.mxu0 %v8759
        %10827 = vmatpush2.bf16.msra.mxu0 %v8758
        %10828 = vmatprep.subr.bf16.mxu0 %v8757
        %10829 = vmatpush2.bf16.msra.mxu0 %v8756
        %10830 = vmatprep.mubr.bf16.mxu0 %v4500
        %10831 = vmatmul.mubr.bf16.gmra.mxu0 %v4499
        %v10832 = vpop.f32.mrf.mxu0
        %v10833 = vadd.f32 %v10792, %v10832
        %v10834 = vpop.f32.mrf.mxu0
        %v10835 = vadd.f32 %v10794, %v10834
        %v10836 = vpop.f32.mrf.mxu0
        %v10837 = vpop.f32.mrf.mxu0
        %10838 = vdwg.mxu0
        %10839 = vmatprep.subr.bf16.mxu0 %v8787
        %10840 = vmatpush1.bf16.msra.mxu0 %v8786
        %10841 = vmatprep.subr.bf16.mxu0 %v8785
        %10842 = vmatpush1.bf16.msra.mxu0 %v8784
        %10843 = vmatprep.subr.bf16.mxu0 %v8783
        %10844 = vmatpush1.bf16.msra.mxu0 %v8782
        %10845 = vmatprep.subr.bf16.mxu0 %v8781
        %10846 = vmatpush1.bf16.msra.mxu0 %v8780
        %10847 = vmatprep.subr.bf16.mxu0 %v8779
        %10848 = vmatpush1.bf16.msra.mxu0 %v8778
        %10849 = vmatprep.subr.bf16.mxu0 %v8777
        %10850 = vmatpush1.bf16.msra.mxu0 %v8776
        %10851 = vmatprep.subr.bf16.mxu0 %v8775
        %10852 = vmatpush1.bf16.msra.mxu0 %v8774
        %10853 = vmatprep.subr.bf16.mxu0 %v8773
        %10854 = vmatpush1.bf16.msra.mxu0 %v8772
        %10855 = vmatprep.subr.bf16.mxu0 %v8803
        %10856 = vmatpush2.bf16.msra.mxu0 %v8802
        %10857 = vmatprep.subr.bf16.mxu0 %v8801
        %10858 = vmatpush2.bf16.msra.mxu0 %v8800
        %10859 = vmatprep.subr.bf16.mxu0 %v8799
        %10860 = vmatpush2.bf16.msra.mxu0 %v8798
        %10861 = vmatprep.subr.bf16.mxu0 %v8797
        %10862 = vmatpush2.bf16.msra.mxu0 %v8796
        %10863 = vmatprep.subr.bf16.mxu0 %v8795
        %10864 = vmatpush2.bf16.msra.mxu0 %v8794
        %10865 = vmatprep.subr.bf16.mxu0 %v8793
        %10866 = vmatpush2.bf16.msra.mxu0 %v8792
        %10867 = vmatprep.subr.bf16.mxu0 %v8791
        %10868 = vmatpush2.bf16.msra.mxu0 %v8790
        %10869 = vmatprep.subr.bf16.mxu0 %v8789
        %10870 = vmatpush2.bf16.msra.mxu0 %v8788
        %10871 = vmatprep.mubr.bf16.mxu0 %v4502
        %10872 = vmatmul.mubr.bf16.gmra.mxu0 %v4501
        %v10873 = vpop.f32.mrf.mxu0
        %v10874 = vadd.f32 %v10833, %v10873
        %v10875 = vpop.f32.mrf.mxu0
        %v10876 = vadd.f32 %v10835, %v10875
        %v10877 = vpop.f32.mrf.mxu0
        %v10878 = vpop.f32.mrf.mxu0
        %10879 = vdwg.mxu0
        %10880 = vmatprep.subr.bf16.mxu0 %v8819
        %10881 = vmatpush1.bf16.msra.mxu0 %v8818
        %10882 = vmatprep.subr.bf16.mxu0 %v8817
        %10883 = vmatpush1.bf16.msra.mxu0 %v8816
        %10884 = vmatprep.subr.bf16.mxu0 %v8815
        %10885 = vmatpush1.bf16.msra.mxu0 %v8814
        %10886 = vmatprep.subr.bf16.mxu0 %v8813
        %10887 = vmatpush1.bf16.msra.mxu0 %v8812
        %10888 = vmatprep.subr.bf16.mxu0 %v8811
        %10889 = vmatpush1.bf16.msra.mxu0 %v8810
        %10890 = vmatprep.subr.bf16.mxu0 %v8809
        %10891 = vmatpush1.bf16.msra.mxu0 %v8808
        %10892 = vmatprep.subr.bf16.mxu0 %v8807
        %10893 = vmatpush1.bf16.msra.mxu0 %v8806
        %10894 = vmatprep.subr.bf16.mxu0 %v8805
        %10895 = vmatpush1.bf16.msra.mxu0 %v8804
        %10896 = vmatprep.subr.bf16.mxu0 %v8835
        %10897 = vmatpush2.bf16.msra.mxu0 %v8834
        %10898 = vmatprep.subr.bf16.mxu0 %v8833
        %10899 = vmatpush2.bf16.msra.mxu0 %v8832
        %10900 = vmatprep.subr.bf16.mxu0 %v8831
        %10901 = vmatpush2.bf16.msra.mxu0 %v8830
        %10902 = vmatprep.subr.bf16.mxu0 %v8829
        %10903 = vmatpush2.bf16.msra.mxu0 %v8828
        %10904 = vmatprep.subr.bf16.mxu0 %v8827
        %10905 = vmatpush2.bf16.msra.mxu0 %v8826
        %10906 = vmatprep.subr.bf16.mxu0 %v8825
        %10907 = vmatpush2.bf16.msra.mxu0 %v8824
        %10908 = vmatprep.subr.bf16.mxu0 %v8823
        %10909 = vmatpush2.bf16.msra.mxu0 %v8822
        %10910 = vmatprep.subr.bf16.mxu0 %v8821
        %10911 = vmatpush2.bf16.msra.mxu0 %v8820
        %10912 = vmatprep.mubr.bf16.mxu0 %v4504
        %10913 = vmatmul.mubr.bf16.gmra.mxu0 %v4503
        %v10914 = vpop.f32.mrf.mxu0
        %v10915 = vadd.f32 %v10874, %v10914
        %v10916 = vpop.f32.mrf.mxu0
        %v10917 = vadd.f32 %v10876, %v10916
        %v10918 = vpop.f32.mrf.mxu0
        %v10919 = vpop.f32.mrf.mxu0
        %10920 = vdwg.mxu0
        %10921 = vmatprep.subr.bf16.mxu0 %v8851
        %10922 = vmatpush1.bf16.msra.mxu0 %v8850
        %10923 = vmatprep.subr.bf16.mxu0 %v8849
        %10924 = vmatpush1.bf16.msra.mxu0 %v8848
        %10925 = vmatprep.subr.bf16.mxu0 %v8847
        %10926 = vmatpush1.bf16.msra.mxu0 %v8846
        %10927 = vmatprep.subr.bf16.mxu0 %v8845
        %10928 = vmatpush1.bf16.msra.mxu0 %v8844
        %10929 = vmatprep.subr.bf16.mxu0 %v8843
        %10930 = vmatpush1.bf16.msra.mxu0 %v8842
        %10931 = vmatprep.subr.bf16.mxu0 %v8841
        %10932 = vmatpush1.bf16.msra.mxu0 %v8840
        %10933 = vmatprep.subr.bf16.mxu0 %v8839
        %10934 = vmatpush1.bf16.msra.mxu0 %v8838
        %10935 = vmatprep.subr.bf16.mxu0 %v8837
        %10936 = vmatpush1.bf16.msra.mxu0 %v8836
        %10937 = vmatprep.subr.bf16.mxu0 %v8867
        %10938 = vmatpush2.bf16.msra.mxu0 %v8866
        %10939 = vmatprep.subr.bf16.mxu0 %v8865
        %10940 = vmatpush2.bf16.msra.mxu0 %v8864
        %10941 = vmatprep.subr.bf16.mxu0 %v8863
        %10942 = vmatpush2.bf16.msra.mxu0 %v8862
        %10943 = vmatprep.subr.bf16.mxu0 %v8861
        %10944 = vmatpush2.bf16.msra.mxu0 %v8860
        %10945 = vmatprep.subr.bf16.mxu0 %v8859
        %10946 = vmatpush2.bf16.msra.mxu0 %v8858
        %10947 = vmatprep.subr.bf16.mxu0 %v8857
        %10948 = vmatpush2.bf16.msra.mxu0 %v8856
        %10949 = vmatprep.subr.bf16.mxu0 %v8855
        %10950 = vmatpush2.bf16.msra.mxu0 %v8854
        %10951 = vmatprep.subr.bf16.mxu0 %v8853
        %10952 = vmatpush2.bf16.msra.mxu0 %v8852
        %10953 = vmatprep.mubr.bf16.mxu0 %v4506
        %10954 = vmatmul.mubr.bf16.gmra.mxu0 %v4505
        %v10955 = vpop.f32.mrf.mxu0
        %v10956 = vadd.f32 %v10915, %v10955
        %v10957 = vpop.f32.mrf.mxu0
        %v10958 = vadd.f32 %v10917, %v10957
        %v10959 = vpop.f32.mrf.mxu0
        %v10960 = vpop.f32.mrf.mxu0
        %10961 = vdwg.mxu0
        %10962 = vmatprep.subr.bf16.mxu0 %v8883
        %10963 = vmatpush1.bf16.msra.mxu0 %v8882
        %10964 = vmatprep.subr.bf16.mxu0 %v8881
        %10965 = vmatpush1.bf16.msra.mxu0 %v8880
        %10966 = vmatprep.subr.bf16.mxu0 %v8879
        %10967 = vmatpush1.bf16.msra.mxu0 %v8878
        %10968 = vmatprep.subr.bf16.mxu0 %v8877
        %10969 = vmatpush1.bf16.msra.mxu0 %v8876
        %10970 = vmatprep.subr.bf16.mxu0 %v8875
        %10971 = vmatpush1.bf16.msra.mxu0 %v8874
        %10972 = vmatprep.subr.bf16.mxu0 %v8873
        %10973 = vmatpush1.bf16.msra.mxu0 %v8872
        %10974 = vmatprep.subr.bf16.mxu0 %v8871
        %10975 = vmatpush1.bf16.msra.mxu0 %v8870
        %10976 = vmatprep.subr.bf16.mxu0 %v8869
        %10977 = vmatpush1.bf16.msra.mxu0 %v8868
        %10978 = vmatprep.subr.bf16.mxu0 %v8899
        %10979 = vmatpush2.bf16.msra.mxu0 %v8898
        %10980 = vmatprep.subr.bf16.mxu0 %v8897
        %10981 = vmatpush2.bf16.msra.mxu0 %v8896
        %10982 = vmatprep.subr.bf16.mxu0 %v8895
        %10983 = vmatpush2.bf16.msra.mxu0 %v8894
        %10984 = vmatprep.subr.bf16.mxu0 %v8893
        %10985 = vmatpush2.bf16.msra.mxu0 %v8892
        %10986 = vmatprep.subr.bf16.mxu0 %v8891
        %10987 = vmatpush2.bf16.msra.mxu0 %v8890
        %10988 = vmatprep.subr.bf16.mxu0 %v8889
        %10989 = vmatpush2.bf16.msra.mxu0 %v8888
        %10990 = vmatprep.subr.bf16.mxu0 %v8887
        %10991 = vmatpush2.bf16.msra.mxu0 %v8886
        %10992 = vmatprep.subr.bf16.mxu0 %v8885
        %10993 = vmatpush2.bf16.msra.mxu0 %v8884
        %10994 = vmatprep.mubr.bf16.mxu0 %v4508
        %10995 = vmatmul.mubr.bf16.gmra.mxu0 %v4507
        %v10996 = vpop.f32.mrf.mxu0
        %v10997 = vadd.f32 %v10956, %v10996
        %v10998 = vpop.f32.mrf.mxu0
        %v10999 = vadd.f32 %v10958, %v10998
        %v11000 = vpop.f32.mrf.mxu0
        %v11001 = vpop.f32.mrf.mxu0
        %11002 = vdwg.mxu0
        %11003 = vmatprep.subr.bf16.mxu0 %v8915
        %11004 = vmatpush1.bf16.msra.mxu0 %v8914
        %11005 = vmatprep.subr.bf16.mxu0 %v8913
        %11006 = vmatpush1.bf16.msra.mxu0 %v8912
        %11007 = vmatprep.subr.bf16.mxu0 %v8911
        %11008 = vmatpush1.bf16.msra.mxu0 %v8910
        %11009 = vmatprep.subr.bf16.mxu0 %v8909
        %11010 = vmatpush1.bf16.msra.mxu0 %v8908
        %11011 = vmatprep.subr.bf16.mxu0 %v8907
        %11012 = vmatpush1.bf16.msra.mxu0 %v8906
        %11013 = vmatprep.subr.bf16.mxu0 %v8905
        %11014 = vmatpush1.bf16.msra.mxu0 %v8904
        %11015 = vmatprep.subr.bf16.mxu0 %v8903
        %11016 = vmatpush1.bf16.msra.mxu0 %v8902
        %11017 = vmatprep.subr.bf16.mxu0 %v8901
        %11018 = vmatpush1.bf16.msra.mxu0 %v8900
        %11019 = vmatprep.subr.bf16.mxu0 %v8931
        %11020 = vmatpush2.bf16.msra.mxu0 %v8930
        %11021 = vmatprep.subr.bf16.mxu0 %v8929
        %11022 = vmatpush2.bf16.msra.mxu0 %v8928
        %11023 = vmatprep.subr.bf16.mxu0 %v8927
        %11024 = vmatpush2.bf16.msra.mxu0 %v8926
        %11025 = vmatprep.subr.bf16.mxu0 %v8925
        %11026 = vmatpush2.bf16.msra.mxu0 %v8924
        %11027 = vmatprep.subr.bf16.mxu0 %v8923
        %11028 = vmatpush2.bf16.msra.mxu0 %v8922
        %11029 = vmatprep.subr.bf16.mxu0 %v8921
        %11030 = vmatpush2.bf16.msra.mxu0 %v8920
        %11031 = vmatprep.subr.bf16.mxu0 %v8919
        %11032 = vmatpush2.bf16.msra.mxu0 %v8918
        %11033 = vmatprep.subr.bf16.mxu0 %v8917
        %11034 = vmatpush2.bf16.msra.mxu0 %v8916
        %11035 = vmatprep.mubr.bf16.mxu0 %v4510
        %11036 = vmatmul.mubr.bf16.gmra.mxu0 %v4509
        %v11037 = vpop.f32.mrf.mxu0
        %v11038 = vadd.f32 %v10997, %v11037
        %v11039 = vpop.f32.mrf.mxu0
        %v11040 = vadd.f32 %v10999, %v11039
        %v11041 = vpop.f32.mrf.mxu0
        %v11042 = vpop.f32.mrf.mxu0
        %11043 = vdwg.mxu0
        %11044 = vmatprep.subr.bf16.mxu0 %v8947
        %11045 = vmatpush1.bf16.msra.mxu0 %v8946
        %11046 = vmatprep.subr.bf16.mxu0 %v8945
        %11047 = vmatpush1.bf16.msra.mxu0 %v8944
        %11048 = vmatprep.subr.bf16.mxu0 %v8943
        %11049 = vmatpush1.bf16.msra.mxu0 %v8942
        %11050 = vmatprep.subr.bf16.mxu0 %v8941
        %11051 = vmatpush1.bf16.msra.mxu0 %v8940
        %11052 = vmatprep.subr.bf16.mxu0 %v8939
        %11053 = vmatpush1.bf16.msra.mxu0 %v8938
        %11054 = vmatprep.subr.bf16.mxu0 %v8937
        %11055 = vmatpush1.bf16.msra.mxu0 %v8936
        %11056 = vmatprep.subr.bf16.mxu0 %v8935
        %11057 = vmatpush1.bf16.msra.mxu0 %v8934
        %11058 = vmatprep.subr.bf16.mxu0 %v8933
        %11059 = vmatpush1.bf16.msra.mxu0 %v8932
        %11060 = vmatprep.subr.bf16.mxu0 %v8963
        %11061 = vmatpush2.bf16.msra.mxu0 %v8962
        %11062 = vmatprep.subr.bf16.mxu0 %v8961
        %11063 = vmatpush2.bf16.msra.mxu0 %v8960
        %11064 = vmatprep.subr.bf16.mxu0 %v8959
        %11065 = vmatpush2.bf16.msra.mxu0 %v8958
        %11066 = vmatprep.subr.bf16.mxu0 %v8957
        %11067 = vmatpush2.bf16.msra.mxu0 %v8956
        %11068 = vmatprep.subr.bf16.mxu0 %v8955
        %11069 = vmatpush2.bf16.msra.mxu0 %v8954
        %11070 = vmatprep.subr.bf16.mxu0 %v8953
        %11071 = vmatpush2.bf16.msra.mxu0 %v8952
        %11072 = vmatprep.subr.bf16.mxu0 %v8951
        %11073 = vmatpush2.bf16.msra.mxu0 %v8950
        %11074 = vmatprep.subr.bf16.mxu0 %v8949
        %11075 = vmatpush2.bf16.msra.mxu0 %v8948
        %11076 = vmatprep.mubr.bf16.mxu0 %v4512
        %11077 = vmatmul.mubr.bf16.gmra.mxu0 %v4511
        %v11078 = vpop.f32.mrf.mxu0
        %v11079 = vadd.f32 %v11038, %v11078
        %v11080 = vpop.f32.mrf.mxu0
        %v11081 = vadd.f32 %v11040, %v11080
        %v11082 = vpop.f32.mrf.mxu0
        %v11083 = vpop.f32.mrf.mxu0
        %11084 = vdwg.mxu0
        %11085 = vmatprep.subr.bf16.mxu0 %v8979
        %11086 = vmatpush1.bf16.msra.mxu0 %v8978
        %11087 = vmatprep.subr.bf16.mxu0 %v8977
        %11088 = vmatpush1.bf16.msra.mxu0 %v8976
        %11089 = vmatprep.subr.bf16.mxu0 %v8975
        %11090 = vmatpush1.bf16.msra.mxu0 %v8974
        %11091 = vmatprep.subr.bf16.mxu0 %v8973
        %11092 = vmatpush1.bf16.msra.mxu0 %v8972
        %11093 = vmatprep.subr.bf16.mxu0 %v8971
        %11094 = vmatpush1.bf16.msra.mxu0 %v8970
        %11095 = vmatprep.subr.bf16.mxu0 %v8969
        %11096 = vmatpush1.bf16.msra.mxu0 %v8968
        %11097 = vmatprep.subr.bf16.mxu0 %v8967
        %11098 = vmatpush1.bf16.msra.mxu0 %v8966
        %11099 = vmatprep.subr.bf16.mxu0 %v8965
        %11100 = vmatpush1.bf16.msra.mxu0 %v8964
        %11101 = vmatprep.subr.bf16.mxu0 %v8995
        %11102 = vmatpush2.bf16.msra.mxu0 %v8994
        %11103 = vmatprep.subr.bf16.mxu0 %v8993
        %11104 = vmatpush2.bf16.msra.mxu0 %v8992
        %11105 = vmatprep.subr.bf16.mxu0 %v8991
        %11106 = vmatpush2.bf16.msra.mxu0 %v8990
        %11107 = vmatprep.subr.bf16.mxu0 %v8989
        %11108 = vmatpush2.bf16.msra.mxu0 %v8988
        %11109 = vmatprep.subr.bf16.mxu0 %v8987
        %11110 = vmatpush2.bf16.msra.mxu0 %v8986
        %11111 = vmatprep.subr.bf16.mxu0 %v8985
        %11112 = vmatpush2.bf16.msra.mxu0 %v8984
        %11113 = vmatprep.subr.bf16.mxu0 %v8983
        %11114 = vmatpush2.bf16.msra.mxu0 %v8982
        %11115 = vmatprep.subr.bf16.mxu0 %v8981
        %11116 = vmatpush2.bf16.msra.mxu0 %v8980
        %11117 = vmatprep.mubr.bf16.mxu0 %v4514
        %11118 = vmatmul.mubr.bf16.gmra.mxu0 %v4513
        %v11119 = vpop.f32.mrf.mxu0
        %v11120 = vadd.f32 %v11079, %v11119
        %v11121 = vpop.f32.mrf.mxu0
        %v11122 = vadd.f32 %v11081, %v11121
        %v11123 = vpop.f32.mrf.mxu0
        %v11124 = vpop.f32.mrf.mxu0
        %11125 = vdwg.mxu0
        %11126 = vmatprep.subr.bf16.mxu0 %v9011
        %11127 = vmatpush1.bf16.msra.mxu0 %v9010
        %11128 = vmatprep.subr.bf16.mxu0 %v9009
        %11129 = vmatpush1.bf16.msra.mxu0 %v9008
        %11130 = vmatprep.subr.bf16.mxu0 %v9007
        %11131 = vmatpush1.bf16.msra.mxu0 %v9006
        %11132 = vmatprep.subr.bf16.mxu0 %v9005
        %11133 = vmatpush1.bf16.msra.mxu0 %v9004
        %11134 = vmatprep.subr.bf16.mxu0 %v9003
        %11135 = vmatpush1.bf16.msra.mxu0 %v9002
        %11136 = vmatprep.subr.bf16.mxu0 %v9001
        %11137 = vmatpush1.bf16.msra.mxu0 %v9000
        %11138 = vmatprep.subr.bf16.mxu0 %v8999
        %11139 = vmatpush1.bf16.msra.mxu0 %v8998
        %11140 = vmatprep.subr.bf16.mxu0 %v8997
        %11141 = vmatpush1.bf16.msra.mxu0 %v8996
        %11142 = vmatprep.subr.bf16.mxu0 %v9027
        %11143 = vmatpush2.bf16.msra.mxu0 %v9026
        %11144 = vmatprep.subr.bf16.mxu0 %v9025
        %11145 = vmatpush2.bf16.msra.mxu0 %v9024
        %11146 = vmatprep.subr.bf16.mxu0 %v9023
        %11147 = vmatpush2.bf16.msra.mxu0 %v9022
        %11148 = vmatprep.subr.bf16.mxu0 %v9021
        %11149 = vmatpush2.bf16.msra.mxu0 %v9020
        %11150 = vmatprep.subr.bf16.mxu0 %v9019
        %11151 = vmatpush2.bf16.msra.mxu0 %v9018
        %11152 = vmatprep.subr.bf16.mxu0 %v9017
        %11153 = vmatpush2.bf16.msra.mxu0 %v9016
        %11154 = vmatprep.subr.bf16.mxu0 %v9015
        %11155 = vmatpush2.bf16.msra.mxu0 %v9014
        %11156 = vmatprep.subr.bf16.mxu0 %v9013
        %11157 = vmatpush2.bf16.msra.mxu0 %v9012
        %11158 = vmatprep.mubr.bf16.mxu0 %v4516
        %11159 = vmatmul.mubr.bf16.gmra.mxu0 %v4515
        %v11160 = vpop.f32.mrf.mxu0
        %v11161 = vadd.f32 %v11120, %v11160
        %v11162 = vpop.f32.mrf.mxu0
        %v11163 = vadd.f32 %v11122, %v11162
        %v11164 = vpop.f32.mrf.mxu0
        %v11165 = vpop.f32.mrf.mxu0
        %11166 = vdwg.mxu0
        %11167 = vmatprep.subr.bf16.mxu0 %v9043
        %11168 = vmatpush1.bf16.msra.mxu0 %v9042
        %11169 = vmatprep.subr.bf16.mxu0 %v9041
        %11170 = vmatpush1.bf16.msra.mxu0 %v9040
        %11171 = vmatprep.subr.bf16.mxu0 %v9039
        %11172 = vmatpush1.bf16.msra.mxu0 %v9038
        %11173 = vmatprep.subr.bf16.mxu0 %v9037
        %11174 = vmatpush1.bf16.msra.mxu0 %v9036
        %11175 = vmatprep.subr.bf16.mxu0 %v9035
        %11176 = vmatpush1.bf16.msra.mxu0 %v9034
        %11177 = vmatprep.subr.bf16.mxu0 %v9033
        %11178 = vmatpush1.bf16.msra.mxu0 %v9032
        %11179 = vmatprep.subr.bf16.mxu0 %v9031
        %11180 = vmatpush1.bf16.msra.mxu0 %v9030
        %11181 = vmatprep.subr.bf16.mxu0 %v9029
        %11182 = vmatpush1.bf16.msra.mxu0 %v9028
        %11183 = vmatprep.subr.bf16.mxu0 %v9059
        %11184 = vmatpush2.bf16.msra.mxu0 %v9058
        %11185 = vmatprep.subr.bf16.mxu0 %v9057
        %11186 = vmatpush2.bf16.msra.mxu0 %v9056
        %11187 = vmatprep.subr.bf16.mxu0 %v9055
        %11188 = vmatpush2.bf16.msra.mxu0 %v9054
        %11189 = vmatprep.subr.bf16.mxu0 %v9053
        %11190 = vmatpush2.bf16.msra.mxu0 %v9052
        %11191 = vmatprep.subr.bf16.mxu0 %v9051
        %11192 = vmatpush2.bf16.msra.mxu0 %v9050
        %11193 = vmatprep.subr.bf16.mxu0 %v9049
        %11194 = vmatpush2.bf16.msra.mxu0 %v9048
        %11195 = vmatprep.subr.bf16.mxu0 %v9047
        %11196 = vmatpush2.bf16.msra.mxu0 %v9046
        %11197 = vmatprep.subr.bf16.mxu0 %v9045
        %11198 = vmatpush2.bf16.msra.mxu0 %v9044
        %11199 = vmatprep.mubr.bf16.mxu0 %v4518
        %11200 = vmatmul.mubr.bf16.gmra.mxu0 %v4517
        %v11201 = vpop.f32.mrf.mxu0
        %v11202 = vadd.f32 %v11161, %v11201
        %v11203 = vpop.f32.mrf.mxu0
        %v11204 = vadd.f32 %v11163, %v11203
        %v11205 = vpop.f32.mrf.mxu0
        %v11206 = vpop.f32.mrf.mxu0
        %11207 = vdwg.mxu0
        %11208 = vmatprep.subr.bf16.mxu0 %v9075
        %11209 = vmatpush1.bf16.msra.mxu0 %v9074
        %11210 = vmatprep.subr.bf16.mxu0 %v9073
        %11211 = vmatpush1.bf16.msra.mxu0 %v9072
        %11212 = vmatprep.subr.bf16.mxu0 %v9071
        %11213 = vmatpush1.bf16.msra.mxu0 %v9070
        %11214 = vmatprep.subr.bf16.mxu0 %v9069
        %11215 = vmatpush1.bf16.msra.mxu0 %v9068
        %11216 = vmatprep.subr.bf16.mxu0 %v9067
        %11217 = vmatpush1.bf16.msra.mxu0 %v9066
        %11218 = vmatprep.subr.bf16.mxu0 %v9065
        %11219 = vmatpush1.bf16.msra.mxu0 %v9064
        %11220 = vmatprep.subr.bf16.mxu0 %v9063
        %11221 = vmatpush1.bf16.msra.mxu0 %v9062
        %11222 = vmatprep.subr.bf16.mxu0 %v9061
        %11223 = vmatpush1.bf16.msra.mxu0 %v9060
        %11224 = vmatprep.subr.bf16.mxu0 %v9091
        %11225 = vmatpush2.bf16.msra.mxu0 %v9090
        %11226 = vmatprep.subr.bf16.mxu0 %v9089
        %11227 = vmatpush2.bf16.msra.mxu0 %v9088
        %11228 = vmatprep.subr.bf16.mxu0 %v9087
        %11229 = vmatpush2.bf16.msra.mxu0 %v9086
        %11230 = vmatprep.subr.bf16.mxu0 %v9085
        %11231 = vmatpush2.bf16.msra.mxu0 %v9084
        %11232 = vmatprep.subr.bf16.mxu0 %v9083
        %11233 = vmatpush2.bf16.msra.mxu0 %v9082
        %11234 = vmatprep.subr.bf16.mxu0 %v9081
        %11235 = vmatpush2.bf16.msra.mxu0 %v9080
        %11236 = vmatprep.subr.bf16.mxu0 %v9079
        %11237 = vmatpush2.bf16.msra.mxu0 %v9078
        %11238 = vmatprep.subr.bf16.mxu0 %v9077
        %11239 = vmatpush2.bf16.msra.mxu0 %v9076
        %11240 = vmatprep.mubr.bf16.mxu0 %v4520
        %11241 = vmatmul.mubr.bf16.gmra.mxu0 %v4519
        %v11242 = vpop.f32.mrf.mxu0
        %v11243 = vadd.f32 %v11202, %v11242
        %v11244 = vpop.f32.mrf.mxu0
        %v11245 = vadd.f32 %v11204, %v11244
        %v11246 = vpop.f32.mrf.mxu0
        %v11247 = vpop.f32.mrf.mxu0
        %11248 = vdwg.mxu0
        %11249 = vmatprep.subr.bf16.mxu0 %v9107
        %11250 = vmatpush1.bf16.msra.mxu0 %v9106
        %11251 = vmatprep.subr.bf16.mxu0 %v9105
        %11252 = vmatpush1.bf16.msra.mxu0 %v9104
        %11253 = vmatprep.subr.bf16.mxu0 %v9103
        %11254 = vmatpush1.bf16.msra.mxu0 %v9102
        %11255 = vmatprep.subr.bf16.mxu0 %v9101
        %11256 = vmatpush1.bf16.msra.mxu0 %v9100
        %11257 = vmatprep.subr.bf16.mxu0 %v9099
        %11258 = vmatpush1.bf16.msra.mxu0 %v9098
        %11259 = vmatprep.subr.bf16.mxu0 %v9097
        %11260 = vmatpush1.bf16.msra.mxu0 %v9096
        %11261 = vmatprep.subr.bf16.mxu0 %v9095
        %11262 = vmatpush1.bf16.msra.mxu0 %v9094
        %11263 = vmatprep.subr.bf16.mxu0 %v9093
        %11264 = vmatpush1.bf16.msra.mxu0 %v9092
        %11265 = vmatprep.subr.bf16.mxu0 %v9123
        %11266 = vmatpush2.bf16.msra.mxu0 %v9122
        %11267 = vmatprep.subr.bf16.mxu0 %v9121
        %11268 = vmatpush2.bf16.msra.mxu0 %v9120
        %11269 = vmatprep.subr.bf16.mxu0 %v9119
        %11270 = vmatpush2.bf16.msra.mxu0 %v9118
        %11271 = vmatprep.subr.bf16.mxu0 %v9117
        %11272 = vmatpush2.bf16.msra.mxu0 %v9116
        %11273 = vmatprep.subr.bf16.mxu0 %v9115
        %11274 = vmatpush2.bf16.msra.mxu0 %v9114
        %11275 = vmatprep.subr.bf16.mxu0 %v9113
        %11276 = vmatpush2.bf16.msra.mxu0 %v9112
        %11277 = vmatprep.subr.bf16.mxu0 %v9111
        %11278 = vmatpush2.bf16.msra.mxu0 %v9110
        %11279 = vmatprep.subr.bf16.mxu0 %v9109
        %11280 = vmatpush2.bf16.msra.mxu0 %v9108
        %11281 = vmatprep.mubr.bf16.mxu0 %v4522
        %11282 = vmatmul.mubr.bf16.gmra.mxu0 %v4521
        %v11283 = vpop.f32.mrf.mxu0
        %v11284 = vadd.f32 %v11243, %v11283
        %v11285 = vpop.f32.mrf.mxu0
        %v11286 = vadd.f32 %v11245, %v11285
        %v11287 = vpop.f32.mrf.mxu0
        %v11288 = vpop.f32.mrf.mxu0
        %11289 = vdwg.mxu0
        %11290 = vmatprep.subr.bf16.mxu0 %v9139
        %11291 = vmatpush1.bf16.msra.mxu0 %v9138
        %11292 = vmatprep.subr.bf16.mxu0 %v9137
        %11293 = vmatpush1.bf16.msra.mxu0 %v9136
        %11294 = vmatprep.subr.bf16.mxu0 %v9135
        %11295 = vmatpush1.bf16.msra.mxu0 %v9134
        %11296 = vmatprep.subr.bf16.mxu0 %v9133
        %11297 = vmatpush1.bf16.msra.mxu0 %v9132
        %11298 = vmatprep.subr.bf16.mxu0 %v9131
        %11299 = vmatpush1.bf16.msra.mxu0 %v9130
        %11300 = vmatprep.subr.bf16.mxu0 %v9129
        %11301 = vmatpush1.bf16.msra.mxu0 %v9128
        %11302 = vmatprep.subr.bf16.mxu0 %v9127
        %11303 = vmatpush1.bf16.msra.mxu0 %v9126
        %11304 = vmatprep.subr.bf16.mxu0 %v9125
        %11305 = vmatpush1.bf16.msra.mxu0 %v9124
        %11306 = vmatprep.subr.bf16.mxu0 %v9155
        %11307 = vmatpush2.bf16.msra.mxu0 %v9154
        %11308 = vmatprep.subr.bf16.mxu0 %v9153
        %11309 = vmatpush2.bf16.msra.mxu0 %v9152
        %11310 = vmatprep.subr.bf16.mxu0 %v9151
        %11311 = vmatpush2.bf16.msra.mxu0 %v9150
        %11312 = vmatprep.subr.bf16.mxu0 %v9149
        %11313 = vmatpush2.bf16.msra.mxu0 %v9148
        %11314 = vmatprep.subr.bf16.mxu0 %v9147
        %11315 = vmatpush2.bf16.msra.mxu0 %v9146
        %11316 = vmatprep.subr.bf16.mxu0 %v9145
        %11317 = vmatpush2.bf16.msra.mxu0 %v9144
        %11318 = vmatprep.subr.bf16.mxu0 %v9143
        %11319 = vmatpush2.bf16.msra.mxu0 %v9142
        %11320 = vmatprep.subr.bf16.mxu0 %v9141
        %11321 = vmatpush2.bf16.msra.mxu0 %v9140
        %11322 = vmatprep.mubr.bf16.mxu0 %v4524
        %11323 = vmatmul.mubr.bf16.gmra.mxu0 %v4523
        %v11324 = vpop.f32.mrf.mxu0
        %v11325 = vadd.f32 %v11284, %v11324
        %v11326 = vpop.f32.mrf.mxu0
        %v11327 = vadd.f32 %v11286, %v11326
        %v11328 = vpop.f32.mrf.mxu0
        %v11329 = vpop.f32.mrf.mxu0
        %11330 = vdwg.mxu0
        %11331 = vmatprep.subr.bf16.mxu0 %v9171
        %11332 = vmatpush1.bf16.msra.mxu0 %v9170
        %11333 = vmatprep.subr.bf16.mxu0 %v9169
        %11334 = vmatpush1.bf16.msra.mxu0 %v9168
        %11335 = vmatprep.subr.bf16.mxu0 %v9167
        %11336 = vmatpush1.bf16.msra.mxu0 %v9166
        %11337 = vmatprep.subr.bf16.mxu0 %v9165
        %11338 = vmatpush1.bf16.msra.mxu0 %v9164
        %11339 = vmatprep.subr.bf16.mxu0 %v9163
        %11340 = vmatpush1.bf16.msra.mxu0 %v9162
        %11341 = vmatprep.subr.bf16.mxu0 %v9161
        %11342 = vmatpush1.bf16.msra.mxu0 %v9160
        %11343 = vmatprep.subr.bf16.mxu0 %v9159
        %11344 = vmatpush1.bf16.msra.mxu0 %v9158
        %11345 = vmatprep.subr.bf16.mxu0 %v9157
        %11346 = vmatpush1.bf16.msra.mxu0 %v9156
        %11347 = vmatprep.subr.bf16.mxu0 %v9187
        %11348 = vmatpush2.bf16.msra.mxu0 %v9186
        %11349 = vmatprep.subr.bf16.mxu0 %v9185
        %11350 = vmatpush2.bf16.msra.mxu0 %v9184
        %11351 = vmatprep.subr.bf16.mxu0 %v9183
        %11352 = vmatpush2.bf16.msra.mxu0 %v9182
        %11353 = vmatprep.subr.bf16.mxu0 %v9181
        %11354 = vmatpush2.bf16.msra.mxu0 %v9180
        %11355 = vmatprep.subr.bf16.mxu0 %v9179
        %11356 = vmatpush2.bf16.msra.mxu0 %v9178
        %11357 = vmatprep.subr.bf16.mxu0 %v9177
        %11358 = vmatpush2.bf16.msra.mxu0 %v9176
        %11359 = vmatprep.subr.bf16.mxu0 %v9175
        %11360 = vmatpush2.bf16.msra.mxu0 %v9174
        %11361 = vmatprep.subr.bf16.mxu0 %v9173
        %11362 = vmatpush2.bf16.msra.mxu0 %v9172
        %11363 = vmatprep.mubr.bf16.mxu0 %v4526
        %11364 = vmatmul.mubr.bf16.gmra.mxu0 %v4525
        %v11365 = vpop.f32.mrf.mxu0
        %v11366 = vadd.f32 %v11325, %v11365
        %v11367 = vpop.f32.mrf.mxu0
        %v11368 = vadd.f32 %v11327, %v11367
        %v11369 = vpop.f32.mrf.mxu0
        %v11370 = vpop.f32.mrf.mxu0
        %11371 = vdwg.mxu0
        %11372 = vmatprep.subr.bf16.mxu0 %v9203
        %11373 = vmatpush1.bf16.msra.mxu0 %v9202
        %11374 = vmatprep.subr.bf16.mxu0 %v9201
        %11375 = vmatpush1.bf16.msra.mxu0 %v9200
        %11376 = vmatprep.subr.bf16.mxu0 %v9199
        %11377 = vmatpush1.bf16.msra.mxu0 %v9198
        %11378 = vmatprep.subr.bf16.mxu0 %v9197
        %11379 = vmatpush1.bf16.msra.mxu0 %v9196
        %11380 = vmatprep.subr.bf16.mxu0 %v9195
        %11381 = vmatpush1.bf16.msra.mxu0 %v9194
        %11382 = vmatprep.subr.bf16.mxu0 %v9193
        %11383 = vmatpush1.bf16.msra.mxu0 %v9192
        %11384 = vmatprep.subr.bf16.mxu0 %v9191
        %11385 = vmatpush1.bf16.msra.mxu0 %v9190
        %11386 = vmatprep.subr.bf16.mxu0 %v9189
        %11387 = vmatpush1.bf16.msra.mxu0 %v9188
        %11388 = vmatprep.subr.bf16.mxu0 %v9219
        %11389 = vmatpush2.bf16.msra.mxu0 %v9218
        %11390 = vmatprep.subr.bf16.mxu0 %v9217
        %11391 = vmatpush2.bf16.msra.mxu0 %v9216
        %11392 = vmatprep.subr.bf16.mxu0 %v9215
        %11393 = vmatpush2.bf16.msra.mxu0 %v9214
        %11394 = vmatprep.subr.bf16.mxu0 %v9213
        %11395 = vmatpush2.bf16.msra.mxu0 %v9212
        %11396 = vmatprep.subr.bf16.mxu0 %v9211
        %11397 = vmatpush2.bf16.msra.mxu0 %v9210
        %11398 = vmatprep.subr.bf16.mxu0 %v9209
        %11399 = vmatpush2.bf16.msra.mxu0 %v9208
        %11400 = vmatprep.subr.bf16.mxu0 %v9207
        %11401 = vmatpush2.bf16.msra.mxu0 %v9206
        %11402 = vmatprep.subr.bf16.mxu0 %v9205
        %11403 = vmatpush2.bf16.msra.mxu0 %v9204
        %11404 = vmatprep.mubr.bf16.mxu0 %v4528
        %11405 = vmatmul.mubr.bf16.gmra.mxu0 %v4527
        %v11406 = vpop.f32.mrf.mxu0
        %v11407 = vadd.f32 %v11366, %v11406
        %v11408 = vpop.f32.mrf.mxu0
        %v11409 = vadd.f32 %v11368, %v11408
        %v11410 = vpop.f32.mrf.mxu0
        %v11411 = vpop.f32.mrf.mxu0
        %11412 = vdwg.mxu0
        %11413 = vmatprep.subr.bf16.mxu0 %v9235
        %11414 = vmatpush1.bf16.msra.mxu0 %v9234
        %11415 = vmatprep.subr.bf16.mxu0 %v9233
        %11416 = vmatpush1.bf16.msra.mxu0 %v9232
        %11417 = vmatprep.subr.bf16.mxu0 %v9231
        %11418 = vmatpush1.bf16.msra.mxu0 %v9230
        %11419 = vmatprep.subr.bf16.mxu0 %v9229
        %11420 = vmatpush1.bf16.msra.mxu0 %v9228
        %11421 = vmatprep.subr.bf16.mxu0 %v9227
        %11422 = vmatpush1.bf16.msra.mxu0 %v9226
        %11423 = vmatprep.subr.bf16.mxu0 %v9225
        %11424 = vmatpush1.bf16.msra.mxu0 %v9224
        %11425 = vmatprep.subr.bf16.mxu0 %v9223
        %11426 = vmatpush1.bf16.msra.mxu0 %v9222
        %11427 = vmatprep.subr.bf16.mxu0 %v9221
        %11428 = vmatpush1.bf16.msra.mxu0 %v9220
        %11429 = vmatprep.subr.bf16.mxu0 %v9251
        %11430 = vmatpush2.bf16.msra.mxu0 %v9250
        %11431 = vmatprep.subr.bf16.mxu0 %v9249
        %11432 = vmatpush2.bf16.msra.mxu0 %v9248
        %11433 = vmatprep.subr.bf16.mxu0 %v9247
        %11434 = vmatpush2.bf16.msra.mxu0 %v9246
        %11435 = vmatprep.subr.bf16.mxu0 %v9245
        %11436 = vmatpush2.bf16.msra.mxu0 %v9244
        %11437 = vmatprep.subr.bf16.mxu0 %v9243
        %11438 = vmatpush2.bf16.msra.mxu0 %v9242
        %11439 = vmatprep.subr.bf16.mxu0 %v9241
        %11440 = vmatpush2.bf16.msra.mxu0 %v9240
        %11441 = vmatprep.subr.bf16.mxu0 %v9239
        %11442 = vmatpush2.bf16.msra.mxu0 %v9238
        %11443 = vmatprep.subr.bf16.mxu0 %v9237
        %11444 = vmatpush2.bf16.msra.mxu0 %v9236
        %11445 = vmatprep.mubr.bf16.mxu0 %v4530
        %11446 = vmatmul.mubr.bf16.gmra.mxu0 %v4529
        %v11447 = vpop.f32.mrf.mxu0
        %v11448 = vadd.f32 %v11407, %v11447
        %v11449 = vpop.f32.mrf.mxu0
        %v11450 = vadd.f32 %v11409, %v11449
        %v11451 = vpop.f32.mrf.mxu0
        %v11452 = vpop.f32.mrf.mxu0
        %11453 = vdwg.mxu0
        %11454 = vmatprep.subr.bf16.mxu0 %v9267
        %11455 = vmatpush1.bf16.msra.mxu0 %v9266
        %11456 = vmatprep.subr.bf16.mxu0 %v9265
        %11457 = vmatpush1.bf16.msra.mxu0 %v9264
        %11458 = vmatprep.subr.bf16.mxu0 %v9263
        %11459 = vmatpush1.bf16.msra.mxu0 %v9262
        %11460 = vmatprep.subr.bf16.mxu0 %v9261
        %11461 = vmatpush1.bf16.msra.mxu0 %v9260
        %11462 = vmatprep.subr.bf16.mxu0 %v9259
        %11463 = vmatpush1.bf16.msra.mxu0 %v9258
        %11464 = vmatprep.subr.bf16.mxu0 %v9257
        %11465 = vmatpush1.bf16.msra.mxu0 %v9256
        %11466 = vmatprep.subr.bf16.mxu0 %v9255
        %11467 = vmatpush1.bf16.msra.mxu0 %v9254
        %11468 = vmatprep.subr.bf16.mxu0 %v9253
        %11469 = vmatpush1.bf16.msra.mxu0 %v9252
        %11470 = vmatprep.subr.bf16.mxu0 %v9283
        %11471 = vmatpush2.bf16.msra.mxu0 %v9282
        %11472 = vmatprep.subr.bf16.mxu0 %v9281
        %11473 = vmatpush2.bf16.msra.mxu0 %v9280
        %11474 = vmatprep.subr.bf16.mxu0 %v9279
        %11475 = vmatpush2.bf16.msra.mxu0 %v9278
        %11476 = vmatprep.subr.bf16.mxu0 %v9277
        %11477 = vmatpush2.bf16.msra.mxu0 %v9276
        %11478 = vmatprep.subr.bf16.mxu0 %v9275
        %11479 = vmatpush2.bf16.msra.mxu0 %v9274
        %11480 = vmatprep.subr.bf16.mxu0 %v9273
        %11481 = vmatpush2.bf16.msra.mxu0 %v9272
        %11482 = vmatprep.subr.bf16.mxu0 %v9271
        %11483 = vmatpush2.bf16.msra.mxu0 %v9270
        %11484 = vmatprep.subr.bf16.mxu0 %v9269
        %11485 = vmatpush2.bf16.msra.mxu0 %v9268
        %11486 = vmatprep.mubr.bf16.mxu0 %v4532
        %11487 = vmatmul.mubr.bf16.gmra.mxu0 %v4531
        %v11488 = vpop.f32.mrf.mxu0
        %v11489 = vadd.f32 %v11448, %v11488
        %v11490 = vpop.f32.mrf.mxu0
        %v11491 = vadd.f32 %v11450, %v11490
        %v11492 = vpop.f32.mrf.mxu0
        %v11493 = vpop.f32.mrf.mxu0
        %11494 = vdwg.mxu0
        %11495 = vmatprep.subr.bf16.mxu0 %v9299
        %11496 = vmatpush1.bf16.msra.mxu0 %v9298
        %11497 = vmatprep.subr.bf16.mxu0 %v9297
        %11498 = vmatpush1.bf16.msra.mxu0 %v9296
        %11499 = vmatprep.subr.bf16.mxu0 %v9295
        %11500 = vmatpush1.bf16.msra.mxu0 %v9294
        %11501 = vmatprep.subr.bf16.mxu0 %v9293
        %11502 = vmatpush1.bf16.msra.mxu0 %v9292
        %11503 = vmatprep.subr.bf16.mxu0 %v9291
        %11504 = vmatpush1.bf16.msra.mxu0 %v9290
        %11505 = vmatprep.subr.bf16.mxu0 %v9289
        %11506 = vmatpush1.bf16.msra.mxu0 %v9288
        %11507 = vmatprep.subr.bf16.mxu0 %v9287
        %11508 = vmatpush1.bf16.msra.mxu0 %v9286
        %11509 = vmatprep.subr.bf16.mxu0 %v9285
        %11510 = vmatpush1.bf16.msra.mxu0 %v9284
        %11511 = vmatprep.subr.bf16.mxu0 %v9315
        %11512 = vmatpush2.bf16.msra.mxu0 %v9314
        %11513 = vmatprep.subr.bf16.mxu0 %v9313
        %11514 = vmatpush2.bf16.msra.mxu0 %v9312
        %11515 = vmatprep.subr.bf16.mxu0 %v9311
        %11516 = vmatpush2.bf16.msra.mxu0 %v9310
        %11517 = vmatprep.subr.bf16.mxu0 %v9309
        %11518 = vmatpush2.bf16.msra.mxu0 %v9308
        %11519 = vmatprep.subr.bf16.mxu0 %v9307
        %11520 = vmatpush2.bf16.msra.mxu0 %v9306
        %11521 = vmatprep.subr.bf16.mxu0 %v9305
        %11522 = vmatpush2.bf16.msra.mxu0 %v9304
        %11523 = vmatprep.subr.bf16.mxu0 %v9303
        %11524 = vmatpush2.bf16.msra.mxu0 %v9302
        %11525 = vmatprep.subr.bf16.mxu0 %v9301
        %11526 = vmatpush2.bf16.msra.mxu0 %v9300
        %11527 = vmatprep.mubr.bf16.mxu0 %v4534
        %11528 = vmatmul.mubr.bf16.gmra.mxu0 %v4533
        %v11529 = vpop.f32.mrf.mxu0
        %v11530 = vadd.f32 %v11489, %v11529
        %v11531 = vpop.f32.mrf.mxu0
        %v11532 = vadd.f32 %v11491, %v11531
        %v11533 = vpop.f32.mrf.mxu0
        %v11534 = vpop.f32.mrf.mxu0
        %11535 = vdwg.mxu0
        %11536 = vmatprep.subr.bf16.mxu0 %v9331
        %11537 = vmatpush1.bf16.msra.mxu0 %v9330
        %11538 = vmatprep.subr.bf16.mxu0 %v9329
        %11539 = vmatpush1.bf16.msra.mxu0 %v9328
        %11540 = vmatprep.subr.bf16.mxu0 %v9327
        %11541 = vmatpush1.bf16.msra.mxu0 %v9326
        %11542 = vmatprep.subr.bf16.mxu0 %v9325
        %11543 = vmatpush1.bf16.msra.mxu0 %v9324
        %11544 = vmatprep.subr.bf16.mxu0 %v9323
        %11545 = vmatpush1.bf16.msra.mxu0 %v9322
        %11546 = vmatprep.subr.bf16.mxu0 %v9321
        %11547 = vmatpush1.bf16.msra.mxu0 %v9320
        %11548 = vmatprep.subr.bf16.mxu0 %v9319
        %11549 = vmatpush1.bf16.msra.mxu0 %v9318
        %11550 = vmatprep.subr.bf16.mxu0 %v9317
        %11551 = vmatpush1.bf16.msra.mxu0 %v9316
        %11552 = vmatprep.subr.bf16.mxu0 %v9347
        %11553 = vmatpush2.bf16.msra.mxu0 %v9346
        %11554 = vmatprep.subr.bf16.mxu0 %v9345
        %11555 = vmatpush2.bf16.msra.mxu0 %v9344
        %11556 = vmatprep.subr.bf16.mxu0 %v9343
        %11557 = vmatpush2.bf16.msra.mxu0 %v9342
        %11558 = vmatprep.subr.bf16.mxu0 %v9341
        %11559 = vmatpush2.bf16.msra.mxu0 %v9340
        %11560 = vmatprep.subr.bf16.mxu0 %v9339
        %11561 = vmatpush2.bf16.msra.mxu0 %v9338
        %11562 = vmatprep.subr.bf16.mxu0 %v9337
        %11563 = vmatpush2.bf16.msra.mxu0 %v9336
        %11564 = vmatprep.subr.bf16.mxu0 %v9335
        %11565 = vmatpush2.bf16.msra.mxu0 %v9334
        %11566 = vmatprep.subr.bf16.mxu0 %v9333
        %11567 = vmatpush2.bf16.msra.mxu0 %v9332
        %11568 = vmatprep.mubr.bf16.mxu0 %v4536
        %11569 = vmatmul.mubr.bf16.gmra.mxu0 %v4535
        %v11570 = vpop.f32.mrf.mxu0
        %v11571 = vadd.f32 %v11530, %v11570
        %v11572 = vpop.f32.mrf.mxu0
        %v11573 = vadd.f32 %v11532, %v11572
        %v11574 = vpop.f32.mrf.mxu0
        %v11575 = vpop.f32.mrf.mxu0
        %11576 = vdwg.mxu0
        %11577 = vmatprep.subr.bf16.mxu0 %v9363
        %11578 = vmatpush1.bf16.msra.mxu0 %v9362
        %11579 = vmatprep.subr.bf16.mxu0 %v9361
        %11580 = vmatpush1.bf16.msra.mxu0 %v9360
        %11581 = vmatprep.subr.bf16.mxu0 %v9359
        %11582 = vmatpush1.bf16.msra.mxu0 %v9358
        %11583 = vmatprep.subr.bf16.mxu0 %v9357
        %11584 = vmatpush1.bf16.msra.mxu0 %v9356
        %11585 = vmatprep.subr.bf16.mxu0 %v9355
        %11586 = vmatpush1.bf16.msra.mxu0 %v9354
        %11587 = vmatprep.subr.bf16.mxu0 %v9353
        %11588 = vmatpush1.bf16.msra.mxu0 %v9352
        %11589 = vmatprep.subr.bf16.mxu0 %v9351
        %11590 = vmatpush1.bf16.msra.mxu0 %v9350
        %11591 = vmatprep.subr.bf16.mxu0 %v9349
        %11592 = vmatpush1.bf16.msra.mxu0 %v9348
        %11593 = vmatprep.subr.bf16.mxu0 %v9379
        %11594 = vmatpush2.bf16.msra.mxu0 %v9378
        %11595 = vmatprep.subr.bf16.mxu0 %v9377
        %11596 = vmatpush2.bf16.msra.mxu0 %v9376
        %11597 = vmatprep.subr.bf16.mxu0 %v9375
        %11598 = vmatpush2.bf16.msra.mxu0 %v9374
        %11599 = vmatprep.subr.bf16.mxu0 %v9373
        %11600 = vmatpush2.bf16.msra.mxu0 %v9372
        %11601 = vmatprep.subr.bf16.mxu0 %v9371
        %11602 = vmatpush2.bf16.msra.mxu0 %v9370
        %11603 = vmatprep.subr.bf16.mxu0 %v9369
        %11604 = vmatpush2.bf16.msra.mxu0 %v9368
        %11605 = vmatprep.subr.bf16.mxu0 %v9367
        %11606 = vmatpush2.bf16.msra.mxu0 %v9366
        %11607 = vmatprep.subr.bf16.mxu0 %v9365
        %11608 = vmatpush2.bf16.msra.mxu0 %v9364
        %11609 = vmatprep.mubr.bf16.mxu0 %v4538
        %11610 = vmatmul.mubr.bf16.gmra.mxu0 %v4537
        %v11611 = vpop.f32.mrf.mxu0
        %v11612 = vadd.f32 %v11571, %v11611
        %v11613 = vpop.f32.mrf.mxu0
        %v11614 = vadd.f32 %v11573, %v11613
        %v11615 = vpop.f32.mrf.mxu0
        %v11616 = vpop.f32.mrf.mxu0
        %11617 = vdwg.mxu0
        %11618 = vmatprep.subr.bf16.mxu0 %v9395
        %11619 = vmatpush1.bf16.msra.mxu0 %v9394
        %11620 = vmatprep.subr.bf16.mxu0 %v9393
        %11621 = vmatpush1.bf16.msra.mxu0 %v9392
        %11622 = vmatprep.subr.bf16.mxu0 %v9391
        %11623 = vmatpush1.bf16.msra.mxu0 %v9390
        %11624 = vmatprep.subr.bf16.mxu0 %v9389
        %11625 = vmatpush1.bf16.msra.mxu0 %v9388
        %11626 = vmatprep.subr.bf16.mxu0 %v9387
        %11627 = vmatpush1.bf16.msra.mxu0 %v9386
        %11628 = vmatprep.subr.bf16.mxu0 %v9385
        %11629 = vmatpush1.bf16.msra.mxu0 %v9384
        %11630 = vmatprep.subr.bf16.mxu0 %v9383
        %11631 = vmatpush1.bf16.msra.mxu0 %v9382
        %11632 = vmatprep.subr.bf16.mxu0 %v9381
        %11633 = vmatpush1.bf16.msra.mxu0 %v9380
        %11634 = vmatprep.subr.bf16.mxu0 %v9411
        %11635 = vmatpush2.bf16.msra.mxu0 %v9410
        %11636 = vmatprep.subr.bf16.mxu0 %v9409
        %11637 = vmatpush2.bf16.msra.mxu0 %v9408
        %11638 = vmatprep.subr.bf16.mxu0 %v9407
        %11639 = vmatpush2.bf16.msra.mxu0 %v9406
        %11640 = vmatprep.subr.bf16.mxu0 %v9405
        %11641 = vmatpush2.bf16.msra.mxu0 %v9404
        %11642 = vmatprep.subr.bf16.mxu0 %v9403
        %11643 = vmatpush2.bf16.msra.mxu0 %v9402
        %11644 = vmatprep.subr.bf16.mxu0 %v9401
        %11645 = vmatpush2.bf16.msra.mxu0 %v9400
        %11646 = vmatprep.subr.bf16.mxu0 %v9399
        %11647 = vmatpush2.bf16.msra.mxu0 %v9398
        %11648 = vmatprep.subr.bf16.mxu0 %v9397
        %11649 = vmatpush2.bf16.msra.mxu0 %v9396
        %11650 = vmatprep.mubr.bf16.mxu0 %v4540
        %11651 = vmatmul.mubr.bf16.gmra.mxu0 %v4539
        %v11652 = vpop.f32.mrf.mxu0
        %v11653 = vadd.f32 %v11612, %v11652
        %v11654 = vpop.f32.mrf.mxu0
        %v11655 = vadd.f32 %v11614, %v11654
        %v11656 = vpop.f32.mrf.mxu0
        %v11657 = vpop.f32.mrf.mxu0
        %11658 = vdwg.mxu0
        %11659 = vmatprep.subr.bf16.mxu0 %v9427
        %11660 = vmatpush1.bf16.msra.mxu0 %v9426
        %11661 = vmatprep.subr.bf16.mxu0 %v9425
        %11662 = vmatpush1.bf16.msra.mxu0 %v9424
        %11663 = vmatprep.subr.bf16.mxu0 %v9423
        %11664 = vmatpush1.bf16.msra.mxu0 %v9422
        %11665 = vmatprep.subr.bf16.mxu0 %v9421
        %11666 = vmatpush1.bf16.msra.mxu0 %v9420
        %11667 = vmatprep.subr.bf16.mxu0 %v9419
        %11668 = vmatpush1.bf16.msra.mxu0 %v9418
        %11669 = vmatprep.subr.bf16.mxu0 %v9417
        %11670 = vmatpush1.bf16.msra.mxu0 %v9416
        %11671 = vmatprep.subr.bf16.mxu0 %v9415
        %11672 = vmatpush1.bf16.msra.mxu0 %v9414
        %11673 = vmatprep.subr.bf16.mxu0 %v9413
        %11674 = vmatpush1.bf16.msra.mxu0 %v9412
        %11675 = vmatprep.subr.bf16.mxu0 %v9443
        %11676 = vmatpush2.bf16.msra.mxu0 %v9442
        %11677 = vmatprep.subr.bf16.mxu0 %v9441
        %11678 = vmatpush2.bf16.msra.mxu0 %v9440
        %11679 = vmatprep.subr.bf16.mxu0 %v9439
        %11680 = vmatpush2.bf16.msra.mxu0 %v9438
        %11681 = vmatprep.subr.bf16.mxu0 %v9437
        %11682 = vmatpush2.bf16.msra.mxu0 %v9436
        %11683 = vmatprep.subr.bf16.mxu0 %v9435
        %11684 = vmatpush2.bf16.msra.mxu0 %v9434
        %11685 = vmatprep.subr.bf16.mxu0 %v9433
        %11686 = vmatpush2.bf16.msra.mxu0 %v9432
        %11687 = vmatprep.subr.bf16.mxu0 %v9431
        %11688 = vmatpush2.bf16.msra.mxu0 %v9430
        %11689 = vmatprep.subr.bf16.mxu0 %v9429
        %11690 = vmatpush2.bf16.msra.mxu0 %v9428
        %11691 = vmatprep.mubr.bf16.mxu0 %v4542
        %11692 = vmatmul.mubr.bf16.gmra.mxu0 %v4541
        %v11693 = vpop.f32.mrf.mxu0
        %v11694 = vadd.f32 %v11653, %v11693
        %v11695 = vpop.f32.mrf.mxu0
        %v11696 = vadd.f32 %v11655, %v11695
        %v11697 = vpop.f32.mrf.mxu0
        %v11698 = vpop.f32.mrf.mxu0
        %11699 = vdwg.mxu0
        %11700 = vmatprep.subr.bf16.mxu0 %v9459
        %11701 = vmatpush1.bf16.msra.mxu0 %v9458
        %11702 = vmatprep.subr.bf16.mxu0 %v9457
        %11703 = vmatpush1.bf16.msra.mxu0 %v9456
        %11704 = vmatprep.subr.bf16.mxu0 %v9455
        %11705 = vmatpush1.bf16.msra.mxu0 %v9454
        %11706 = vmatprep.subr.bf16.mxu0 %v9453
        %11707 = vmatpush1.bf16.msra.mxu0 %v9452
        %11708 = vmatprep.subr.bf16.mxu0 %v9451
        %11709 = vmatpush1.bf16.msra.mxu0 %v9450
        %11710 = vmatprep.subr.bf16.mxu0 %v9449
        %11711 = vmatpush1.bf16.msra.mxu0 %v9448
        %11712 = vmatprep.subr.bf16.mxu0 %v9447
        %11713 = vmatpush1.bf16.msra.mxu0 %v9446
        %11714 = vmatprep.subr.bf16.mxu0 %v9445
        %11715 = vmatpush1.bf16.msra.mxu0 %v9444
        %11716 = vmatprep.subr.bf16.mxu0 %v9475
        %11717 = vmatpush2.bf16.msra.mxu0 %v9474
        %11718 = vmatprep.subr.bf16.mxu0 %v9473
        %11719 = vmatpush2.bf16.msra.mxu0 %v9472
        %11720 = vmatprep.subr.bf16.mxu0 %v9471
        %11721 = vmatpush2.bf16.msra.mxu0 %v9470
        %11722 = vmatprep.subr.bf16.mxu0 %v9469
        %11723 = vmatpush2.bf16.msra.mxu0 %v9468
        %11724 = vmatprep.subr.bf16.mxu0 %v9467
        %11725 = vmatpush2.bf16.msra.mxu0 %v9466
        %11726 = vmatprep.subr.bf16.mxu0 %v9465
        %11727 = vmatpush2.bf16.msra.mxu0 %v9464
        %11728 = vmatprep.subr.bf16.mxu0 %v9463
        %11729 = vmatpush2.bf16.msra.mxu0 %v9462
        %11730 = vmatprep.subr.bf16.mxu0 %v9461
        %11731 = vmatpush2.bf16.msra.mxu0 %v9460
        %11732 = vmatprep.mubr.bf16.mxu0 %v4544
        %11733 = vmatmul.mubr.bf16.gmra.mxu0 %v4543
        %v11734 = vpop.f32.mrf.mxu0
        %v11735 = vadd.f32 %v11694, %v11734
        %v11736 = vpop.f32.mrf.mxu0
        %v11737 = vadd.f32 %v11696, %v11736
        %v11738 = vpop.f32.mrf.mxu0
        %v11739 = vpop.f32.mrf.mxu0
        %11740 = vdwg.mxu0
        %11741 = vmatprep.subr.bf16.mxu0 %v9491
        %11742 = vmatpush1.bf16.msra.mxu0 %v9490
        %11743 = vmatprep.subr.bf16.mxu0 %v9489
        %11744 = vmatpush1.bf16.msra.mxu0 %v9488
        %11745 = vmatprep.subr.bf16.mxu0 %v9487
        %11746 = vmatpush1.bf16.msra.mxu0 %v9486
        %11747 = vmatprep.subr.bf16.mxu0 %v9485
        %11748 = vmatpush1.bf16.msra.mxu0 %v9484
        %11749 = vmatprep.subr.bf16.mxu0 %v9483
        %11750 = vmatpush1.bf16.msra.mxu0 %v9482
        %11751 = vmatprep.subr.bf16.mxu0 %v9481
        %11752 = vmatpush1.bf16.msra.mxu0 %v9480
        %11753 = vmatprep.subr.bf16.mxu0 %v9479
        %11754 = vmatpush1.bf16.msra.mxu0 %v9478
        %11755 = vmatprep.subr.bf16.mxu0 %v9477
        %11756 = vmatpush1.bf16.msra.mxu0 %v9476
        %11757 = vmatprep.subr.bf16.mxu0 %v9507
        %11758 = vmatpush2.bf16.msra.mxu0 %v9506
        %11759 = vmatprep.subr.bf16.mxu0 %v9505
        %11760 = vmatpush2.bf16.msra.mxu0 %v9504
        %11761 = vmatprep.subr.bf16.mxu0 %v9503
        %11762 = vmatpush2.bf16.msra.mxu0 %v9502
        %11763 = vmatprep.subr.bf16.mxu0 %v9501
        %11764 = vmatpush2.bf16.msra.mxu0 %v9500
        %11765 = vmatprep.subr.bf16.mxu0 %v9499
        %11766 = vmatpush2.bf16.msra.mxu0 %v9498
        %11767 = vmatprep.subr.bf16.mxu0 %v9497
        %11768 = vmatpush2.bf16.msra.mxu0 %v9496
        %11769 = vmatprep.subr.bf16.mxu0 %v9495
        %11770 = vmatpush2.bf16.msra.mxu0 %v9494
        %11771 = vmatprep.subr.bf16.mxu0 %v9493
        %11772 = vmatpush2.bf16.msra.mxu0 %v9492
        %11773 = vmatprep.mubr.bf16.mxu0 %v4546
        %11774 = vmatmul.mubr.bf16.gmra.mxu0 %v4545
        %v11775 = vpop.f32.mrf.mxu0
        %v11776 = vadd.f32 %v11735, %v11775
        %v11777 = vpop.f32.mrf.mxu0
        %v11778 = vadd.f32 %v11737, %v11777
        %v11779 = vpop.f32.mrf.mxu0
        %v11780 = vpop.f32.mrf.mxu0
        %11781 = vdwg.mxu0
        %v11782 = vmax.f32 %v11776, 0.0
        %v11783 = vmax.f32 %v11778, 0.0
        %v11784 = vpack.c.bf16 %v11782, %v11782
        %v11785 = vpack.c.bf16 %v11783, %v11783
        %v11786 = vld [vmem:[%s7] sm:$0xf]
        %v11787 = vld [vmem:[%s7 + $0x4] sm:$0xf]
        %v11788 = vld [vmem:[%s7 + $0x8] sm:$0xf]
        %v11789 = vld [vmem:[%s7 + $0xc] sm:$0xf]
        %v11790 = vld [vmem:[%s7 + $0x10] sm:$0xf]
        %v11791 = vld [vmem:[%s7 + $0x14] sm:$0xf]
        %v11792 = vld [vmem:[%s7 + $0x18] sm:$0xf]
        %v11793 = vld [vmem:[%s7 + $0x1c] sm:$0xf]
        %v11794 = vld [vmem:[%s7 + $0x20] sm:$0xf]
        %v11795 = vld [vmem:[%s7 + $0x24] sm:$0xf]
        %v11796 = vld [vmem:[%s7 + $0x28] sm:$0xf]
        %v11797 = vld [vmem:[%s7 + $0x2c] sm:$0xf]
        %v11798 = vld [vmem:[%s7 + $0x30] sm:$0xf]
        %v11799 = vld [vmem:[%s7 + $0x34] sm:$0xf]
        %v11800 = vld [vmem:[%s7 + $0x38] sm:$0xf]
        %v11801 = vld [vmem:[%s7 + $0x3c] sm:$0xf]
        %v11802 = vld [vmem:[%s7 + $0x40] sm:$0xf]
        %v11803 = vld [vmem:[%s7 + $0x44] sm:$0xf]
        %v11804 = vld [vmem:[%s7 + $0x48] sm:$0xf]
        %v11805 = vld [vmem:[%s7 + $0x4c] sm:$0xf]
        %v11806 = vld [vmem:[%s7 + $0x50] sm:$0xf]
        %v11807 = vld [vmem:[%s7 + $0x54] sm:$0xf]
        %v11808 = vld [vmem:[%s7 + $0x58] sm:$0xf]
        %v11809 = vld [vmem:[%s7 + $0x5c] sm:$0xf]
        %v11810 = vld [vmem:[%s7 + $0x60] sm:$0xf]
        %v11811 = vld [vmem:[%s8] sm:$0x1]
        %v11837 = vunpack.c.l.b16 %v11786
        %v11838 = vunpack.c.l.b16 %v11787
        %v11839 = vunpack.c.l.b16 %v11788
        %v11840 = vunpack.c.l.b16 %v11789
        %v11841 = vunpack.c.l.b16 %v11790
        %v11842 = vunpack.c.l.b16 %v11791
        %v11843 = vunpack.c.l.b16 %v11792
        %v11844 = vunpack.c.l.b16 %v11793
        %v11845 = vunpack.c.l.b16 %v11794
        %v11846 = vunpack.c.l.b16 %v11795
        %v11847 = vunpack.c.l.b16 %v11796
        %v11848 = vunpack.c.l.b16 %v11797
        %v11849 = vunpack.c.l.b16 %v11798
        %v11850 = vunpack.c.l.b16 %v11799
        %v11851 = vunpack.c.l.b16 %v11800
        %v11852 = vunpack.c.l.b16 %v11801
        %v11853 = vunpack.c.l.b16 %v11802
        %v11854 = vunpack.c.l.b16 %v11803
        %v11855 = vunpack.c.l.b16 %v11804
        %v11856 = vunpack.c.l.b16 %v11805
        %v11857 = vunpack.c.l.b16 %v11806
        %v11858 = vunpack.c.l.b16 %v11807
        %v11859 = vunpack.c.l.b16 %v11808
        %v11860 = vunpack.c.l.b16 %v11809
        %v11861 = vunpack.c.l.b16 %v11810
        %v11862 = vpack.c.b16 %v11838, %v11837
        %v11863 = vpack.c.b16 %v11840, %v11839
        %v11864 = vpack.c.b16 %v11842, %v11841
        %v11865 = vpack.c.b16 %v11844, %v11843
        %v11866 = vpack.c.b16 %v11846, %v11845
        %v11867 = vpack.c.b16 %v11848, %v11847
        %v11868 = vpack.c.b16 %v11850, %v11849
        %v11869 = vpack.c.b16 %v11852, %v11851
        %v11870 = vpack.c.b16 %v11854, %v11853
        %v11871 = vpack.c.b16 %v11856, %v11855
        %v11872 = vpack.c.b16 %v11858, %v11857
        %v11873 = vpack.c.b16 %v11860, %v11859
        %v11874 = vpack.c.b16 %v11861, %v11861
        %vm11887 = vcmask 588800
        %v11889 = vsel %vm11887, %v11785, 0
        %v11892 = vsel %vm3658, %v11874, 0
        %11894 = vmatprep.subr.bf16.mxu0 0
        %11895 = vmatpush1.bf16.msra.mxu0 %v11869
        %11896 = vmatprep.subr.bf16.mxu0 0
        %11897 = vmatpush1.bf16.msra.mxu0 %v11868
        %11898 = vmatprep.subr.bf16.mxu0 0
        %11899 = vmatpush1.bf16.msra.mxu0 %v11867
        %11900 = vmatprep.subr.bf16.mxu0 0
        %11901 = vmatpush1.bf16.msra.mxu0 %v11866
        %11902 = vmatprep.subr.bf16.mxu0 0
        %11903 = vmatpush1.bf16.msra.mxu0 %v11865
        %11904 = vmatprep.subr.bf16.mxu0 0
        %11905 = vmatpush1.bf16.msra.mxu0 %v11864
        %11906 = vmatprep.subr.bf16.mxu0 0
        %11907 = vmatpush1.bf16.msra.mxu0 %v11863
        %11908 = vmatprep.subr.bf16.mxu0 0
        %11909 = vmatpush1.bf16.msra.mxu0 %v11862
        %11910 = vmatprep.subr.bf16.mxu0 0
        %11911 = vmatpush2.bf16.msra.mxu0 0
        %11912 = vmatprep.subr.bf16.mxu0 0
        %11913 = vmatpush2.bf16.msra.mxu0 0
        %11914 = vmatprep.subr.bf16.mxu0 0
        %11915 = vmatpush2.bf16.msra.mxu0 0
        %11916 = vmatprep.subr.bf16.mxu0 0
        %11917 = vmatpush2.bf16.msra.mxu0 %v11892
        %11918 = vmatprep.subr.bf16.mxu0 0
        %11919 = vmatpush2.bf16.msra.mxu0 %v11873
        %11920 = vmatprep.subr.bf16.mxu0 0
        %11921 = vmatpush2.bf16.msra.mxu0 %v11872
        %11922 = vmatprep.subr.bf16.mxu0 0
        %11923 = vmatpush2.bf16.msra.mxu0 %v11871
        %11924 = vmatprep.subr.bf16.mxu0 0
        %11925 = vmatpush2.bf16.msra.mxu0 %v11870
        %11926 = vmatprep.mubr.bf16.mxu0 %v11889
        %11927 = vmatmul.mubr.bf16.gmra.mxu0 %v11784
        %v11928 = vpop.f32.mrf.mxu0
        %v11929 = vadd.f32 %v11811, %v11928
        %v11930 = vpop.f32.mrf.mxu0
        %v11931 = vpop.f32.mrf.mxu0
        %v11932 = vpop.f32.mrf.mxu0
        %11933 = vdwg.mxu0
        %vm11934 = vcmask 90112
        %11935 = vst.msk [vmem:[%s324] sm:$0x1] %vm11934, %v11929
        %s11936 = sand.u32 %s225, 1
        %s11937 = scalar_lea.sflag [#allocation4], %s11936
        %s11938 = sand.u32 %s225, 1
        %s11939 = scalar_lea.vmem [#allocation3], %s11938
        // Predicated region
        $region57: #{tpu_custom_call.1} parent=55 // pred_check
          %p11940 = pneg %p235
        $region58: #{tpu_custom_call.1} parent=55 // pred_check_branch
          %11942 = sbr.rel (%p11940) target = $region60
        $region59: #{tpu_custom_call.1} parent=55 // pred_region
          %s11944 = ssub.s32 16, 16
          %11945 = vsyncadd %s11937, %s11944
          %s11946 = smul.addr %s23, 16
          %s11947 = scalar_lea.hbm %s9, %s11946
          %s11949 = sshll.u32 %s11939, 4
          %s11950 = int_to_ptr.vmem [resolvable:$true] %s11949
          %11952 = dma.vmem_to_hbm [thread:$0]  %s11950, 16, %s11947, %s11937
        $region60: #{tpu_custom_call.1} parent=55 // pred_fallthru
          _
      $region56: #{tpu_custom_call.1} parent=5 // pred_fallthru
        _
      %p11953 = scmp.le.s32.totalorder 2, %s18
      // Predicated region
      $region61: #{tpu_custom_call.1} parent=5 // pred_check
        %p11954 = pneg %p11953
      $region62: #{tpu_custom_call.1} parent=5 // pred_check_branch
        %11956 = sbr.rel (%p11954) target = $region64
      $region63: #{tpu_custom_call.1} parent=5 // pred_region
        %s11957 = ssub.s32 %s18, 2
        // Predicated region
        $region65: #{tpu_custom_call.1} parent=63 // pred_check
          %p11958 = pneg %p241
        $region66: #{tpu_custom_call.1} parent=63 // pred_check_branch
          %11960 = sbr.rel (%p11958) target = $region68
        $region67: #{tpu_custom_call.1} parent=63 // pred_region
          %s11961 = sand.u32 %s226, 1
          %s11962 = scalar_lea.sflag [#allocation4], %s11961
          %s11963 = sand.u32 %s226, 1
          %s11964 = scalar_lea.vmem [#allocation3], %s11963
          %11965 = dma.done %s11962, 16
        $region68: #{tpu_custom_call.1} parent=63 // pred_fallthru
          _
      $region64: #{tpu_custom_call.1} parent=5 // pred_fallthru
        _
    $region6: #{tpu_custom_call.1} parent=1 // loop_footer
      %s22 = sadd.s32 1, %s18
    $region7: #{tpu_custom_call.1} parent=1 // loop_footer_branch
      %17 = sbr.rel target = $region3
    $region8: #{tpu_custom_call.1} parent=1 // loop_exit
      _
    %11966 = vsyncpa [#allocation4], 1
    %s11967 = scalar_lea.sflag [#allocation4], 1
    %11968 = vsyncpa %s11967, 1

</llo_original>
